<compile_context>
chip_gen: v6e
topology: v6e:2x2x1
jax: 0.10.0
libtpu: 0.0.40
codegen_flags: <defaults>
</compile_context>

<pallas_src>
import functools
import math

import jax
import jax.numpy as jnp
from jax.experimental import pallas as pl
from jax.experimental.pallas import tpu as pltpu

MY_INF = 2.0 ** 32
NEG_PAD = -MY_INF + 1.0

# bf16 matmul inputs (f32 accumulation) — MXU-native on v5e/v6e/v7x, halves
# weight DMA bytes. LayerNorm / softmax / mask math stays f32.
MXU_DT = jnp.bfloat16


# ----------------------------------------------------------------------------
# In-kernel helpers
# ----------------------------------------------------------------------------
def _layernorm(z, gamma, beta, eps):
    # torch.nn.LayerNorm over the last dim (biased variance), f32 math.
    mean = jnp.mean(z, axis=-1, keepdims=True)
    var = jnp.mean((z - mean) ** 2, axis=-1, keepdims=True)
    return (z - mean) * jax.lax.rsqrt(var + eps) * gamma + beta


def _mha_core(q, k, v, num_heads, causal):
    # q: (Sq, NH) f32, k/v: (Sk, NH) f32 (post bias+ReLU projections).
    # All heads of one batch element processed in a single kernel invocation.
    sq, nh = q.shape
    sk = k.shape[0]
    d = nh // num_heads
    scale = 1.0 / (float(d) ** 0.5)

    if causal:
        row = jax.lax.broadcasted_iota(jnp.int32, (sq, sk), 0)
        col = jax.lax.broadcasted_iota(jnp.int32, (sq, sk), 1)
        causal_mask = col > row           # tril(diag=0) == 0  <=>  col > row

    heads = []
    for h in range(num_heads):            # static unroll over heads
        lo = h * d
        qh = q[:, lo:lo + d]
        kh = k[:, lo:lo + d]
        vh = v[:, lo:lo + d]

        # scores = Qh @ Kh^T / sqrt(d)  (contraction on the feature dim; no
        # explicit transpose materialized)
        s = jax.lax.dot_general(qh.astype(MXU_DT), kh.astype(MXU_DT),
                                (((1,), (1,)), ((), ())),
                                preferred_element_type=jnp.float32) * scale

        # key padding mask: keys whose (post-ReLU, per-head) features sum to 0
        ksum = jnp.sum(kh, axis=-1, keepdims=True)        # (Sk, 1) XLU reduce
        kpad = jnp.transpose(ksum) == 0.0                 # (1, Sk)
        s = jnp.where(kpad, NEG_PAD, s)
        if causal:
            s = jnp.where(causal_mask, NEG_PAD, s)

        # softmax over keys (f32)
        m = jnp.max(s, axis=-1, keepdims=True)
        e = jnp.exp(s - m)
        p = e / jnp.sum(e, axis=-1, keepdims=True)

        heads.append(jnp.dot(p.astype(MXU_DT), vh.astype(MXU_DT),
                             preferred_element_type=jnp.float32))
    return jnp.concatenate(heads, axis=-1)                # (Sq, NH)


# ----------------------------------------------------------------------------
# Pallas kernels (one fused kernel per transformer sub-layer)
# ----------------------------------------------------------------------------
def mha_self_kernel(x_ref, wqkv_ref, bqkv_ref, wo_ref, bo_ref, g_ref, be_ref,
                    o_ref, *, num_heads, causal, eps):
    # x: (1, S, D); computes LayerNorm(x + W_o(attn(relu(x@Wqkv + b))))
    x = x_ref[0]                                           # (S, D) f32
    qkv = jnp.dot(x.astype(MXU_DT), wqkv_ref[...],
                  preferred_element_type=jnp.float32) + bqkv_ref[...]
    qkv = jnp.maximum(qkv, 0.0)
    nh = wo_ref.shape[0]
    q = qkv[:, 0 * nh:1 * nh]
    k = qkv[:, 1 * nh:2 * nh]
    v = qkv[:, 2 * nh:3 * nh]
    attn = _mha_core(q, k, v, num_heads, causal)           # (S, NH) f32
    y = jnp.dot(attn.astype(MXU_DT), wo_ref[...],
                preferred_element_type=jnp.float32) + bo_ref[...]
    o_ref[0] = _layernorm(x + y, g_ref[...], be_ref[...], eps)


def mha_cross_kernel(xq_ref, xkv_ref, wq_ref, bq_ref, wkv_ref, bkv_ref,
                     wo_ref, bo_ref, g_ref, be_ref, o_ref, *, num_heads, eps):
    # xq: (1, Sq, D) query/residual; xkv: (1, Sk, D) memory.
    xq = xq_ref[0]
    xkv = xkv_ref[0]
    q = jnp.maximum(jnp.dot(xq.astype(MXU_DT), wq_ref[...],
                            preferred_element_type=jnp.float32) + bq_ref[...], 0.0)
    kv = jnp.maximum(jnp.dot(xkv.astype(MXU_DT), wkv_ref[...],
                             preferred_element_type=jnp.float32) + bkv_ref[...], 0.0)
    nh = wo_ref.shape[0]
    k = kv[:, :nh]
    v = kv[:, nh:]
    attn = _mha_core(q, k, v, num_heads, causal=False)
    y = jnp.dot(attn.astype(MXU_DT), wo_ref[...],
                preferred_element_type=jnp.float32) + bo_ref[...]
    o_ref[0] = _layernorm(xq + y, g_ref[...], be_ref[...], eps)


def ffn_kernel(x_ref, w1_ref, b1_ref, w2_ref, b2_ref, g1_ref, be1_ref,
               g2_ref, be2_ref, o_ref, *, eps_inner, eps_outer):
    # LN_outer(x + LN_inner(x + relu(x@W1 + b1)@W2 + b2)); hidden stays in VMEM.
    x = x_ref[...]                                         # (rows, D) f32
    h = jnp.maximum(jnp.dot(x.astype(MXU_DT), w1_ref[...],
                            preferred_element_type=jnp.float32) + b1_ref[...], 0.0)
    y = jnp.dot(h.astype(MXU_DT), w2_ref[...],
                preferred_element_type=jnp.float32) + b2_ref[...]
    z = _layernorm(y + x, g1_ref[...], be1_ref[...], eps_inner)   # FeedForward.norm
    o_ref[...] = _layernorm(x + z, g2_ref[...], be2_ref[...], eps_outer)  # layer norm


def proj_softmax_kernel(x_ref, w_ref, o_ref):
    logits = jnp.dot(x_ref[...].astype(MXU_DT), w_ref[...],
                     preferred_element_type=jnp.float32)
    m = jnp.max(logits, axis=-1, keepdims=True)
    e = jnp.exp(logits - m)
    o_ref[...] = e / jnp.sum(e, axis=-1, keepdims=True)


# ----------------------------------------------------------------------------
# Pallas wrappers
# ----------------------------------------------------------------------------
def _row_block(n):
    """Row-tile size: multiple of 8, divides n, <=256, >=2 grid steps when possible."""
    if n <= 8 or n % 8 != 0:
        return n
    cands = [b for b in range(8, min(n, 256) + 1, 8) if n % b == 0]
    multi = [b for b in cands if n // b >= 2]
    return multi[-1] if multi else cands[-1]


def fused_self_attn_ln(x, p, gamma, beta, num_heads, causal, eps):
    b, s, d = x.shape
    nh3 = p["wqkv"].shape[1]
    nh = nh3 // 3
    oc = p["wo"].shape[1]
    kern = functools.partial(mha_self_kernel, num_heads=num_heads,
                             causal=causal, eps=eps)
    return pl.pallas_call(
        kern,
        out_shape=jax.ShapeDtypeStruct((b, s, oc), jnp.float32),
        grid=(b,),
        in_specs=[pl.BlockSpec((1, s, d), lambda i: (i, 0, 0)),
                  pl.BlockSpec((d, nh3), lambda i: (0, 0)),     # weights stay resident
                  pl.BlockSpec((1, nh3), lambda i: (0, 0)),
                  pl.BlockSpec((nh, oc), lambda i: (0, 0)),
                  pl.BlockSpec((1, oc), lambda i: (0, 0)),
                  pl.BlockSpec((1, oc), lambda i: (0, 0)),
                  pl.BlockSpec((1, oc), lambda i: (0, 0))],
        out_specs=pl.BlockSpec((1, s, oc), lambda i: (i, 0, 0)),
        compiler_params=pltpu.CompilerParams(dimension_semantics=("parallel",)),
    )(x, p["wqkv"], p["bqkv"], p["wo"], p["bo"], gamma, beta)


def fused_cross_attn_ln(x, memory, p, gamma, beta, num_heads, eps):
    b, sq, d = x.shape
    sk = memory.shape[1]
    nh = p["wq"].shape[1]
    oc = p["wo"].shape[1]
    kern = functools.partial(mha_cross_kernel, num_heads=num_heads, eps=eps)
    return pl.pallas_call(
        kern,
        out_shape=jax.ShapeDtypeStruct((b, sq, oc), jnp.float32),
        grid=(b,),
        in_specs=[pl.BlockSpec((1, sq, d), lambda i: (i, 0, 0)),
                  pl.BlockSpec((1, sk, d), lambda i: (i, 0, 0)),
                  pl.BlockSpec((d, nh), lambda i: (0, 0)),
                  pl.BlockSpec((1, nh), lambda i: (0, 0)),
                  pl.BlockSpec((d, 2 * nh), lambda i: (0, 0)),
                  pl.BlockSpec((1, 2 * nh), lambda i: (0, 0)),
                  pl.BlockSpec((nh, oc), lambda i: (0, 0)),
                  pl.BlockSpec((1, oc), lambda i: (0, 0)),
                  pl.BlockSpec((1, oc), lambda i: (0, 0)),
                  pl.BlockSpec((1, oc), lambda i: (0, 0))],
        out_specs=pl.BlockSpec((1, sq, oc), lambda i: (i, 0, 0)),
        compiler_params=pltpu.CompilerParams(dimension_semantics=("parallel",)),
    )(x, memory, p["wq"], p["bq"], p["wkv"], p["bkv"], p["wo"], p["bo"],
      gamma, beta)


def fused_ffn_ln(x, p, gamma2, beta2, eps_inner, eps_outer):
    b, s, d = x.shape
    n = b * s
    x2 = x.reshape(n, d)
    hid = p["w1"].shape[1]
    blk = _row_block(n)
    kern = functools.partial(ffn_kernel, eps_inner=eps_inner, eps_outer=eps_outer)
    out = pl.pallas_call(
        kern,
        out_shape=jax.ShapeDtypeStruct((n, d), jnp.float32),
        grid=(n // blk,),
        in_specs=[pl.BlockSpec((blk, d), lambda i: (i, 0)),
                  pl.BlockSpec((d, hid), lambda i: (0, 0)),
                  pl.BlockSpec((1, hid), lambda i: (0, 0)),
                  pl.BlockSpec((hid, d), lambda i: (0, 0)),
                  pl.BlockSpec((1, d), lambda i: (0, 0)),
                  pl.BlockSpec((1, d), lambda i: (0, 0)),
                  pl.BlockSpec((1, d), lambda i: (0, 0)),
                  pl.BlockSpec((1, d), lambda i: (0, 0)),
                  pl.BlockSpec((1, d), lambda i: (0, 0))],
        out_specs=pl.BlockSpec((blk, d), lambda i: (i, 0)),
        compiler_params=pltpu.CompilerParams(dimension_semantics=("parallel",)),
    )(x2, p["w1"], p["b1"], p["w2"], p["b2"], p["ln_g"], p["ln_b"], gamma2, beta2)
    return out.reshape(b, s, d)


def fused_proj_softmax(x, w):
    # x: (B, S, D); w: (D, V) pre-transposed at init.
    b, s, d = x.shape
    v = w.shape[1]
    n = b * s
    x2 = x.reshape(n, d)
    blk = _row_block(n)
    out = pl.pallas_call(
        proj_softmax_kernel,
        out_shape=jax.ShapeDtypeStruct((n, v), jnp.float32),
        grid=(n // blk,),
        in_specs=[pl.BlockSpec((blk, d), lambda i: (i, 0)),
                  pl.BlockSpec((d, v), lambda i: (0, 0))],
        out_specs=pl.BlockSpec((blk, v), lambda i: (i, 0)),
        compiler_params=pltpu.CompilerParams(dimension_semantics=("parallel",)),
    )(x2, w)
    return out.reshape(b, s, v)


# ----------------------------------------------------------------------------
# Model glue (mirrors the PyTorch modules)
# ----------------------------------------------------------------------------
def positional_encoding(x, emb_dim):
    s = x.shape[1]
    pos = jnp.arange(s, dtype=jnp.float32)[:, None]
    div = jnp.exp(jnp.arange(0, emb_dim, 2, dtype=jnp.float32) / emb_dim
                  * math.log(10000.0))
    pe = jnp.zeros((s, emb_dim), jnp.float32)
    pe = pe.at[:, 0::2].set(jnp.sin(pos / div))
    pe = pe.at[:, 1::2].set(jnp.cos(pos / div))
    return x + pe[None, :, :x.shape[-1]]


def encoder_layer(p, x, num_heads, eps=1e-5):
    x = fused_self_attn_ln(x, p["self_attn"], p["norm1_g"], p["norm1_b"],
                           num_heads, causal=False, eps=eps)
    x = fused_ffn_ln(x, p["ff"], p["norm2_g"], p["norm2_b"],
                     eps_inner=1e-6, eps_outer=eps)
    return x


def decoder_layer(p, x, memory, num_heads, eps=1e-5):
    x = fused_self_attn_ln(x, p["self_attn"], p["norm1_g"], p["norm1_b"],
                           num_heads, causal=True, eps=eps)
    x = fused_cross_attn_ln(x, memory, p["cross_attn"], p["norm2_g"], p["norm2_b"],
                            num_heads, eps=eps)
    x = fused_ffn_ln(x, p["ff"], p["norm3_g"], p["norm3_b"],
                     eps_inner=1e-6, eps_outer=eps)
    return x


def transformer_model_forward(params, src_seq, tgt_seq, cfg):
    emb_dim = cfg["emb_dim"]
    scale = emb_dim ** 0.5
    src = params["src_emb"][src_seq] * scale          # embedding gather: JAX glue
    src = positional_encoding(src, emb_dim)
    tgt = params["tgt_emb"][tgt_seq] * scale
    tgt = positional_encoding(tgt, emb_dim)
    # dropout = identity (eval)

    mem = src
    for lp in params["enc_layers"]:
        mem = encoder_layer(lp, mem, cfg["num_head"])
    out = tgt
    for lp in params["dec_layers"]:
        out = decoder_layer(lp, out, mem, cfg["num_head"])

    return fused_proj_softmax(out, params["w_out"])


# ----------------------------------------------------------------------------
# Deterministic parameter init (synthetic; shapes follow the module __init__).
# Weights stored pre-transposed (Din, Dout) in bf16; biases / LN params in f32
# with kernel-ready (1, Dout) shapes; QKV weights concatenated at init time.
# ----------------------------------------------------------------------------
def _dense(key, in_dim, out_dim, scale=0.02):
    kw, kb = jax.random.split(key)
    w = (jax.random.normal(kw, (in_dim, out_dim), jnp.float32) * scale).astype(MXU_DT)
    b = jax.random.normal(kb, (1, out_dim), jnp.float32) * scale
    return w, b


def _ln_params(n):
    return jnp.ones((1, n), jnp.float32), jnp.zeros((1, n), jnp.float32)


def _init_mha_self(key, in_dim, nh, oc):
    kq, kk, kv, ko = jax.random.split(key, 4)
    wq, bq = _dense(kq, in_dim, nh)
    wk, bk = _dense(kk, in_dim, nh)
    wv, bv = _dense(kv, in_dim, nh)
    wo, bo = _dense(ko, nh, oc)
    return {"wqkv": jnp.concatenate([wq, wk, wv], axis=1),
            "bqkv": jnp.concatenate([bq, bk, bv], axis=1),
            "wo": wo, "bo": bo}


def _init_mha_cross(key, in_dim, nh, oc):
    kq, kk, kv, ko = jax.random.split(key, 4)
    wq, bq = _dense(kq, in_dim, nh)
    wk, bk = _dense(kk, in_dim, nh)
    wv, bv = _dense(kv, in_dim, nh)
    wo, bo = _dense(ko, nh, oc)
    return {"wq": wq, "bq": bq,
            "wkv": jnp.concatenate([wk, wv], axis=1),
            "bkv": jnp.concatenate([bk, bv], axis=1),
            "wo": wo, "bo": bo}


def _init_ff(key, in_ch, hid, out_ch):
    k1, k2 = jax.random.split(key)
    w1, b1 = _dense(k1, in_ch, hid)
    w2, b2 = _dense(k2, hid, out_ch)
    g, b = _ln_params(out_ch)
    return {"w1": w1, "b1": b1, "w2": w2, "b2": b2, "ln_g": g, "ln_b": b}


def init_params(key, cfg):
    d, nh = cfg["emb_dim"], cfg["num_hiddens"]
    hc, oc = cfg["hidden_channel"], cfg["output_channel"]
    keys = jax.random.split(key, 8)

    src_emb = jax.random.normal(keys[0], (cfg["src_voc_len"], d), jnp.float32) * 0.02
    src_emb = src_emb.at[cfg["PAD_ID"]].set(0.0)      # padding_idx row -> zeros
    tgt_emb = jax.random.normal(keys[1], (cfg["tgt_voc_len"], d), jnp.float32) * 0.02
    tgt_emb = tgt_emb.at[cfg["PAD_ID"]].set(0.0)

    enc_layers = []
    for k in jax.random.split(keys[2], cfg["num_encoder_layers"]):
        k1, k2 = jax.random.split(k)
        n1g, n1b = _ln_params(oc)
        n2g, n2b = _ln_params(oc)
        enc_layers.append({"self_attn": _init_mha_self(k1, d, nh, oc),
                           "ff": _init_ff(k2, oc, hc, oc),
                           "norm1_g": n1g, "norm1_b": n1b,
                           "norm2_g": n2g, "norm2_b": n2b})

    dec_layers = []
    for k in jax.random.split(keys[3], cfg["num_decoder_layers"]):
        k1, k2, k3 = jax.random.split(k, 3)
        n1g, n1b = _ln_params(oc)
        n2g, n2b = _ln_params(oc)
        n3g, n3b = _ln_params(oc)
        dec_layers.append({"self_attn": _init_mha_self(k1, d, nh, oc),
                           "cross_attn": _init_mha_cross(k2, d, nh, oc),
                           "ff": _init_ff(k3, oc, hc, oc),
                           "norm1_g": n1g, "norm1_b": n1b,
                           "norm2_g": n2g, "norm2_b": n2b,
                           "norm3_g": n3g, "norm3_b": n3b})

    w_out = (jax.random.normal(keys[4], (oc, cfg["tgt_voc_len"]), jnp.float32)
             * 0.02).astype(MXU_DT)                  # pre-transposed (D, V), no bias

    return {"src_emb": src_emb, "tgt_emb": tgt_emb,
            "enc_layers": enc_layers, "dec_layers": dec_layers, "w_out": w_out}


# ----------------------------------------------------------------------------
if __name__ == "__main__":
    cfg = dict(src_voc_len=256, tgt_voc_len=256, emb_dim=128, PAD_ID=2,
               num_head=4, num_hiddens=128, hidden_channel=256, output_channel=128,
               num_encoder_layers=2, num_decoder_layers=2)
    B, S_SRC, S_TGT = 2, 8, 8

    root = jax.random.PRNGKey(0)
    kp, ks, kt = jax.random.split(root, 3)
    params = init_params(kp, cfg)
    src_seq = jax.random.randint(ks, (B, S_SRC), 0, cfg["src_voc_len"], dtype=jnp.int32)
    tgt_seq = jax.random.randint(kt, (B, S_TGT), 0, cfg["tgt_voc_len"], dtype=jnp.int32)

    fwd = jax.jit(lambda p, s, t: transformer_model_forward(p, s, t, cfg))
    out = jax.block_until_ready(fwd(params, src_seq, tgt_seq))
    assert out.shape == (B, S_TGT, cfg["tgt_voc_len"])
    print("KERNEL_OK")
</pallas_src>

<mosaic_0001>
module attributes {stable_mosaic.version = 11 : i64} {
  func.func @ffn_kernel(%arg0: i32, %arg1: memref<8x128xf32, #tpu.memory_space<vmem>>, %arg2: memref<128x256xbf16, #tpu.memory_space<vmem>>, %arg3: memref<1x256xf32, #tpu.memory_space<vmem>>, %arg4: memref<256x128xbf16, #tpu.memory_space<vmem>>, %arg5: memref<1x128xf32, #tpu.memory_space<vmem>>, %arg6: memref<1x128xf32, #tpu.memory_space<vmem>>, %arg7: memref<1x128xf32, #tpu.memory_space<vmem>>, %arg8: memref<1x128xf32, #tpu.memory_space<vmem>>, %arg9: memref<1x128xf32, #tpu.memory_space<vmem>>, %arg10: memref<8x128xf32, #tpu.memory_space<vmem>>) attributes {dimension_semantics = [#tpu.dimension_semantics<parallel>], iteration_bounds = array<i64: 2>, scalar_prefetch = 0 : i64, scratch_operands = 0 : i64, tpu.core_type = #tpu.core_type<tc>, window_params = [{transform_indices = @transform_0, window_bounds = array<i64: 8, 128>}, {pipeline_mode = #tpu.pipeline_mode<synchronous>, transform_indices = @transform_1, window_bounds = array<i64: 128, 256>}, {pipeline_mode = #tpu.pipeline_mode<synchronous>, transform_indices = @transform_2, window_bounds = array<i64: 1, 256>}, {pipeline_mode = #tpu.pipeline_mode<synchronous>, transform_indices = @transform_3, window_bounds = array<i64: 256, 128>}, {pipeline_mode = #tpu.pipeline_mode<synchronous>, transform_indices = @transform_4, window_bounds = array<i64: 1, 128>}, {pipeline_mode = #tpu.pipeline_mode<synchronous>, transform_indices = @transform_5, window_bounds = array<i64: 1, 128>}, {pipeline_mode = #tpu.pipeline_mode<synchronous>, transform_indices = @transform_6, window_bounds = array<i64: 1, 128>}, {pipeline_mode = #tpu.pipeline_mode<synchronous>, transform_indices = @transform_7, window_bounds = array<i64: 1, 128>}, {pipeline_mode = #tpu.pipeline_mode<synchronous>, transform_indices = @transform_8, window_bounds = array<i64: 1, 128>}, {transform_indices = @transform_9, window_bounds = array<i64: 8, 128>}]} {
    %c0 = arith.constant 0 : index
    %c0_0 = arith.constant 0 : index
    %0 = vector.load %arg1[%c0, %c0_0] : memref<8x128xf32, #tpu.memory_space<vmem>>, vector<8x128xf32>
    %1 = arith.truncf %0 : vector<8x128xf32> to vector<8x128xbf16>
    %c0_1 = arith.constant 0 : index
    %c0_2 = arith.constant 0 : index
    %2 = vector.load %arg2[%c0_1, %c0_2] : memref<128x256xbf16, #tpu.memory_space<vmem>>, vector<128x256xbf16>
    %cst = arith.constant dense<0.000000e+00> : vector<8x256xf32>
    %3 = tpu.matmul %1, %2, %cst {dimension_numbers = #tpu.dot_dimension_numbers<[1], [0], [0], [1], [0, 0, 1, 1], [], []>} : vector<8x128xbf16>, vector<128x256xbf16>, vector<8x256xf32> -> vector<8x256xf32>
    %c0_3 = arith.constant 0 : index
    %c0_4 = arith.constant 0 : index
    %4 = vector.load %arg3[%c0_3, %c0_4] : memref<1x256xf32, #tpu.memory_space<vmem>>, vector<1x256xf32>
    %5 = vector.broadcast %4 : vector<1x256xf32> to vector<8x256xf32>
    %6 = arith.addf %3, %5 : vector<8x256xf32>
    %cst_5 = arith.constant 0.000000e+00 : f32
    %7 = vector.broadcast %cst_5 : f32 to vector<8x256xf32>
    %8 = arith.maximumf %6, %7 : vector<8x256xf32>
    %9 = arith.truncf %8 : vector<8x256xf32> to vector<8x256xbf16>
    %c0_6 = arith.constant 0 : index
    %c0_7 = arith.constant 0 : index
    %10 = vector.load %arg4[%c0_6, %c0_7] : memref<256x128xbf16, #tpu.memory_space<vmem>>, vector<256x128xbf16>
    %cst_8 = arith.constant dense<0.000000e+00> : vector<8x128xf32>
    %11 = tpu.matmul %9, %10, %cst_8 {dimension_numbers = #tpu.dot_dimension_numbers<[1], [0], [0], [1], [0, 0, 1, 1], [], []>} : vector<8x256xbf16>, vector<256x128xbf16>, vector<8x128xf32> -> vector<8x128xf32>
    %c0_9 = arith.constant 0 : index
    %c0_10 = arith.constant 0 : index
    %12 = vector.load %arg5[%c0_9, %c0_10] : memref<1x128xf32, #tpu.memory_space<vmem>>, vector<1x128xf32>
    %13 = vector.broadcast %12 : vector<1x128xf32> to vector<8x128xf32>
    %14 = arith.addf %11, %13 : vector<8x128xf32>
    %15 = arith.addf %14, %0 : vector<8x128xf32>
    %c0_11 = arith.constant 0 : index
    %c0_12 = arith.constant 0 : index
    %16 = vector.load %arg6[%c0_11, %c0_12] : memref<1x128xf32, #tpu.memory_space<vmem>>, vector<1x128xf32>
    %c0_13 = arith.constant 0 : index
    %c0_14 = arith.constant 0 : index
    %17 = vector.load %arg7[%c0_13, %c0_14] : memref<1x128xf32, #tpu.memory_space<vmem>>, vector<1x128xf32>
    %cst_15 = arith.constant dense<0.000000e+00> : vector<8xf32>
    %18 = vector.multi_reduction <add>, %15, %cst_15 [1] : vector<8x128xf32> to vector<8xf32>
    %19 = vector.shape_cast %18 : vector<8xf32> to vector<8x1xf32>
    %cst_16 = arith.constant 1.280000e+02 : f32
    %20 = vector.broadcast %cst_16 : f32 to vector<8x1xf32>
    %21 = arith.divf %19, %20 : vector<8x1xf32>
    %22 = vector.broadcast %21 : vector<8x1xf32> to vector<8x128xf32>
    %23 = arith.subf %15, %22 : vector<8x128xf32>
    %24 = arith.mulf %23, %23 : vector<8x128xf32>
    %cst_17 = arith.constant dense<0.000000e+00> : vector<8xf32>
    %25 = vector.multi_reduction <add>, %24, %cst_17 [1] : vector<8x128xf32> to vector<8xf32>
    %26 = vector.shape_cast %25 : vector<8xf32> to vector<8x1xf32>
    %cst_18 = arith.constant 1.280000e+02 : f32
    %27 = vector.broadcast %cst_18 : f32 to vector<8x1xf32>
    %28 = arith.divf %26, %27 : vector<8x1xf32>
    %29 = vector.broadcast %21 : vector<8x1xf32> to vector<8x128xf32>
    %30 = arith.subf %15, %29 : vector<8x128xf32>
    %cst_19 = arith.constant 9.99999997E-7 : f32
    %31 = vector.broadcast %cst_19 : f32 to vector<8x1xf32>
    %32 = arith.addf %28, %31 : vector<8x1xf32>
    %33 = math.rsqrt %32 : vector<8x1xf32>
    %34 = vector.broadcast %33 : vector<8x1xf32> to vector<8x128xf32>
    %35 = arith.mulf %30, %34 : vector<8x128xf32>
    %36 = vector.broadcast %16 : vector<1x128xf32> to vector<8x128xf32>
    %37 = arith.mulf %35, %36 : vector<8x128xf32>
    %38 = vector.broadcast %17 : vector<1x128xf32> to vector<8x128xf32>
    %39 = arith.addf %37, %38 : vector<8x128xf32>
    %40 = arith.addf %0, %39 : vector<8x128xf32>
    %c0_20 = arith.constant 0 : index
    %c0_21 = arith.constant 0 : index
    %41 = vector.load %arg8[%c0_20, %c0_21] : memref<1x128xf32, #tpu.memory_space<vmem>>, vector<1x128xf32>
    %c0_22 = arith.constant 0 : index
    %c0_23 = arith.constant 0 : index
    %42 = vector.load %arg9[%c0_22, %c0_23] : memref<1x128xf32, #tpu.memory_space<vmem>>, vector<1x128xf32>
    %cst_24 = arith.constant dense<0.000000e+00> : vector<8xf32>
    %43 = vector.multi_reduction <add>, %40, %cst_24 [1] : vector<8x128xf32> to vector<8xf32>
    %44 = vector.shape_cast %43 : vector<8xf32> to vector<8x1xf32>
    %cst_25 = arith.constant 1.280000e+02 : f32
    %45 = vector.broadcast %cst_25 : f32 to vector<8x1xf32>
    %46 = arith.divf %44, %45 : vector<8x1xf32>
    %47 = vector.broadcast %46 : vector<8x1xf32> to vector<8x128xf32>
    %48 = arith.subf %40, %47 : vector<8x128xf32>
    %49 = arith.mulf %48, %48 : vector<8x128xf32>
    %cst_26 = arith.constant dense<0.000000e+00> : vector<8xf32>
    %50 = vector.multi_reduction <add>, %49, %cst_26 [1] : vector<8x128xf32> to vector<8xf32>
    %51 = vector.shape_cast %50 : vector<8xf32> to vector<8x1xf32>
    %cst_27 = arith.constant 1.280000e+02 : f32
    %52 = vector.broadcast %cst_27 : f32 to vector<8x1xf32>
    %53 = arith.divf %51, %52 : vector<8x1xf32>
    %54 = vector.broadcast %46 : vector<8x1xf32> to vector<8x128xf32>
    %55 = arith.subf %40, %54 : vector<8x128xf32>
    %cst_28 = arith.constant 9.99999974E-6 : f32
    %56 = vector.broadcast %cst_28 : f32 to vector<8x1xf32>
    %57 = arith.addf %53, %56 : vector<8x1xf32>
    %58 = math.rsqrt %57 : vector<8x1xf32>
    %59 = vector.broadcast %58 : vector<8x1xf32> to vector<8x128xf32>
    %60 = arith.mulf %55, %59 : vector<8x128xf32>
    %61 = vector.broadcast %41 : vector<1x128xf32> to vector<8x128xf32>
    %62 = arith.mulf %60, %61 : vector<8x128xf32>
    %63 = vector.broadcast %42 : vector<1x128xf32> to vector<8x128xf32>
    %64 = arith.addf %62, %63 : vector<8x128xf32>
    %c0_29 = arith.constant 0 : index
    %c0_30 = arith.constant 0 : index
    %65 = vector.load %arg10[%c0_29, %c0_30] : memref<8x128xf32, #tpu.memory_space<vmem>>, vector<8x128xf32>
    tpu.vector_store %arg10[%c0_29, %c0_30], %64 {strides = array<i32>} : memref<8x128xf32, #tpu.memory_space<vmem>>, vector<8x128xf32>,
    return
  }
  func.func @transform_0(%arg0: i32) -> (i32, i32) {
    %c0_i32 = arith.constant 0 : i32
    %c0_i32_0 = arith.constant 0 : i32
    return %arg0, %c0_i32 : i32, i32
  }
  func.func @transform_1(%arg0: i32) -> (i32, i32) {
    %c0_i32 = arith.constant 0 : i32
    %c0_i32_0 = arith.constant 0 : i32
    %c0_i32_1 = arith.constant 0 : i32
    return %c0_i32, %c0_i32_0 : i32, i32
  }
  func.func @transform_2(%arg0: i32) -> (i32, i32) {
    %c0_i32 = arith.constant 0 : i32
    %c0_i32_0 = arith.constant 0 : i32
    %c0_i32_1 = arith.constant 0 : i32
    return %c0_i32, %c0_i32_0 : i32, i32
  }
  func.func @transform_3(%arg0: i32) -> (i32, i32) {
    %c0_i32 = arith.constant 0 : i32
    %c0_i32_0 = arith.constant 0 : i32
    %c0_i32_1 = arith.constant 0 : i32
    return %c0_i32, %c0_i32_0 : i32, i32
  }
  func.func @transform_4(%arg0: i32) -> (i32, i32) {
    %c0_i32 = arith.constant 0 : i32
    %c0_i32_0 = arith.constant 0 : i32
    %c0_i32_1 = arith.constant 0 : i32
    return %c0_i32, %c0_i32_0 : i32, i32
  }
  func.func @transform_5(%arg0: i32) -> (i32, i32) {
    %c0_i32 = arith.constant 0 : i32
    %c0_i32_0 = arith.constant 0 : i32
    %c0_i32_1 = arith.constant 0 : i32
    return %c0_i32, %c0_i32_0 : i32, i32
  }
  func.func @transform_6(%arg0: i32) -> (i32, i32) {
    %c0_i32 = arith.constant 0 : i32
    %c0_i32_0 = arith.constant 0 : i32
    %c0_i32_1 = arith.constant 0 : i32
    return %c0_i32, %c0_i32_0 : i32, i32
  }
  func.func @transform_7(%arg0: i32) -> (i32, i32) {
    %c0_i32 = arith.constant 0 : i32
    %c0_i32_0 = arith.constant 0 : i32
    %c0_i32_1 = arith.constant 0 : i32
    return %c0_i32, %c0_i32_0 : i32, i32
  }
  func.func @transform_8(%arg0: i32) -> (i32, i32) {
    %c0_i32 = arith.constant 0 : i32
    %c0_i32_0 = arith.constant 0 : i32
    %c0_i32_1 = arith.constant 0 : i32
    return %c0_i32, %c0_i32_0 : i32, i32
  }
  func.func @transform_9(%arg0: i32) -> (i32, i32) {
    %c0_i32 = arith.constant 0 : i32
    %c0_i32_0 = arith.constant 0 : i32
    return %arg0, %c0_i32 : i32, i32
  }
}

module attributes {stable_mosaic.version = 11 : i64} {
  func.func @mha_self_kernel(%arg0: i32, %arg1: memref<1x8x128xf32, #tpu.memory_space<vmem>>, %arg2: memref<128x384xbf16, #tpu.memory_space<vmem>>, %arg3: memref<1x384xf32, #tpu.memory_space<vmem>>, %arg4: memref<128x128xbf16, #tpu.memory_space<vmem>>, %arg5: memref<1x128xf32, #tpu.memory_space<vmem>>, %arg6: memref<1x128xf32, #tpu.memory_space<vmem>>, %arg7: memref<1x128xf32, #tpu.memory_space<vmem>>, %arg8: memref<1x8x128xf32, #tpu.memory_space<vmem>>) attributes {dimension_semantics = [#tpu.dimension_semantics<parallel>], iteration_bounds = array<i64: 2>, scalar_prefetch = 0 : i64, scratch_operands = 0 : i64, tpu.core_type = #tpu.core_type<tc>, window_params = [{transform_indices = @transform_0, window_bounds = array<i64: 1, 8, 128>}, {pipeline_mode = #tpu.pipeline_mode<synchronous>, transform_indices = @transform_1, window_bounds = array<i64: 128, 384>}, {pipeline_mode = #tpu.pipeline_mode<synchronous>, transform_indices = @transform_2, window_bounds = array<i64: 1, 384>}, {pipeline_mode = #tpu.pipeline_mode<synchronous>, transform_indices = @transform_3, window_bounds = array<i64: 128, 128>}, {pipeline_mode = #tpu.pipeline_mode<synchronous>, transform_indices = @transform_4, window_bounds = array<i64: 1, 128>}, {pipeline_mode = #tpu.pipeline_mode<synchronous>, transform_indices = @transform_5, window_bounds = array<i64: 1, 128>}, {pipeline_mode = #tpu.pipeline_mode<synchronous>, transform_indices = @transform_6, window_bounds = array<i64: 1, 128>}, {transform_indices = @transform_7, window_bounds = array<i64: 1, 8, 128>}]} {
    %c0 = arith.constant 0 : index
    %c0_0 = arith.constant 0 : index
    %c0_1 = arith.constant 0 : index
    %0 = vector.load %arg1[%c0, %c0_0, %c0_1] : memref<1x8x128xf32, #tpu.memory_space<vmem>>, vector<1x8x128xf32>
    %1 = vector.shape_cast %0 : vector<1x8x128xf32> to vector<8x128xf32>
    %2 = arith.truncf %1 : vector<8x128xf32> to vector<8x128xbf16>
    %c0_2 = arith.constant 0 : index
    %c0_3 = arith.constant 0 : index
    %3 = vector.load %arg2[%c0_2, %c0_3] : memref<128x384xbf16, #tpu.memory_space<vmem>>, vector<128x384xbf16>
    %cst = arith.constant dense<0.000000e+00> : vector<8x384xf32>
    %4 = tpu.matmul %2, %3, %cst {dimension_numbers = #tpu.dot_dimension_numbers<[1], [0], [0], [1], [0, 0, 1, 1], [], []>} : vector<8x128xbf16>, vector<128x384xbf16>, vector<8x384xf32> -> vector<8x384xf32>
    %c0_4 = arith.constant 0 : index
    %c0_5 = arith.constant 0 : index
    %5 = vector.load %arg3[%c0_4, %c0_5] : memref<1x384xf32, #tpu.memory_space<vmem>>, vector<1x384xf32>
    %6 = vector.broadcast %5 : vector<1x384xf32> to vector<8x384xf32>
    %7 = arith.addf %4, %6 : vector<8x384xf32>
    %cst_6 = arith.constant 0.000000e+00 : f32
    %8 = vector.broadcast %cst_6 : f32 to vector<8x384xf32>
    %9 = arith.maximumf %7, %8 : vector<8x384xf32>
    %10 = vector.extract_strided_slice %9 {offsets = [0, 0], sizes = [8, 128], strides = [1, 1]} : vector<8x384xf32> to vector<8x128xf32>
    %11 = vector.extract_strided_slice %9 {offsets = [0, 128], sizes = [8, 128], strides = [1, 1]} : vector<8x384xf32> to vector<8x128xf32>
    %12 = vector.extract_strided_slice %9 {offsets = [0, 256], sizes = [8, 128], strides = [1, 1]} : vector<8x384xf32> to vector<8x128xf32>
    %13 = vector.extract_strided_slice %10 {offsets = [0, 0], sizes = [8, 32], strides = [1, 1]} : vector<8x128xf32> to vector<8x32xf32>
    %14 = vector.extract_strided_slice %11 {offsets = [0, 0], sizes = [8, 32], strides = [1, 1]} : vector<8x128xf32> to vector<8x32xf32>
    %15 = vector.extract_strided_slice %12 {offsets = [0, 0], sizes = [8, 32], strides = [1, 1]} : vector<8x128xf32> to vector<8x32xf32>
    %16 = arith.truncf %13 : vector<8x32xf32> to vector<8x32xbf16>
    %17 = arith.truncf %14 : vector<8x32xf32> to vector<8x32xbf16>
    %cst_7 = arith.constant dense<0.000000e+00> : vector<8x8xf32>
    %18 = tpu.matmul %16, %17, %cst_7 {dimension_numbers = #tpu.dot_dimension_numbers<[1], [1], [0], [0], [0, 0, 1, 0], [], []>} : vector<8x32xbf16>, vector<8x32xbf16>, vector<8x8xf32> -> vector<8x8xf32>
    %cst_8 = arith.constant 0.176776692 : f32
    %19 = vector.broadcast %cst_8 : f32 to vector<8x8xf32>
    %20 = arith.mulf %18, %19 : vector<8x8xf32>
    %cst_9 = arith.constant dense<0.000000e+00> : vector<8xf32>
    %21 = vector.multi_reduction <add>, %14, %cst_9 [1] : vector<8x32xf32> to vector<8xf32>
    %22 = vector.shape_cast %21 : vector<8xf32> to vector<8x1xf32>
    %23 = tpu.transpose %22, [1, 0] : vector<8x1xf32> -> vector<1x8xf32>
    %cst_10 = arith.constant 0.000000e+00 : f32
    %24 = vector.broadcast %cst_10 : f32 to vector<1x8xf32>
    %25 = arith.cmpf oeq, %23, %24 : vector<1x8xf32>
    %cst_11 = arith.constant -4.2949673E+9 : f32
    %26 = vector.shape_cast %25 : vector<1x8xi1> to vector<1x8xi1>
    %27 = vector.broadcast %26 : vector<1x8xi1> to vector<8x8xi1>
    %28 = vector.broadcast %cst_11 : f32 to vector<8x8xf32>
    %29 = arith.select %27, %28, %20 : vector<8x8xi1>, vector<8x8xf32>
    %cst_12 = arith.constant dense<0xFF800000> : vector<8xf32>
    %30 = vector.multi_reduction <maximumf>, %29, %cst_12 [1] : vector<8x8xf32> to vector<8xf32>
    %31 = vector.shape_cast %30 : vector<8xf32> to vector<8x1xf32>
    %32 = vector.broadcast %31 : vector<8x1xf32> to vector<8x8xf32>
    %33 = arith.subf %29, %32 : vector<8x8xf32>
    %34 = math.exp %33 : vector<8x8xf32>
    %cst_13 = arith.constant dense<0.000000e+00> : vector<8xf32>
    %35 = vector.multi_reduction <add>, %34, %cst_13 [1] : vector<8x8xf32> to vector<8xf32>
    %36 = vector.shape_cast %35 : vector<8xf32> to vector<8x1xf32>
    %37 = vector.broadcast %36 : vector<8x1xf32> to vector<8x8xf32>
    %38 = arith.divf %34, %37 : vector<8x8xf32>
    %39 = arith.truncf %38 : vector<8x8xf32> to vector<8x8xbf16>
    %40 = arith.truncf %15 : vector<8x32xf32> to vector<8x32xbf16>
    %cst_14 = arith.constant dense<0.000000e+00> : vector<8x32xf32>
    %41 = tpu.matmul %39, %40, %cst_14 {dimension_numbers = #tpu.dot_dimension_numbers<[1], [0], [0], [1], [0, 0, 1, 1], [], []>} : vector<8x8xbf16>, vector<8x32xbf16>, vector<8x32xf32> -> vector<8x32xf32>
    %42 = vector.extract_strided_slice %10 {offsets = [0, 32], sizes = [8, 32], strides = [1, 1]} : vector<8x128xf32> to vector<8x32xf32>
    %43 = vector.extract_strided_slice %11 {offsets = [0, 32], sizes = [8, 32], strides = [1, 1]} : vector<8x128xf32> to vector<8x32xf32>
    %44 = vector.extract_strided_slice %12 {offsets = [0, 32], sizes = [8, 32], strides = [1, 1]} : vector<8x128xf32> to vector<8x32xf32>
    %45 = arith.truncf %42 : vector<8x32xf32> to vector<8x32xbf16>
    %46 = arith.truncf %43 : vector<8x32xf32> to vector<8x32xbf16>
    %cst_15 = arith.constant dense<0.000000e+00> : vector<8x8xf32>
    %47 = tpu.matmul %45, %46, %cst_15 {dimension_numbers = #tpu.dot_dimension_numbers<[1], [1], [0], [0], [0, 0, 1, 0], [], []>} : vector<8x32xbf16>, vector<8x32xbf16>, vector<8x8xf32> -> vector<8x8xf32>
    %cst_16 = arith.constant 0.176776692 : f32
    %48 = vector.broadcast %cst_16 : f32 to vector<8x8xf32>
    %49 = arith.mulf %47, %48 : vector<8x8xf32>
    %cst_17 = arith.constant dense<0.000000e+00> : vector<8xf32>
    %50 = vector.multi_reduction <add>, %43, %cst_17 [1] : vector<8x32xf32> to vector<8xf32>
    %51 = vector.shape_cast %50 : vector<8xf32> to vector<8x1xf32>
    %52 = tpu.transpose %51, [1, 0] : vector<8x1xf32> -> vector<1x8xf32>
    %cst_18 = arith.constant 0.000000e+00 : f32
    %53 = vector.broadcast %cst_18 : f32 to vector<1x8xf32>
    %54 = arith.cmpf oeq, %52, %53 : vector<1x8xf32>
    %cst_19 = arith.constant -4.2949673E+9 : f32
    %55 = vector.shape_cast %54 : vector<1x8xi1> to vector<1x8xi1>
    %56 = vector.broadcast %55 : vector<1x8xi1> to vector<8x8xi1>
    %57 = vector.broadcast %cst_19 : f32 to vector<8x8xf32>
    %58 = arith.select %56, %57, %49 : vector<8x8xi1>, vector<8x8xf32>
    %cst_20 = arith.constant dense<0xFF800000> : vector<8xf32>
    %59 = vector.multi_reduction <maximumf>, %58, %cst_20 [1] : vector<8x8xf32> to vector<8xf32>
    %60 = vector.shape_cast %59 : vector<8xf32> to vector<8x1xf32>
    %61 = vector.broadcast %60 : vector<8x1xf32> to vector<8x8xf32>
    %62 = arith.subf %58, %61 : vector<8x8xf32>
    %63 = math.exp %62 : vector<8x8xf32>
    %cst_21 = arith.constant dense<0.000000e+00> : vector<8xf32>
    %64 = vector.multi_reduction <add>, %63, %cst_21 [1] : vector<8x8xf32> to vector<8xf32>
    %65 = vector.shape_cast %64 : vector<8xf32> to vector<8x1xf32>
    %66 = vector.broadcast %65 : vector<8x1xf32> to vector<8x8xf32>
    %67 = arith.divf %63, %66 : vector<8x8xf32>
    %68 = arith.truncf %67 : vector<8x8xf32> to vector<8x8xbf16>
    %69 = arith.truncf %44 : vector<8x32xf32> to vector<8x32xbf16>
    %cst_22 = arith.constant dense<0.000000e+00> : vector<8x32xf32>
    %70 = tpu.matmul %68, %69, %cst_22 {dimension_numbers = #tpu.dot_dimension_numbers<[1], [0], [0], [1], [0, 0, 1, 1], [], []>} : vector<8x8xbf16>, vector<8x32xbf16>, vector<8x32xf32> -> vector<8x32xf32>
    %71 = vector.extract_strided_slice %10 {offsets = [0, 64], sizes = [8, 32], strides = [1, 1]} : vector<8x128xf32> to vector<8x32xf32>
    %72 = vector.extract_strided_slice %11 {offsets = [0, 64], sizes = [8, 32], strides = [1, 1]} : vector<8x128xf32> to vector<8x32xf32>
    %73 = vector.extract_strided_slice %12 {offsets = [0, 64], sizes = [8, 32], strides = [1, 1]} : vector<8x128xf32> to vector<8x32xf32>
    %74 = arith.truncf %71 : vector<8x32xf32> to vector<8x32xbf16>
    %75 = arith.truncf %72 : vector<8x32xf32> to vector<8x32xbf16>
    %cst_23 = arith.constant dense<0.000000e+00> : vector<8x8xf32>
    %76 = tpu.matmul %74, %75, %cst_23 {dimension_numbers = #tpu.dot_dimension_numbers<[1], [1], [0], [0], [0, 0, 1, 0], [], []>} : vector<8x32xbf16>, vector<8x32xbf16>, vector<8x8xf32> -> vector<8x8xf32>
    %cst_24 = arith.constant 0.176776692 : f32
    %77 = vector.broadcast %cst_24 : f32 to vector<8x8xf32>
    %78 = arith.mulf %76, %77 : vector<8x8xf32>
    %cst_25 = arith.constant dense<0.000000e+00> : vector<8xf32>
    %79 = vector.multi_reduction <add>, %72, %cst_25 [1] : vector<8x32xf32> to vector<8xf32>
    %80 = vector.shape_cast %79 : vector<8xf32> to vector<8x1xf32>
    %81 = tpu.transpose %80, [1, 0] : vector<8x1xf32> -> vector<1x8xf32>
    %cst_26 = arith.constant 0.000000e+00 : f32
    %82 = vector.broadcast %cst_26 : f32 to vector<1x8xf32>
    %83 = arith.cmpf oeq, %81, %82 : vector<1x8xf32>
    %cst_27 = arith.constant -4.2949673E+9 : f32
    %84 = vector.shape_cast %83 : vector<1x8xi1> to vector<1x8xi1>
    %85 = vector.broadcast %84 : vector<1x8xi1> to vector<8x8xi1>
    %86 = vector.broadcast %cst_27 : f32 to vector<8x8xf32>
    %87 = arith.select %85, %86, %78 : vector<8x8xi1>, vector<8x8xf32>
    %cst_28 = arith.constant dense<0xFF800000> : vector<8xf32>
    %88 = vector.multi_reduction <maximumf>, %87, %cst_28 [1] : vector<8x8xf32> to vector<8xf32>
    %89 = vector.shape_cast %88 : vector<8xf32> to vector<8x1xf32>
    %90 = vector.broadcast %89 : vector<8x1xf32> to vector<8x8xf32>
    %91 = arith.subf %87, %90 : vector<8x8xf32>
    %92 = math.exp %91 : vector<8x8xf32>
    %cst_29 = arith.constant dense<0.000000e+00> : vector<8xf32>
    %93 = vector.multi_reduction <add>, %92, %cst_29 [1] : vector<8x8xf32> to vector<8xf32>
    %94 = vector.shape_cast %93 : vector<8xf32> to vector<8x1xf32>
    %95 = vector.broadcast %94 : vector<8x1xf32> to vector<8x8xf32>
    %96 = arith.divf %92, %95 : vector<8x8xf32>
    %97 = arith.truncf %96 : vector<8x8xf32> to vector<8x8xbf16>
    %98 = arith.truncf %73 : vector<8x32xf32> to vector<8x32xbf16>
    %cst_30 = arith.constant dense<0.000000e+00> : vector<8x32xf32>
    %99 = tpu.matmul %97, %98, %cst_30 {dimension_numbers = #tpu.dot_dimension_numbers<[1], [0], [0], [1], [0, 0, 1, 1], [], []>} : vector<8x8xbf16>, vector<8x32xbf16>, vector<8x32xf32> -> vector<8x32xf32>
    %100 = vector.extract_strided_slice %10 {offsets = [0, 96], sizes = [8, 32], strides = [1, 1]} : vector<8x128xf32> to vector<8x32xf32>
    %101 = vector.extract_strided_slice %11 {offsets = [0, 96], sizes = [8, 32], strides = [1, 1]} : vector<8x128xf32> to vector<8x32xf32>
    %102 = vector.extract_strided_slice %12 {offsets = [0, 96], sizes = [8, 32], strides = [1, 1]} : vector<8x128xf32> to vector<8x32xf32>
    %103 = arith.truncf %100 : vector<8x32xf32> to vector<8x32xbf16>
    %104 = arith.truncf %101 : vector<8x32xf32> to vector<8x32xbf16>
    %cst_31 = arith.constant dense<0.000000e+00> : vector<8x8xf32>
    %105 = tpu.matmul %103, %104, %cst_31 {dimension_numbers = #tpu.dot_dimension_numbers<[1], [1], [0], [0], [0, 0, 1, 0], [], []>} : vector<8x32xbf16>, vector<8x32xbf16>, vector<8x8xf32> -> vector<8x8xf32>
    %cst_32 = arith.constant 0.176776692 : f32
    %106 = vector.broadcast %cst_32 : f32 to vector<8x8xf32>
    %107 = arith.mulf %105, %106 : vector<8x8xf32>
    %cst_33 = arith.constant dense<0.000000e+00> : vector<8xf32>
    %108 = vector.multi_reduction <add>, %101, %cst_33 [1] : vector<8x32xf32> to vector<8xf32>
    %109 = vector.shape_cast %108 : vector<8xf32> to vector<8x1xf32>
    %110 = tpu.transpose %109, [1, 0] : vector<8x1xf32> -> vector<1x8xf32>
    %cst_34 = arith.constant 0.000000e+00 : f32
    %111 = vector.broadcast %cst_34 : f32 to vector<1x8xf32>
    %112 = arith.cmpf oeq, %110, %111 : vector<1x8xf32>
    %cst_35 = arith.constant -4.2949673E+9 : f32
    %113 = vector.shape_cast %112 : vector<1x8xi1> to vector<1x8xi1>
    %114 = vector.broadcast %113 : vector<1x8xi1> to vector<8x8xi1>
    %115 = vector.broadcast %cst_35 : f32 to vector<8x8xf32>
    %116 = arith.select %114, %115, %107 : vector<8x8xi1>, vector<8x8xf32>
    %cst_36 = arith.constant dense<0xFF800000> : vector<8xf32>
    %117 = vector.multi_reduction <maximumf>, %116, %cst_36 [1] : vector<8x8xf32> to vector<8xf32>
    %118 = vector.shape_cast %117 : vector<8xf32> to vector<8x1xf32>
    %119 = vector.broadcast %118 : vector<8x1xf32> to vector<8x8xf32>
    %120 = arith.subf %116, %119 : vector<8x8xf32>
    %121 = math.exp %120 : vector<8x8xf32>
    %cst_37 = arith.constant dense<0.000000e+00> : vector<8xf32>
    %122 = vector.multi_reduction <add>, %121, %cst_37 [1] : vector<8x8xf32> to vector<8xf32>
    %123 = vector.shape_cast %122 : vector<8xf32> to vector<8x1xf32>
    %124 = vector.broadcast %123 : vector<8x1xf32> to vector<8x8xf32>
    %125 = arith.divf %121, %124 : vector<8x8xf32>
    %126 = arith.truncf %125 : vector<8x8xf32> to vector<8x8xbf16>
    %127 = arith.truncf %102 : vector<8x32xf32> to vector<8x32xbf16>
    %cst_38 = arith.constant dense<0.000000e+00> : vector<8x32xf32>
    %128 = tpu.matmul %126, %127, %cst_38 {dimension_numbers = #tpu.dot_dimension_numbers<[1], [0], [0], [1], [0, 0, 1, 1], [], []>} : vector<8x8xbf16>, vector<8x32xbf16>, vector<8x32xf32> -> vector<8x32xf32>
    %129 = tpu.concatenate %41, %70, %99, %128 in 1 : vector<8x32xf32>, vector<8x32xf32>, vector<8x32xf32>, vector<8x32xf32> -> vector<8x128xf32>
    %130 = arith.truncf %129 : vector<8x128xf32> to vector<8x128xbf16>
    %c0_39 = arith.constant 0 : index
    %c0_40 = arith.constant 0 : index
    %131 = vector.load %arg4[%c0_39, %c0_40] : memref<128x128xbf16, #tpu.memory_space<vmem>>, vector<128x128xbf16>
    %cst_41 = arith.constant dense<0.000000e+00> : vector<8x128xf32>
    %132 = tpu.matmul %130, %131, %cst_41 {dimension_numbers = #tpu.dot_dimension_numbers<[1], [0], [0], [1], [0, 0, 1, 1], [], []>} : vector<8x128xbf16>, vector<128x128xbf16>, vector<8x128xf32> -> vector<8x128xf32>
    %c0_42 = arith.constant 0 : index
    %c0_43 = arith.constant 0 : index
    %133 = vector.load %arg5[%c0_42, %c0_43] : memref<1x128xf32, #tpu.memory_space<vmem>>, vector<1x128xf32>
    %134 = vector.broadcast %133 : vector<1x128xf32> to vector<8x128xf32>
    %135 = arith.addf %132, %134 : vector<8x128xf32>
    %136 = arith.addf %1, %135 : vector<8x128xf32>
    %c0_44 = arith.constant 0 : index
    %c0_45 = arith.constant 0 : index
    %137 = vector.load %arg6[%c0_44, %c0_45] : memref<1x128xf32, #tpu.memory_space<vmem>>, vector<1x128xf32>
    %c0_46 = arith.constant 0 : index
    %c0_47 = arith.constant 0 : index
    %138 = vector.load %arg7[%c0_46, %c0_47] : memref<1x128xf32, #tpu.memory_space<vmem>>, vector<1x128xf32>
    %cst_48 = arith.constant dense<0.000000e+00> : vector<8xf32>
    %139 = vector.multi_reduction <add>, %136, %cst_48 [1] : vector<8x128xf32> to vector<8xf32>
    %140 = vector.shape_cast %139 : vector<8xf32> to vector<8x1xf32>
    %cst_49 = arith.constant 1.280000e+02 : f32
    %141 = vector.broadcast %cst_49 : f32 to vector<8x1xf32>
    %142 = arith.divf %140, %141 : vector<8x1xf32>
    %143 = vector.broadcast %142 : vector<8x1xf32> to vector<8x128xf32>
    %144 = arith.subf %136, %143 : vector<8x128xf32>
    %145 = arith.mulf %144, %144 : vector<8x128xf32>
    %cst_50 = arith.constant dense<0.000000e+00> : vector<8xf32>
    %146 = vector.multi_reduction <add>, %145, %cst_50 [1] : vector<8x128xf32> to vector<8xf32>
    %147 = vector.shape_cast %146 : vector<8xf32> to vector<8x1xf32>
    %cst_51 = arith.constant 1.280000e+02 : f32
    %148 = vector.broadcast %cst_51 : f32 to vector<8x1xf32>
    %149 = arith.divf %147, %148 : vector<8x1xf32>
    %150 = vector.broadcast %142 : vector<8x1xf32> to vector<8x128xf32>
    %151 = arith.subf %136, %150 : vector<8x128xf32>
    %cst_52 = arith.constant 9.99999974E-6 : f32
    %152 = vector.broadcast %cst_52 : f32 to vector<8x1xf32>
    %153 = arith.addf %149, %152 : vector<8x1xf32>
    %154 = math.rsqrt %153 : vector<8x1xf32>
    %155 = vector.broadcast %154 : vector<8x1xf32> to vector<8x128xf32>
    %156 = arith.mulf %151, %155 : vector<8x128xf32>
    %157 = vector.broadcast %137 : vector<1x128xf32> to vector<8x128xf32>
    %158 = arith.mulf %156, %157 : vector<8x128xf32>
    %159 = vector.broadcast %138 : vector<1x128xf32> to vector<8x128xf32>
    %160 = arith.addf %158, %159 : vector<8x128xf32>
    %c0_53 = arith.constant 0 : index
    %c0_54 = arith.constant 0 : index
    %c0_55 = arith.constant 0 : index
    %161 = vector.load %arg8[%c0_53, %c0_54, %c0_55] : memref<1x8x128xf32, #tpu.memory_space<vmem>>, vector<1x8x128xf32>
    %162 = vector.shape_cast %161 : vector<1x8x128xf32> to vector<8x128xf32>
    %163 = vector.shape_cast %160 : vector<8x128xf32> to vector<1x8x128xf32>
    tpu.vector_store %arg8[%c0_53, %c0_54, %c0_55], %163 {strides = array<i32>} : memref<1x8x128xf32, #tpu.memory_space<vmem>>, vector<1x8x128xf32>,
    return
  }
  func.func @transform_0(%arg0: i32) -> (i32, i32, i32) {
    %c0_i32 = arith.constant 0 : i32
    %c0_i32_0 = arith.constant 0 : i32
    %c0_i32_1 = arith.constant 0 : i32
    return %arg0, %c0_i32, %c0_i32_0 : i32, i32, i32
  }
  func.func @transform_1(%arg0: i32) -> (i32, i32) {
    %c0_i32 = arith.constant 0 : i32
    %c0_i32_0 = arith.constant 0 : i32
    %c0_i32_1 = arith.constant 0 : i32
    return %c0_i32, %c0_i32_0 : i32, i32
  }
  func.func @transform_2(%arg0: i32) -> (i32, i32) {
    %c0_i32 = arith.constant 0 : i32
    %c0_i32_0 = arith.constant 0 : i32
    %c0_i32_1 = arith.constant 0 : i32
    return %c0_i32, %c0_i32_0 : i32, i32
  }
  func.func @transform_3(%arg0: i32) -> (i32, i32) {
    %c0_i32 = arith.constant 0 : i32
    %c0_i32_0 = arith.constant 0 : i32
    %c0_i32_1 = arith.constant 0 : i32
    return %c0_i32, %c0_i32_0 : i32, i32
  }
  func.func @transform_4(%arg0: i32) -> (i32, i32) {
    %c0_i32 = arith.constant 0 : i32
    %c0_i32_0 = arith.constant 0 : i32
    %c0_i32_1 = arith.constant 0 : i32
    return %c0_i32, %c0_i32_0 : i32, i32
  }
  func.func @transform_5(%arg0: i32) -> (i32, i32) {
    %c0_i32 = arith.constant 0 : i32
    %c0_i32_0 = arith.constant 0 : i32
    %c0_i32_1 = arith.constant 0 : i32
    return %c0_i32, %c0_i32_0 : i32, i32
  }
  func.func @transform_6(%arg0: i32) -> (i32, i32) {
    %c0_i32 = arith.constant 0 : i32
    %c0_i32_0 = arith.constant 0 : i32
    %c0_i32_1 = arith.constant 0 : i32
    return %c0_i32, %c0_i32_0 : i32, i32
  }
  func.func @transform_7(%arg0: i32) -> (i32, i32, i32) {
    %c0_i32 = arith.constant 0 : i32
    %c0_i32_0 = arith.constant 0 : i32
    %c0_i32_1 = arith.constant 0 : i32
    return %arg0, %c0_i32, %c0_i32_0 : i32, i32, i32
  }
}

module attributes {stable_mosaic.version = 11 : i64} {
  func.func @mha_self_kernel(%arg0: i32, %arg1: memref<1x8x128xf32, #tpu.memory_space<vmem>>, %arg2: memref<128x384xbf16, #tpu.memory_space<vmem>>, %arg3: memref<1x384xf32, #tpu.memory_space<vmem>>, %arg4: memref<128x128xbf16, #tpu.memory_space<vmem>>, %arg5: memref<1x128xf32, #tpu.memory_space<vmem>>, %arg6: memref<1x128xf32, #tpu.memory_space<vmem>>, %arg7: memref<1x128xf32, #tpu.memory_space<vmem>>, %arg8: memref<1x8x128xf32, #tpu.memory_space<vmem>>) attributes {dimension_semantics = [#tpu.dimension_semantics<parallel>], iteration_bounds = array<i64: 2>, scalar_prefetch = 0 : i64, scratch_operands = 0 : i64, tpu.core_type = #tpu.core_type<tc>, window_params = [{transform_indices = @transform_0, window_bounds = array<i64: 1, 8, 128>}, {pipeline_mode = #tpu.pipeline_mode<synchronous>, transform_indices = @transform_1, window_bounds = array<i64: 128, 384>}, {pipeline_mode = #tpu.pipeline_mode<synchronous>, transform_indices = @transform_2, window_bounds = array<i64: 1, 384>}, {pipeline_mode = #tpu.pipeline_mode<synchronous>, transform_indices = @transform_3, window_bounds = array<i64: 128, 128>}, {pipeline_mode = #tpu.pipeline_mode<synchronous>, transform_indices = @transform_4, window_bounds = array<i64: 1, 128>}, {pipeline_mode = #tpu.pipeline_mode<synchronous>, transform_indices = @transform_5, window_bounds = array<i64: 1, 128>}, {pipeline_mode = #tpu.pipeline_mode<synchronous>, transform_indices = @transform_6, window_bounds = array<i64: 1, 128>}, {transform_indices = @transform_7, window_bounds = array<i64: 1, 8, 128>}]} {
    %c0 = arith.constant 0 : index
    %c0_0 = arith.constant 0 : index
    %c0_1 = arith.constant 0 : index
    %0 = vector.load %arg1[%c0, %c0_0, %c0_1] : memref<1x8x128xf32, #tpu.memory_space<vmem>>, vector<1x8x128xf32>
    %1 = vector.shape_cast %0 : vector<1x8x128xf32> to vector<8x128xf32>
    %2 = arith.truncf %1 : vector<8x128xf32> to vector<8x128xbf16>
    %c0_2 = arith.constant 0 : index
    %c0_3 = arith.constant 0 : index
    %3 = vector.load %arg2[%c0_2, %c0_3] : memref<128x384xbf16, #tpu.memory_space<vmem>>, vector<128x384xbf16>
    %cst = arith.constant dense<0.000000e+00> : vector<8x384xf32>
    %4 = tpu.matmul %2, %3, %cst {dimension_numbers = #tpu.dot_dimension_numbers<[1], [0], [0], [1], [0, 0, 1, 1], [], []>} : vector<8x128xbf16>, vector<128x384xbf16>, vector<8x384xf32> -> vector<8x384xf32>
    %c0_4 = arith.constant 0 : index
    %c0_5 = arith.constant 0 : index
    %5 = vector.load %arg3[%c0_4, %c0_5] : memref<1x384xf32, #tpu.memory_space<vmem>>, vector<1x384xf32>
    %6 = vector.broadcast %5 : vector<1x384xf32> to vector<8x384xf32>
    %7 = arith.addf %4, %6 : vector<8x384xf32>
    %cst_6 = arith.constant 0.000000e+00 : f32
    %8 = vector.broadcast %cst_6 : f32 to vector<8x384xf32>
    %9 = arith.maximumf %7, %8 : vector<8x384xf32>
    %10 = vector.extract_strided_slice %9 {offsets = [0, 0], sizes = [8, 128], strides = [1, 1]} : vector<8x384xf32> to vector<8x128xf32>
    %11 = vector.extract_strided_slice %9 {offsets = [0, 128], sizes = [8, 128], strides = [1, 1]} : vector<8x384xf32> to vector<8x128xf32>
    %12 = vector.extract_strided_slice %9 {offsets = [0, 256], sizes = [8, 128], strides = [1, 1]} : vector<8x384xf32> to vector<8x128xf32>
    %13 = tpu.iota {dimensions = array<i32: 0>} : vector<8x8xi32>
    %14 = tpu.iota {dimensions = array<i32: 1>} : vector<8x8xi32>
    %15 = arith.cmpi sgt, %14, %13 : vector<8x8xi32>
    %16 = vector.extract_strided_slice %10 {offsets = [0, 0], sizes = [8, 32], strides = [1, 1]} : vector<8x128xf32> to vector<8x32xf32>
    %17 = vector.extract_strided_slice %11 {offsets = [0, 0], sizes = [8, 32], strides = [1, 1]} : vector<8x128xf32> to vector<8x32xf32>
    %18 = vector.extract_strided_slice %12 {offsets = [0, 0], sizes = [8, 32], strides = [1, 1]} : vector<8x128xf32> to vector<8x32xf32>
    %19 = arith.truncf %16 : vector<8x32xf32> to vector<8x32xbf16>
    %20 = arith.truncf %17 : vector<8x32xf32> to vector<8x32xbf16>
    %cst_7 = arith.constant dense<0.000000e+00> : vector<8x8xf32>
    %21 = tpu.matmul %19, %20, %cst_7 {dimension_numbers = #tpu.dot_dimension_numbers<[1], [1], [0], [0], [0, 0, 1, 0], [], []>} : vector<8x32xbf16>, vector<8x32xbf16>, vector<8x8xf32> -> vector<8x8xf32>
    %cst_8 = arith.constant 0.176776692 : f32
    %22 = vector.broadcast %cst_8 : f32 to vector<8x8xf32>
    %23 = arith.mulf %21, %22 : vector<8x8xf32>
    %cst_9 = arith.constant dense<0.000000e+00> : vector<8xf32>
    %24 = vector.multi_reduction <add>, %17, %cst_9 [1] : vector<8x32xf32> to vector<8xf32>
    %25 = vector.shape_cast %24 : vector<8xf32> to vector<8x1xf32>
    %26 = tpu.transpose %25, [1, 0] : vector<8x1xf32> -> vector<1x8xf32>
    %cst_10 = arith.constant 0.000000e+00 : f32
    %27 = vector.broadcast %cst_10 : f32 to vector<1x8xf32>
    %28 = arith.cmpf oeq, %26, %27 : vector<1x8xf32>
    %cst_11 = arith.constant -4.2949673E+9 : f32
    %29 = vector.shape_cast %28 : vector<1x8xi1> to vector<1x8xi1>
    %30 = vector.broadcast %29 : vector<1x8xi1> to vector<8x8xi1>
    %31 = vector.broadcast %cst_11 : f32 to vector<8x8xf32>
    %32 = arith.select %30, %31, %23 : vector<8x8xi1>, vector<8x8xf32>
    %cst_12 = arith.constant -4.2949673E+9 : f32
    %33 = vector.broadcast %cst_12 : f32 to vector<8x8xf32>
    %34 = arith.select %15, %33, %32 : vector<8x8xi1>, vector<8x8xf32>
    %cst_13 = arith.constant dense<0xFF800000> : vector<8xf32>
    %35 = vector.multi_reduction <maximumf>, %34, %cst_13 [1] : vector<8x8xf32> to vector<8xf32>
    %36 = vector.shape_cast %35 : vector<8xf32> to vector<8x1xf32>
    %37 = vector.broadcast %36 : vector<8x1xf32> to vector<8x8xf32>
    %38 = arith.subf %34, %37 : vector<8x8xf32>
    %39 = math.exp %38 : vector<8x8xf32>
    %cst_14 = arith.constant dense<0.000000e+00> : vector<8xf32>
    %40 = vector.multi_reduction <add>, %39, %cst_14 [1] : vector<8x8xf32> to vector<8xf32>
    %41 = vector.shape_cast %40 : vector<8xf32> to vector<8x1xf32>
    %42 = vector.broadcast %41 : vector<8x1xf32> to vector<8x8xf32>
    %43 = arith.divf %39, %42 : vector<8x8xf32>
    %44 = arith.truncf %43 : vector<8x8xf32> to vector<8x8xbf16>
    %45 = arith.truncf %18 : vector<8x32xf32> to vector<8x32xbf16>
    %cst_15 = arith.constant dense<0.000000e+00> : vector<8x32xf32>
    %46 = tpu.matmul %44, %45, %cst_15 {dimension_numbers = #tpu.dot_dimension_numbers<[1], [0], [0], [1], [0, 0, 1, 1], [], []>} : vector<8x8xbf16>, vector<8x32xbf16>, vector<8x32xf32> -> vector<8x32xf32>
    %47 = vector.extract_strided_slice %10 {offsets = [0, 32], sizes = [8, 32], strides = [1, 1]} : vector<8x128xf32> to vector<8x32xf32>
    %48 = vector.extract_strided_slice %11 {offsets = [0, 32], sizes = [8, 32], strides = [1, 1]} : vector<8x128xf32> to vector<8x32xf32>
    %49 = vector.extract_strided_slice %12 {offsets = [0, 32], sizes = [8, 32], strides = [1, 1]} : vector<8x128xf32> to vector<8x32xf32>
    %50 = arith.truncf %47 : vector<8x32xf32> to vector<8x32xbf16>
    %51 = arith.truncf %48 : vector<8x32xf32> to vector<8x32xbf16>
    %cst_16 = arith.constant dense<0.000000e+00> : vector<8x8xf32>
    %52 = tpu.matmul %50, %51, %cst_16 {dimension_numbers = #tpu.dot_dimension_numbers<[1], [1], [0], [0], [0, 0, 1, 0], [], []>} : vector<8x32xbf16>, vector<8x32xbf16>, vector<8x8xf32> -> vector<8x8xf32>
    %cst_17 = arith.constant 0.176776692 : f32
    %53 = vector.broadcast %cst_17 : f32 to vector<8x8xf32>
    %54 = arith.mulf %52, %53 : vector<8x8xf32>
    %cst_18 = arith.constant dense<0.000000e+00> : vector<8xf32>
    %55 = vector.multi_reduction <add>, %48, %cst_18 [1] : vector<8x32xf32> to vector<8xf32>
    %56 = vector.shape_cast %55 : vector<8xf32> to vector<8x1xf32>
    %57 = tpu.transpose %56, [1, 0] : vector<8x1xf32> -> vector<1x8xf32>
    %cst_19 = arith.constant 0.000000e+00 : f32
    %58 = vector.broadcast %cst_19 : f32 to vector<1x8xf32>
    %59 = arith.cmpf oeq, %57, %58 : vector<1x8xf32>
    %cst_20 = arith.constant -4.2949673E+9 : f32
    %60 = vector.shape_cast %59 : vector<1x8xi1> to vector<1x8xi1>
    %61 = vector.broadcast %60 : vector<1x8xi1> to vector<8x8xi1>
    %62 = vector.broadcast %cst_20 : f32 to vector<8x8xf32>
    %63 = arith.select %61, %62, %54 : vector<8x8xi1>, vector<8x8xf32>
    %cst_21 = arith.constant -4.2949673E+9 : f32
    %64 = vector.broadcast %cst_21 : f32 to vector<8x8xf32>
    %65 = arith.select %15, %64, %63 : vector<8x8xi1>, vector<8x8xf32>
    %cst_22 = arith.constant dense<0xFF800000> : vector<8xf32>
    %66 = vector.multi_reduction <maximumf>, %65, %cst_22 [1] : vector<8x8xf32> to vector<8xf32>
    %67 = vector.shape_cast %66 : vector<8xf32> to vector<8x1xf32>
    %68 = vector.broadcast %67 : vector<8x1xf32> to vector<8x8xf32>
    %69 = arith.subf %65, %68 : vector<8x8xf32>
    %70 = math.exp %69 : vector<8x8xf32>
    %cst_23 = arith.constant dense<0.000000e+00> : vector<8xf32>
    %71 = vector.multi_reduction <add>, %70, %cst_23 [1] : vector<8x8xf32> to vector<8xf32>
    %72 = vector.shape_cast %71 : vector<8xf32> to vector<8x1xf32>
    %73 = vector.broadcast %72 : vector<8x1xf32> to vector<8x8xf32>
    %74 = arith.divf %70, %73 : vector<8x8xf32>
    %75 = arith.truncf %74 : vector<8x8xf32> to vector<8x8xbf16>
    %76 = arith.truncf %49 : vector<8x32xf32> to vector<8x32xbf16>
    %cst_24 = arith.constant dense<0.000000e+00> : vector<8x32xf32>
    %77 = tpu.matmul %75, %76, %cst_24 {dimension_numbers = #tpu.dot_dimension_numbers<[1], [0], [0], [1], [0, 0, 1, 1], [], []>} : vector<8x8xbf16>, vector<8x32xbf16>, vector<8x32xf32> -> vector<8x32xf32>
    %78 = vector.extract_strided_slice %10 {offsets = [0, 64], sizes = [8, 32], strides = [1, 1]} : vector<8x128xf32> to vector<8x32xf32>
    %79 = vector.extract_strided_slice %11 {offsets = [0, 64], sizes = [8, 32], strides = [1, 1]} : vector<8x128xf32> to vector<8x32xf32>
    %80 = vector.extract_strided_slice %12 {offsets = [0, 64], sizes = [8, 32], strides = [1, 1]} : vector<8x128xf32> to vector<8x32xf32>
    %81 = arith.truncf %78 : vector<8x32xf32> to vector<8x32xbf16>
    %82 = arith.truncf %79 : vector<8x32xf32> to vector<8x32xbf16>
    %cst_25 = arith.constant dense<0.000000e+00> : vector<8x8xf32>
    %83 = tpu.matmul %81, %82, %cst_25 {dimension_numbers = #tpu.dot_dimension_numbers<[1], [1], [0], [0], [0, 0, 1, 0], [], []>} : vector<8x32xbf16>, vector<8x32xbf16>, vector<8x8xf32> -> vector<8x8xf32>
    %cst_26 = arith.constant 0.176776692 : f32
    %84 = vector.broadcast %cst_26 : f32 to vector<8x8xf32>
    %85 = arith.mulf %83, %84 : vector<8x8xf32>
    %cst_27 = arith.constant dense<0.000000e+00> : vector<8xf32>
    %86 = vector.multi_reduction <add>, %79, %cst_27 [1] : vector<8x32xf32> to vector<8xf32>
    %87 = vector.shape_cast %86 : vector<8xf32> to vector<8x1xf32>
    %88 = tpu.transpose %87, [1, 0] : vector<8x1xf32> -> vector<1x8xf32>
    %cst_28 = arith.constant 0.000000e+00 : f32
    %89 = vector.broadcast %cst_28 : f32 to vector<1x8xf32>
    %90 = arith.cmpf oeq, %88, %89 : vector<1x8xf32>
    %cst_29 = arith.constant -4.2949673E+9 : f32
    %91 = vector.shape_cast %90 : vector<1x8xi1> to vector<1x8xi1>
    %92 = vector.broadcast %91 : vector<1x8xi1> to vector<8x8xi1>
    %93 = vector.broadcast %cst_29 : f32 to vector<8x8xf32>
    %94 = arith.select %92, %93, %85 : vector<8x8xi1>, vector<8x8xf32>
    %cst_30 = arith.constant -4.2949673E+9 : f32
    %95 = vector.broadcast %cst_30 : f32 to vector<8x8xf32>
    %96 = arith.select %15, %95, %94 : vector<8x8xi1>, vector<8x8xf32>
    %cst_31 = arith.constant dense<0xFF800000> : vector<8xf32>
    %97 = vector.multi_reduction <maximumf>, %96, %cst_31 [1] : vector<8x8xf32> to vector<8xf32>
    %98 = vector.shape_cast %97 : vector<8xf32> to vector<8x1xf32>
    %99 = vector.broadcast %98 : vector<8x1xf32> to vector<8x8xf32>
    %100 = arith.subf %96, %99 : vector<8x8xf32>
    %101 = math.exp %100 : vector<8x8xf32>
    %cst_32 = arith.constant dense<0.000000e+00> : vector<8xf32>
    %102 = vector.multi_reduction <add>, %101, %cst_32 [1] : vector<8x8xf32> to vector<8xf32>
    %103 = vector.shape_cast %102 : vector<8xf32> to vector<8x1xf32>
    %104 = vector.broadcast %103 : vector<8x1xf32> to vector<8x8xf32>
    %105 = arith.divf %101, %104 : vector<8x8xf32>
    %106 = arith.truncf %105 : vector<8x8xf32> to vector<8x8xbf16>
    %107 = arith.truncf %80 : vector<8x32xf32> to vector<8x32xbf16>
    %cst_33 = arith.constant dense<0.000000e+00> : vector<8x32xf32>
    %108 = tpu.matmul %106, %107, %cst_33 {dimension_numbers = #tpu.dot_dimension_numbers<[1], [0], [0], [1], [0, 0, 1, 1], [], []>} : vector<8x8xbf16>, vector<8x32xbf16>, vector<8x32xf32> -> vector<8x32xf32>
    %109 = vector.extract_strided_slice %10 {offsets = [0, 96], sizes = [8, 32], strides = [1, 1]} : vector<8x128xf32> to vector<8x32xf32>
    %110 = vector.extract_strided_slice %11 {offsets = [0, 96], sizes = [8, 32], strides = [1, 1]} : vector<8x128xf32> to vector<8x32xf32>
    %111 = vector.extract_strided_slice %12 {offsets = [0, 96], sizes = [8, 32], strides = [1, 1]} : vector<8x128xf32> to vector<8x32xf32>
    %112 = arith.truncf %109 : vector<8x32xf32> to vector<8x32xbf16>
    %113 = arith.truncf %110 : vector<8x32xf32> to vector<8x32xbf16>
    %cst_34 = arith.constant dense<0.000000e+00> : vector<8x8xf32>
    %114 = tpu.matmul %112, %113, %cst_34 {dimension_numbers = #tpu.dot_dimension_numbers<[1], [1], [0], [0], [0, 0, 1, 0], [], []>} : vector<8x32xbf16>, vector<8x32xbf16>, vector<8x8xf32> -> vector<8x8xf32>
    %cst_35 = arith.constant 0.176776692 : f32
    %115 = vector.broadcast %cst_35 : f32 to vector<8x8xf32>
    %116 = arith.mulf %114, %115 : vector<8x8xf32>
    %cst_36 = arith.constant dense<0.000000e+00> : vector<8xf32>
    %117 = vector.multi_reduction <add>, %110, %cst_36 [1] : vector<8x32xf32> to vector<8xf32>
    %118 = vector.shape_cast %117 : vector<8xf32> to vector<8x1xf32>
    %119 = tpu.transpose %118, [1, 0] : vector<8x1xf32> -> vector<1x8xf32>
    %cst_37 = arith.constant 0.000000e+00 : f32
    %120 = vector.broadcast %cst_37 : f32 to vector<1x8xf32>
    %121 = arith.cmpf oeq, %119, %120 : vector<1x8xf32>
    %cst_38 = arith.constant -4.2949673E+9 : f32
    %122 = vector.shape_cast %121 : vector<1x8xi1> to vector<1x8xi1>
    %123 = vector.broadcast %122 : vector<1x8xi1> to vector<8x8xi1>
    %124 = vector.broadcast %cst_38 : f32 to vector<8x8xf32>
    %125 = arith.select %123, %124, %116 : vector<8x8xi1>, vector<8x8xf32>
    %cst_39 = arith.constant -4.2949673E+9 : f32
    %126 = vector.broadcast %cst_39 : f32 to vector<8x8xf32>
    %127 = arith.select %15, %126, %125 : vector<8x8xi1>, vector<8x8xf32>
    %cst_40 = arith.constant dense<0xFF800000> : vector<8xf32>
    %128 = vector.multi_reduction <maximumf>, %127, %cst_40 [1] : vector<8x8xf32> to vector<8xf32>
    %129 = vector.shape_cast %128 : vector<8xf32> to vector<8x1xf32>
    %130 = vector.broadcast %129 : vector<8x1xf32> to vector<8x8xf32>
    %131 = arith.subf %127, %130 : vector<8x8xf32>
    %132 = math.exp %131 : vector<8x8xf32>
    %cst_41 = arith.constant dense<0.000000e+00> : vector<8xf32>
    %133 = vector.multi_reduction <add>, %132, %cst_41 [1] : vector<8x8xf32> to vector<8xf32>
    %134 = vector.shape_cast %133 : vector<8xf32> to vector<8x1xf32>
    %135 = vector.broadcast %134 : vector<8x1xf32> to vector<8x8xf32>
    %136 = arith.divf %132, %135 : vector<8x8xf32>
    %137 = arith.truncf %136 : vector<8x8xf32> to vector<8x8xbf16>
    %138 = arith.truncf %111 : vector<8x32xf32> to vector<8x32xbf16>
    %cst_42 = arith.constant dense<0.000000e+00> : vector<8x32xf32>
    %139 = tpu.matmul %137, %138, %cst_42 {dimension_numbers = #tpu.dot_dimension_numbers<[1], [0], [0], [1], [0, 0, 1, 1], [], []>} : vector<8x8xbf16>, vector<8x32xbf16>, vector<8x32xf32> -> vector<8x32xf32>
    %140 = tpu.concatenate %46, %77, %108, %139 in 1 : vector<8x32xf32>, vector<8x32xf32>, vector<8x32xf32>, vector<8x32xf32> -> vector<8x128xf32>
    %141 = arith.truncf %140 : vector<8x128xf32> to vector<8x128xbf16>
    %c0_43 = arith.constant 0 : index
    %c0_44 = arith.constant 0 : index
    %142 = vector.load %arg4[%c0_43, %c0_44] : memref<128x128xbf16, #tpu.memory_space<vmem>>, vector<128x128xbf16>
    %cst_45 = arith.constant dense<0.000000e+00> : vector<8x128xf32>
    %143 = tpu.matmul %141, %142, %cst_45 {dimension_numbers = #tpu.dot_dimension_numbers<[1], [0], [0], [1], [0, 0, 1, 1], [], []>} : vector<8x128xbf16>, vector<128x128xbf16>, vector<8x128xf32> -> vector<8x128xf32>
    %c0_46 = arith.constant 0 : index
    %c0_47 = arith.constant 0 : index
    %144 = vector.load %arg5[%c0_46, %c0_47] : memref<1x128xf32, #tpu.memory_space<vmem>>, vector<1x128xf32>
    %145 = vector.broadcast %144 : vector<1x128xf32> to vector<8x128xf32>
    %146 = arith.addf %143, %145 : vector<8x128xf32>
    %147 = arith.addf %1, %146 : vector<8x128xf32>
    %c0_48 = arith.constant 0 : index
    %c0_49 = arith.constant 0 : index
    %148 = vector.load %arg6[%c0_48, %c0_49] : memref<1x128xf32, #tpu.memory_space<vmem>>, vector<1x128xf32>
    %c0_50 = arith.constant 0 : index
    %c0_51 = arith.constant 0 : index
    %149 = vector.load %arg7[%c0_50, %c0_51] : memref<1x128xf32, #tpu.memory_space<vmem>>, vector<1x128xf32>
    %cst_52 = arith.constant dense<0.000000e+00> : vector<8xf32>
    %150 = vector.multi_reduction <add>, %147, %cst_52 [1] : vector<8x128xf32> to vector<8xf32>
    %151 = vector.shape_cast %150 : vector<8xf32> to vector<8x1xf32>
    %cst_53 = arith.constant 1.280000e+02 : f32
    %152 = vector.broadcast %cst_53 : f32 to vector<8x1xf32>
    %153 = arith.divf %151, %152 : vector<8x1xf32>
    %154 = vector.broadcast %153 : vector<8x1xf32> to vector<8x128xf32>
    %155 = arith.subf %147, %154 : vector<8x128xf32>
    %156 = arith.mulf %155, %155 : vector<8x128xf32>
    %cst_54 = arith.constant dense<0.000000e+00> : vector<8xf32>
    %157 = vector.multi_reduction <add>, %156, %cst_54 [1] : vector<8x128xf32> to vector<8xf32>
    %158 = vector.shape_cast %157 : vector<8xf32> to vector<8x1xf32>
    %cst_55 = arith.constant 1.280000e+02 : f32
    %159 = vector.broadcast %cst_55 : f32 to vector<8x1xf32>
    %160 = arith.divf %158, %159 : vector<8x1xf32>
    %161 = vector.broadcast %153 : vector<8x1xf32> to vector<8x128xf32>
    %162 = arith.subf %147, %161 : vector<8x128xf32>
    %cst_56 = arith.constant 9.99999974E-6 : f32
    %163 = vector.broadcast %cst_56 : f32 to vector<8x1xf32>
    %164 = arith.addf %160, %163 : vector<8x1xf32>
    %165 = math.rsqrt %164 : vector<8x1xf32>
    %166 = vector.broadcast %165 : vector<8x1xf32> to vector<8x128xf32>
    %167 = arith.mulf %162, %166 : vector<8x128xf32>
    %168 = vector.broadcast %148 : vector<1x128xf32> to vector<8x128xf32>
    %169 = arith.mulf %167, %168 : vector<8x128xf32>
    %170 = vector.broadcast %149 : vector<1x128xf32> to vector<8x128xf32>
    %171 = arith.addf %169, %170 : vector<8x128xf32>
    %c0_57 = arith.constant 0 : index
    %c0_58 = arith.constant 0 : index
    %c0_59 = arith.constant 0 : index
    %172 = vector.load %arg8[%c0_57, %c0_58, %c0_59] : memref<1x8x128xf32, #tpu.memory_space<vmem>>, vector<1x8x128xf32>
    %173 = vector.shape_cast %172 : vector<1x8x128xf32> to vector<8x128xf32>
    %174 = vector.shape_cast %171 : vector<8x128xf32> to vector<1x8x128xf32>
    tpu.vector_store %arg8[%c0_57, %c0_58, %c0_59], %174 {strides = array<i32>} : memref<1x8x128xf32, #tpu.memory_space<vmem>>, vector<1x8x128xf32>,
    return
  }
  func.func @transform_0(%arg0: i32) -> (i32, i32, i32) {
    %c0_i32 = arith.constant 0 : i32
    %c0_i32_0 = arith.constant 0 : i32
    %c0_i32_1 = arith.constant 0 : i32
    return %arg0, %c0_i32, %c0_i32_0 : i32, i32, i32
  }
  func.func @transform_1(%arg0: i32) -> (i32, i32) {
    %c0_i32 = arith.constant 0 : i32
    %c0_i32_0 = arith.constant 0 : i32
    %c0_i32_1 = arith.constant 0 : i32
    return %c0_i32, %c0_i32_0 : i32, i32
  }
  func.func @transform_2(%arg0: i32) -> (i32, i32) {
    %c0_i32 = arith.constant 0 : i32
    %c0_i32_0 = arith.constant 0 : i32
    %c0_i32_1 = arith.constant 0 : i32
    return %c0_i32, %c0_i32_0 : i32, i32
  }
  func.func @transform_3(%arg0: i32) -> (i32, i32) {
    %c0_i32 = arith.constant 0 : i32
    %c0_i32_0 = arith.constant 0 : i32
    %c0_i32_1 = arith.constant 0 : i32
    return %c0_i32, %c0_i32_0 : i32, i32
  }
  func.func @transform_4(%arg0: i32) -> (i32, i32) {
    %c0_i32 = arith.constant 0 : i32
    %c0_i32_0 = arith.constant 0 : i32
    %c0_i32_1 = arith.constant 0 : i32
    return %c0_i32, %c0_i32_0 : i32, i32
  }
  func.func @transform_5(%arg0: i32) -> (i32, i32) {
    %c0_i32 = arith.constant 0 : i32
    %c0_i32_0 = arith.constant 0 : i32
    %c0_i32_1 = arith.constant 0 : i32
    return %c0_i32, %c0_i32_0 : i32, i32
  }
  func.func @transform_6(%arg0: i32) -> (i32, i32) {
    %c0_i32 = arith.constant 0 : i32
    %c0_i32_0 = arith.constant 0 : i32
    %c0_i32_1 = arith.constant 0 : i32
    return %c0_i32, %c0_i32_0 : i32, i32
  }
  func.func @transform_7(%arg0: i32) -> (i32, i32, i32) {
    %c0_i32 = arith.constant 0 : i32
    %c0_i32_0 = arith.constant 0 : i32
    %c0_i32_1 = arith.constant 0 : i32
    return %arg0, %c0_i32, %c0_i32_0 : i32, i32, i32
  }
}

module attributes {stable_mosaic.version = 11 : i64} {
  func.func @mha_cross_kernel(%arg0: i32, %arg1: memref<1x8x128xf32, #tpu.memory_space<vmem>>, %arg2: memref<1x8x128xf32, #tpu.memory_space<vmem>>, %arg3: memref<128x128xbf16, #tpu.memory_space<vmem>>, %arg4: memref<1x128xf32, #tpu.memory_space<vmem>>, %arg5: memref<128x256xbf16, #tpu.memory_space<vmem>>, %arg6: memref<1x256xf32, #tpu.memory_space<vmem>>, %arg7: memref<128x128xbf16, #tpu.memory_space<vmem>>, %arg8: memref<1x128xf32, #tpu.memory_space<vmem>>, %arg9: memref<1x128xf32, #tpu.memory_space<vmem>>, %arg10: memref<1x128xf32, #tpu.memory_space<vmem>>, %arg11: memref<1x8x128xf32, #tpu.memory_space<vmem>>) attributes {dimension_semantics = [#tpu.dimension_semantics<parallel>], iteration_bounds = array<i64: 2>, scalar_prefetch = 0 : i64, scratch_operands = 0 : i64, tpu.core_type = #tpu.core_type<tc>, window_params = [{transform_indices = @transform_0, window_bounds = array<i64: 1, 8, 128>}, {transform_indices = @transform_1, window_bounds = array<i64: 1, 8, 128>}, {pipeline_mode = #tpu.pipeline_mode<synchronous>, transform_indices = @transform_2, window_bounds = array<i64: 128, 128>}, {pipeline_mode = #tpu.pipeline_mode<synchronous>, transform_indices = @transform_3, window_bounds = array<i64: 1, 128>}, {pipeline_mode = #tpu.pipeline_mode<synchronous>, transform_indices = @transform_4, window_bounds = array<i64: 128, 256>}, {pipeline_mode = #tpu.pipeline_mode<synchronous>, transform_indices = @transform_5, window_bounds = array<i64: 1, 256>}, {pipeline_mode = #tpu.pipeline_mode<synchronous>, transform_indices = @transform_6, window_bounds = array<i64: 128, 128>}, {pipeline_mode = #tpu.pipeline_mode<synchronous>, transform_indices = @transform_7, window_bounds = array<i64: 1, 128>}, {pipeline_mode = #tpu.pipeline_mode<synchronous>, transform_indices = @transform_8, window_bounds = array<i64: 1, 128>}, {pipeline_mode = #tpu.pipeline_mode<synchronous>, transform_indices = @transform_9, window_bounds = array<i64: 1, 128>}, {transform_indices = @transform_10, window_bounds = array<i64: 1, 8, 128>}]} {
    %c0 = arith.constant 0 : index
    %c0_0 = arith.constant 0 : index
    %c0_1 = arith.constant 0 : index
    %0 = vector.load %arg1[%c0, %c0_0, %c0_1] : memref<1x8x128xf32, #tpu.memory_space<vmem>>, vector<1x8x128xf32>
    %1 = vector.shape_cast %0 : vector<1x8x128xf32> to vector<8x128xf32>
    %c0_2 = arith.constant 0 : index
    %c0_3 = arith.constant 0 : index
    %c0_4 = arith.constant 0 : index
    %2 = vector.load %arg2[%c0_2, %c0_3, %c0_4] : memref<1x8x128xf32, #tpu.memory_space<vmem>>, vector<1x8x128xf32>
    %3 = vector.shape_cast %2 : vector<1x8x128xf32> to vector<8x128xf32>
    %4 = arith.truncf %1 : vector<8x128xf32> to vector<8x128xbf16>
    %c0_5 = arith.constant 0 : index
    %c0_6 = arith.constant 0 : index
    %5 = vector.load %arg3[%c0_5, %c0_6] : memref<128x128xbf16, #tpu.memory_space<vmem>>, vector<128x128xbf16>
    %cst = arith.constant dense<0.000000e+00> : vector<8x128xf32>
    %6 = tpu.matmul %4, %5, %cst {dimension_numbers = #tpu.dot_dimension_numbers<[1], [0], [0], [1], [0, 0, 1, 1], [], []>} : vector<8x128xbf16>, vector<128x128xbf16>, vector<8x128xf32> -> vector<8x128xf32>
    %c0_7 = arith.constant 0 : index
    %c0_8 = arith.constant 0 : index
    %7 = vector.load %arg4[%c0_7, %c0_8] : memref<1x128xf32, #tpu.memory_space<vmem>>, vector<1x128xf32>
    %8 = vector.broadcast %7 : vector<1x128xf32> to vector<8x128xf32>
    %9 = arith.addf %6, %8 : vector<8x128xf32>
    %cst_9 = arith.constant 0.000000e+00 : f32
    %10 = vector.broadcast %cst_9 : f32 to vector<8x128xf32>
    %11 = arith.maximumf %9, %10 : vector<8x128xf32>
    %12 = arith.truncf %3 : vector<8x128xf32> to vector<8x128xbf16>
    %c0_10 = arith.constant 0 : index
    %c0_11 = arith.constant 0 : index
    %13 = vector.load %arg5[%c0_10, %c0_11] : memref<128x256xbf16, #tpu.memory_space<vmem>>, vector<128x256xbf16>
    %cst_12 = arith.constant dense<0.000000e+00> : vector<8x256xf32>
    %14 = tpu.matmul %12, %13, %cst_12 {dimension_numbers = #tpu.dot_dimension_numbers<[1], [0], [0], [1], [0, 0, 1, 1], [], []>} : vector<8x128xbf16>, vector<128x256xbf16>, vector<8x256xf32> -> vector<8x256xf32>
    %c0_13 = arith.constant 0 : index
    %c0_14 = arith.constant 0 : index
    %15 = vector.load %arg6[%c0_13, %c0_14] : memref<1x256xf32, #tpu.memory_space<vmem>>, vector<1x256xf32>
    %16 = vector.broadcast %15 : vector<1x256xf32> to vector<8x256xf32>
    %17 = arith.addf %14, %16 : vector<8x256xf32>
    %cst_15 = arith.constant 0.000000e+00 : f32
    %18 = vector.broadcast %cst_15 : f32 to vector<8x256xf32>
    %19 = arith.maximumf %17, %18 : vector<8x256xf32>
    %20 = vector.extract_strided_slice %19 {offsets = [0, 0], sizes = [8, 128], strides = [1, 1]} : vector<8x256xf32> to vector<8x128xf32>
    %21 = vector.extract_strided_slice %19 {offsets = [0, 128], sizes = [8, 128], strides = [1, 1]} : vector<8x256xf32> to vector<8x128xf32>
    %22 = vector.extract_strided_slice %11 {offsets = [0, 0], sizes = [8, 32], strides = [1, 1]} : vector<8x128xf32> to vector<8x32xf32>
    %23 = vector.extract_strided_slice %20 {offsets = [0, 0], sizes = [8, 32], strides = [1, 1]} : vector<8x128xf32> to vector<8x32xf32>
    %24 = vector.extract_strided_slice %21 {offsets = [0, 0], sizes = [8, 32], strides = [1, 1]} : vector<8x128xf32> to vector<8x32xf32>
    %25 = arith.truncf %22 : vector<8x32xf32> to vector<8x32xbf16>
    %26 = arith.truncf %23 : vector<8x32xf32> to vector<8x32xbf16>
    %cst_16 = arith.constant dense<0.000000e+00> : vector<8x8xf32>
    %27 = tpu.matmul %25, %26, %cst_16 {dimension_numbers = #tpu.dot_dimension_numbers<[1], [1], [0], [0], [0, 0, 1, 0], [], []>} : vector<8x32xbf16>, vector<8x32xbf16>, vector<8x8xf32> -> vector<8x8xf32>
    %cst_17 = arith.constant 0.176776692 : f32
    %28 = vector.broadcast %cst_17 : f32 to vector<8x8xf32>
    %29 = arith.mulf %27, %28 : vector<8x8xf32>
    %cst_18 = arith.constant dense<0.000000e+00> : vector<8xf32>
    %30 = vector.multi_reduction <add>, %23, %cst_18 [1] : vector<8x32xf32> to vector<8xf32>
    %31 = vector.shape_cast %30 : vector<8xf32> to vector<8x1xf32>
    %32 = tpu.transpose %31, [1, 0] : vector<8x1xf32> -> vector<1x8xf32>
    %cst_19 = arith.constant 0.000000e+00 : f32
    %33 = vector.broadcast %cst_19 : f32 to vector<1x8xf32>
    %34 = arith.cmpf oeq, %32, %33 : vector<1x8xf32>
    %cst_20 = arith.constant -4.2949673E+9 : f32
    %35 = vector.shape_cast %34 : vector<1x8xi1> to vector<1x8xi1>
    %36 = vector.broadcast %35 : vector<1x8xi1> to vector<8x8xi1>
    %37 = vector.broadcast %cst_20 : f32 to vector<8x8xf32>
    %38 = arith.select %36, %37, %29 : vector<8x8xi1>, vector<8x8xf32>
    %cst_21 = arith.constant dense<0xFF800000> : vector<8xf32>
    %39 = vector.multi_reduction <maximumf>, %38, %cst_21 [1] : vector<8x8xf32> to vector<8xf32>
    %40 = vector.shape_cast %39 : vector<8xf32> to vector<8x1xf32>
    %41 = vector.broadcast %40 : vector<8x1xf32> to vector<8x8xf32>
    %42 = arith.subf %38, %41 : vector<8x8xf32>
    %43 = math.exp %42 : vector<8x8xf32>
    %cst_22 = arith.constant dense<0.000000e+00> : vector<8xf32>
    %44 = vector.multi_reduction <add>, %43, %cst_22 [1] : vector<8x8xf32> to vector<8xf32>
    %45 = vector.shape_cast %44 : vector<8xf32> to vector<8x1xf32>
    %46 = vector.broadcast %45 : vector<8x1xf32> to vector<8x8xf32>
    %47 = arith.divf %43, %46 : vector<8x8xf32>
    %48 = arith.truncf %47 : vector<8x8xf32> to vector<8x8xbf16>
    %49 = arith.truncf %24 : vector<8x32xf32> to vector<8x32xbf16>
    %cst_23 = arith.constant dense<0.000000e+00> : vector<8x32xf32>
    %50 = tpu.matmul %48, %49, %cst_23 {dimension_numbers = #tpu.dot_dimension_numbers<[1], [0], [0], [1], [0, 0, 1, 1], [], []>} : vector<8x8xbf16>, vector<8x32xbf16>, vector<8x32xf32> -> vector<8x32xf32>
    %51 = vector.extract_strided_slice %11 {offsets = [0, 32], sizes = [8, 32], strides = [1, 1]} : vector<8x128xf32> to vector<8x32xf32>
    %52 = vector.extract_strided_slice %20 {offsets = [0, 32], sizes = [8, 32], strides = [1, 1]} : vector<8x128xf32> to vector<8x32xf32>
    %53 = vector.extract_strided_slice %21 {offsets = [0, 32], sizes = [8, 32], strides = [1, 1]} : vector<8x128xf32> to vector<8x32xf32>
    %54 = arith.truncf %51 : vector<8x32xf32> to vector<8x32xbf16>
    %55 = arith.truncf %52 : vector<8x32xf32> to vector<8x32xbf16>
    %cst_24 = arith.constant dense<0.000000e+00> : vector<8x8xf32>
    %56 = tpu.matmul %54, %55, %cst_24 {dimension_numbers = #tpu.dot_dimension_numbers<[1], [1], [0], [0], [0, 0, 1, 0], [], []>} : vector<8x32xbf16>, vector<8x32xbf16>, vector<8x8xf32> -> vector<8x8xf32>
    %cst_25 = arith.constant 0.176776692 : f32
    %57 = vector.broadcast %cst_25 : f32 to vector<8x8xf32>
    %58 = arith.mulf %56, %57 : vector<8x8xf32>
    %cst_26 = arith.constant dense<0.000000e+00> : vector<8xf32>
    %59 = vector.multi_reduction <add>, %52, %cst_26 [1] : vector<8x32xf32> to vector<8xf32>
    %60 = vector.shape_cast %59 : vector<8xf32> to vector<8x1xf32>
    %61 = tpu.transpose %60, [1, 0] : vector<8x1xf32> -> vector<1x8xf32>
    %cst_27 = arith.constant 0.000000e+00 : f32
    %62 = vector.broadcast %cst_27 : f32 to vector<1x8xf32>
    %63 = arith.cmpf oeq, %61, %62 : vector<1x8xf32>
    %cst_28 = arith.constant -4.2949673E+9 : f32
    %64 = vector.shape_cast %63 : vector<1x8xi1> to vector<1x8xi1>
    %65 = vector.broadcast %64 : vector<1x8xi1> to vector<8x8xi1>
    %66 = vector.broadcast %cst_28 : f32 to vector<8x8xf32>
    %67 = arith.select %65, %66, %58 : vector<8x8xi1>, vector<8x8xf32>
    %cst_29 = arith.constant dense<0xFF800000> : vector<8xf32>
    %68 = vector.multi_reduction <maximumf>, %67, %cst_29 [1] : vector<8x8xf32> to vector<8xf32>
    %69 = vector.shape_cast %68 : vector<8xf32> to vector<8x1xf32>
    %70 = vector.broadcast %69 : vector<8x1xf32> to vector<8x8xf32>
    %71 = arith.subf %67, %70 : vector<8x8xf32>
    %72 = math.exp %71 : vector<8x8xf32>
    %cst_30 = arith.constant dense<0.000000e+00> : vector<8xf32>
    %73 = vector.multi_reduction <add>, %72, %cst_30 [1] : vector<8x8xf32> to vector<8xf32>
    %74 = vector.shape_cast %73 : vector<8xf32> to vector<8x1xf32>
    %75 = vector.broadcast %74 : vector<8x1xf32> to vector<8x8xf32>
    %76 = arith.divf %72, %75 : vector<8x8xf32>
    %77 = arith.truncf %76 : vector<8x8xf32> to vector<8x8xbf16>
    %78 = arith.truncf %53 : vector<8x32xf32> to vector<8x32xbf16>
    %cst_31 = arith.constant dense<0.000000e+00> : vector<8x32xf32>
    %79 = tpu.matmul %77, %78, %cst_31 {dimension_numbers = #tpu.dot_dimension_numbers<[1], [0], [0], [1], [0, 0, 1, 1], [], []>} : vector<8x8xbf16>, vector<8x32xbf16>, vector<8x32xf32> -> vector<8x32xf32>
    %80 = vector.extract_strided_slice %11 {offsets = [0, 64], sizes = [8, 32], strides = [1, 1]} : vector<8x128xf32> to vector<8x32xf32>
    %81 = vector.extract_strided_slice %20 {offsets = [0, 64], sizes = [8, 32], strides = [1, 1]} : vector<8x128xf32> to vector<8x32xf32>
    %82 = vector.extract_strided_slice %21 {offsets = [0, 64], sizes = [8, 32], strides = [1, 1]} : vector<8x128xf32> to vector<8x32xf32>
    %83 = arith.truncf %80 : vector<8x32xf32> to vector<8x32xbf16>
    %84 = arith.truncf %81 : vector<8x32xf32> to vector<8x32xbf16>
    %cst_32 = arith.constant dense<0.000000e+00> : vector<8x8xf32>
    %85 = tpu.matmul %83, %84, %cst_32 {dimension_numbers = #tpu.dot_dimension_numbers<[1], [1], [0], [0], [0, 0, 1, 0], [], []>} : vector<8x32xbf16>, vector<8x32xbf16>, vector<8x8xf32> -> vector<8x8xf32>
    %cst_33 = arith.constant 0.176776692 : f32
    %86 = vector.broadcast %cst_33 : f32 to vector<8x8xf32>
    %87 = arith.mulf %85, %86 : vector<8x8xf32>
    %cst_34 = arith.constant dense<0.000000e+00> : vector<8xf32>
    %88 = vector.multi_reduction <add>, %81, %cst_34 [1] : vector<8x32xf32> to vector<8xf32>
    %89 = vector.shape_cast %88 : vector<8xf32> to vector<8x1xf32>
    %90 = tpu.transpose %89, [1, 0] : vector<8x1xf32> -> vector<1x8xf32>
    %cst_35 = arith.constant 0.000000e+00 : f32
    %91 = vector.broadcast %cst_35 : f32 to vector<1x8xf32>
    %92 = arith.cmpf oeq, %90, %91 : vector<1x8xf32>
    %cst_36 = arith.constant -4.2949673E+9 : f32
    %93 = vector.shape_cast %92 : vector<1x8xi1> to vector<1x8xi1>
    %94 = vector.broadcast %93 : vector<1x8xi1> to vector<8x8xi1>
    %95 = vector.broadcast %cst_36 : f32 to vector<8x8xf32>
    %96 = arith.select %94, %95, %87 : vector<8x8xi1>, vector<8x8xf32>
    %cst_37 = arith.constant dense<0xFF800000> : vector<8xf32>
    %97 = vector.multi_reduction <maximumf>, %96, %cst_37 [1] : vector<8x8xf32> to vector<8xf32>
    %98 = vector.shape_cast %97 : vector<8xf32> to vector<8x1xf32>
    %99 = vector.broadcast %98 : vector<8x1xf32> to vector<8x8xf32>
    %100 = arith.subf %96, %99 : vector<8x8xf32>
    %101 = math.exp %100 : vector<8x8xf32>
    %cst_38 = arith.constant dense<0.000000e+00> : vector<8xf32>
    %102 = vector.multi_reduction <add>, %101, %cst_38 [1] : vector<8x8xf32> to vector<8xf32>
    %103 = vector.shape_cast %102 : vector<8xf32> to vector<8x1xf32>
    %104 = vector.broadcast %103 : vector<8x1xf32> to vector<8x8xf32>
    %105 = arith.divf %101, %104 : vector<8x8xf32>
    %106 = arith.truncf %105 : vector<8x8xf32> to vector<8x8xbf16>
    %107 = arith.truncf %82 : vector<8x32xf32> to vector<8x32xbf16>
    %cst_39 = arith.constant dense<0.000000e+00> : vector<8x32xf32>
    %108 = tpu.matmul %106, %107, %cst_39 {dimension_numbers = #tpu.dot_dimension_numbers<[1], [0], [0], [1], [0, 0, 1, 1], [], []>} : vector<8x8xbf16>, vector<8x32xbf16>, vector<8x32xf32> -> vector<8x32xf32>
    %109 = vector.extract_strided_slice %11 {offsets = [0, 96], sizes = [8, 32], strides = [1, 1]} : vector<8x128xf32> to vector<8x32xf32>
    %110 = vector.extract_strided_slice %20 {offsets = [0, 96], sizes = [8, 32], strides = [1, 1]} : vector<8x128xf32> to vector<8x32xf32>
    %111 = vector.extract_strided_slice %21 {offsets = [0, 96], sizes = [8, 32], strides = [1, 1]} : vector<8x128xf32> to vector<8x32xf32>
    %112 = arith.truncf %109 : vector<8x32xf32> to vector<8x32xbf16>
    %113 = arith.truncf %110 : vector<8x32xf32> to vector<8x32xbf16>
    %cst_40 = arith.constant dense<0.000000e+00> : vector<8x8xf32>
    %114 = tpu.matmul %112, %113, %cst_40 {dimension_numbers = #tpu.dot_dimension_numbers<[1], [1], [0], [0], [0, 0, 1, 0], [], []>} : vector<8x32xbf16>, vector<8x32xbf16>, vector<8x8xf32> -> vector<8x8xf32>
    %cst_41 = arith.constant 0.176776692 : f32
    %115 = vector.broadcast %cst_41 : f32 to vector<8x8xf32>
    %116 = arith.mulf %114, %115 : vector<8x8xf32>
    %cst_42 = arith.constant dense<0.000000e+00> : vector<8xf32>
    %117 = vector.multi_reduction <add>, %110, %cst_42 [1] : vector<8x32xf32> to vector<8xf32>
    %118 = vector.shape_cast %117 : vector<8xf32> to vector<8x1xf32>
    %119 = tpu.transpose %118, [1, 0] : vector<8x1xf32> -> vector<1x8xf32>
    %cst_43 = arith.constant 0.000000e+00 : f32
    %120 = vector.broadcast %cst_43 : f32 to vector<1x8xf32>
    %121 = arith.cmpf oeq, %119, %120 : vector<1x8xf32>
    %cst_44 = arith.constant -4.2949673E+9 : f32
    %122 = vector.shape_cast %121 : vector<1x8xi1> to vector<1x8xi1>
    %123 = vector.broadcast %122 : vector<1x8xi1> to vector<8x8xi1>
    %124 = vector.broadcast %cst_44 : f32 to vector<8x8xf32>
    %125 = arith.select %123, %124, %116 : vector<8x8xi1>, vector<8x8xf32>
    %cst_45 = arith.constant dense<0xFF800000> : vector<8xf32>
    %126 = vector.multi_reduction <maximumf>, %125, %cst_45 [1] : vector<8x8xf32> to vector<8xf32>
    %127 = vector.shape_cast %126 : vector<8xf32> to vector<8x1xf32>
    %128 = vector.broadcast %127 : vector<8x1xf32> to vector<8x8xf32>
    %129 = arith.subf %125, %128 : vector<8x8xf32>
    %130 = math.exp %129 : vector<8x8xf32>
    %cst_46 = arith.constant dense<0.000000e+00> : vector<8xf32>
    %131 = vector.multi_reduction <add>, %130, %cst_46 [1] : vector<8x8xf32> to vector<8xf32>
    %132 = vector.shape_cast %131 : vector<8xf32> to vector<8x1xf32>
    %133 = vector.broadcast %132 : vector<8x1xf32> to vector<8x8xf32>
    %134 = arith.divf %130, %133 : vector<8x8xf32>
    %135 = arith.truncf %134 : vector<8x8xf32> to vector<8x8xbf16>
    %136 = arith.truncf %111 : vector<8x32xf32> to vector<8x32xbf16>
    %cst_47 = arith.constant dense<0.000000e+00> : vector<8x32xf32>
    %137 = tpu.matmul %135, %136, %cst_47 {dimension_numbers = #tpu.dot_dimension_numbers<[1], [0], [0], [1], [0, 0, 1, 1], [], []>} : vector<8x8xbf16>, vector<8x32xbf16>, vector<8x32xf32> -> vector<8x32xf32>
    %138 = tpu.concatenate %50, %79, %108, %137 in 1 : vector<8x32xf32>, vector<8x32xf32>, vector<8x32xf32>, vector<8x32xf32> -> vector<8x128xf32>
    %139 = arith.truncf %138 : vector<8x128xf32> to vector<8x128xbf16>
    %c0_48 = arith.constant 0 : index
    %c0_49 = arith.constant 0 : index
    %140 = vector.load %arg7[%c0_48, %c0_49] : memref<128x128xbf16, #tpu.memory_space<vmem>>, vector<128x128xbf16>
    %cst_50 = arith.constant dense<0.000000e+00> : vector<8x128xf32>
    %141 = tpu.matmul %139, %140, %cst_50 {dimension_numbers = #tpu.dot_dimension_numbers<[1], [0], [0], [1], [0, 0, 1, 1], [], []>} : vector<8x128xbf16>, vector<128x128xbf16>, vector<8x128xf32> -> vector<8x128xf32>
    %c0_51 = arith.constant 0 : index
    %c0_52 = arith.constant 0 : index
    %142 = vector.load %arg8[%c0_51, %c0_52] : memref<1x128xf32, #tpu.memory_space<vmem>>, vector<1x128xf32>
    %143 = vector.broadcast %142 : vector<1x128xf32> to vector<8x128xf32>
    %144 = arith.addf %141, %143 : vector<8x128xf32>
    %145 = arith.addf %1, %144 : vector<8x128xf32>
    %c0_53 = arith.constant 0 : index
    %c0_54 = arith.constant 0 : index
    %146 = vector.load %arg9[%c0_53, %c0_54] : memref<1x128xf32, #tpu.memory_space<vmem>>, vector<1x128xf32>
    %c0_55 = arith.constant 0 : index
    %c0_56 = arith.constant 0 : index
    %147 = vector.load %arg10[%c0_55, %c0_56] : memref<1x128xf32, #tpu.memory_space<vmem>>, vector<1x128xf32>
    %cst_57 = arith.constant dense<0.000000e+00> : vector<8xf32>
    %148 = vector.multi_reduction <add>, %145, %cst_57 [1] : vector<8x128xf32> to vector<8xf32>
    %149 = vector.shape_cast %148 : vector<8xf32> to vector<8x1xf32>
    %cst_58 = arith.constant 1.280000e+02 : f32
    %150 = vector.broadcast %cst_58 : f32 to vector<8x1xf32>
    %151 = arith.divf %149, %150 : vector<8x1xf32>
    %152 = vector.broadcast %151 : vector<8x1xf32> to vector<8x128xf32>
    %153 = arith.subf %145, %152 : vector<8x128xf32>
    %154 = arith.mulf %153, %153 : vector<8x128xf32>
    %cst_59 = arith.constant dense<0.000000e+00> : vector<8xf32>
    %155 = vector.multi_reduction <add>, %154, %cst_59 [1] : vector<8x128xf32> to vector<8xf32>
    %156 = vector.shape_cast %155 : vector<8xf32> to vector<8x1xf32>
    %cst_60 = arith.constant 1.280000e+02 : f32
    %157 = vector.broadcast %cst_60 : f32 to vector<8x1xf32>
    %158 = arith.divf %156, %157 : vector<8x1xf32>
    %159 = vector.broadcast %151 : vector<8x1xf32> to vector<8x128xf32>
    %160 = arith.subf %145, %159 : vector<8x128xf32>
    %cst_61 = arith.constant 9.99999974E-6 : f32
    %161 = vector.broadcast %cst_61 : f32 to vector<8x1xf32>
    %162 = arith.addf %158, %161 : vector<8x1xf32>
    %163 = math.rsqrt %162 : vector<8x1xf32>
    %164 = vector.broadcast %163 : vector<8x1xf32> to vector<8x128xf32>
    %165 = arith.mulf %160, %164 : vector<8x128xf32>
    %166 = vector.broadcast %146 : vector<1x128xf32> to vector<8x128xf32>
    %167 = arith.mulf %165, %166 : vector<8x128xf32>
    %168 = vector.broadcast %147 : vector<1x128xf32> to vector<8x128xf32>
    %169 = arith.addf %167, %168 : vector<8x128xf32>
    %c0_62 = arith.constant 0 : index
    %c0_63 = arith.constant 0 : index
    %c0_64 = arith.constant 0 : index
    %170 = vector.load %arg11[%c0_62, %c0_63, %c0_64] : memref<1x8x128xf32, #tpu.memory_space<vmem>>, vector<1x8x128xf32>
    %171 = vector.shape_cast %170 : vector<1x8x128xf32> to vector<8x128xf32>
    %172 = vector.shape_cast %169 : vector<8x128xf32> to vector<1x8x128xf32>
    tpu.vector_store %arg11[%c0_62, %c0_63, %c0_64], %172 {strides = array<i32>} : memref<1x8x128xf32, #tpu.memory_space<vmem>>, vector<1x8x128xf32>,
    return
  }
  func.func @transform_0(%arg0: i32) -> (i32, i32, i32) {
    %c0_i32 = arith.constant 0 : i32
    %c0_i32_0 = arith.constant 0 : i32
    %c0_i32_1 = arith.constant 0 : i32
    return %arg0, %c0_i32, %c0_i32_0 : i32, i32, i32
  }
  func.func @transform_1(%arg0: i32) -> (i32, i32, i32) {
    %c0_i32 = arith.constant 0 : i32
    %c0_i32_0 = arith.constant 0 : i32
    %c0_i32_1 = arith.constant 0 : i32
    return %arg0, %c0_i32, %c0_i32_0 : i32, i32, i32
  }
  func.func @transform_2(%arg0: i32) -> (i32, i32) {
    %c0_i32 = arith.constant 0 : i32
    %c0_i32_0 = arith.constant 0 : i32
    %c0_i32_1 = arith.constant 0 : i32
    return %c0_i32, %c0_i32_0 : i32, i32
  }
  func.func @transform_3(%arg0: i32) -> (i32, i32) {
    %c0_i32 = arith.constant 0 : i32
    %c0_i32_0 = arith.constant 0 : i32
    %c0_i32_1 = arith.constant 0 : i32
    return %c0_i32, %c0_i32_0 : i32, i32
  }
  func.func @transform_4(%arg0: i32) -> (i32, i32) {
    %c0_i32 = arith.constant 0 : i32
    %c0_i32_0 = arith.constant 0 : i32
    %c0_i32_1 = arith.constant 0 : i32
    return %c0_i32, %c0_i32_0 : i32, i32
  }
  func.func @transform_5(%arg0: i32) -> (i32, i32) {
    %c0_i32 = arith.constant 0 : i32
    %c0_i32_0 = arith.constant 0 : i32
    %c0_i32_1 = arith.constant 0 : i32
    return %c0_i32, %c0_i32_0 : i32, i32
  }
  func.func @transform_6(%arg0: i32) -> (i32, i32) {
    %c0_i32 = arith.constant 0 : i32
    %c0_i32_0 = arith.constant 0 : i32
    %c0_i32_1 = arith.constant 0 : i32
    return %c0_i32, %c0_i32_0 : i32, i32
  }
  func.func @transform_7(%arg0: i32) -> (i32, i32) {
    %c0_i32 = arith.constant 0 : i32
    %c0_i32_0 = arith.constant 0 : i32
    %c0_i32_1 = arith.constant 0 : i32
    return %c0_i32, %c0_i32_0 : i32, i32
  }
  func.func @transform_8(%arg0: i32) -> (i32, i32) {
    %c0_i32 = arith.constant 0 : i32
    %c0_i32_0 = arith.constant 0 : i32
    %c0_i32_1 = arith.constant 0 : i32
    return %c0_i32, %c0_i32_0 : i32, i32
  }
  func.func @transform_9(%arg0: i32) -> (i32, i32) {
    %c0_i32 = arith.constant 0 : i32
    %c0_i32_0 = arith.constant 0 : i32
    %c0_i32_1 = arith.constant 0 : i32
    return %c0_i32, %c0_i32_0 : i32, i32
  }
  func.func @transform_10(%arg0: i32) -> (i32, i32, i32) {
    %c0_i32 = arith.constant 0 : i32
    %c0_i32_0 = arith.constant 0 : i32
    %c0_i32_1 = arith.constant 0 : i32
    return %arg0, %c0_i32, %c0_i32_0 : i32, i32, i32
  }
}

module attributes {stable_mosaic.version = 11 : i64} {
  func.func @proj_softmax_kernel(%arg0: i32, %arg1: memref<8x128xf32, #tpu.memory_space<vmem>>, %arg2: memref<128x256xbf16, #tpu.memory_space<vmem>>, %arg3: memref<8x256xf32, #tpu.memory_space<vmem>>) attributes {dimension_semantics = [#tpu.dimension_semantics<parallel>], iteration_bounds = array<i64: 2>, scalar_prefetch = 0 : i64, scratch_operands = 0 : i64, tpu.core_type = #tpu.core_type<tc>, window_params = [{transform_indices = @transform_0, window_bounds = array<i64: 8, 128>}, {pipeline_mode = #tpu.pipeline_mode<synchronous>, transform_indices = @transform_1, window_bounds = array<i64: 128, 256>}, {transform_indices = @transform_2, window_bounds = array<i64: 8, 256>}]} {
    %c0 = arith.constant 0 : index
    %c0_0 = arith.constant 0 : index
    %0 = vector.load %arg1[%c0, %c0_0] : memref<8x128xf32, #tpu.memory_space<vmem>>, vector<8x128xf32>
    %1 = arith.truncf %0 : vector<8x128xf32> to vector<8x128xbf16>
    %c0_1 = arith.constant 0 : index
    %c0_2 = arith.constant 0 : index
    %2 = vector.load %arg2[%c0_1, %c0_2] : memref<128x256xbf16, #tpu.memory_space<vmem>>, vector<128x256xbf16>
    %cst = arith.constant dense<0.000000e+00> : vector<8x256xf32>
    %3 = tpu.matmul %1, %2, %cst {dimension_numbers = #tpu.dot_dimension_numbers<[1], [0], [0], [1], [0, 0, 1, 1], [], []>} : vector<8x128xbf16>, vector<128x256xbf16>, vector<8x256xf32> -> vector<8x256xf32>
    %cst_3 = arith.constant dense<0xFF800000> : vector<8xf32>
    %4 = vector.multi_reduction <maximumf>, %3, %cst_3 [1] : vector<8x256xf32> to vector<8xf32>
    %5 = vector.shape_cast %4 : vector<8xf32> to vector<8x1xf32>
    %6 = vector.broadcast %5 : vector<8x1xf32> to vector<8x256xf32>
    %7 = arith.subf %3, %6 : vector<8x256xf32>
    %8 = math.exp %7 : vector<8x256xf32>
    %cst_4 = arith.constant dense<0.000000e+00> : vector<8xf32>
    %9 = vector.multi_reduction <add>, %8, %cst_4 [1] : vector<8x256xf32> to vector<8xf32>
    %10 = vector.shape_cast %9 : vector<8xf32> to vector<8x1xf32>
    %11 = vector.broadcast %10 : vector<8x1xf32> to vector<8x256xf32>
    %12 = arith.divf %8, %11 : vector<8x256xf32>
    %c0_5 = arith.constant 0 : index
    %c0_6 = arith.constant 0 : index
    %13 = vector.load %arg3[%c0_5, %c0_6] : memref<8x256xf32, #tpu.memory_space<vmem>>, vector<8x256xf32>
    tpu.vector_store %arg3[%c0_5, %c0_6], %12 {strides = array<i32>} : memref<8x256xf32, #tpu.memory_space<vmem>>, vector<8x256xf32>,
    return
  }
  func.func @transform_0(%arg0: i32) -> (i32, i32) {
    %c0_i32 = arith.constant 0 : i32
    %c0_i32_0 = arith.constant 0 : i32
    return %arg0, %c0_i32 : i32, i32
  }
  func.func @transform_1(%arg0: i32) -> (i32, i32) {
    %c0_i32 = arith.constant 0 : i32
    %c0_i32_0 = arith.constant 0 : i32
    %c0_i32_1 = arith.constant 0 : i32
    return %c0_i32, %c0_i32_0 : i32, i32
  }
  func.func @transform_2(%arg0: i32) -> (i32, i32) {
    %c0_i32 = arith.constant 0 : i32
    %c0_i32_0 = arith.constant 0 : i32
    return %arg0, %c0_i32 : i32, i32
  }
}

</mosaic_0001>

<llo_original>
// kernel: _lambda_.12
$region0: #{_lambda_.12}
  #allocation0 [shape = 'u32[]', space=smem, size = 0x4, offset = 0x4, fixed_abs, tag = 'smem constant byte address 0x4 - core index']
  #allocation1 [shape = 'u32[144,128]{1,0:T(1,128)}', space=vmem, size = 0x12000, scoped, tag = 'internal scratch']
  %s0 = inlined_call_operand.vmem [shape: f32[16,128], index: 0, kind: input, shape index: {}]
  %s1 = inlined_call_operand.vmem [shape: bf16[128,256], index: 1, kind: input, shape index: {}]
  %s2 = inlined_call_operand.vmem [shape: f32[1,256], index: 2, kind: input, shape index: {}]
  %s3 = inlined_call_operand.vmem [shape: bf16[256,128], index: 3, kind: input, shape index: {}]
  %s4 = inlined_call_operand.vmem [shape: f32[1,128], index: 4, kind: input, shape index: {}]
  %s5 = inlined_call_operand.vmem [shape: f32[1,128], index: 5, kind: input, shape index: {}]
  %s6 = inlined_call_operand.vmem [shape: f32[1,128], index: 6, kind: input, shape index: {}]
  %s7 = inlined_call_operand.vmem [shape: f32[1,128], index: 7, kind: input, shape index: {}]
  %s8 = inlined_call_operand.vmem [shape: f32[1,128], index: 8, kind: input, shape index: {}]
  %s9 = inlined_call_operand.vmem [shape: f32[16,128], index: 9, kind: output, shape index: {}]
  %s10 = sld [smem:[#allocation0]]
  $region69: #{_lambda_.12} parent=0
    _
  %s12 = ssub.s32 1, %s10
  %s13 = scalar_select 0, %s12, %s10
  loop: start=0, step=1, limit=4
  $region2: #{_lambda_.12} parent=0 // loop_pre_header
    _
  $region3: #{_lambda_.12} parent=0 // loop_header
    %s15 = sphi 0, %s19
    %p16 = scmp.ge.s32.totalorder %s15, 4
    %s25 = sphi 0, %s27
    %s28 = sphi 0, %s25
    %s29 = sphi 0, %s28
    %s45 = sphi 0, %s29
    %s49 = sphi 0, %s49
    %s51 = sphi 0, %s49
    %s52 = sphi 0, %s51
    %s66 = sphi 0, %s52
    %s70 = sphi 0, %s70
    %s72 = sphi 0, %s70
    %s73 = sphi 0, %s72
    %s87 = sphi 0, %s73
    %s91 = sphi 0, %s91
    %s93 = sphi 0, %s91
    %s94 = sphi 0, %s93
    %s108 = sphi 0, %s94
    %s112 = sphi 0, %s112
    %s114 = sphi 0, %s112
    %s115 = sphi 0, %s114
    %s129 = sphi 0, %s115
    %s133 = sphi 0, %s133
    %s135 = sphi 0, %s133
    %s136 = sphi 0, %s135
    %s150 = sphi 0, %s136
    %s154 = sphi 0, %s154
    %s156 = sphi 0, %s154
    %s157 = sphi 0, %s156
    %s171 = sphi 0, %s157
    %s175 = sphi 0, %s175
    %s177 = sphi 0, %s175
    %s178 = sphi 0, %s177
    %s192 = sphi 0, %s178
    %s196 = sphi 0, %s196
    %s198 = sphi 0, %s196
    %s199 = sphi 0, %s198
    %s213 = sphi 0, %s199
    %s219 = sphi 0, %s221
    %s222 = sphi 0, %s219
    %s223 = sphi 0, %s222
    %s239 = sphi 0, %s223
  $region4: #{_lambda_.12} parent=0 // loop_header_branch
    %18 = sbr.rel (%p16) target = $region8
  $region5: #{_lambda_.12} parent=0 // loop_body
    %s20 = ssub.s32 %s15, 1
    %s21 = ssub.s32 %s15, 2
    %s22 = sadd.s32 %s15, 1
    %s23 = ssub.s32 %s15, %s22
    %p24 = scmp.eq.s32.totalorder %s23, 0
    %s26 = sadd.s32 %s25, 1
    %s27 = scalar_select %p24, %s25, %s26
    %p30 = pneg %p24
    %p31 = scmp.eq.s32.totalorder %s15, 1
    %p32 = por %p30, %p31
    %p33 = scmp.ne.s32.totalorder %s25, %s28
    %p34 = scmp.eq.s32.totalorder %s15, 0
    %p35 = por %p33, %p34
    %p36 = scmp.ne.s32.totalorder %s25, %s28
    %p37 = scmp.eq.s32.totalorder %s20, 1
    %p38 = por %p36, %p37
    %p39 = scmp.ne.s32.totalorder %s28, %s29
    %p40 = scmp.eq.s32.totalorder %s20, 0
    %p41 = por %p39, %p40
    %p42 = scmp.ne.s32.totalorder %s28, %s29
    %p43 = scmp.eq.s32.totalorder %s21, 1
    %p44 = por %p42, %p43
    %p46 = scmp.ne.s32.totalorder %s29, %s45
    %p47 = scmp.eq.s32.totalorder %s21, 0
    %p48 = por %p46, %p47
    %s50 = sadd.s32 %s49, 1
    %p53 = scmp.eq.s32.totalorder %s15, 1
    %p54 = scmp.ne.s32.totalorder %s49, %s51
    %p55 = scmp.eq.s32.totalorder %s15, 0
    %p56 = por %p54, %p55
    %p57 = scmp.ne.s32.totalorder %s49, %s51
    %p58 = scmp.eq.s32.totalorder %s20, 1
    %p59 = por %p57, %p58
    %p60 = scmp.ne.s32.totalorder %s51, %s52
    %p61 = scmp.eq.s32.totalorder %s20, 0
    %p62 = por %p60, %p61
    %p63 = scmp.ne.s32.totalorder %s51, %s52
    %p64 = scmp.eq.s32.totalorder %s21, 1
    %p65 = por %p63, %p64
    %p67 = scmp.ne.s32.totalorder %s52, %s66
    %p68 = scmp.eq.s32.totalorder %s21, 0
    %p69 = por %p67, %p68
    %s71 = sadd.s32 %s70, 1
    %p74 = scmp.eq.s32.totalorder %s15, 1
    %p75 = scmp.ne.s32.totalorder %s70, %s72
    %p76 = scmp.eq.s32.totalorder %s15, 0
    %p77 = por %p75, %p76
    %p78 = scmp.ne.s32.totalorder %s70, %s72
    %p79 = scmp.eq.s32.totalorder %s20, 1
    %p80 = por %p78, %p79
    %p81 = scmp.ne.s32.totalorder %s72, %s73
    %p82 = scmp.eq.s32.totalorder %s20, 0
    %p83 = por %p81, %p82
    %p84 = scmp.ne.s32.totalorder %s72, %s73
    %p85 = scmp.eq.s32.totalorder %s21, 1
    %p86 = por %p84, %p85
    %p88 = scmp.ne.s32.totalorder %s73, %s87
    %p89 = scmp.eq.s32.totalorder %s21, 0
    %p90 = por %p88, %p89
    %s92 = sadd.s32 %s91, 1
    %p95 = scmp.eq.s32.totalorder %s15, 1
    %p96 = scmp.ne.s32.totalorder %s91, %s93
    %p97 = scmp.eq.s32.totalorder %s15, 0
    %p98 = por %p96, %p97
    %p99 = scmp.ne.s32.totalorder %s91, %s93
    %p100 = scmp.eq.s32.totalorder %s20, 1
    %p101 = por %p99, %p100
    %p102 = scmp.ne.s32.totalorder %s93, %s94
    %p103 = scmp.eq.s32.totalorder %s20, 0
    %p104 = por %p102, %p103
    %p105 = scmp.ne.s32.totalorder %s93, %s94
    %p106 = scmp.eq.s32.totalorder %s21, 1
    %p107 = por %p105, %p106
    %p109 = scmp.ne.s32.totalorder %s94, %s108
    %p110 = scmp.eq.s32.totalorder %s21, 0
    %p111 = por %p109, %p110
    %s113 = sadd.s32 %s112, 1
    %p116 = scmp.eq.s32.totalorder %s15, 1
    %p117 = scmp.ne.s32.totalorder %s112, %s114
    %p118 = scmp.eq.s32.totalorder %s15, 0
    %p119 = por %p117, %p118
    %p120 = scmp.ne.s32.totalorder %s112, %s114
    %p121 = scmp.eq.s32.totalorder %s20, 1
    %p122 = por %p120, %p121
    %p123 = scmp.ne.s32.totalorder %s114, %s115
    %p124 = scmp.eq.s32.totalorder %s20, 0
    %p125 = por %p123, %p124
    %p126 = scmp.ne.s32.totalorder %s114, %s115
    %p127 = scmp.eq.s32.totalorder %s21, 1
    %p128 = por %p126, %p127
    %p130 = scmp.ne.s32.totalorder %s115, %s129
    %p131 = scmp.eq.s32.totalorder %s21, 0
    %p132 = por %p130, %p131
    %s134 = sadd.s32 %s133, 1
    %p137 = scmp.eq.s32.totalorder %s15, 1
    %p138 = scmp.ne.s32.totalorder %s133, %s135
    %p139 = scmp.eq.s32.totalorder %s15, 0
    %p140 = por %p138, %p139
    %p141 = scmp.ne.s32.totalorder %s133, %s135
    %p142 = scmp.eq.s32.totalorder %s20, 1
    %p143 = por %p141, %p142
    %p144 = scmp.ne.s32.totalorder %s135, %s136
    %p145 = scmp.eq.s32.totalorder %s20, 0
    %p146 = por %p144, %p145
    %p147 = scmp.ne.s32.totalorder %s135, %s136
    %p148 = scmp.eq.s32.totalorder %s21, 1
    %p149 = por %p147, %p148
    %p151 = scmp.ne.s32.totalorder %s136, %s150
    %p152 = scmp.eq.s32.totalorder %s21, 0
    %p153 = por %p151, %p152
    %s155 = sadd.s32 %s154, 1
    %p158 = scmp.eq.s32.totalorder %s15, 1
    %p159 = scmp.ne.s32.totalorder %s154, %s156
    %p160 = scmp.eq.s32.totalorder %s15, 0
    %p161 = por %p159, %p160
    %p162 = scmp.ne.s32.totalorder %s154, %s156
    %p163 = scmp.eq.s32.totalorder %s20, 1
    %p164 = por %p162, %p163
    %p165 = scmp.ne.s32.totalorder %s156, %s157
    %p166 = scmp.eq.s32.totalorder %s20, 0
    %p167 = por %p165, %p166
    %p168 = scmp.ne.s32.totalorder %s156, %s157
    %p169 = scmp.eq.s32.totalorder %s21, 1
    %p170 = por %p168, %p169
    %p172 = scmp.ne.s32.totalorder %s157, %s171
    %p173 = scmp.eq.s32.totalorder %s21, 0
    %p174 = por %p172, %p173
    %s176 = sadd.s32 %s175, 1
    %p179 = scmp.eq.s32.totalorder %s15, 1
    %p180 = scmp.ne.s32.totalorder %s175, %s177
    %p181 = scmp.eq.s32.totalorder %s15, 0
    %p182 = por %p180, %p181
    %p183 = scmp.ne.s32.totalorder %s175, %s177
    %p184 = scmp.eq.s32.totalorder %s20, 1
    %p185 = por %p183, %p184
    %p186 = scmp.ne.s32.totalorder %s177, %s178
    %p187 = scmp.eq.s32.totalorder %s20, 0
    %p188 = por %p186, %p187
    %p189 = scmp.ne.s32.totalorder %s177, %s178
    %p190 = scmp.eq.s32.totalorder %s21, 1
    %p191 = por %p189, %p190
    %p193 = scmp.ne.s32.totalorder %s178, %s192
    %p194 = scmp.eq.s32.totalorder %s21, 0
    %p195 = por %p193, %p194
    %s197 = sadd.s32 %s196, 1
    %p200 = scmp.eq.s32.totalorder %s15, 1
    %p201 = scmp.ne.s32.totalorder %s196, %s198
    %p202 = scmp.eq.s32.totalorder %s15, 0
    %p203 = por %p201, %p202
    %p204 = scmp.ne.s32.totalorder %s196, %s198
    %p205 = scmp.eq.s32.totalorder %s20, 1
    %p206 = por %p204, %p205
    %p207 = scmp.ne.s32.totalorder %s198, %s199
    %p208 = scmp.eq.s32.totalorder %s20, 0
    %p209 = por %p207, %p208
    %p210 = scmp.ne.s32.totalorder %s198, %s199
    %p211 = scmp.eq.s32.totalorder %s21, 1
    %p212 = por %p210, %p211
    %p214 = scmp.ne.s32.totalorder %s199, %s213
    %p215 = scmp.eq.s32.totalorder %s21, 0
    %p216 = por %p214, %p215
    %s217 = ssub.s32 %s15, %s22
    %p218 = scmp.eq.s32.totalorder %s217, 0
    %s220 = sadd.s32 %s219, 1
    %s221 = scalar_select %p218, %s219, %s220
    %p224 = pneg %p218
    %p225 = scmp.eq.s32.totalorder %s15, 1
    %p226 = por %p224, %p225
    %p227 = scmp.ne.s32.totalorder %s219, %s222
    %p228 = scmp.eq.s32.totalorder %s15, 0
    %p229 = por %p227, %p228
    %p230 = scmp.ne.s32.totalorder %s219, %s222
    %p231 = scmp.eq.s32.totalorder %s20, 1
    %p232 = por %p230, %p231
    %p233 = scmp.ne.s32.totalorder %s222, %s223
    %p234 = scmp.eq.s32.totalorder %s20, 0
    %p235 = por %p233, %p234
    %p236 = scmp.ne.s32.totalorder %s222, %s223
    %p237 = scmp.eq.s32.totalorder %s21, 1
    %p238 = por %p236, %p237
    %p240 = scmp.ne.s32.totalorder %s223, %s239
    %p241 = scmp.eq.s32.totalorder %s21, 0
    %p242 = por %p240, %p241
    %p243 = scmp.le.s32.totalorder 1, %s15
    %p244 = scmp.lt.s32.totalorder %s15, 3
    %p245 = pnand %p243, %p244
    %p246 = pneg %p245
    // Predicated region
    $region9: #{_lambda_.12} parent=5 // pred_check
      _
    $region10: #{_lambda_.12} parent=5 // pred_check_branch
      %248 = sbr.rel (%p245) target = $region12
    $region11: #{_lambda_.12} parent=5 // pred_region
      %s249 = ssub.s32 %s15, 1
      // Predicated region
      $region13: #{_lambda_.12} parent=11 // pred_check
        %p250 = pneg %p62
      $region14: #{_lambda_.12} parent=11 // pred_check_branch
        %252 = sbr.rel (%p250) target = $region16
      $region15: #{_lambda_.12} parent=11 // pred_region
        _
      $region16: #{_lambda_.12} parent=11 // pred_fallthru
        _
      // Predicated region
      $region17: #{_lambda_.12} parent=11 // pred_check
        %p253 = pneg %p83
      $region18: #{_lambda_.12} parent=11 // pred_check_branch
        %255 = sbr.rel (%p253) target = $region20
      $region19: #{_lambda_.12} parent=11 // pred_region
        _
      $region20: #{_lambda_.12} parent=11 // pred_fallthru
        _
      // Predicated region
      $region21: #{_lambda_.12} parent=11 // pred_check
        %p256 = pneg %p104
      $region22: #{_lambda_.12} parent=11 // pred_check_branch
        %258 = sbr.rel (%p256) target = $region24
      $region23: #{_lambda_.12} parent=11 // pred_region
        _
      $region24: #{_lambda_.12} parent=11 // pred_fallthru
        _
      // Predicated region
      $region25: #{_lambda_.12} parent=11 // pred_check
        %p259 = pneg %p125
      $region26: #{_lambda_.12} parent=11 // pred_check_branch
        %261 = sbr.rel (%p259) target = $region28
      $region27: #{_lambda_.12} parent=11 // pred_region
        _
      $region28: #{_lambda_.12} parent=11 // pred_fallthru
        _
      // Predicated region
      $region29: #{_lambda_.12} parent=11 // pred_check
        %p262 = pneg %p146
      $region30: #{_lambda_.12} parent=11 // pred_check_branch
        %264 = sbr.rel (%p262) target = $region32
      $region31: #{_lambda_.12} parent=11 // pred_region
        _
      $region32: #{_lambda_.12} parent=11 // pred_fallthru
        _
      // Predicated region
      $region33: #{_lambda_.12} parent=11 // pred_check
        %p265 = pneg %p167
      $region34: #{_lambda_.12} parent=11 // pred_check_branch
        %267 = sbr.rel (%p265) target = $region36
      $region35: #{_lambda_.12} parent=11 // pred_region
        _
      $region36: #{_lambda_.12} parent=11 // pred_fallthru
        _
      // Predicated region
      $region37: #{_lambda_.12} parent=11 // pred_check
        %p268 = pneg %p188
      $region38: #{_lambda_.12} parent=11 // pred_check_branch
        %270 = sbr.rel (%p268) target = $region40
      $region39: #{_lambda_.12} parent=11 // pred_region
        _
      $region40: #{_lambda_.12} parent=11 // pred_fallthru
        _
      // Predicated region
      $region41: #{_lambda_.12} parent=11 // pred_check
        %p271 = pneg %p209
      $region42: #{_lambda_.12} parent=11 // pred_check_branch
        %273 = sbr.rel (%p271) target = $region44
      $region43: #{_lambda_.12} parent=11 // pred_region
        _
      $region44: #{_lambda_.12} parent=11 // pred_fallthru
        _
    $region12: #{_lambda_.12} parent=5 // pred_fallthru
      _
    %p274 = scmp.lt.s32.totalorder %s15, 2
    // Predicated region
    $region45: #{_lambda_.12} parent=5 // pred_check
      %p275 = pneg %p274
    $region46: #{_lambda_.12} parent=5 // pred_check_branch
      %277 = sbr.rel (%p275) target = $region48
    $region47: #{_lambda_.12} parent=5 // pred_region
      // Predicated region
      $region49: #{_lambda_.12} parent=47 // pred_check
        %p278 = pneg %p35
      $region50: #{_lambda_.12} parent=47 // pred_check_branch
        %280 = sbr.rel (%p278) target = $region52
      $region51: #{_lambda_.12} parent=47 // pred_region
        %p281 = scmp.lt.s32.totalorder %s15, 1
        %s282 = scalar_select %p281, %s15, 1
        %s283 = smul.addr %s282, 8
        %s284 = scalar_lea.vmem %s0, %s283
      $region52: #{_lambda_.12} parent=47 // pred_fallthru
        _
    $region48: #{_lambda_.12} parent=5 // pred_fallthru
      _
    %p285 = scmp.le.s32.totalorder 1, %s15
    %p286 = scmp.lt.s32.totalorder %s15, 3
    %p287 = pnand %p285, %p286
    %p288 = pneg %p287
    // Predicated region
    $region53: #{_lambda_.12} parent=5 // pred_check
      _
    $region54: #{_lambda_.12} parent=5 // pred_check_branch
      %290 = sbr.rel (%p287) target = $region56
    $region55: #{_lambda_.12} parent=5 // pred_region
      %s291 = ssub.s32 %s15, 1
      %p292 = scmp.lt.s32.totalorder %s20, 1
      %s293 = scalar_select %p292, %s20, 1
      %s294 = smul.addr %s293, 8
      %s295 = scalar_lea.vmem %s0, %s294
      %p296 = pneg %p41
      %p297 = pneg %p38
      %p298 = pneg %p62
      %p299 = pneg %p59
      %p300 = pneg %p83
      %p301 = pneg %p80
      %p302 = pneg %p104
      %p303 = pneg %p101
      %p304 = pneg %p125
      %p305 = pneg %p122
      %p306 = pneg %p146
      %p307 = pneg %p143
      %p308 = pneg %p167
      %p309 = pneg %p164
      %p310 = pneg %p188
      %p311 = pneg %p185
      %p312 = pneg %p209
      %p313 = pneg %p206
      %p314 = pneg %p235
      %p315 = pneg %p232
      %p316 = scmp.lt.s32.totalorder %s20, 1
      %s317 = scalar_select %p316, %s20, 1
      %s318 = smul.addr %s317, 8
      %s319 = scalar_lea.vmem %s9, %s318
      %p320 = scmp.lt.s32.totalorder %s20, 1
      %s321 = scalar_select %p320, %s20, 1
      %s322 = smul.addr %s321, 8
      %s323 = scalar_lea.vmem %s0, %s322
      %p324 = scmp.lt.s32.totalorder %s20, 1
      %s325 = scalar_select %p324, %s20, 1
      %s326 = smul.addr %s325, 8
      %s327 = scalar_lea.vmem %s9, %s326
      %v329 = vld [vmem:[%s323] sm:$0xff]
      %v330 = vpack.c.bf16 %v329, %v329
      %v331 = vld [vmem:[%s1] sm:$0xff]
      %v332 = vld [vmem:[%s1 + $0x8] sm:$0xff]
      %v333 = vld [vmem:[%s1 + $0x10] sm:$0xff]
      %v334 = vld [vmem:[%s1 + $0x18] sm:$0xff]
      %v335 = vld [vmem:[%s1 + $0x20] sm:$0xff]
      %v336 = vld [vmem:[%s1 + $0x28] sm:$0xff]
      %v337 = vld [vmem:[%s1 + $0x30] sm:$0xff]
      %v338 = vld [vmem:[%s1 + $0x38] sm:$0xff]
      %v339 = vld [vmem:[%s1 + $0x40] sm:$0xff]
      %v340 = vld [vmem:[%s1 + $0x48] sm:$0xff]
      %v341 = vld [vmem:[%s1 + $0x50] sm:$0xff]
      %v342 = vld [vmem:[%s1 + $0x58] sm:$0xff]
      %v343 = vld [vmem:[%s1 + $0x60] sm:$0xff]
      %v344 = vld [vmem:[%s1 + $0x68] sm:$0xff]
      %v345 = vld [vmem:[%s1 + $0x70] sm:$0xff]
      %v346 = vld [vmem:[%s1 + $0x78] sm:$0xff]
      %v347 = vld [vmem:[%s2] sm:$0x3]
      %v349 = vlaneseq
      %v350 = vshrl.u32 %v349, 7
      %v351 = vsub.s32 0, %v350
      %v352 = vrot.slane %v347, %v351
      %v353 = vlaneseq
      %v354 = vshrl.u32 %v353, 7
      %v355 = vsub.s32 1, %v354
      %v356 = vrot.slane %v347, %v355
      %v375 = vunpack.c.l.b16 %v331
      %v376 = vunpack.c.h.b16 %v331
      %v377 = vunpack.c.l.b16 %v332
      %v378 = vunpack.c.h.b16 %v332
      %v379 = vunpack.c.l.b16 %v333
      %v380 = vunpack.c.h.b16 %v333
      %v381 = vunpack.c.l.b16 %v334
      %v382 = vunpack.c.h.b16 %v334
      %v383 = vunpack.c.l.b16 %v335
      %v384 = vunpack.c.h.b16 %v335
      %v385 = vunpack.c.l.b16 %v336
      %v386 = vunpack.c.h.b16 %v336
      %v387 = vunpack.c.l.b16 %v337
      %v388 = vunpack.c.h.b16 %v337
      %v389 = vunpack.c.l.b16 %v338
      %v390 = vunpack.c.h.b16 %v338
      %v391 = vunpack.c.l.b16 %v339
      %v392 = vunpack.c.h.b16 %v339
      %v393 = vunpack.c.l.b16 %v340
      %v394 = vunpack.c.h.b16 %v340
      %v395 = vunpack.c.l.b16 %v341
      %v396 = vunpack.c.h.b16 %v341
      %v397 = vunpack.c.l.b16 %v342
      %v398 = vunpack.c.h.b16 %v342
      %v399 = vunpack.c.l.b16 %v343
      %v400 = vunpack.c.h.b16 %v343
      %v401 = vunpack.c.l.b16 %v344
      %v402 = vunpack.c.h.b16 %v344
      %v403 = vunpack.c.l.b16 %v345
      %v404 = vunpack.c.h.b16 %v345
      %v405 = vunpack.c.l.b16 %v346
      %v406 = vunpack.c.h.b16 %v346
      %v407 = vpack.c.b16 %v377, %v375
      %v408 = vpack.c.b16 %v378, %v376
      %v409 = vpack.c.b16 %v381, %v379
      %v410 = vpack.c.b16 %v382, %v380
      %v411 = vpack.c.b16 %v385, %v383
      %v412 = vpack.c.b16 %v386, %v384
      %v413 = vpack.c.b16 %v389, %v387
      %v414 = vpack.c.b16 %v390, %v388
      %v415 = vpack.c.b16 %v393, %v391
      %v416 = vpack.c.b16 %v394, %v392
      %v417 = vpack.c.b16 %v397, %v395
      %v418 = vpack.c.b16 %v398, %v396
      %v419 = vpack.c.b16 %v401, %v399
      %v420 = vpack.c.b16 %v402, %v400
      %v421 = vpack.c.b16 %v405, %v403
      %v422 = vpack.c.b16 %v406, %v404
      %439 = vmatprep.subr.bf16.mxu0 %v422
      %440 = vmatpush1.bf16.msra.mxu0 %v421
      %441 = vmatprep.subr.bf16.mxu0 %v420
      %442 = vmatpush1.bf16.msra.mxu0 %v419
      %443 = vmatprep.subr.bf16.mxu0 %v418
      %444 = vmatpush1.bf16.msra.mxu0 %v417
      %445 = vmatprep.subr.bf16.mxu0 %v416
      %446 = vmatpush1.bf16.msra.mxu0 %v415
      %447 = vmatprep.subr.bf16.mxu0 %v414
      %448 = vmatpush1.bf16.msra.mxu0 %v413
      %449 = vmatprep.subr.bf16.mxu0 %v412
      %450 = vmatpush1.bf16.msra.mxu0 %v411
      %451 = vmatprep.subr.bf16.mxu0 %v410
      %452 = vmatpush1.bf16.msra.mxu0 %v409
      %453 = vmatprep.subr.bf16.mxu0 %v408
      %454 = vmatpush1.bf16.msra.mxu0 %v407
      %455 = vmatprep.subr.bf16.mxu0 0
      %456 = vmatpush2.bf16.msra.mxu0 0
      %457 = vmatprep.subr.bf16.mxu0 0
      %458 = vmatpush2.bf16.msra.mxu0 0
      %459 = vmatprep.subr.bf16.mxu0 0
      %460 = vmatpush2.bf16.msra.mxu0 0
      %461 = vmatprep.subr.bf16.mxu0 0
      %462 = vmatpush2.bf16.msra.mxu0 0
      %463 = vmatprep.subr.bf16.mxu0 0
      %464 = vmatpush2.bf16.msra.mxu0 0
      %465 = vmatprep.subr.bf16.mxu0 0
      %466 = vmatpush2.bf16.msra.mxu0 0
      %467 = vmatprep.subr.bf16.mxu0 0
      %468 = vmatpush2.bf16.msra.mxu0 0
      %469 = vmatprep.subr.bf16.mxu0 0
      %470 = vmatpush2.bf16.msra.mxu0 0
      %471 = vmatprep.mubr.bf16.mxu0 0
      %472 = vmatmul.mubr.bf16.gmra.mxu0 %v330
      %v473 = vpop.f32.mrf.mxu0
      %v474 = vadd.f32 %v352, %v473
      %v475 = vpop.f32.mrf.mxu0
      %v476 = vadd.f32 %v356, %v475
      %v477 = vpop.f32.mrf.mxu0
      %v478 = vpop.f32.mrf.mxu0
      %479 = vdwg.mxu0
      %v480 = vmax.f32 %v474, 0.0
      %v481 = vmax.f32 %v476, 0.0
      %v482 = vpack.c.bf16 %v480, %v480
      %v483 = vpack.c.bf16 %v481, %v481
      %v484 = vld [vmem:[%s3] sm:$0xf]
      %v485 = vld [vmem:[%s3 + $0x4] sm:$0xf]
      %v486 = vld [vmem:[%s3 + $0x8] sm:$0xf]
      %v487 = vld [vmem:[%s3 + $0xc] sm:$0xf]
      %v488 = vld [vmem:[%s3 + $0x10] sm:$0xf]
      %v489 = vld [vmem:[%s3 + $0x14] sm:$0xf]
      %v490 = vld [vmem:[%s3 + $0x18] sm:$0xf]
      %v491 = vld [vmem:[%s3 + $0x1c] sm:$0xf]
      %v492 = vld [vmem:[%s3 + $0x20] sm:$0xf]
      %v493 = vld [vmem:[%s3 + $0x24] sm:$0xf]
      %v494 = vld [vmem:[%s3 + $0x28] sm:$0xf]
      %v495 = vld [vmem:[%s3 + $0x2c] sm:$0xf]
      %v496 = vld [vmem:[%s3 + $0x30] sm:$0xf]
      %v497 = vld [vmem:[%s3 + $0x34] sm:$0xf]
      %v498 = vld [vmem:[%s3 + $0x38] sm:$0xf]
      %v499 = vld [vmem:[%s3 + $0x3c] sm:$0xf]
      %v500 = vld [vmem:[%s3 + $0x40] sm:$0xf]
      %v501 = vld [vmem:[%s3 + $0x44] sm:$0xf]
      %v502 = vld [vmem:[%s3 + $0x48] sm:$0xf]
      %v503 = vld [vmem:[%s3 + $0x4c] sm:$0xf]
      %v504 = vld [vmem:[%s3 + $0x50] sm:$0xf]
      %v505 = vld [vmem:[%s3 + $0x54] sm:$0xf]
      %v506 = vld [vmem:[%s3 + $0x58] sm:$0xf]
      %v507 = vld [vmem:[%s3 + $0x5c] sm:$0xf]
      %v508 = vld [vmem:[%s3 + $0x60] sm:$0xf]
      %v509 = vld [vmem:[%s3 + $0x64] sm:$0xf]
      %v510 = vld [vmem:[%s3 + $0x68] sm:$0xf]
      %v511 = vld [vmem:[%s3 + $0x6c] sm:$0xf]
      %v512 = vld [vmem:[%s3 + $0x70] sm:$0xf]
      %v513 = vld [vmem:[%s3 + $0x74] sm:$0xf]
      %v514 = vld [vmem:[%s3 + $0x78] sm:$0xf]
      %v515 = vld [vmem:[%s3 + $0x7c] sm:$0xf]
      %v516 = vld [vmem:[%s4] sm:$0x1]
      %v518 = vlaneseq
      %v519 = vshrl.u32 %v518, 7
      %v520 = vsub.s32 0, %v519
      %v521 = vrot.slane %v516, %v520
      %v555 = vunpack.c.l.b16 %v484
      %v556 = vunpack.c.l.b16 %v485
      %v557 = vunpack.c.l.b16 %v486
      %v558 = vunpack.c.l.b16 %v487
      %v559 = vunpack.c.l.b16 %v488
      %v560 = vunpack.c.l.b16 %v489
      %v561 = vunpack.c.l.b16 %v490
      %v562 = vunpack.c.l.b16 %v491
      %v563 = vunpack.c.l.b16 %v492
      %v564 = vunpack.c.l.b16 %v493
      %v565 = vunpack.c.l.b16 %v494
      %v566 = vunpack.c.l.b16 %v495
      %v567 = vunpack.c.l.b16 %v496
      %v568 = vunpack.c.l.b16 %v497
      %v569 = vunpack.c.l.b16 %v498
      %v570 = vunpack.c.l.b16 %v499
      %v571 = vunpack.c.l.b16 %v500
      %v572 = vunpack.c.l.b16 %v501
      %v573 = vunpack.c.l.b16 %v502
      %v574 = vunpack.c.l.b16 %v503
      %v575 = vunpack.c.l.b16 %v504
      %v576 = vunpack.c.l.b16 %v505
      %v577 = vunpack.c.l.b16 %v506
      %v578 = vunpack.c.l.b16 %v507
      %v579 = vunpack.c.l.b16 %v508
      %v580 = vunpack.c.l.b16 %v509
      %v581 = vunpack.c.l.b16 %v510
      %v582 = vunpack.c.l.b16 %v511
      %v583 = vunpack.c.l.b16 %v512
      %v584 = vunpack.c.l.b16 %v513
      %v585 = vunpack.c.l.b16 %v514
      %v586 = vunpack.c.l.b16 %v515
      %v587 = vpack.c.b16 %v556, %v555
      %v588 = vpack.c.b16 %v558, %v557
      %v589 = vpack.c.b16 %v560, %v559
      %v590 = vpack.c.b16 %v562, %v561
      %v591 = vpack.c.b16 %v564, %v563
      %v592 = vpack.c.b16 %v566, %v565
      %v593 = vpack.c.b16 %v568, %v567
      %v594 = vpack.c.b16 %v570, %v569
      %v595 = vpack.c.b16 %v572, %v571
      %v596 = vpack.c.b16 %v574, %v573
      %v597 = vpack.c.b16 %v576, %v575
      %v598 = vpack.c.b16 %v578, %v577
      %v599 = vpack.c.b16 %v580, %v579
      %v600 = vpack.c.b16 %v582, %v581
      %v601 = vpack.c.b16 %v584, %v583
      %v602 = vpack.c.b16 %v586, %v585
      %619 = vmatprep.subr.bf16.mxu0 0
      %620 = vmatpush1.bf16.msra.mxu0 %v594
      %621 = vmatprep.subr.bf16.mxu0 0
      %622 = vmatpush1.bf16.msra.mxu0 %v593
      %623 = vmatprep.subr.bf16.mxu0 0
      %624 = vmatpush1.bf16.msra.mxu0 %v592
      %625 = vmatprep.subr.bf16.mxu0 0
      %626 = vmatpush1.bf16.msra.mxu0 %v591
      %627 = vmatprep.subr.bf16.mxu0 0
      %628 = vmatpush1.bf16.msra.mxu0 %v590
      %629 = vmatprep.subr.bf16.mxu0 0
      %630 = vmatpush1.bf16.msra.mxu0 %v589
      %631 = vmatprep.subr.bf16.mxu0 0
      %632 = vmatpush1.bf16.msra.mxu0 %v588
      %633 = vmatprep.subr.bf16.mxu0 0
      %634 = vmatpush1.bf16.msra.mxu0 %v587
      %635 = vmatprep.subr.bf16.mxu0 0
      %636 = vmatpush2.bf16.msra.mxu0 %v602
      %637 = vmatprep.subr.bf16.mxu0 0
      %638 = vmatpush2.bf16.msra.mxu0 %v601
      %639 = vmatprep.subr.bf16.mxu0 0
      %640 = vmatpush2.bf16.msra.mxu0 %v600
      %641 = vmatprep.subr.bf16.mxu0 0
      %642 = vmatpush2.bf16.msra.mxu0 %v599
      %643 = vmatprep.subr.bf16.mxu0 0
      %644 = vmatpush2.bf16.msra.mxu0 %v598
      %645 = vmatprep.subr.bf16.mxu0 0
      %646 = vmatpush2.bf16.msra.mxu0 %v597
      %647 = vmatprep.subr.bf16.mxu0 0
      %648 = vmatpush2.bf16.msra.mxu0 %v596
      %649 = vmatprep.subr.bf16.mxu0 0
      %650 = vmatpush2.bf16.msra.mxu0 %v595
      %651 = vmatprep.mubr.bf16.mxu0 %v483
      %652 = vmatmul.mubr.bf16.gmra.mxu0 %v482
      %v653 = vpop.f32.mrf.mxu0
      %v654 = vadd.f32 %v521, %v653
      %v655 = vpop.f32.mrf.mxu0
      %v656 = vpop.f32.mrf.mxu0
      %v657 = vpop.f32.mrf.mxu0
      %658 = vdwg.mxu0
      %v659 = vadd.f32 %v654, %v329
      %v660 = vld [vmem:[%s5] sm:$0x1]
      %v661 = vld [vmem:[%s6] sm:$0x1]
      %662 = vadd.xlane.f32.xlu0 %v659
      %v663 = vpop.xlane.xlu0 %662
      %v664 = vrcp.pop 128.0
      %v665 = vmul.f32 %v663, %v664
      %v666 = vsub.f32 %v659, %v665
      %v667 = vmul.f32 %v666, %v666
      %668 = vadd.xlane.f32.xlu0 %v667
      %v669 = vpop.xlane.xlu0 %668
      %v670 = vmul.f32 %v669, %v664
      %v671 = vadd.f32 %v670, 1e-06
      %v672 = vrsqrt.pop %v671
      %v673 = vmul.f32 %v666, %v672
      %v675 = vlaneseq
      %v676 = vshrl.u32 %v675, 7
      %v677 = vsub.s32 0, %v676
      %v678 = vrot.slane %v660, %v677
      %v680 = vmul.f32 %v673, %v678
      %v682 = vlaneseq
      %v683 = vshrl.u32 %v682, 7
      %v684 = vsub.s32 0, %v683
      %v685 = vrot.slane %v661, %v684
      %v687 = vadd.f32 %v680, %v685
      %v688 = vadd.f32 %v329, %v687
      %v689 = vld [vmem:[%s7] sm:$0x1]
      %v690 = vld [vmem:[%s8] sm:$0x1]
      %691 = vadd.xlane.f32.xlu0 %v688
      %v692 = vpop.xlane.xlu0 %691
      %v693 = vmul.f32 %v692, %v664
      %v694 = vsub.f32 %v688, %v693
      %v695 = vmul.f32 %v694, %v694
      %696 = vadd.xlane.f32.xlu0 %v695
      %v697 = vpop.xlane.xlu0 %696
      %v698 = vmul.f32 %v697, %v664
      %v699 = vadd.f32 %v698, 1e-05
      %v700 = vrsqrt.pop %v699
      %v701 = vmul.f32 %v694, %v700
      %v703 = vlaneseq
      %v704 = vshrl.u32 %v703, 7
      %v705 = vsub.s32 0, %v704
      %v706 = vrot.slane %v689, %v705
      %v708 = vmul.f32 %v701, %v706
      %v710 = vlaneseq
      %v711 = vshrl.u32 %v710, 7
      %v712 = vsub.s32 0, %v711
      %v713 = vrot.slane %v690, %v712
      %v715 = vadd.f32 %v708, %v713
      %716 = vst [vmem:[%s327] sm:$0xff] %v715
      %p717 = scmp.lt.s32.totalorder %s20, 1
      %s718 = scalar_select %p717, %s20, 1
      %s719 = smul.addr %s718, 8
      %s720 = scalar_lea.vmem %s9, %s719
      // Predicated region
      $region57: #{_lambda_.12} parent=55 // pred_check
        %p721 = pneg %p232
      $region58: #{_lambda_.12} parent=55 // pred_check_branch
        %723 = sbr.rel (%p721) target = $region60
      $region59: #{_lambda_.12} parent=55 // pred_region
        _
      $region60: #{_lambda_.12} parent=55 // pred_fallthru
        _
    $region56: #{_lambda_.12} parent=5 // pred_fallthru
      _
    %p724 = scmp.le.s32.totalorder 2, %s15
    // Predicated region
    $region61: #{_lambda_.12} parent=5 // pred_check
      %p725 = pneg %p724
    $region62: #{_lambda_.12} parent=5 // pred_check_branch
      %727 = sbr.rel (%p725) target = $region64
    $region63: #{_lambda_.12} parent=5 // pred_region
      %s728 = ssub.s32 %s15, 2
      // Predicated region
      $region65: #{_lambda_.12} parent=63 // pred_check
        %p729 = pneg %p238
      $region66: #{_lambda_.12} parent=63 // pred_check_branch
        %731 = sbr.rel (%p729) target = $region68
      $region67: #{_lambda_.12} parent=63 // pred_region
        %p732 = scmp.lt.s32.totalorder %s21, 1
        %s733 = scalar_select %p732, %s21, 1
        %s734 = smul.addr %s733, 8
        %s735 = scalar_lea.vmem %s9, %s734
      $region68: #{_lambda_.12} parent=63 // pred_fallthru
        _
    $region64: #{_lambda_.12} parent=5 // pred_fallthru
      _
  $region6: #{_lambda_.12} parent=0 // loop_footer
    %s19 = sadd.s32 1, %s15
  $region7: #{_lambda_.12} parent=0 // loop_footer_branch
    %14 = sbr.rel target = $region3
  $region8: #{_lambda_.12} parent=0 // loop_exit
    _

// kernel: _lambda_.11
$region0: #{_lambda_.11}
  #allocation0 [shape = 'u32[]', space=smem, size = 0x4, offset = 0x4, fixed_abs, tag = 'smem constant byte address 0x4 - core index']
  #allocation1 [shape = 'u32[144,128]{1,0:T(1,128)}', space=vmem, size = 0x12000, scoped, tag = 'internal scratch']
  %s0 = inlined_call_operand.vmem [shape: f32[2,8,128], index: 0, kind: input, shape index: {}]
  %s1 = inlined_call_operand.vmem [shape: bf16[128,384], index: 1, kind: input, shape index: {}]
  %s2 = inlined_call_operand.vmem [shape: f32[1,384], index: 2, kind: input, shape index: {}]
  %s3 = inlined_call_operand.vmem [shape: bf16[128,128], index: 3, kind: input, shape index: {}]
  %s4 = inlined_call_operand.vmem [shape: f32[1,128], index: 4, kind: input, shape index: {}]
  %s5 = inlined_call_operand.vmem [shape: f32[1,128], index: 5, kind: input, shape index: {}]
  %s6 = inlined_call_operand.vmem [shape: f32[1,128], index: 6, kind: input, shape index: {}]
  %s7 = inlined_call_operand.vmem [shape: f32[2,8,128], index: 7, kind: output, shape index: {}]
  %s8 = sld [smem:[#allocation0]]
  $region61: #{_lambda_.11} parent=0
    _
  %s10 = ssub.s32 1, %s8
  %s11 = scalar_select 0, %s10, %s8
  loop: start=0, step=1, limit=4
  $region2: #{_lambda_.11} parent=0 // loop_pre_header
    _
  $region3: #{_lambda_.11} parent=0 // loop_header
    %s13 = sphi 0, %s17
    %p14 = scmp.ge.s32.totalorder %s13, 4
    %s23 = sphi 0, %s25
    %s26 = sphi 0, %s23
    %s27 = sphi 0, %s26
    %s43 = sphi 0, %s27
    %s47 = sphi 0, %s47
    %s49 = sphi 0, %s47
    %s50 = sphi 0, %s49
    %s64 = sphi 0, %s50
    %s68 = sphi 0, %s68
    %s70 = sphi 0, %s68
    %s71 = sphi 0, %s70
    %s85 = sphi 0, %s71
    %s89 = sphi 0, %s89
    %s91 = sphi 0, %s89
    %s92 = sphi 0, %s91
    %s106 = sphi 0, %s92
    %s110 = sphi 0, %s110
    %s112 = sphi 0, %s110
    %s113 = sphi 0, %s112
    %s127 = sphi 0, %s113
    %s131 = sphi 0, %s131
    %s133 = sphi 0, %s131
    %s134 = sphi 0, %s133
    %s148 = sphi 0, %s134
    %s152 = sphi 0, %s152
    %s154 = sphi 0, %s152
    %s155 = sphi 0, %s154
    %s169 = sphi 0, %s155
    %s175 = sphi 0, %s177
    %s178 = sphi 0, %s175
    %s179 = sphi 0, %s178
    %s195 = sphi 0, %s179
  $region4: #{_lambda_.11} parent=0 // loop_header_branch
    %16 = sbr.rel (%p14) target = $region8
  $region5: #{_lambda_.11} parent=0 // loop_body
    %s18 = ssub.s32 %s13, 1
    %s19 = ssub.s32 %s13, 2
    %s20 = sadd.s32 %s13, 1
    %s21 = ssub.s32 %s13, %s20
    %p22 = scmp.eq.s32.totalorder %s21, 0
    %s24 = sadd.s32 %s23, 1
    %s25 = scalar_select %p22, %s23, %s24
    %p28 = pneg %p22
    %p29 = scmp.eq.s32.totalorder %s13, 1
    %p30 = por %p28, %p29
    %p31 = scmp.ne.s32.totalorder %s23, %s26
    %p32 = scmp.eq.s32.totalorder %s13, 0
    %p33 = por %p31, %p32
    %p34 = scmp.ne.s32.totalorder %s23, %s26
    %p35 = scmp.eq.s32.totalorder %s18, 1
    %p36 = por %p34, %p35
    %p37 = scmp.ne.s32.totalorder %s26, %s27
    %p38 = scmp.eq.s32.totalorder %s18, 0
    %p39 = por %p37, %p38
    %p40 = scmp.ne.s32.totalorder %s26, %s27
    %p41 = scmp.eq.s32.totalorder %s19, 1
    %p42 = por %p40, %p41
    %p44 = scmp.ne.s32.totalorder %s27, %s43
    %p45 = scmp.eq.s32.totalorder %s19, 0
    %p46 = por %p44, %p45
    %s48 = sadd.s32 %s47, 1
    %p51 = scmp.eq.s32.totalorder %s13, 1
    %p52 = scmp.ne.s32.totalorder %s47, %s49
    %p53 = scmp.eq.s32.totalorder %s13, 0
    %p54 = por %p52, %p53
    %p55 = scmp.ne.s32.totalorder %s47, %s49
    %p56 = scmp.eq.s32.totalorder %s18, 1
    %p57 = por %p55, %p56
    %p58 = scmp.ne.s32.totalorder %s49, %s50
    %p59 = scmp.eq.s32.totalorder %s18, 0
    %p60 = por %p58, %p59
    %p61 = scmp.ne.s32.totalorder %s49, %s50
    %p62 = scmp.eq.s32.totalorder %s19, 1
    %p63 = por %p61, %p62
    %p65 = scmp.ne.s32.totalorder %s50, %s64
    %p66 = scmp.eq.s32.totalorder %s19, 0
    %p67 = por %p65, %p66
    %s69 = sadd.s32 %s68, 1
    %p72 = scmp.eq.s32.totalorder %s13, 1
    %p73 = scmp.ne.s32.totalorder %s68, %s70
    %p74 = scmp.eq.s32.totalorder %s13, 0
    %p75 = por %p73, %p74
    %p76 = scmp.ne.s32.totalorder %s68, %s70
    %p77 = scmp.eq.s32.totalorder %s18, 1
    %p78 = por %p76, %p77
    %p79 = scmp.ne.s32.totalorder %s70, %s71
    %p80 = scmp.eq.s32.totalorder %s18, 0
    %p81 = por %p79, %p80
    %p82 = scmp.ne.s32.totalorder %s70, %s71
    %p83 = scmp.eq.s32.totalorder %s19, 1
    %p84 = por %p82, %p83
    %p86 = scmp.ne.s32.totalorder %s71, %s85
    %p87 = scmp.eq.s32.totalorder %s19, 0
    %p88 = por %p86, %p87
    %s90 = sadd.s32 %s89, 1
    %p93 = scmp.eq.s32.totalorder %s13, 1
    %p94 = scmp.ne.s32.totalorder %s89, %s91
    %p95 = scmp.eq.s32.totalorder %s13, 0
    %p96 = por %p94, %p95
    %p97 = scmp.ne.s32.totalorder %s89, %s91
    %p98 = scmp.eq.s32.totalorder %s18, 1
    %p99 = por %p97, %p98
    %p100 = scmp.ne.s32.totalorder %s91, %s92
    %p101 = scmp.eq.s32.totalorder %s18, 0
    %p102 = por %p100, %p101
    %p103 = scmp.ne.s32.totalorder %s91, %s92
    %p104 = scmp.eq.s32.totalorder %s19, 1
    %p105 = por %p103, %p104
    %p107 = scmp.ne.s32.totalorder %s92, %s106
    %p108 = scmp.eq.s32.totalorder %s19, 0
    %p109 = por %p107, %p108
    %s111 = sadd.s32 %s110, 1
    %p114 = scmp.eq.s32.totalorder %s13, 1
    %p115 = scmp.ne.s32.totalorder %s110, %s112
    %p116 = scmp.eq.s32.totalorder %s13, 0
    %p117 = por %p115, %p116
    %p118 = scmp.ne.s32.totalorder %s110, %s112
    %p119 = scmp.eq.s32.totalorder %s18, 1
    %p120 = por %p118, %p119
    %p121 = scmp.ne.s32.totalorder %s112, %s113
    %p122 = scmp.eq.s32.totalorder %s18, 0
    %p123 = por %p121, %p122
    %p124 = scmp.ne.s32.totalorder %s112, %s113
    %p125 = scmp.eq.s32.totalorder %s19, 1
    %p126 = por %p124, %p125
    %p128 = scmp.ne.s32.totalorder %s113, %s127
    %p129 = scmp.eq.s32.totalorder %s19, 0
    %p130 = por %p128, %p129
    %s132 = sadd.s32 %s131, 1
    %p135 = scmp.eq.s32.totalorder %s13, 1
    %p136 = scmp.ne.s32.totalorder %s131, %s133
    %p137 = scmp.eq.s32.totalorder %s13, 0
    %p138 = por %p136, %p137
    %p139 = scmp.ne.s32.totalorder %s131, %s133
    %p140 = scmp.eq.s32.totalorder %s18, 1
    %p141 = por %p139, %p140
    %p142 = scmp.ne.s32.totalorder %s133, %s134
    %p143 = scmp.eq.s32.totalorder %s18, 0
    %p144 = por %p142, %p143
    %p145 = scmp.ne.s32.totalorder %s133, %s134
    %p146 = scmp.eq.s32.totalorder %s19, 1
    %p147 = por %p145, %p146
    %p149 = scmp.ne.s32.totalorder %s134, %s148
    %p150 = scmp.eq.s32.totalorder %s19, 0
    %p151 = por %p149, %p150
    %s153 = sadd.s32 %s152, 1
    %p156 = scmp.eq.s32.totalorder %s13, 1
    %p157 = scmp.ne.s32.totalorder %s152, %s154
    %p158 = scmp.eq.s32.totalorder %s13, 0
    %p159 = por %p157, %p158
    %p160 = scmp.ne.s32.totalorder %s152, %s154
    %p161 = scmp.eq.s32.totalorder %s18, 1
    %p162 = por %p160, %p161
    %p163 = scmp.ne.s32.totalorder %s154, %s155
    %p164 = scmp.eq.s32.totalorder %s18, 0
    %p165 = por %p163, %p164
    %p166 = scmp.ne.s32.totalorder %s154, %s155
    %p167 = scmp.eq.s32.totalorder %s19, 1
    %p168 = por %p166, %p167
    %p170 = scmp.ne.s32.totalorder %s155, %s169
    %p171 = scmp.eq.s32.totalorder %s19, 0
    %p172 = por %p170, %p171
    %s173 = ssub.s32 %s13, %s20
    %p174 = scmp.eq.s32.totalorder %s173, 0
    %s176 = sadd.s32 %s175, 1
    %s177 = scalar_select %p174, %s175, %s176
    %p180 = pneg %p174
    %p181 = scmp.eq.s32.totalorder %s13, 1
    %p182 = por %p180, %p181
    %p183 = scmp.ne.s32.totalorder %s175, %s178
    %p184 = scmp.eq.s32.totalorder %s13, 0
    %p185 = por %p183, %p184
    %p186 = scmp.ne.s32.totalorder %s175, %s178
    %p187 = scmp.eq.s32.totalorder %s18, 1
    %p188 = por %p186, %p187
    %p189 = scmp.ne.s32.totalorder %s178, %s179
    %p190 = scmp.eq.s32.totalorder %s18, 0
    %p191 = por %p189, %p190
    %p192 = scmp.ne.s32.totalorder %s178, %s179
    %p193 = scmp.eq.s32.totalorder %s19, 1
    %p194 = por %p192, %p193
    %p196 = scmp.ne.s32.totalorder %s179, %s195
    %p197 = scmp.eq.s32.totalorder %s19, 0
    %p198 = por %p196, %p197
    %p199 = scmp.le.s32.totalorder 1, %s13
    %p200 = scmp.lt.s32.totalorder %s13, 3
    %p201 = pnand %p199, %p200
    %p202 = pneg %p201
    // Predicated region
    $region9: #{_lambda_.11} parent=5 // pred_check
      _
    $region10: #{_lambda_.11} parent=5 // pred_check_branch
      %204 = sbr.rel (%p201) target = $region12
    $region11: #{_lambda_.11} parent=5 // pred_region
      %s205 = ssub.s32 %s13, 1
      // Predicated region
      $region13: #{_lambda_.11} parent=11 // pred_check
        %p206 = pneg %p60
      $region14: #{_lambda_.11} parent=11 // pred_check_branch
        %208 = sbr.rel (%p206) target = $region16
      $region15: #{_lambda_.11} parent=11 // pred_region
        _
      $region16: #{_lambda_.11} parent=11 // pred_fallthru
        _
      // Predicated region
      $region17: #{_lambda_.11} parent=11 // pred_check
        %p209 = pneg %p81
      $region18: #{_lambda_.11} parent=11 // pred_check_branch
        %211 = sbr.rel (%p209) target = $region20
      $region19: #{_lambda_.11} parent=11 // pred_region
        _
      $region20: #{_lambda_.11} parent=11 // pred_fallthru
        _
      // Predicated region
      $region21: #{_lambda_.11} parent=11 // pred_check
        %p212 = pneg %p102
      $region22: #{_lambda_.11} parent=11 // pred_check_branch
        %214 = sbr.rel (%p212) target = $region24
      $region23: #{_lambda_.11} parent=11 // pred_region
        _
      $region24: #{_lambda_.11} parent=11 // pred_fallthru
        _
      // Predicated region
      $region25: #{_lambda_.11} parent=11 // pred_check
        %p215 = pneg %p123
      $region26: #{_lambda_.11} parent=11 // pred_check_branch
        %217 = sbr.rel (%p215) target = $region28
      $region27: #{_lambda_.11} parent=11 // pred_region
        _
      $region28: #{_lambda_.11} parent=11 // pred_fallthru
        _
      // Predicated region
      $region29: #{_lambda_.11} parent=11 // pred_check
        %p218 = pneg %p144
      $region30: #{_lambda_.11} parent=11 // pred_check_branch
        %220 = sbr.rel (%p218) target = $region32
      $region31: #{_lambda_.11} parent=11 // pred_region
        _
      $region32: #{_lambda_.11} parent=11 // pred_fallthru
        _
      // Predicated region
      $region33: #{_lambda_.11} parent=11 // pred_check
        %p221 = pneg %p165
      $region34: #{_lambda_.11} parent=11 // pred_check_branch
        %223 = sbr.rel (%p221) target = $region36
      $region35: #{_lambda_.11} parent=11 // pred_region
        _
      $region36: #{_lambda_.11} parent=11 // pred_fallthru
        _
    $region12: #{_lambda_.11} parent=5 // pred_fallthru
      _
    %p224 = scmp.lt.s32.totalorder %s13, 2
    // Predicated region
    $region37: #{_lambda_.11} parent=5 // pred_check
      %p225 = pneg %p224
    $region38: #{_lambda_.11} parent=5 // pred_check_branch
      %227 = sbr.rel (%p225) target = $region40
    $region39: #{_lambda_.11} parent=5 // pred_region
      // Predicated region
      $region41: #{_lambda_.11} parent=39 // pred_check
        %p228 = pneg %p33
      $region42: #{_lambda_.11} parent=39 // pred_check_branch
        %230 = sbr.rel (%p228) target = $region44
      $region43: #{_lambda_.11} parent=39 // pred_region
        %p231 = scmp.lt.s32.totalorder %s13, 1
        %s232 = scalar_select %p231, %s13, 1
        %s233 = smul.addr %s232, 8
        %s234 = scalar_lea.vmem %s0, %s233
      $region44: #{_lambda_.11} parent=39 // pred_fallthru
        _
    $region40: #{_lambda_.11} parent=5 // pred_fallthru
      _
    %p235 = scmp.le.s32.totalorder 1, %s13
    %p236 = scmp.lt.s32.totalorder %s13, 3
    %p237 = pnand %p235, %p236
    %p238 = pneg %p237
    // Predicated region
    $region45: #{_lambda_.11} parent=5 // pred_check
      _
    $region46: #{_lambda_.11} parent=5 // pred_check_branch
      %240 = sbr.rel (%p237) target = $region48
    $region47: #{_lambda_.11} parent=5 // pred_region
      %s241 = ssub.s32 %s13, 1
      %p242 = scmp.lt.s32.totalorder %s18, 1
      %s243 = scalar_select %p242, %s18, 1
      %s244 = smul.addr %s243, 8
      %s245 = scalar_lea.vmem %s0, %s244
      %p246 = pneg %p39
      %p247 = pneg %p36
      %p248 = pneg %p60
      %p249 = pneg %p57
      %p250 = pneg %p81
      %p251 = pneg %p78
      %p252 = pneg %p102
      %p253 = pneg %p99
      %p254 = pneg %p123
      %p255 = pneg %p120
      %p256 = pneg %p144
      %p257 = pneg %p141
      %p258 = pneg %p165
      %p259 = pneg %p162
      %p260 = pneg %p191
      %p261 = pneg %p188
      %p262 = scmp.lt.s32.totalorder %s18, 1
      %s263 = scalar_select %p262, %s18, 1
      %s264 = smul.addr %s263, 8
      %s265 = scalar_lea.vmem %s7, %s264
      %p266 = scmp.lt.s32.totalorder %s18, 1
      %s267 = scalar_select %p266, %s18, 1
      %s268 = smul.addr %s267, 8
      %s269 = scalar_lea.vmem %s0, %s268
      %p270 = scmp.lt.s32.totalorder %s18, 1
      %s271 = scalar_select %p270, %s18, 1
      %s272 = smul.addr %s271, 8
      %s273 = scalar_lea.vmem %s7, %s272
      %v275 = vld [vmem:[%s269] sm:$0xff]
      %v276 = vpack.c.bf16 %v275, %v275
      %v277 = vld [vmem:[%s1] sm:$0xff]
      %v278 = vld [vmem:[%s1 + $0x8] sm:$0xf]
      %v279 = vld [vmem:[%s1 + $0xc] sm:$0xff]
      %v280 = vld [vmem:[%s1 + $0x14] sm:$0xf]
      %v281 = vld [vmem:[%s1 + $0x18] sm:$0xff]
      %v282 = vld [vmem:[%s1 + $0x20] sm:$0xf]
      %v283 = vld [vmem:[%s1 + $0x24] sm:$0xff]
      %v284 = vld [vmem:[%s1 + $0x2c] sm:$0xf]
      %v285 = vld [vmem:[%s1 + $0x30] sm:$0xff]
      %v286 = vld [vmem:[%s1 + $0x38] sm:$0xf]
      %v287 = vld [vmem:[%s1 + $0x3c] sm:$0xff]
      %v288 = vld [vmem:[%s1 + $0x44] sm:$0xf]
      %v289 = vld [vmem:[%s1 + $0x48] sm:$0xff]
      %v290 = vld [vmem:[%s1 + $0x50] sm:$0xf]
      %v291 = vld [vmem:[%s1 + $0x54] sm:$0xff]
      %v292 = vld [vmem:[%s1 + $0x5c] sm:$0xf]
      %v293 = vld [vmem:[%s1 + $0x60] sm:$0xff]
      %v294 = vld [vmem:[%s1 + $0x68] sm:$0xf]
      %v295 = vld [vmem:[%s1 + $0x6c] sm:$0xff]
      %v296 = vld [vmem:[%s1 + $0x74] sm:$0xf]
      %v297 = vld [vmem:[%s1 + $0x78] sm:$0xff]
      %v298 = vld [vmem:[%s1 + $0x80] sm:$0xf]
      %v299 = vld [vmem:[%s1 + $0x84] sm:$0xff]
      %v300 = vld [vmem:[%s1 + $0x8c] sm:$0xf]
      %v301 = vld [vmem:[%s1 + $0x90] sm:$0xff]
      %v302 = vld [vmem:[%s1 + $0x98] sm:$0xf]
      %v303 = vld [vmem:[%s1 + $0x9c] sm:$0xff]
      %v304 = vld [vmem:[%s1 + $0xa4] sm:$0xf]
      %v305 = vld [vmem:[%s1 + $0xa8] sm:$0xff]
      %v306 = vld [vmem:[%s1 + $0xb0] sm:$0xf]
      %v307 = vld [vmem:[%s1 + $0xb4] sm:$0xff]
      %v308 = vld [vmem:[%s1 + $0xbc] sm:$0xf]
      %v309 = vld [vmem:[%s2] sm:$0x7]
      %v311 = vlaneseq
      %v312 = vshrl.u32 %v311, 7
      %v313 = vsub.s32 0, %v312
      %v314 = vrot.slane %v309, %v313
      %v315 = vlaneseq
      %v316 = vshrl.u32 %v315, 7
      %v317 = vsub.s32 1, %v316
      %v318 = vrot.slane %v309, %v317
      %v319 = vlaneseq
      %v320 = vshrl.u32 %v319, 7
      %v321 = vsub.s32 2, %v320
      %v322 = vrot.slane %v309, %v321
      %v358 = vunpack.c.l.b16 %v277
      %v359 = vunpack.c.h.b16 %v277
      %v360 = vunpack.c.l.b16 %v278
      %v361 = vunpack.c.l.b16 %v279
      %v362 = vunpack.c.h.b16 %v279
      %v363 = vunpack.c.l.b16 %v280
      %v364 = vunpack.c.l.b16 %v281
      %v365 = vunpack.c.h.b16 %v281
      %v366 = vunpack.c.l.b16 %v282
      %v367 = vunpack.c.l.b16 %v283
      %v368 = vunpack.c.h.b16 %v283
      %v369 = vunpack.c.l.b16 %v284
      %v370 = vunpack.c.l.b16 %v285
      %v371 = vunpack.c.h.b16 %v285
      %v372 = vunpack.c.l.b16 %v286
      %v373 = vunpack.c.l.b16 %v287
      %v374 = vunpack.c.h.b16 %v287
      %v375 = vunpack.c.l.b16 %v288
      %v376 = vunpack.c.l.b16 %v289
      %v377 = vunpack.c.h.b16 %v289
      %v378 = vunpack.c.l.b16 %v290
      %v379 = vunpack.c.l.b16 %v291
      %v380 = vunpack.c.h.b16 %v291
      %v381 = vunpack.c.l.b16 %v292
      %v382 = vunpack.c.l.b16 %v293
      %v383 = vunpack.c.h.b16 %v293
      %v384 = vunpack.c.l.b16 %v294
      %v385 = vunpack.c.l.b16 %v295
      %v386 = vunpack.c.h.b16 %v295
      %v387 = vunpack.c.l.b16 %v296
      %v388 = vunpack.c.l.b16 %v297
      %v389 = vunpack.c.h.b16 %v297
      %v390 = vunpack.c.l.b16 %v298
      %v391 = vunpack.c.l.b16 %v299
      %v392 = vunpack.c.h.b16 %v299
      %v393 = vunpack.c.l.b16 %v300
      %v394 = vunpack.c.l.b16 %v301
      %v395 = vunpack.c.h.b16 %v301
      %v396 = vunpack.c.l.b16 %v302
      %v397 = vunpack.c.l.b16 %v303
      %v398 = vunpack.c.h.b16 %v303
      %v399 = vunpack.c.l.b16 %v304
      %v400 = vunpack.c.l.b16 %v305
      %v401 = vunpack.c.h.b16 %v305
      %v402 = vunpack.c.l.b16 %v306
      %v403 = vunpack.c.l.b16 %v307
      %v404 = vunpack.c.h.b16 %v307
      %v405 = vunpack.c.l.b16 %v308
      %v406 = vpack.c.b16 %v361, %v358
      %v407 = vpack.c.b16 %v362, %v359
      %v408 = vpack.c.b16 %v363, %v360
      %v409 = vpack.c.b16 %v367, %v364
      %v410 = vpack.c.b16 %v368, %v365
      %v411 = vpack.c.b16 %v369, %v366
      %v412 = vpack.c.b16 %v373, %v370
      %v413 = vpack.c.b16 %v374, %v371
      %v414 = vpack.c.b16 %v375, %v372
      %v415 = vpack.c.b16 %v379, %v376
      %v416 = vpack.c.b16 %v380, %v377
      %v417 = vpack.c.b16 %v381, %v378
      %v418 = vpack.c.b16 %v385, %v382
      %v419 = vpack.c.b16 %v386, %v383
      %v420 = vpack.c.b16 %v387, %v384
      %v421 = vpack.c.b16 %v391, %v388
      %v422 = vpack.c.b16 %v392, %v389
      %v423 = vpack.c.b16 %v393, %v390
      %v424 = vpack.c.b16 %v397, %v394
      %v425 = vpack.c.b16 %v398, %v395
      %v426 = vpack.c.b16 %v399, %v396
      %v427 = vpack.c.b16 %v403, %v400
      %v428 = vpack.c.b16 %v404, %v401
      %v429 = vpack.c.b16 %v405, %v402
      %454 = vmatprep.subr.bf16.mxu0 %v428
      %455 = vmatpush1.bf16.msra.mxu0 %v427
      %456 = vmatprep.subr.bf16.mxu0 %v425
      %457 = vmatpush1.bf16.msra.mxu0 %v424
      %458 = vmatprep.subr.bf16.mxu0 %v422
      %459 = vmatpush1.bf16.msra.mxu0 %v421
      %460 = vmatprep.subr.bf16.mxu0 %v419
      %461 = vmatpush1.bf16.msra.mxu0 %v418
      %462 = vmatprep.subr.bf16.mxu0 %v416
      %463 = vmatpush1.bf16.msra.mxu0 %v415
      %464 = vmatprep.subr.bf16.mxu0 %v413
      %465 = vmatpush1.bf16.msra.mxu0 %v412
      %466 = vmatprep.subr.bf16.mxu0 %v410
      %467 = vmatpush1.bf16.msra.mxu0 %v409
      %468 = vmatprep.subr.bf16.mxu0 %v407
      %469 = vmatpush1.bf16.msra.mxu0 %v406
      %470 = vmatprep.subr.bf16.mxu0 0
      %471 = vmatpush2.bf16.msra.mxu0 0
      %472 = vmatprep.subr.bf16.mxu0 0
      %473 = vmatpush2.bf16.msra.mxu0 0
      %474 = vmatprep.subr.bf16.mxu0 0
      %475 = vmatpush2.bf16.msra.mxu0 0
      %476 = vmatprep.subr.bf16.mxu0 0
      %477 = vmatpush2.bf16.msra.mxu0 0
      %478 = vmatprep.subr.bf16.mxu0 0
      %479 = vmatpush2.bf16.msra.mxu0 0
      %480 = vmatprep.subr.bf16.mxu0 0
      %481 = vmatpush2.bf16.msra.mxu0 0
      %482 = vmatprep.subr.bf16.mxu0 0
      %483 = vmatpush2.bf16.msra.mxu0 0
      %484 = vmatprep.subr.bf16.mxu0 0
      %485 = vmatpush2.bf16.msra.mxu0 0
      %486 = vmatprep.mubr.bf16.mxu0 0
      %487 = vmatmul.mubr.bf16.gmra.mxu0 %v276
      %v488 = vpop.f32.mrf.mxu0
      %v489 = vadd.f32 %v314, %v488
      %v490 = vpop.f32.mrf.mxu0
      %v491 = vadd.f32 %v318, %v490
      %v492 = vpop.f32.mrf.mxu0
      %v493 = vpop.f32.mrf.mxu0
      %494 = vdwg.mxu0
      %495 = vmatprep.subr.bf16.mxu0 0
      %496 = vmatpush1.bf16.msra.mxu0 %v429
      %497 = vmatprep.subr.bf16.mxu0 0
      %498 = vmatpush1.bf16.msra.mxu0 %v426
      %499 = vmatprep.subr.bf16.mxu0 0
      %500 = vmatpush1.bf16.msra.mxu0 %v423
      %501 = vmatprep.subr.bf16.mxu0 0
      %502 = vmatpush1.bf16.msra.mxu0 %v420
      %503 = vmatprep.subr.bf16.mxu0 0
      %504 = vmatpush1.bf16.msra.mxu0 %v417
      %505 = vmatprep.subr.bf16.mxu0 0
      %506 = vmatpush1.bf16.msra.mxu0 %v414
      %507 = vmatprep.subr.bf16.mxu0 0
      %508 = vmatpush1.bf16.msra.mxu0 %v411
      %509 = vmatprep.subr.bf16.mxu0 0
      %510 = vmatpush1.bf16.msra.mxu0 %v408
      %511 = vmatprep.subr.bf16.mxu0 0
      %512 = vmatpush2.bf16.msra.mxu0 0
      %513 = vmatprep.subr.bf16.mxu0 0
      %514 = vmatpush2.bf16.msra.mxu0 0
      %515 = vmatprep.subr.bf16.mxu0 0
      %516 = vmatpush2.bf16.msra.mxu0 0
      %517 = vmatprep.subr.bf16.mxu0 0
      %518 = vmatpush2.bf16.msra.mxu0 0
      %519 = vmatprep.subr.bf16.mxu0 0
      %520 = vmatpush2.bf16.msra.mxu0 0
      %521 = vmatprep.subr.bf16.mxu0 0
      %522 = vmatpush2.bf16.msra.mxu0 0
      %523 = vmatprep.subr.bf16.mxu0 0
      %524 = vmatpush2.bf16.msra.mxu0 0
      %525 = vmatprep.subr.bf16.mxu0 0
      %526 = vmatpush2.bf16.msra.mxu0 0
      %527 = vmatprep.mubr.bf16.mxu0 0
      %528 = vmatmul.mubr.bf16.gmra.mxu0 %v276
      %v529 = vpop.f32.mrf.mxu0
      %v530 = vadd.f32 %v322, %v529
      %v531 = vpop.f32.mrf.mxu0
      %v532 = vpop.f32.mrf.mxu0
      %v533 = vpop.f32.mrf.mxu0
      %534 = vdwg.mxu0
      %v535 = vmax.f32 %v489, 0.0
      %v536 = vmax.f32 %v491, 0.0
      %v537 = vmax.f32 %v530, 0.0
      %v538 = vpack.c.bf16 %v535, %v535
      %v539 = vpack.c.bf16 %v536, %v536
      %vm540 = vcmask 261120
      %v542 = vsel %vm540, %v538, 0
      %v545 = vsel %vm540, %v539, 0
      %547 = vmatprep.subr.bf16.mxu0 0
      %548 = vmatpush1.bf16.xpose.msra.mxu0 0
      %549 = vmatprep.subr.bf16.mxu0 0
      %550 = vmatpush1.bf16.xpose.msra.mxu0 0
      %551 = vmatprep.subr.bf16.mxu0 0
      %552 = vmatpush1.bf16.xpose.msra.mxu0 0
      %553 = vmatprep.subr.bf16.mxu0 0
      %554 = vmatpush1.bf16.xpose.msra.mxu0 0
      %555 = vmatprep.subr.bf16.mxu0 0
      %556 = vmatpush1.bf16.xpose.msra.mxu0 0
      %557 = vmatprep.subr.bf16.mxu0 0
      %558 = vmatpush1.bf16.xpose.msra.mxu0 0
      %559 = vmatprep.subr.bf16.mxu0 0
      %560 = vmatpush1.bf16.xpose.msra.mxu0 0
      %561 = vmatprep.subr.bf16.mxu0 0
      %562 = vmatpush1.bf16.xpose.msra.mxu0 %v545
      %563 = vmatprep.subr.bf16.mxu0 0
      %564 = vmatpush2.bf16.xpose.msra.mxu0 0
      %565 = vmatprep.subr.bf16.mxu0 0
      %566 = vmatpush2.bf16.xpose.msra.mxu0 0
      %567 = vmatprep.subr.bf16.mxu0 0
      %568 = vmatpush2.bf16.xpose.msra.mxu0 0
      %569 = vmatprep.subr.bf16.mxu0 0
      %570 = vmatpush2.bf16.xpose.msra.mxu0 0
      %571 = vmatprep.subr.bf16.mxu0 0
      %572 = vmatpush2.bf16.xpose.msra.mxu0 0
      %573 = vmatprep.subr.bf16.mxu0 0
      %574 = vmatpush2.bf16.xpose.msra.mxu0 0
      %575 = vmatprep.subr.bf16.mxu0 0
      %576 = vmatpush2.bf16.xpose.msra.mxu0 0
      %577 = vmatprep.subr.bf16.mxu0 0
      %578 = vmatpush2.bf16.xpose.msra.mxu0 0
      %579 = vmatprep.mubr.bf16.mxu0 0
      %580 = vmatmul.mubr.bf16.gmra.mxu0 %v542
      %v581 = vpop.f32.mrf.mxu0
      %v582 = vadd.f32 0.0, %v581
      %v583 = vpop.f32.mrf.mxu0
      %v584 = vpop.f32.mrf.mxu0
      %v585 = vpop.f32.mrf.mxu0
      %586 = vdwg.mxu0
      %v587 = vmul.f32 %v582, 0.17677669
      %v588 = vsel %vm540, %v536, 0.0
      %589 = vadd.xlane.f32.xlu0 %v588
      %v590 = vpop.xlane.xlu0 %589
      %591 = vxpose.xlu0.b32.start [1/16] %v590, 128
      %592 = vxpose.xlu0.b32.cont [2/16] 0.0, 128
      %593 = vxpose.xlu0.b32.cont [3/16] 0.0, 128
      %594 = vxpose.xlu0.b32.cont [4/16] 0.0, 128
      %595 = vxpose.xlu0.b32.cont [5/16] 0.0, 128
      %596 = vxpose.xlu0.b32.cont [6/16] 0.0, 128
      %597 = vxpose.xlu0.b32.cont [7/16] 0.0, 128
      %598 = vxpose.xlu0.b32.cont [8/16] 0.0, 128
      %599 = vxpose.xlu0.b32.cont [9/16] 0.0, 128
      %600 = vxpose.xlu0.b32.cont [10/16] 0.0, 128
      %601 = vxpose.xlu0.b32.cont [11/16] 0.0, 128
      %602 = vxpose.xlu0.b32.cont [12/16] 0.0, 128
      %603 = vxpose.xlu0.b32.cont [13/16] 0.0, 128
      %604 = vxpose.xlu0.b32.cont [14/16] 0.0, 128
      %605 = vxpose.xlu0.b32.cont [15/16] 0.0, 128
      %606 = vxpose.xlu0.b32.end [16/16] 0.0, 128
      %v607 = vpop.trf.xlu0
      %v608 = vpop.trf.xlu0
      %v609 = vpop.trf.xlu0
      %v610 = vpop.trf.xlu0
      %v611 = vpop.trf.xlu0
      %v612 = vpop.trf.xlu0
      %v613 = vpop.trf.xlu0
      %v614 = vpop.trf.xlu0
      %v615 = vpop.trf.xlu0
      %v616 = vpop.trf.xlu0
      %v617 = vpop.trf.xlu0
      %v618 = vpop.trf.xlu0
      %v619 = vpop.trf.xlu0
      %v620 = vpop.trf.xlu0
      %v621 = vpop.trf.xlu0
      %v622 = vpop.trf.xlu0
      %vm623 = vcmp.eq.f32.partialorder %v607, 0.0
      %v624 = vsel %vm623, 1, 0
      %v625 = vlaneseq
      %v626 = vshrl.u32 %v625, 7
      %v627 = vsub.s32 0, %v626
      %v628 = vrot.slane %v624, %v627
      %vm629 = vcmp.eq.s32.totalorder %v628, 1
      %v630 = vsel %vm629, -4.2949673e+09, %v587
      %vm631 = vcmask 64512
      %v632 = vsel %vm631, %v630, -inf
      %633 = vmax.xlane.f32.xlu0 %v632
      %v634 = vpop.xlane.xlu0 %633
      %v635 = vsub.f32 %v630, %v634
      %v636 = vmul.f32 %v635, 1.442695
      %v637 = vpow.pop %v636
      %v638 = vsel %vm631, %v637, 0.0
      %639 = vadd.xlane.f32.xlu0 %v638
      %v640 = vpop.xlane.xlu0 %639
      %v641 = vrcp.pop %v640
      %v642 = vmul.f32 %v637, %v641
      %v643 = vpack.c.bf16 %v642, %v642
      %v644 = vpack.c.bf16 %v537, %v537
      %v646 = vsel %vm631, %v643, 0
      %vm648 = vcmask 1043456
      %v650 = vsel %vm648, %v644, 0
      %652 = vmatprep.subr.bf16.mxu0 0
      %653 = vmatpush1.bf16.msra.mxu0 0
      %654 = vmatprep.subr.bf16.mxu0 0
      %655 = vmatpush1.bf16.msra.mxu0 0
      %656 = vmatprep.subr.bf16.mxu0 0
      %657 = vmatpush1.bf16.msra.mxu0 0
      %658 = vmatprep.subr.bf16.mxu0 0
      %659 = vmatpush1.bf16.msra.mxu0 0
      %660 = vmatprep.subr.bf16.mxu0 0
      %661 = vmatpush1.bf16.msra.mxu0 0
      %662 = vmatprep.subr.bf16.mxu0 0
      %663 = vmatpush1.bf16.msra.mxu0 0
      %664 = vmatprep.subr.bf16.mxu0 0
      %665 = vmatpush1.bf16.msra.mxu0 0
      %666 = vmatprep.subr.bf16.mxu0 0
      %667 = vmatpush1.bf16.msra.mxu0 %v650
      %668 = vmatprep.subr.bf16.mxu0 0
      %669 = vmatpush2.bf16.msra.mxu0 0
      %670 = vmatprep.subr.bf16.mxu0 0
      %671 = vmatpush2.bf16.msra.mxu0 0
      %672 = vmatprep.subr.bf16.mxu0 0
      %673 = vmatpush2.bf16.msra.mxu0 0
      %674 = vmatprep.subr.bf16.mxu0 0
      %675 = vmatpush2.bf16.msra.mxu0 0
      %676 = vmatprep.subr.bf16.mxu0 0
      %677 = vmatpush2.bf16.msra.mxu0 0
      %678 = vmatprep.subr.bf16.mxu0 0
      %679 = vmatpush2.bf16.msra.mxu0 0
      %680 = vmatprep.subr.bf16.mxu0 0
      %681 = vmatpush2.bf16.msra.mxu0 0
      %682 = vmatprep.subr.bf16.mxu0 0
      %683 = vmatpush2.bf16.msra.mxu0 0
      %684 = vmatprep.mubr.bf16.mxu0 0
      %685 = vmatmul.mubr.bf16.gmra.mxu0 %v646
      %v686 = vpop.f32.mrf.mxu0
      %v687 = vadd.f32 0.0, %v686
      %v688 = vpop.f32.mrf.mxu0
      %v689 = vpop.f32.mrf.mxu0
      %v690 = vpop.f32.mrf.mxu0
      %691 = vdwg.mxu0
      %693 = vrot.lane.b32.xlu0 %v538, 96
      %v694 = vpop.permute.xlu0 %693
      %696 = vrot.lane.b32.xlu0 %v539, 96
      %v697 = vpop.permute.xlu0 %696
      %v699 = vsel %vm540, %v694, 0
      %v702 = vsel %vm540, %v697, 0
      %704 = vmatprep.subr.bf16.mxu0 0
      %705 = vmatpush1.bf16.xpose.msra.mxu0 0
      %706 = vmatprep.subr.bf16.mxu0 0
      %707 = vmatpush1.bf16.xpose.msra.mxu0 0
      %708 = vmatprep.subr.bf16.mxu0 0
      %709 = vmatpush1.bf16.xpose.msra.mxu0 0
      %710 = vmatprep.subr.bf16.mxu0 0
      %711 = vmatpush1.bf16.xpose.msra.mxu0 0
      %712 = vmatprep.subr.bf16.mxu0 0
      %713 = vmatpush1.bf16.xpose.msra.mxu0 0
      %714 = vmatprep.subr.bf16.mxu0 0
      %715 = vmatpush1.bf16.xpose.msra.mxu0 0
      %716 = vmatprep.subr.bf16.mxu0 0
      %717 = vmatpush1.bf16.xpose.msra.mxu0 0
      %718 = vmatprep.subr.bf16.mxu0 0
      %719 = vmatpush1.bf16.xpose.msra.mxu0 %v702
      %720 = vmatprep.subr.bf16.mxu0 0
      %721 = vmatpush2.bf16.xpose.msra.mxu0 0
      %722 = vmatprep.subr.bf16.mxu0 0
      %723 = vmatpush2.bf16.xpose.msra.mxu0 0
      %724 = vmatprep.subr.bf16.mxu0 0
      %725 = vmatpush2.bf16.xpose.msra.mxu0 0
      %726 = vmatprep.subr.bf16.mxu0 0
      %727 = vmatpush2.bf16.xpose.msra.mxu0 0
      %728 = vmatprep.subr.bf16.mxu0 0
      %729 = vmatpush2.bf16.xpose.msra.mxu0 0
      %730 = vmatprep.subr.bf16.mxu0 0
      %731 = vmatpush2.bf16.xpose.msra.mxu0 0
      %732 = vmatprep.subr.bf16.mxu0 0
      %733 = vmatpush2.bf16.xpose.msra.mxu0 0
      %734 = vmatprep.subr.bf16.mxu0 0
      %735 = vmatpush2.bf16.xpose.msra.mxu0 0
      %736 = vmatprep.mubr.bf16.mxu0 0
      %737 = vmatmul.mubr.bf16.gmra.mxu0 %v699
      %v738 = vpop.f32.mrf.mxu0
      %v739 = vadd.f32 0.0, %v738
      %v740 = vpop.f32.mrf.mxu0
      %v741 = vpop.f32.mrf.mxu0
      %v742 = vpop.f32.mrf.mxu0
      %743 = vdwg.mxu0
      %v744 = vmul.f32 %v739, 0.17677669
      %746 = vrot.lane.b32.xlu0 %v536, 96
      %v747 = vpop.permute.xlu0 %746
      %v749 = vsel %vm540, %v747, 0.0
      %750 = vadd.xlane.f32.xlu0 %v749
      %v751 = vpop.xlane.xlu0 %750
      %752 = vxpose.xlu0.b32.start [1/16] %v751, 128
      %753 = vxpose.xlu0.b32.cont [2/16] 0.0, 128
      %754 = vxpose.xlu0.b32.cont [3/16] 0.0, 128
      %755 = vxpose.xlu0.b32.cont [4/16] 0.0, 128
      %756 = vxpose.xlu0.b32.cont [5/16] 0.0, 128
      %757 = vxpose.xlu0.b32.cont [6/16] 0.0, 128
      %758 = vxpose.xlu0.b32.cont [7/16] 0.0, 128
      %759 = vxpose.xlu0.b32.cont [8/16] 0.0, 128
      %760 = vxpose.xlu0.b32.cont [9/16] 0.0, 128
      %761 = vxpose.xlu0.b32.cont [10/16] 0.0, 128
      %762 = vxpose.xlu0.b32.cont [11/16] 0.0, 128
      %763 = vxpose.xlu0.b32.cont [12/16] 0.0, 128
      %764 = vxpose.xlu0.b32.cont [13/16] 0.0, 128
      %765 = vxpose.xlu0.b32.cont [14/16] 0.0, 128
      %766 = vxpose.xlu0.b32.cont [15/16] 0.0, 128
      %767 = vxpose.xlu0.b32.end [16/16] 0.0, 128
      %v768 = vpop.trf.xlu0
      %v769 = vpop.trf.xlu0
      %v770 = vpop.trf.xlu0
      %v771 = vpop.trf.xlu0
      %v772 = vpop.trf.xlu0
      %v773 = vpop.trf.xlu0
      %v774 = vpop.trf.xlu0
      %v775 = vpop.trf.xlu0
      %v776 = vpop.trf.xlu0
      %v777 = vpop.trf.xlu0
      %v778 = vpop.trf.xlu0
      %v779 = vpop.trf.xlu0
      %v780 = vpop.trf.xlu0
      %v781 = vpop.trf.xlu0
      %v782 = vpop.trf.xlu0
      %v783 = vpop.trf.xlu0
      %vm784 = vcmp.eq.f32.partialorder %v768, 0.0
      %v785 = vsel %vm784, 1, 0
      %v786 = vlaneseq
      %v787 = vshrl.u32 %v786, 7
      %v788 = vsub.s32 0, %v787
      %v789 = vrot.slane %v785, %v788
      %vm790 = vcmp.eq.s32.totalorder %v789, 1
      %v791 = vsel %vm790, -4.2949673e+09, %v744
      %v792 = vsel %vm631, %v791, -inf
      %793 = vmax.xlane.f32.xlu0 %v792
      %v794 = vpop.xlane.xlu0 %793
      %v795 = vsub.f32 %v791, %v794
      %v796 = vmul.f32 %v795, 1.442695
      %v797 = vpow.pop %v796
      %v798 = vsel %vm631, %v797, 0.0
      %799 = vadd.xlane.f32.xlu0 %v798
      %v800 = vpop.xlane.xlu0 %799
      %v801 = vrcp.pop %v800
      %v802 = vmul.f32 %v797, %v801
      %v803 = vpack.c.bf16 %v802, %v802
      %805 = vrot.lane.b32.xlu0 %v644, 96
      %v806 = vpop.permute.xlu0 %805
      %v808 = vsel %vm631, %v803, 0
      %v811 = vsel %vm648, %v806, 0
      %813 = vmatprep.subr.bf16.mxu0 0
      %814 = vmatpush1.bf16.msra.mxu0 0
      %815 = vmatprep.subr.bf16.mxu0 0
      %816 = vmatpush1.bf16.msra.mxu0 0
      %817 = vmatprep.subr.bf16.mxu0 0
      %818 = vmatpush1.bf16.msra.mxu0 0
      %819 = vmatprep.subr.bf16.mxu0 0
      %820 = vmatpush1.bf16.msra.mxu0 0
      %821 = vmatprep.subr.bf16.mxu0 0
      %822 = vmatpush1.bf16.msra.mxu0 0
      %823 = vmatprep.subr.bf16.mxu0 0
      %824 = vmatpush1.bf16.msra.mxu0 0
      %825 = vmatprep.subr.bf16.mxu0 0
      %826 = vmatpush1.bf16.msra.mxu0 0
      %827 = vmatprep.subr.bf16.mxu0 0
      %828 = vmatpush1.bf16.msra.mxu0 %v811
      %829 = vmatprep.subr.bf16.mxu0 0
      %830 = vmatpush2.bf16.msra.mxu0 0
      %831 = vmatprep.subr.bf16.mxu0 0
      %832 = vmatpush2.bf16.msra.mxu0 0
      %833 = vmatprep.subr.bf16.mxu0 0
      %834 = vmatpush2.bf16.msra.mxu0 0
      %835 = vmatprep.subr.bf16.mxu0 0
      %836 = vmatpush2.bf16.msra.mxu0 0
      %837 = vmatprep.subr.bf16.mxu0 0
      %838 = vmatpush2.bf16.msra.mxu0 0
      %839 = vmatprep.subr.bf16.mxu0 0
      %840 = vmatpush2.bf16.msra.mxu0 0
      %841 = vmatprep.subr.bf16.mxu0 0
      %842 = vmatpush2.bf16.msra.mxu0 0
      %843 = vmatprep.subr.bf16.mxu0 0
      %844 = vmatpush2.bf16.msra.mxu0 0
      %845 = vmatprep.mubr.bf16.mxu0 0
      %846 = vmatmul.mubr.bf16.gmra.mxu0 %v808
      %v847 = vpop.f32.mrf.mxu0
      %v848 = vadd.f32 0.0, %v847
      %v849 = vpop.f32.mrf.mxu0
      %v850 = vpop.f32.mrf.mxu0
      %v851 = vpop.f32.mrf.mxu0
      %852 = vdwg.mxu0
      %853 = vrot.lane.b32.xlu0 %v538, 64
      %v854 = vpop.permute.xlu0 %853
      %855 = vrot.lane.b32.xlu0 %v539, 64
      %v856 = vpop.permute.xlu0 %855
      %v858 = vsel %vm540, %v854, 0
      %v861 = vsel %vm540, %v856, 0
      %863 = vmatprep.subr.bf16.mxu0 0
      %864 = vmatpush1.bf16.xpose.msra.mxu0 0
      %865 = vmatprep.subr.bf16.mxu0 0
      %866 = vmatpush1.bf16.xpose.msra.mxu0 0
      %867 = vmatprep.subr.bf16.mxu0 0
      %868 = vmatpush1.bf16.xpose.msra.mxu0 0
      %869 = vmatprep.subr.bf16.mxu0 0
      %870 = vmatpush1.bf16.xpose.msra.mxu0 0
      %871 = vmatprep.subr.bf16.mxu0 0
      %872 = vmatpush1.bf16.xpose.msra.mxu0 0
      %873 = vmatprep.subr.bf16.mxu0 0
      %874 = vmatpush1.bf16.xpose.msra.mxu0 0
      %875 = vmatprep.subr.bf16.mxu0 0
      %876 = vmatpush1.bf16.xpose.msra.mxu0 0
      %877 = vmatprep.subr.bf16.mxu0 0
      %878 = vmatpush1.bf16.xpose.msra.mxu0 %v861
      %879 = vmatprep.subr.bf16.mxu0 0
      %880 = vmatpush2.bf16.xpose.msra.mxu0 0
      %881 = vmatprep.subr.bf16.mxu0 0
      %882 = vmatpush2.bf16.xpose.msra.mxu0 0
      %883 = vmatprep.subr.bf16.mxu0 0
      %884 = vmatpush2.bf16.xpose.msra.mxu0 0
      %885 = vmatprep.subr.bf16.mxu0 0
      %886 = vmatpush2.bf16.xpose.msra.mxu0 0
      %887 = vmatprep.subr.bf16.mxu0 0
      %888 = vmatpush2.bf16.xpose.msra.mxu0 0
      %889 = vmatprep.subr.bf16.mxu0 0
      %890 = vmatpush2.bf16.xpose.msra.mxu0 0
      %891 = vmatprep.subr.bf16.mxu0 0
      %892 = vmatpush2.bf16.xpose.msra.mxu0 0
      %893 = vmatprep.subr.bf16.mxu0 0
      %894 = vmatpush2.bf16.xpose.msra.mxu0 0
      %895 = vmatprep.mubr.bf16.mxu0 0
      %896 = vmatmul.mubr.bf16.gmra.mxu0 %v858
      %v897 = vpop.f32.mrf.mxu0
      %v898 = vadd.f32 0.0, %v897
      %v899 = vpop.f32.mrf.mxu0
      %v900 = vpop.f32.mrf.mxu0
      %v901 = vpop.f32.mrf.mxu0
      %902 = vdwg.mxu0
      %v903 = vmul.f32 %v898, 0.17677669
      %904 = vrot.lane.b32.xlu0 %v536, 64
      %v905 = vpop.permute.xlu0 %904
      %v907 = vsel %vm540, %v905, 0.0
      %908 = vadd.xlane.f32.xlu0 %v907
      %v909 = vpop.xlane.xlu0 %908
      %910 = vxpose.xlu0.b32.start [1/16] %v909, 128
      %911 = vxpose.xlu0.b32.cont [2/16] 0.0, 128
      %912 = vxpose.xlu0.b32.cont [3/16] 0.0, 128
      %913 = vxpose.xlu0.b32.cont [4/16] 0.0, 128
      %914 = vxpose.xlu0.b32.cont [5/16] 0.0, 128
      %915 = vxpose.xlu0.b32.cont [6/16] 0.0, 128
      %916 = vxpose.xlu0.b32.cont [7/16] 0.0, 128
      %917 = vxpose.xlu0.b32.cont [8/16] 0.0, 128
      %918 = vxpose.xlu0.b32.cont [9/16] 0.0, 128
      %919 = vxpose.xlu0.b32.cont [10/16] 0.0, 128
      %920 = vxpose.xlu0.b32.cont [11/16] 0.0, 128
      %921 = vxpose.xlu0.b32.cont [12/16] 0.0, 128
      %922 = vxpose.xlu0.b32.cont [13/16] 0.0, 128
      %923 = vxpose.xlu0.b32.cont [14/16] 0.0, 128
      %924 = vxpose.xlu0.b32.cont [15/16] 0.0, 128
      %925 = vxpose.xlu0.b32.end [16/16] 0.0, 128
      %v926 = vpop.trf.xlu0
      %v927 = vpop.trf.xlu0
      %v928 = vpop.trf.xlu0
      %v929 = vpop.trf.xlu0
      %v930 = vpop.trf.xlu0
      %v931 = vpop.trf.xlu0
      %v932 = vpop.trf.xlu0
      %v933 = vpop.trf.xlu0
      %v934 = vpop.trf.xlu0
      %v935 = vpop.trf.xlu0
      %v936 = vpop.trf.xlu0
      %v937 = vpop.trf.xlu0
      %v938 = vpop.trf.xlu0
      %v939 = vpop.trf.xlu0
      %v940 = vpop.trf.xlu0
      %v941 = vpop.trf.xlu0
      %vm942 = vcmp.eq.f32.partialorder %v926, 0.0
      %v943 = vsel %vm942, 1, 0
      %v944 = vlaneseq
      %v945 = vshrl.u32 %v944, 7
      %v946 = vsub.s32 0, %v945
      %v947 = vrot.slane %v943, %v946
      %vm948 = vcmp.eq.s32.totalorder %v947, 1
      %v949 = vsel %vm948, -4.2949673e+09, %v903
      %v950 = vsel %vm631, %v949, -inf
      %951 = vmax.xlane.f32.xlu0 %v950
      %v952 = vpop.xlane.xlu0 %951
      %v953 = vsub.f32 %v949, %v952
      %v954 = vmul.f32 %v953, 1.442695
      %v955 = vpow.pop %v954
      %v956 = vsel %vm631, %v955, 0.0
      %957 = vadd.xlane.f32.xlu0 %v956
      %v958 = vpop.xlane.xlu0 %957
      %v959 = vrcp.pop %v958
      %v960 = vmul.f32 %v955, %v959
      %v961 = vpack.c.bf16 %v960, %v960
      %962 = vrot.lane.b32.xlu0 %v644, 64
      %v963 = vpop.permute.xlu0 %962
      %v965 = vsel %vm631, %v961, 0
      %v968 = vsel %vm648, %v963, 0
      %970 = vmatprep.subr.bf16.mxu0 0
      %971 = vmatpush1.bf16.msra.mxu0 0
      %972 = vmatprep.subr.bf16.mxu0 0
      %973 = vmatpush1.bf16.msra.mxu0 0
      %974 = vmatprep.subr.bf16.mxu0 0
      %975 = vmatpush1.bf16.msra.mxu0 0
      %976 = vmatprep.subr.bf16.mxu0 0
      %977 = vmatpush1.bf16.msra.mxu0 0
      %978 = vmatprep.subr.bf16.mxu0 0
      %979 = vmatpush1.bf16.msra.mxu0 0
      %980 = vmatprep.subr.bf16.mxu0 0
      %981 = vmatpush1.bf16.msra.mxu0 0
      %982 = vmatprep.subr.bf16.mxu0 0
      %983 = vmatpush1.bf16.msra.mxu0 0
      %984 = vmatprep.subr.bf16.mxu0 0
      %985 = vmatpush1.bf16.msra.mxu0 %v968
      %986 = vmatprep.subr.bf16.mxu0 0
      %987 = vmatpush2.bf16.msra.mxu0 0
      %988 = vmatprep.subr.bf16.mxu0 0
      %989 = vmatpush2.bf16.msra.mxu0 0
      %990 = vmatprep.subr.bf16.mxu0 0
      %991 = vmatpush2.bf16.msra.mxu0 0
      %992 = vmatprep.subr.bf16.mxu0 0
      %993 = vmatpush2.bf16.msra.mxu0 0
      %994 = vmatprep.subr.bf16.mxu0 0
      %995 = vmatpush2.bf16.msra.mxu0 0
      %996 = vmatprep.subr.bf16.mxu0 0
      %997 = vmatpush2.bf16.msra.mxu0 0
      %998 = vmatprep.subr.bf16.mxu0 0
      %999 = vmatpush2.bf16.msra.mxu0 0
      %1000 = vmatprep.subr.bf16.mxu0 0
      %1001 = vmatpush2.bf16.msra.mxu0 0
      %1002 = vmatprep.mubr.bf16.mxu0 0
      %1003 = vmatmul.mubr.bf16.gmra.mxu0 %v965
      %v1004 = vpop.f32.mrf.mxu0
      %v1005 = vadd.f32 0.0, %v1004
      %v1006 = vpop.f32.mrf.mxu0
      %v1007 = vpop.f32.mrf.mxu0
      %v1008 = vpop.f32.mrf.mxu0
      %1009 = vdwg.mxu0
      %1010 = vrot.lane.b32.xlu0 %v538, 32
      %v1011 = vpop.permute.xlu0 %1010
      %1012 = vrot.lane.b32.xlu0 %v539, 32
      %v1013 = vpop.permute.xlu0 %1012
      %v1015 = vsel %vm540, %v1011, 0
      %v1018 = vsel %vm540, %v1013, 0
      %1020 = vmatprep.subr.bf16.mxu0 0
      %1021 = vmatpush1.bf16.xpose.msra.mxu0 0
      %1022 = vmatprep.subr.bf16.mxu0 0
      %1023 = vmatpush1.bf16.xpose.msra.mxu0 0
      %1024 = vmatprep.subr.bf16.mxu0 0
      %1025 = vmatpush1.bf16.xpose.msra.mxu0 0
      %1026 = vmatprep.subr.bf16.mxu0 0
      %1027 = vmatpush1.bf16.xpose.msra.mxu0 0
      %1028 = vmatprep.subr.bf16.mxu0 0
      %1029 = vmatpush1.bf16.xpose.msra.mxu0 0
      %1030 = vmatprep.subr.bf16.mxu0 0
      %1031 = vmatpush1.bf16.xpose.msra.mxu0 0
      %1032 = vmatprep.subr.bf16.mxu0 0
      %1033 = vmatpush1.bf16.xpose.msra.mxu0 0
      %1034 = vmatprep.subr.bf16.mxu0 0
      %1035 = vmatpush1.bf16.xpose.msra.mxu0 %v1018
      %1036 = vmatprep.subr.bf16.mxu0 0
      %1037 = vmatpush2.bf16.xpose.msra.mxu0 0
      %1038 = vmatprep.subr.bf16.mxu0 0
      %1039 = vmatpush2.bf16.xpose.msra.mxu0 0
      %1040 = vmatprep.subr.bf16.mxu0 0
      %1041 = vmatpush2.bf16.xpose.msra.mxu0 0
      %1042 = vmatprep.subr.bf16.mxu0 0
      %1043 = vmatpush2.bf16.xpose.msra.mxu0 0
      %1044 = vmatprep.subr.bf16.mxu0 0
      %1045 = vmatpush2.bf16.xpose.msra.mxu0 0
      %1046 = vmatprep.subr.bf16.mxu0 0
      %1047 = vmatpush2.bf16.xpose.msra.mxu0 0
      %1048 = vmatprep.subr.bf16.mxu0 0
      %1049 = vmatpush2.bf16.xpose.msra.mxu0 0
      %1050 = vmatprep.subr.bf16.mxu0 0
      %1051 = vmatpush2.bf16.xpose.msra.mxu0 0
      %1052 = vmatprep.mubr.bf16.mxu0 0
      %1053 = vmatmul.mubr.bf16.gmra.mxu0 %v1015
      %v1054 = vpop.f32.mrf.mxu0
      %v1055 = vadd.f32 0.0, %v1054
      %v1056 = vpop.f32.mrf.mxu0
      %v1057 = vpop.f32.mrf.mxu0
      %v1058 = vpop.f32.mrf.mxu0
      %1059 = vdwg.mxu0
      %v1060 = vmul.f32 %v1055, 0.17677669
      %1061 = vrot.lane.b32.xlu0 %v536, 32
      %v1062 = vpop.permute.xlu0 %1061
      %v1064 = vsel %vm540, %v1062, 0.0
      %1065 = vadd.xlane.f32.xlu0 %v1064
      %v1066 = vpop.xlane.xlu0 %1065
      %1067 = vxpose.xlu0.b32.start [1/16] %v1066, 128
      %1068 = vxpose.xlu0.b32.cont [2/16] 0.0, 128
      %1069 = vxpose.xlu0.b32.cont [3/16] 0.0, 128
      %1070 = vxpose.xlu0.b32.cont [4/16] 0.0, 128
      %1071 = vxpose.xlu0.b32.cont [5/16] 0.0, 128
      %1072 = vxpose.xlu0.b32.cont [6/16] 0.0, 128
      %1073 = vxpose.xlu0.b32.cont [7/16] 0.0, 128
      %1074 = vxpose.xlu0.b32.cont [8/16] 0.0, 128
      %1075 = vxpose.xlu0.b32.cont [9/16] 0.0, 128
      %1076 = vxpose.xlu0.b32.cont [10/16] 0.0, 128
      %1077 = vxpose.xlu0.b32.cont [11/16] 0.0, 128
      %1078 = vxpose.xlu0.b32.cont [12/16] 0.0, 128
      %1079 = vxpose.xlu0.b32.cont [13/16] 0.0, 128
      %1080 = vxpose.xlu0.b32.cont [14/16] 0.0, 128
      %1081 = vxpose.xlu0.b32.cont [15/16] 0.0, 128
      %1082 = vxpose.xlu0.b32.end [16/16] 0.0, 128
      %v1083 = vpop.trf.xlu0
      %v1084 = vpop.trf.xlu0
      %v1085 = vpop.trf.xlu0
      %v1086 = vpop.trf.xlu0
      %v1087 = vpop.trf.xlu0
      %v1088 = vpop.trf.xlu0
      %v1089 = vpop.trf.xlu0
      %v1090 = vpop.trf.xlu0
      %v1091 = vpop.trf.xlu0
      %v1092 = vpop.trf.xlu0
      %v1093 = vpop.trf.xlu0
      %v1094 = vpop.trf.xlu0
      %v1095 = vpop.trf.xlu0
      %v1096 = vpop.trf.xlu0
      %v1097 = vpop.trf.xlu0
      %v1098 = vpop.trf.xlu0
      %vm1099 = vcmp.eq.f32.partialorder %v1083, 0.0
      %v1100 = vsel %vm1099, 1, 0
      %v1101 = vlaneseq
      %v1102 = vshrl.u32 %v1101, 7
      %v1103 = vsub.s32 0, %v1102
      %v1104 = vrot.slane %v1100, %v1103
      %vm1105 = vcmp.eq.s32.totalorder %v1104, 1
      %v1106 = vsel %vm1105, -4.2949673e+09, %v1060
      %v1107 = vsel %vm631, %v1106, -inf
      %1108 = vmax.xlane.f32.xlu0 %v1107
      %v1109 = vpop.xlane.xlu0 %1108
      %v1110 = vsub.f32 %v1106, %v1109
      %v1111 = vmul.f32 %v1110, 1.442695
      %v1112 = vpow.pop %v1111
      %v1113 = vsel %vm631, %v1112, 0.0
      %1114 = vadd.xlane.f32.xlu0 %v1113
      %v1115 = vpop.xlane.xlu0 %1114
      %v1116 = vrcp.pop %v1115
      %v1117 = vmul.f32 %v1112, %v1116
      %v1118 = vpack.c.bf16 %v1117, %v1117
      %1119 = vrot.lane.b32.xlu0 %v644, 32
      %v1120 = vpop.permute.xlu0 %1119
      %v1122 = vsel %vm631, %v1118, 0
      %v1125 = vsel %vm648, %v1120, 0
      %1127 = vmatprep.subr.bf16.mxu0 0
      %1128 = vmatpush1.bf16.msra.mxu0 0
      %1129 = vmatprep.subr.bf16.mxu0 0
      %1130 = vmatpush1.bf16.msra.mxu0 0
      %1131 = vmatprep.subr.bf16.mxu0 0
      %1132 = vmatpush1.bf16.msra.mxu0 0
      %1133 = vmatprep.subr.bf16.mxu0 0
      %1134 = vmatpush1.bf16.msra.mxu0 0
      %1135 = vmatprep.subr.bf16.mxu0 0
      %1136 = vmatpush1.bf16.msra.mxu0 0
      %1137 = vmatprep.subr.bf16.mxu0 0
      %1138 = vmatpush1.bf16.msra.mxu0 0
      %1139 = vmatprep.subr.bf16.mxu0 0
      %1140 = vmatpush1.bf16.msra.mxu0 0
      %1141 = vmatprep.subr.bf16.mxu0 0
      %1142 = vmatpush1.bf16.msra.mxu0 %v1125
      %1143 = vmatprep.subr.bf16.mxu0 0
      %1144 = vmatpush2.bf16.msra.mxu0 0
      %1145 = vmatprep.subr.bf16.mxu0 0
      %1146 = vmatpush2.bf16.msra.mxu0 0
      %1147 = vmatprep.subr.bf16.mxu0 0
      %1148 = vmatpush2.bf16.msra.mxu0 0
      %1149 = vmatprep.subr.bf16.mxu0 0
      %1150 = vmatpush2.bf16.msra.mxu0 0
      %1151 = vmatprep.subr.bf16.mxu0 0
      %1152 = vmatpush2.bf16.msra.mxu0 0
      %1153 = vmatprep.subr.bf16.mxu0 0
      %1154 = vmatpush2.bf16.msra.mxu0 0
      %1155 = vmatprep.subr.bf16.mxu0 0
      %1156 = vmatpush2.bf16.msra.mxu0 0
      %1157 = vmatprep.subr.bf16.mxu0 0
      %1158 = vmatpush2.bf16.msra.mxu0 0
      %1159 = vmatprep.mubr.bf16.mxu0 0
      %1160 = vmatmul.mubr.bf16.gmra.mxu0 %v1122
      %v1161 = vpop.f32.mrf.mxu0
      %v1162 = vadd.f32 0.0, %v1161
      %v1163 = vpop.f32.mrf.mxu0
      %v1164 = vpop.f32.mrf.mxu0
      %v1165 = vpop.f32.mrf.mxu0
      %1166 = vdwg.mxu0
      %1168 = vrot.lane.b32.xlu0 %v848, 32
      %v1169 = vpop.permute.xlu0 %1168
      %1172 = vrot.lane.b32.xlu0 %v1005, 64
      %v1173 = vpop.permute.xlu0 %1172
      %1176 = vrot.lane.b32.xlu0 %v1162, 96
      %v1177 = vpop.permute.xlu0 %1176
      %v1179 = vsel %vm540, %v687, %v1169
      %vm1180 = vcmask 523264
      %v1181 = vsel %vm1180, %v1179, %v1173
      %vm1182 = vcmask 785408
      %v1183 = vsel %vm1182, %v1181, %v1177
      %v1184 = vpack.c.bf16 %v1183, %v1183
      %v1185 = vld [vmem:[%s3] sm:$0xf]
      %v1186 = vld [vmem:[%s3 + $0x4] sm:$0xf]
      %v1187 = vld [vmem:[%s3 + $0x8] sm:$0xf]
      %v1188 = vld [vmem:[%s3 + $0xc] sm:$0xf]
      %v1189 = vld [vmem:[%s3 + $0x10] sm:$0xf]
      %v1190 = vld [vmem:[%s3 + $0x14] sm:$0xf]
      %v1191 = vld [vmem:[%s3 + $0x18] sm:$0xf]
      %v1192 = vld [vmem:[%s3 + $0x1c] sm:$0xf]
      %v1193 = vld [vmem:[%s3 + $0x20] sm:$0xf]
      %v1194 = vld [vmem:[%s3 + $0x24] sm:$0xf]
      %v1195 = vld [vmem:[%s3 + $0x28] sm:$0xf]
      %v1196 = vld [vmem:[%s3 + $0x2c] sm:$0xf]
      %v1197 = vld [vmem:[%s3 + $0x30] sm:$0xf]
      %v1198 = vld [vmem:[%s3 + $0x34] sm:$0xf]
      %v1199 = vld [vmem:[%s3 + $0x38] sm:$0xf]
      %v1200 = vld [vmem:[%s3 + $0x3c] sm:$0xf]
      %v1201 = vld [vmem:[%s4] sm:$0x1]
      %v1203 = vlaneseq
      %v1204 = vshrl.u32 %v1203, 7
      %v1205 = vsub.s32 0, %v1204
      %v1206 = vrot.slane %v1201, %v1205
      %v1224 = vunpack.c.l.b16 %v1185
      %v1225 = vunpack.c.l.b16 %v1186
      %v1226 = vunpack.c.l.b16 %v1187
      %v1227 = vunpack.c.l.b16 %v1188
      %v1228 = vunpack.c.l.b16 %v1189
      %v1229 = vunpack.c.l.b16 %v1190
      %v1230 = vunpack.c.l.b16 %v1191
      %v1231 = vunpack.c.l.b16 %v1192
      %v1232 = vunpack.c.l.b16 %v1193
      %v1233 = vunpack.c.l.b16 %v1194
      %v1234 = vunpack.c.l.b16 %v1195
      %v1235 = vunpack.c.l.b16 %v1196
      %v1236 = vunpack.c.l.b16 %v1197
      %v1237 = vunpack.c.l.b16 %v1198
      %v1238 = vunpack.c.l.b16 %v1199
      %v1239 = vunpack.c.l.b16 %v1200
      %v1240 = vpack.c.b16 %v1225, %v1224
      %v1241 = vpack.c.b16 %v1227, %v1226
      %v1242 = vpack.c.b16 %v1229, %v1228
      %v1243 = vpack.c.b16 %v1231, %v1230
      %v1244 = vpack.c.b16 %v1233, %v1232
      %v1245 = vpack.c.b16 %v1235, %v1234
      %v1246 = vpack.c.b16 %v1237, %v1236
      %v1247 = vpack.c.b16 %v1239, %v1238
      %1256 = vmatprep.subr.bf16.mxu0 0
      %1257 = vmatpush1.bf16.msra.mxu0 %v1247
      %1258 = vmatprep.subr.bf16.mxu0 0
      %1259 = vmatpush1.bf16.msra.mxu0 %v1246
      %1260 = vmatprep.subr.bf16.mxu0 0
      %1261 = vmatpush1.bf16.msra.mxu0 %v1245
      %1262 = vmatprep.subr.bf16.mxu0 0
      %1263 = vmatpush1.bf16.msra.mxu0 %v1244
      %1264 = vmatprep.subr.bf16.mxu0 0
      %1265 = vmatpush1.bf16.msra.mxu0 %v1243
      %1266 = vmatprep.subr.bf16.mxu0 0
      %1267 = vmatpush1.bf16.msra.mxu0 %v1242
      %1268 = vmatprep.subr.bf16.mxu0 0
      %1269 = vmatpush1.bf16.msra.mxu0 %v1241
      %1270 = vmatprep.subr.bf16.mxu0 0
      %1271 = vmatpush1.bf16.msra.mxu0 %v1240
      %1272 = vmatprep.subr.bf16.mxu0 0
      %1273 = vmatpush2.bf16.msra.mxu0 0
      %1274 = vmatprep.subr.bf16.mxu0 0
      %1275 = vmatpush2.bf16.msra.mxu0 0
      %1276 = vmatprep.subr.bf16.mxu0 0
      %1277 = vmatpush2.bf16.msra.mxu0 0
      %1278 = vmatprep.subr.bf16.mxu0 0
      %1279 = vmatpush2.bf16.msra.mxu0 0
      %1280 = vmatprep.subr.bf16.mxu0 0
      %1281 = vmatpush2.bf16.msra.mxu0 0
      %1282 = vmatprep.subr.bf16.mxu0 0
      %1283 = vmatpush2.bf16.msra.mxu0 0
      %1284 = vmatprep.subr.bf16.mxu0 0
      %1285 = vmatpush2.bf16.msra.mxu0 0
      %1286 = vmatprep.subr.bf16.mxu0 0
      %1287 = vmatpush2.bf16.msra.mxu0 0
      %1288 = vmatprep.mubr.bf16.mxu0 0
      %1289 = vmatmul.mubr.bf16.gmra.mxu0 %v1184
      %v1290 = vpop.f32.mrf.mxu0
      %v1291 = vadd.f32 %v1206, %v1290
      %v1292 = vpop.f32.mrf.mxu0
      %v1293 = vpop.f32.mrf.mxu0
      %v1294 = vpop.f32.mrf.mxu0
      %1295 = vdwg.mxu0
      %v1296 = vadd.f32 %v275, %v1291
      %v1297 = vld [vmem:[%s5] sm:$0x1]
      %v1298 = vld [vmem:[%s6] sm:$0x1]
      %1299 = vadd.xlane.f32.xlu0 %v1296
      %v1300 = vpop.xlane.xlu0 %1299
      %v1301 = vrcp.pop 128.0
      %v1302 = vmul.f32 %v1300, %v1301
      %v1303 = vsub.f32 %v1296, %v1302
      %v1304 = vmul.f32 %v1303, %v1303
      %1305 = vadd.xlane.f32.xlu0 %v1304
      %v1306 = vpop.xlane.xlu0 %1305
      %v1307 = vmul.f32 %v1306, %v1301
      %v1308 = vadd.f32 %v1307, 1e-05
      %v1309 = vrsqrt.pop %v1308
      %v1310 = vmul.f32 %v1303, %v1309
      %v1312 = vlaneseq
      %v1313 = vshrl.u32 %v1312, 7
      %v1314 = vsub.s32 0, %v1313
      %v1315 = vrot.slane %v1297, %v1314
      %v1317 = vmul.f32 %v1310, %v1315
      %v1319 = vlaneseq
      %v1320 = vshrl.u32 %v1319, 7
      %v1321 = vsub.s32 0, %v1320
      %v1322 = vrot.slane %v1298, %v1321
      %v1324 = vadd.f32 %v1317, %v1322
      %1325 = vst [vmem:[%s273] sm:$0xff] %v1324
      %p1326 = scmp.lt.s32.totalorder %s18, 1
      %s1327 = scalar_select %p1326, %s18, 1
      %s1328 = smul.addr %s1327, 8
      %s1329 = scalar_lea.vmem %s7, %s1328
      // Predicated region
      $region49: #{_lambda_.11} parent=47 // pred_check
        %p1330 = pneg %p188
      $region50: #{_lambda_.11} parent=47 // pred_check_branch
        %1332 = sbr.rel (%p1330) target = $region52
      $region51: #{_lambda_.11} parent=47 // pred_region
        _
      $region52: #{_lambda_.11} parent=47 // pred_fallthru
        _
    $region48: #{_lambda_.11} parent=5 // pred_fallthru
      _
    %p1333 = scmp.le.s32.totalorder 2, %s13
    // Predicated region
    $region53: #{_lambda_.11} parent=5 // pred_check
      %p1334 = pneg %p1333
    $region54: #{_lambda_.11} parent=5 // pred_check_branch
      %1336 = sbr.rel (%p1334) target = $region56
    $region55: #{_lambda_.11} parent=5 // pred_region
      %s1337 = ssub.s32 %s13, 2
      // Predicated region
      $region57: #{_lambda_.11} parent=55 // pred_check
        %p1338 = pneg %p194
      $region58: #{_lambda_.11} parent=55 // pred_check_branch
        %1340 = sbr.rel (%p1338) target = $region60
      $region59: #{_lambda_.11} parent=55 // pred_region
        %p1341 = scmp.lt.s32.totalorder %s19, 1
        %s1342 = scalar_select %p1341, %s19, 1
        %s1343 = smul.addr %s1342, 8
        %s1344 = scalar_lea.vmem %s7, %s1343
      $region60: #{_lambda_.11} parent=55 // pred_fallthru
        _
    $region56: #{_lambda_.11} parent=5 // pred_fallthru
      _
  $region6: #{_lambda_.11} parent=0 // loop_footer
    %s17 = sadd.s32 1, %s13
  $region7: #{_lambda_.11} parent=0 // loop_footer_branch
    %12 = sbr.rel target = $region3
  $region8: #{_lambda_.11} parent=0 // loop_exit
    _

// kernel: _lambda_.15
$region0: #{_lambda_.15}
  #allocation0 [shape = 'u32[]', space=smem, size = 0x4, offset = 0x4, fixed_abs, tag = 'smem constant byte address 0x4 - core index']
  #allocation1 [shape = 'u32[144,128]{1,0:T(1,128)}', space=vmem, size = 0x12000, scoped, tag = 'internal scratch']
  %s0 = inlined_call_operand.vmem [shape: f32[2,8,128], index: 0, kind: input, shape index: {}]
  %s1 = inlined_call_operand.vmem [shape: bf16[128,384], index: 1, kind: input, shape index: {}]
  %s2 = inlined_call_operand.vmem [shape: f32[1,384], index: 2, kind: input, shape index: {}]
  %s3 = inlined_call_operand.vmem [shape: bf16[128,128], index: 3, kind: input, shape index: {}]
  %s4 = inlined_call_operand.vmem [shape: f32[1,128], index: 4, kind: input, shape index: {}]
  %s5 = inlined_call_operand.vmem [shape: f32[1,128], index: 5, kind: input, shape index: {}]
  %s6 = inlined_call_operand.vmem [shape: f32[1,128], index: 6, kind: input, shape index: {}]
  %s7 = inlined_call_operand.vmem [shape: f32[2,8,128], index: 7, kind: output, shape index: {}]
  %s8 = sld [smem:[#allocation0]]
  $region61: #{_lambda_.15} parent=0
    _
  %s10 = ssub.s32 1, %s8
  %s11 = scalar_select 0, %s10, %s8
  loop: start=0, step=1, limit=4
  $region2: #{_lambda_.15} parent=0 // loop_pre_header
    _
  $region3: #{_lambda_.15} parent=0 // loop_header
    %s13 = sphi 0, %s17
    %p14 = scmp.ge.s32.totalorder %s13, 4
    %s23 = sphi 0, %s25
    %s26 = sphi 0, %s23
    %s27 = sphi 0, %s26
    %s43 = sphi 0, %s27
    %s47 = sphi 0, %s47
    %s49 = sphi 0, %s47
    %s50 = sphi 0, %s49
    %s64 = sphi 0, %s50
    %s68 = sphi 0, %s68
    %s70 = sphi 0, %s68
    %s71 = sphi 0, %s70
    %s85 = sphi 0, %s71
    %s89 = sphi 0, %s89
    %s91 = sphi 0, %s89
    %s92 = sphi 0, %s91
    %s106 = sphi 0, %s92
    %s110 = sphi 0, %s110
    %s112 = sphi 0, %s110
    %s113 = sphi 0, %s112
    %s127 = sphi 0, %s113
    %s131 = sphi 0, %s131
    %s133 = sphi 0, %s131
    %s134 = sphi 0, %s133
    %s148 = sphi 0, %s134
    %s152 = sphi 0, %s152
    %s154 = sphi 0, %s152
    %s155 = sphi 0, %s154
    %s169 = sphi 0, %s155
    %s175 = sphi 0, %s177
    %s178 = sphi 0, %s175
    %s179 = sphi 0, %s178
    %s195 = sphi 0, %s179
  $region4: #{_lambda_.15} parent=0 // loop_header_branch
    %16 = sbr.rel (%p14) target = $region8
  $region5: #{_lambda_.15} parent=0 // loop_body
    %s18 = ssub.s32 %s13, 1
    %s19 = ssub.s32 %s13, 2
    %s20 = sadd.s32 %s13, 1
    %s21 = ssub.s32 %s13, %s20
    %p22 = scmp.eq.s32.totalorder %s21, 0
    %s24 = sadd.s32 %s23, 1
    %s25 = scalar_select %p22, %s23, %s24
    %p28 = pneg %p22
    %p29 = scmp.eq.s32.totalorder %s13, 1
    %p30 = por %p28, %p29
    %p31 = scmp.ne.s32.totalorder %s23, %s26
    %p32 = scmp.eq.s32.totalorder %s13, 0
    %p33 = por %p31, %p32
    %p34 = scmp.ne.s32.totalorder %s23, %s26
    %p35 = scmp.eq.s32.totalorder %s18, 1
    %p36 = por %p34, %p35
    %p37 = scmp.ne.s32.totalorder %s26, %s27
    %p38 = scmp.eq.s32.totalorder %s18, 0
    %p39 = por %p37, %p38
    %p40 = scmp.ne.s32.totalorder %s26, %s27
    %p41 = scmp.eq.s32.totalorder %s19, 1
    %p42 = por %p40, %p41
    %p44 = scmp.ne.s32.totalorder %s27, %s43
    %p45 = scmp.eq.s32.totalorder %s19, 0
    %p46 = por %p44, %p45
    %s48 = sadd.s32 %s47, 1
    %p51 = scmp.eq.s32.totalorder %s13, 1
    %p52 = scmp.ne.s32.totalorder %s47, %s49
    %p53 = scmp.eq.s32.totalorder %s13, 0
    %p54 = por %p52, %p53
    %p55 = scmp.ne.s32.totalorder %s47, %s49
    %p56 = scmp.eq.s32.totalorder %s18, 1
    %p57 = por %p55, %p56
    %p58 = scmp.ne.s32.totalorder %s49, %s50
    %p59 = scmp.eq.s32.totalorder %s18, 0
    %p60 = por %p58, %p59
    %p61 = scmp.ne.s32.totalorder %s49, %s50
    %p62 = scmp.eq.s32.totalorder %s19, 1
    %p63 = por %p61, %p62
    %p65 = scmp.ne.s32.totalorder %s50, %s64
    %p66 = scmp.eq.s32.totalorder %s19, 0
    %p67 = por %p65, %p66
    %s69 = sadd.s32 %s68, 1
    %p72 = scmp.eq.s32.totalorder %s13, 1
    %p73 = scmp.ne.s32.totalorder %s68, %s70
    %p74 = scmp.eq.s32.totalorder %s13, 0
    %p75 = por %p73, %p74
    %p76 = scmp.ne.s32.totalorder %s68, %s70
    %p77 = scmp.eq.s32.totalorder %s18, 1
    %p78 = por %p76, %p77
    %p79 = scmp.ne.s32.totalorder %s70, %s71
    %p80 = scmp.eq.s32.totalorder %s18, 0
    %p81 = por %p79, %p80
    %p82 = scmp.ne.s32.totalorder %s70, %s71
    %p83 = scmp.eq.s32.totalorder %s19, 1
    %p84 = por %p82, %p83
    %p86 = scmp.ne.s32.totalorder %s71, %s85
    %p87 = scmp.eq.s32.totalorder %s19, 0
    %p88 = por %p86, %p87
    %s90 = sadd.s32 %s89, 1
    %p93 = scmp.eq.s32.totalorder %s13, 1
    %p94 = scmp.ne.s32.totalorder %s89, %s91
    %p95 = scmp.eq.s32.totalorder %s13, 0
    %p96 = por %p94, %p95
    %p97 = scmp.ne.s32.totalorder %s89, %s91
    %p98 = scmp.eq.s32.totalorder %s18, 1
    %p99 = por %p97, %p98
    %p100 = scmp.ne.s32.totalorder %s91, %s92
    %p101 = scmp.eq.s32.totalorder %s18, 0
    %p102 = por %p100, %p101
    %p103 = scmp.ne.s32.totalorder %s91, %s92
    %p104 = scmp.eq.s32.totalorder %s19, 1
    %p105 = por %p103, %p104
    %p107 = scmp.ne.s32.totalorder %s92, %s106
    %p108 = scmp.eq.s32.totalorder %s19, 0
    %p109 = por %p107, %p108
    %s111 = sadd.s32 %s110, 1
    %p114 = scmp.eq.s32.totalorder %s13, 1
    %p115 = scmp.ne.s32.totalorder %s110, %s112
    %p116 = scmp.eq.s32.totalorder %s13, 0
    %p117 = por %p115, %p116
    %p118 = scmp.ne.s32.totalorder %s110, %s112
    %p119 = scmp.eq.s32.totalorder %s18, 1
    %p120 = por %p118, %p119
    %p121 = scmp.ne.s32.totalorder %s112, %s113
    %p122 = scmp.eq.s32.totalorder %s18, 0
    %p123 = por %p121, %p122
    %p124 = scmp.ne.s32.totalorder %s112, %s113
    %p125 = scmp.eq.s32.totalorder %s19, 1
    %p126 = por %p124, %p125
    %p128 = scmp.ne.s32.totalorder %s113, %s127
    %p129 = scmp.eq.s32.totalorder %s19, 0
    %p130 = por %p128, %p129
    %s132 = sadd.s32 %s131, 1
    %p135 = scmp.eq.s32.totalorder %s13, 1
    %p136 = scmp.ne.s32.totalorder %s131, %s133
    %p137 = scmp.eq.s32.totalorder %s13, 0
    %p138 = por %p136, %p137
    %p139 = scmp.ne.s32.totalorder %s131, %s133
    %p140 = scmp.eq.s32.totalorder %s18, 1
    %p141 = por %p139, %p140
    %p142 = scmp.ne.s32.totalorder %s133, %s134
    %p143 = scmp.eq.s32.totalorder %s18, 0
    %p144 = por %p142, %p143
    %p145 = scmp.ne.s32.totalorder %s133, %s134
    %p146 = scmp.eq.s32.totalorder %s19, 1
    %p147 = por %p145, %p146
    %p149 = scmp.ne.s32.totalorder %s134, %s148
    %p150 = scmp.eq.s32.totalorder %s19, 0
    %p151 = por %p149, %p150
    %s153 = sadd.s32 %s152, 1
    %p156 = scmp.eq.s32.totalorder %s13, 1
    %p157 = scmp.ne.s32.totalorder %s152, %s154
    %p158 = scmp.eq.s32.totalorder %s13, 0
    %p159 = por %p157, %p158
    %p160 = scmp.ne.s32.totalorder %s152, %s154
    %p161 = scmp.eq.s32.totalorder %s18, 1
    %p162 = por %p160, %p161
    %p163 = scmp.ne.s32.totalorder %s154, %s155
    %p164 = scmp.eq.s32.totalorder %s18, 0
    %p165 = por %p163, %p164
    %p166 = scmp.ne.s32.totalorder %s154, %s155
    %p167 = scmp.eq.s32.totalorder %s19, 1
    %p168 = por %p166, %p167
    %p170 = scmp.ne.s32.totalorder %s155, %s169
    %p171 = scmp.eq.s32.totalorder %s19, 0
    %p172 = por %p170, %p171
    %s173 = ssub.s32 %s13, %s20
    %p174 = scmp.eq.s32.totalorder %s173, 0
    %s176 = sadd.s32 %s175, 1
    %s177 = scalar_select %p174, %s175, %s176
    %p180 = pneg %p174
    %p181 = scmp.eq.s32.totalorder %s13, 1
    %p182 = por %p180, %p181
    %p183 = scmp.ne.s32.totalorder %s175, %s178
    %p184 = scmp.eq.s32.totalorder %s13, 0
    %p185 = por %p183, %p184
    %p186 = scmp.ne.s32.totalorder %s175, %s178
    %p187 = scmp.eq.s32.totalorder %s18, 1
    %p188 = por %p186, %p187
    %p189 = scmp.ne.s32.totalorder %s178, %s179
    %p190 = scmp.eq.s32.totalorder %s18, 0
    %p191 = por %p189, %p190
    %p192 = scmp.ne.s32.totalorder %s178, %s179
    %p193 = scmp.eq.s32.totalorder %s19, 1
    %p194 = por %p192, %p193
    %p196 = scmp.ne.s32.totalorder %s179, %s195
    %p197 = scmp.eq.s32.totalorder %s19, 0
    %p198 = por %p196, %p197
    %p199 = scmp.le.s32.totalorder 1, %s13
    %p200 = scmp.lt.s32.totalorder %s13, 3
    %p201 = pnand %p199, %p200
    %p202 = pneg %p201
    // Predicated region
    $region9: #{_lambda_.15} parent=5 // pred_check
      _
    $region10: #{_lambda_.15} parent=5 // pred_check_branch
      %204 = sbr.rel (%p201) target = $region12
    $region11: #{_lambda_.15} parent=5 // pred_region
      %s205 = ssub.s32 %s13, 1
      // Predicated region
      $region13: #{_lambda_.15} parent=11 // pred_check
        %p206 = pneg %p60
      $region14: #{_lambda_.15} parent=11 // pred_check_branch
        %208 = sbr.rel (%p206) target = $region16
      $region15: #{_lambda_.15} parent=11 // pred_region
        _
      $region16: #{_lambda_.15} parent=11 // pred_fallthru
        _
      // Predicated region
      $region17: #{_lambda_.15} parent=11 // pred_check
        %p209 = pneg %p81
      $region18: #{_lambda_.15} parent=11 // pred_check_branch
        %211 = sbr.rel (%p209) target = $region20
      $region19: #{_lambda_.15} parent=11 // pred_region
        _
      $region20: #{_lambda_.15} parent=11 // pred_fallthru
        _
      // Predicated region
      $region21: #{_lambda_.15} parent=11 // pred_check
        %p212 = pneg %p102
      $region22: #{_lambda_.15} parent=11 // pred_check_branch
        %214 = sbr.rel (%p212) target = $region24
      $region23: #{_lambda_.15} parent=11 // pred_region
        _
      $region24: #{_lambda_.15} parent=11 // pred_fallthru
        _
      // Predicated region
      $region25: #{_lambda_.15} parent=11 // pred_check
        %p215 = pneg %p123
      $region26: #{_lambda_.15} parent=11 // pred_check_branch
        %217 = sbr.rel (%p215) target = $region28
      $region27: #{_lambda_.15} parent=11 // pred_region
        _
      $region28: #{_lambda_.15} parent=11 // pred_fallthru
        _
      // Predicated region
      $region29: #{_lambda_.15} parent=11 // pred_check
        %p218 = pneg %p144
      $region30: #{_lambda_.15} parent=11 // pred_check_branch
        %220 = sbr.rel (%p218) target = $region32
      $region31: #{_lambda_.15} parent=11 // pred_region
        _
      $region32: #{_lambda_.15} parent=11 // pred_fallthru
        _
      // Predicated region
      $region33: #{_lambda_.15} parent=11 // pred_check
        %p221 = pneg %p165
      $region34: #{_lambda_.15} parent=11 // pred_check_branch
        %223 = sbr.rel (%p221) target = $region36
      $region35: #{_lambda_.15} parent=11 // pred_region
        _
      $region36: #{_lambda_.15} parent=11 // pred_fallthru
        _
    $region12: #{_lambda_.15} parent=5 // pred_fallthru
      _
    %p224 = scmp.lt.s32.totalorder %s13, 2
    // Predicated region
    $region37: #{_lambda_.15} parent=5 // pred_check
      %p225 = pneg %p224
    $region38: #{_lambda_.15} parent=5 // pred_check_branch
      %227 = sbr.rel (%p225) target = $region40
    $region39: #{_lambda_.15} parent=5 // pred_region
      // Predicated region
      $region41: #{_lambda_.15} parent=39 // pred_check
        %p228 = pneg %p33
      $region42: #{_lambda_.15} parent=39 // pred_check_branch
        %230 = sbr.rel (%p228) target = $region44
      $region43: #{_lambda_.15} parent=39 // pred_region
        %p231 = scmp.lt.s32.totalorder %s13, 1
        %s232 = scalar_select %p231, %s13, 1
        %s233 = smul.addr %s232, 8
        %s234 = scalar_lea.vmem %s0, %s233
      $region44: #{_lambda_.15} parent=39 // pred_fallthru
        _
    $region40: #{_lambda_.15} parent=5 // pred_fallthru
      _
    %p235 = scmp.le.s32.totalorder 1, %s13
    %p236 = scmp.lt.s32.totalorder %s13, 3
    %p237 = pnand %p235, %p236
    %p238 = pneg %p237
    // Predicated region
    $region45: #{_lambda_.15} parent=5 // pred_check
      _
    $region46: #{_lambda_.15} parent=5 // pred_check_branch
      %240 = sbr.rel (%p237) target = $region48
    $region47: #{_lambda_.15} parent=5 // pred_region
      %s241 = ssub.s32 %s13, 1
      %p242 = scmp.lt.s32.totalorder %s18, 1
      %s243 = scalar_select %p242, %s18, 1
      %s244 = smul.addr %s243, 8
      %s245 = scalar_lea.vmem %s0, %s244
      %p246 = pneg %p39
      %p247 = pneg %p36
      %p248 = pneg %p60
      %p249 = pneg %p57
      %p250 = pneg %p81
      %p251 = pneg %p78
      %p252 = pneg %p102
      %p253 = pneg %p99
      %p254 = pneg %p123
      %p255 = pneg %p120
      %p256 = pneg %p144
      %p257 = pneg %p141
      %p258 = pneg %p165
      %p259 = pneg %p162
      %p260 = pneg %p191
      %p261 = pneg %p188
      %p262 = scmp.lt.s32.totalorder %s18, 1
      %s263 = scalar_select %p262, %s18, 1
      %s264 = smul.addr %s263, 8
      %s265 = scalar_lea.vmem %s7, %s264
      %p266 = scmp.lt.s32.totalorder %s18, 1
      %s267 = scalar_select %p266, %s18, 1
      %s268 = smul.addr %s267, 8
      %s269 = scalar_lea.vmem %s0, %s268
      %p270 = scmp.lt.s32.totalorder %s18, 1
      %s271 = scalar_select %p270, %s18, 1
      %s272 = smul.addr %s271, 8
      %s273 = scalar_lea.vmem %s7, %s272
      %v275 = vld [vmem:[%s269] sm:$0xff]
      %v276 = vpack.c.bf16 %v275, %v275
      %v277 = vld [vmem:[%s1] sm:$0xff]
      %v278 = vld [vmem:[%s1 + $0x8] sm:$0xf]
      %v279 = vld [vmem:[%s1 + $0xc] sm:$0xff]
      %v280 = vld [vmem:[%s1 + $0x14] sm:$0xf]
      %v281 = vld [vmem:[%s1 + $0x18] sm:$0xff]
      %v282 = vld [vmem:[%s1 + $0x20] sm:$0xf]
      %v283 = vld [vmem:[%s1 + $0x24] sm:$0xff]
      %v284 = vld [vmem:[%s1 + $0x2c] sm:$0xf]
      %v285 = vld [vmem:[%s1 + $0x30] sm:$0xff]
      %v286 = vld [vmem:[%s1 + $0x38] sm:$0xf]
      %v287 = vld [vmem:[%s1 + $0x3c] sm:$0xff]
      %v288 = vld [vmem:[%s1 + $0x44] sm:$0xf]
      %v289 = vld [vmem:[%s1 + $0x48] sm:$0xff]
      %v290 = vld [vmem:[%s1 + $0x50] sm:$0xf]
      %v291 = vld [vmem:[%s1 + $0x54] sm:$0xff]
      %v292 = vld [vmem:[%s1 + $0x5c] sm:$0xf]
      %v293 = vld [vmem:[%s1 + $0x60] sm:$0xff]
      %v294 = vld [vmem:[%s1 + $0x68] sm:$0xf]
      %v295 = vld [vmem:[%s1 + $0x6c] sm:$0xff]
      %v296 = vld [vmem:[%s1 + $0x74] sm:$0xf]
      %v297 = vld [vmem:[%s1 + $0x78] sm:$0xff]
      %v298 = vld [vmem:[%s1 + $0x80] sm:$0xf]
      %v299 = vld [vmem:[%s1 + $0x84] sm:$0xff]
      %v300 = vld [vmem:[%s1 + $0x8c] sm:$0xf]
      %v301 = vld [vmem:[%s1 + $0x90] sm:$0xff]
      %v302 = vld [vmem:[%s1 + $0x98] sm:$0xf]
      %v303 = vld [vmem:[%s1 + $0x9c] sm:$0xff]
      %v304 = vld [vmem:[%s1 + $0xa4] sm:$0xf]
      %v305 = vld [vmem:[%s1 + $0xa8] sm:$0xff]
      %v306 = vld [vmem:[%s1 + $0xb0] sm:$0xf]
      %v307 = vld [vmem:[%s1 + $0xb4] sm:$0xff]
      %v308 = vld [vmem:[%s1 + $0xbc] sm:$0xf]
      %v309 = vld [vmem:[%s2] sm:$0x7]
      %v311 = vlaneseq
      %v312 = vshrl.u32 %v311, 7
      %v313 = vsub.s32 0, %v312
      %v314 = vrot.slane %v309, %v313
      %v315 = vlaneseq
      %v316 = vshrl.u32 %v315, 7
      %v317 = vsub.s32 1, %v316
      %v318 = vrot.slane %v309, %v317
      %v319 = vlaneseq
      %v320 = vshrl.u32 %v319, 7
      %v321 = vsub.s32 2, %v320
      %v322 = vrot.slane %v309, %v321
      %v358 = vunpack.c.l.b16 %v277
      %v359 = vunpack.c.h.b16 %v277
      %v360 = vunpack.c.l.b16 %v278
      %v361 = vunpack.c.l.b16 %v279
      %v362 = vunpack.c.h.b16 %v279
      %v363 = vunpack.c.l.b16 %v280
      %v364 = vunpack.c.l.b16 %v281
      %v365 = vunpack.c.h.b16 %v281
      %v366 = vunpack.c.l.b16 %v282
      %v367 = vunpack.c.l.b16 %v283
      %v368 = vunpack.c.h.b16 %v283
      %v369 = vunpack.c.l.b16 %v284
      %v370 = vunpack.c.l.b16 %v285
      %v371 = vunpack.c.h.b16 %v285
      %v372 = vunpack.c.l.b16 %v286
      %v373 = vunpack.c.l.b16 %v287
      %v374 = vunpack.c.h.b16 %v287
      %v375 = vunpack.c.l.b16 %v288
      %v376 = vunpack.c.l.b16 %v289
      %v377 = vunpack.c.h.b16 %v289
      %v378 = vunpack.c.l.b16 %v290
      %v379 = vunpack.c.l.b16 %v291
      %v380 = vunpack.c.h.b16 %v291
      %v381 = vunpack.c.l.b16 %v292
      %v382 = vunpack.c.l.b16 %v293
      %v383 = vunpack.c.h.b16 %v293
      %v384 = vunpack.c.l.b16 %v294
      %v385 = vunpack.c.l.b16 %v295
      %v386 = vunpack.c.h.b16 %v295
      %v387 = vunpack.c.l.b16 %v296
      %v388 = vunpack.c.l.b16 %v297
      %v389 = vunpack.c.h.b16 %v297
      %v390 = vunpack.c.l.b16 %v298
      %v391 = vunpack.c.l.b16 %v299
      %v392 = vunpack.c.h.b16 %v299
      %v393 = vunpack.c.l.b16 %v300
      %v394 = vunpack.c.l.b16 %v301
      %v395 = vunpack.c.h.b16 %v301
      %v396 = vunpack.c.l.b16 %v302
      %v397 = vunpack.c.l.b16 %v303
      %v398 = vunpack.c.h.b16 %v303
      %v399 = vunpack.c.l.b16 %v304
      %v400 = vunpack.c.l.b16 %v305
      %v401 = vunpack.c.h.b16 %v305
      %v402 = vunpack.c.l.b16 %v306
      %v403 = vunpack.c.l.b16 %v307
      %v404 = vunpack.c.h.b16 %v307
      %v405 = vunpack.c.l.b16 %v308
      %v406 = vpack.c.b16 %v361, %v358
      %v407 = vpack.c.b16 %v362, %v359
      %v408 = vpack.c.b16 %v363, %v360
      %v409 = vpack.c.b16 %v367, %v364
      %v410 = vpack.c.b16 %v368, %v365
      %v411 = vpack.c.b16 %v369, %v366
      %v412 = vpack.c.b16 %v373, %v370
      %v413 = vpack.c.b16 %v374, %v371
      %v414 = vpack.c.b16 %v375, %v372
      %v415 = vpack.c.b16 %v379, %v376
      %v416 = vpack.c.b16 %v380, %v377
      %v417 = vpack.c.b16 %v381, %v378
      %v418 = vpack.c.b16 %v385, %v382
      %v419 = vpack.c.b16 %v386, %v383
      %v420 = vpack.c.b16 %v387, %v384
      %v421 = vpack.c.b16 %v391, %v388
      %v422 = vpack.c.b16 %v392, %v389
      %v423 = vpack.c.b16 %v393, %v390
      %v424 = vpack.c.b16 %v397, %v394
      %v425 = vpack.c.b16 %v398, %v395
      %v426 = vpack.c.b16 %v399, %v396
      %v427 = vpack.c.b16 %v403, %v400
      %v428 = vpack.c.b16 %v404, %v401
      %v429 = vpack.c.b16 %v405, %v402
      %454 = vmatprep.subr.bf16.mxu0 %v428
      %455 = vmatpush1.bf16.msra.mxu0 %v427
      %456 = vmatprep.subr.bf16.mxu0 %v425
      %457 = vmatpush1.bf16.msra.mxu0 %v424
      %458 = vmatprep.subr.bf16.mxu0 %v422
      %459 = vmatpush1.bf16.msra.mxu0 %v421
      %460 = vmatprep.subr.bf16.mxu0 %v419
      %461 = vmatpush1.bf16.msra.mxu0 %v418
      %462 = vmatprep.subr.bf16.mxu0 %v416
      %463 = vmatpush1.bf16.msra.mxu0 %v415
      %464 = vmatprep.subr.bf16.mxu0 %v413
      %465 = vmatpush1.bf16.msra.mxu0 %v412
      %466 = vmatprep.subr.bf16.mxu0 %v410
      %467 = vmatpush1.bf16.msra.mxu0 %v409
      %468 = vmatprep.subr.bf16.mxu0 %v407
      %469 = vmatpush1.bf16.msra.mxu0 %v406
      %470 = vmatprep.subr.bf16.mxu0 0
      %471 = vmatpush2.bf16.msra.mxu0 0
      %472 = vmatprep.subr.bf16.mxu0 0
      %473 = vmatpush2.bf16.msra.mxu0 0
      %474 = vmatprep.subr.bf16.mxu0 0
      %475 = vmatpush2.bf16.msra.mxu0 0
      %476 = vmatprep.subr.bf16.mxu0 0
      %477 = vmatpush2.bf16.msra.mxu0 0
      %478 = vmatprep.subr.bf16.mxu0 0
      %479 = vmatpush2.bf16.msra.mxu0 0
      %480 = vmatprep.subr.bf16.mxu0 0
      %481 = vmatpush2.bf16.msra.mxu0 0
      %482 = vmatprep.subr.bf16.mxu0 0
      %483 = vmatpush2.bf16.msra.mxu0 0
      %484 = vmatprep.subr.bf16.mxu0 0
      %485 = vmatpush2.bf16.msra.mxu0 0
      %486 = vmatprep.mubr.bf16.mxu0 0
      %487 = vmatmul.mubr.bf16.gmra.mxu0 %v276
      %v488 = vpop.f32.mrf.mxu0
      %v489 = vadd.f32 %v314, %v488
      %v490 = vpop.f32.mrf.mxu0
      %v491 = vadd.f32 %v318, %v490
      %v492 = vpop.f32.mrf.mxu0
      %v493 = vpop.f32.mrf.mxu0
      %494 = vdwg.mxu0
      %495 = vmatprep.subr.bf16.mxu0 0
      %496 = vmatpush1.bf16.msra.mxu0 %v429
      %497 = vmatprep.subr.bf16.mxu0 0
      %498 = vmatpush1.bf16.msra.mxu0 %v426
      %499 = vmatprep.subr.bf16.mxu0 0
      %500 = vmatpush1.bf16.msra.mxu0 %v423
      %501 = vmatprep.subr.bf16.mxu0 0
      %502 = vmatpush1.bf16.msra.mxu0 %v420
      %503 = vmatprep.subr.bf16.mxu0 0
      %504 = vmatpush1.bf16.msra.mxu0 %v417
      %505 = vmatprep.subr.bf16.mxu0 0
      %506 = vmatpush1.bf16.msra.mxu0 %v414
      %507 = vmatprep.subr.bf16.mxu0 0
      %508 = vmatpush1.bf16.msra.mxu0 %v411
      %509 = vmatprep.subr.bf16.mxu0 0
      %510 = vmatpush1.bf16.msra.mxu0 %v408
      %511 = vmatprep.subr.bf16.mxu0 0
      %512 = vmatpush2.bf16.msra.mxu0 0
      %513 = vmatprep.subr.bf16.mxu0 0
      %514 = vmatpush2.bf16.msra.mxu0 0
      %515 = vmatprep.subr.bf16.mxu0 0
      %516 = vmatpush2.bf16.msra.mxu0 0
      %517 = vmatprep.subr.bf16.mxu0 0
      %518 = vmatpush2.bf16.msra.mxu0 0
      %519 = vmatprep.subr.bf16.mxu0 0
      %520 = vmatpush2.bf16.msra.mxu0 0
      %521 = vmatprep.subr.bf16.mxu0 0
      %522 = vmatpush2.bf16.msra.mxu0 0
      %523 = vmatprep.subr.bf16.mxu0 0
      %524 = vmatpush2.bf16.msra.mxu0 0
      %525 = vmatprep.subr.bf16.mxu0 0
      %526 = vmatpush2.bf16.msra.mxu0 0
      %527 = vmatprep.mubr.bf16.mxu0 0
      %528 = vmatmul.mubr.bf16.gmra.mxu0 %v276
      %v529 = vpop.f32.mrf.mxu0
      %v530 = vadd.f32 %v322, %v529
      %v531 = vpop.f32.mrf.mxu0
      %v532 = vpop.f32.mrf.mxu0
      %v533 = vpop.f32.mrf.mxu0
      %534 = vdwg.mxu0
      %v535 = vmax.f32 %v489, 0.0
      %v536 = vmax.f32 %v491, 0.0
      %v537 = vmax.f32 %v530, 0.0
      %v538 = vlaneseq
      %v539 = vshrl.u32 %v538, 7
      %v540 = vlaneseq
      %v541 = vand.u32 %v540, 127
      %vm542 = vcmp.gt.s32.totalorder %v541, %v539
      %v543 = vpack.c.bf16 %v535, %v535
      %v544 = vpack.c.bf16 %v536, %v536
      %vm545 = vcmask 261120
      %v547 = vsel %vm545, %v543, 0
      %v550 = vsel %vm545, %v544, 0
      %552 = vmatprep.subr.bf16.mxu0 0
      %553 = vmatpush1.bf16.xpose.msra.mxu0 0
      %554 = vmatprep.subr.bf16.mxu0 0
      %555 = vmatpush1.bf16.xpose.msra.mxu0 0
      %556 = vmatprep.subr.bf16.mxu0 0
      %557 = vmatpush1.bf16.xpose.msra.mxu0 0
      %558 = vmatprep.subr.bf16.mxu0 0
      %559 = vmatpush1.bf16.xpose.msra.mxu0 0
      %560 = vmatprep.subr.bf16.mxu0 0
      %561 = vmatpush1.bf16.xpose.msra.mxu0 0
      %562 = vmatprep.subr.bf16.mxu0 0
      %563 = vmatpush1.bf16.xpose.msra.mxu0 0
      %564 = vmatprep.subr.bf16.mxu0 0
      %565 = vmatpush1.bf16.xpose.msra.mxu0 0
      %566 = vmatprep.subr.bf16.mxu0 0
      %567 = vmatpush1.bf16.xpose.msra.mxu0 %v550
      %568 = vmatprep.subr.bf16.mxu0 0
      %569 = vmatpush2.bf16.xpose.msra.mxu0 0
      %570 = vmatprep.subr.bf16.mxu0 0
      %571 = vmatpush2.bf16.xpose.msra.mxu0 0
      %572 = vmatprep.subr.bf16.mxu0 0
      %573 = vmatpush2.bf16.xpose.msra.mxu0 0
      %574 = vmatprep.subr.bf16.mxu0 0
      %575 = vmatpush2.bf16.xpose.msra.mxu0 0
      %576 = vmatprep.subr.bf16.mxu0 0
      %577 = vmatpush2.bf16.xpose.msra.mxu0 0
      %578 = vmatprep.subr.bf16.mxu0 0
      %579 = vmatpush2.bf16.xpose.msra.mxu0 0
      %580 = vmatprep.subr.bf16.mxu0 0
      %581 = vmatpush2.bf16.xpose.msra.mxu0 0
      %582 = vmatprep.subr.bf16.mxu0 0
      %583 = vmatpush2.bf16.xpose.msra.mxu0 0
      %584 = vmatprep.mubr.bf16.mxu0 0
      %585 = vmatmul.mubr.bf16.gmra.mxu0 %v547
      %v586 = vpop.f32.mrf.mxu0
      %v587 = vadd.f32 0.0, %v586
      %v588 = vpop.f32.mrf.mxu0
      %v589 = vpop.f32.mrf.mxu0
      %v590 = vpop.f32.mrf.mxu0
      %591 = vdwg.mxu0
      %v592 = vmul.f32 %v587, 0.17677669
      %v593 = vsel %vm545, %v536, 0.0
      %594 = vadd.xlane.f32.xlu0 %v593
      %v595 = vpop.xlane.xlu0 %594
      %596 = vxpose.xlu0.b32.start [1/16] %v595, 128
      %597 = vxpose.xlu0.b32.cont [2/16] 0.0, 128
      %598 = vxpose.xlu0.b32.cont [3/16] 0.0, 128
      %599 = vxpose.xlu0.b32.cont [4/16] 0.0, 128
      %600 = vxpose.xlu0.b32.cont [5/16] 0.0, 128
      %601 = vxpose.xlu0.b32.cont [6/16] 0.0, 128
      %602 = vxpose.xlu0.b32.cont [7/16] 0.0, 128
      %603 = vxpose.xlu0.b32.cont [8/16] 0.0, 128
      %604 = vxpose.xlu0.b32.cont [9/16] 0.0, 128
      %605 = vxpose.xlu0.b32.cont [10/16] 0.0, 128
      %606 = vxpose.xlu0.b32.cont [11/16] 0.0, 128
      %607 = vxpose.xlu0.b32.cont [12/16] 0.0, 128
      %608 = vxpose.xlu0.b32.cont [13/16] 0.0, 128
      %609 = vxpose.xlu0.b32.cont [14/16] 0.0, 128
      %610 = vxpose.xlu0.b32.cont [15/16] 0.0, 128
      %611 = vxpose.xlu0.b32.end [16/16] 0.0, 128
      %v612 = vpop.trf.xlu0
      %v613 = vpop.trf.xlu0
      %v614 = vpop.trf.xlu0
      %v615 = vpop.trf.xlu0
      %v616 = vpop.trf.xlu0
      %v617 = vpop.trf.xlu0
      %v618 = vpop.trf.xlu0
      %v619 = vpop.trf.xlu0
      %v620 = vpop.trf.xlu0
      %v621 = vpop.trf.xlu0
      %v622 = vpop.trf.xlu0
      %v623 = vpop.trf.xlu0
      %v624 = vpop.trf.xlu0
      %v625 = vpop.trf.xlu0
      %v626 = vpop.trf.xlu0
      %v627 = vpop.trf.xlu0
      %vm628 = vcmp.eq.f32.partialorder %v612, 0.0
      %v629 = vsel %vm628, 1, 0
      %v630 = vlaneseq
      %v631 = vshrl.u32 %v630, 7
      %v632 = vsub.s32 0, %v631
      %v633 = vrot.slane %v629, %v632
      %vm634 = vcmp.eq.s32.totalorder %v633, 1
      %v635 = vsel %vm634, -4.2949673e+09, %v592
      %v636 = vsel %vm542, -4.2949673e+09, %v635
      %vm637 = vcmask 64512
      %v638 = vsel %vm637, %v636, -inf
      %639 = vmax.xlane.f32.xlu0 %v638
      %v640 = vpop.xlane.xlu0 %639
      %v641 = vsub.f32 %v636, %v640
      %v642 = vmul.f32 %v641, 1.442695
      %v643 = vpow.pop %v642
      %v644 = vsel %vm637, %v643, 0.0
      %645 = vadd.xlane.f32.xlu0 %v644
      %v646 = vpop.xlane.xlu0 %645
      %v647 = vrcp.pop %v646
      %v648 = vmul.f32 %v643, %v647
      %v649 = vpack.c.bf16 %v648, %v648
      %v650 = vpack.c.bf16 %v537, %v537
      %v652 = vsel %vm637, %v649, 0
      %vm654 = vcmask 1043456
      %v656 = vsel %vm654, %v650, 0
      %658 = vmatprep.subr.bf16.mxu0 0
      %659 = vmatpush1.bf16.msra.mxu0 0
      %660 = vmatprep.subr.bf16.mxu0 0
      %661 = vmatpush1.bf16.msra.mxu0 0
      %662 = vmatprep.subr.bf16.mxu0 0
      %663 = vmatpush1.bf16.msra.mxu0 0
      %664 = vmatprep.subr.bf16.mxu0 0
      %665 = vmatpush1.bf16.msra.mxu0 0
      %666 = vmatprep.subr.bf16.mxu0 0
      %667 = vmatpush1.bf16.msra.mxu0 0
      %668 = vmatprep.subr.bf16.mxu0 0
      %669 = vmatpush1.bf16.msra.mxu0 0
      %670 = vmatprep.subr.bf16.mxu0 0
      %671 = vmatpush1.bf16.msra.mxu0 0
      %672 = vmatprep.subr.bf16.mxu0 0
      %673 = vmatpush1.bf16.msra.mxu0 %v656
      %674 = vmatprep.subr.bf16.mxu0 0
      %675 = vmatpush2.bf16.msra.mxu0 0
      %676 = vmatprep.subr.bf16.mxu0 0
      %677 = vmatpush2.bf16.msra.mxu0 0
      %678 = vmatprep.subr.bf16.mxu0 0
      %679 = vmatpush2.bf16.msra.mxu0 0
      %680 = vmatprep.subr.bf16.mxu0 0
      %681 = vmatpush2.bf16.msra.mxu0 0
      %682 = vmatprep.subr.bf16.mxu0 0
      %683 = vmatpush2.bf16.msra.mxu0 0
      %684 = vmatprep.subr.bf16.mxu0 0
      %685 = vmatpush2.bf16.msra.mxu0 0
      %686 = vmatprep.subr.bf16.mxu0 0
      %687 = vmatpush2.bf16.msra.mxu0 0
      %688 = vmatprep.subr.bf16.mxu0 0
      %689 = vmatpush2.bf16.msra.mxu0 0
      %690 = vmatprep.mubr.bf16.mxu0 0
      %691 = vmatmul.mubr.bf16.gmra.mxu0 %v652
      %v692 = vpop.f32.mrf.mxu0
      %v693 = vadd.f32 0.0, %v692
      %v694 = vpop.f32.mrf.mxu0
      %v695 = vpop.f32.mrf.mxu0
      %v696 = vpop.f32.mrf.mxu0
      %697 = vdwg.mxu0
      %699 = vrot.lane.b32.xlu0 %v543, 96
      %v700 = vpop.permute.xlu0 %699
      %702 = vrot.lane.b32.xlu0 %v544, 96
      %v703 = vpop.permute.xlu0 %702
      %v705 = vsel %vm545, %v700, 0
      %v708 = vsel %vm545, %v703, 0
      %710 = vmatprep.subr.bf16.mxu0 0
      %711 = vmatpush1.bf16.xpose.msra.mxu0 0
      %712 = vmatprep.subr.bf16.mxu0 0
      %713 = vmatpush1.bf16.xpose.msra.mxu0 0
      %714 = vmatprep.subr.bf16.mxu0 0
      %715 = vmatpush1.bf16.xpose.msra.mxu0 0
      %716 = vmatprep.subr.bf16.mxu0 0
      %717 = vmatpush1.bf16.xpose.msra.mxu0 0
      %718 = vmatprep.subr.bf16.mxu0 0
      %719 = vmatpush1.bf16.xpose.msra.mxu0 0
      %720 = vmatprep.subr.bf16.mxu0 0
      %721 = vmatpush1.bf16.xpose.msra.mxu0 0
      %722 = vmatprep.subr.bf16.mxu0 0
      %723 = vmatpush1.bf16.xpose.msra.mxu0 0
      %724 = vmatprep.subr.bf16.mxu0 0
      %725 = vmatpush1.bf16.xpose.msra.mxu0 %v708
      %726 = vmatprep.subr.bf16.mxu0 0
      %727 = vmatpush2.bf16.xpose.msra.mxu0 0
      %728 = vmatprep.subr.bf16.mxu0 0
      %729 = vmatpush2.bf16.xpose.msra.mxu0 0
      %730 = vmatprep.subr.bf16.mxu0 0
      %731 = vmatpush2.bf16.xpose.msra.mxu0 0
      %732 = vmatprep.subr.bf16.mxu0 0
      %733 = vmatpush2.bf16.xpose.msra.mxu0 0
      %734 = vmatprep.subr.bf16.mxu0 0
      %735 = vmatpush2.bf16.xpose.msra.mxu0 0
      %736 = vmatprep.subr.bf16.mxu0 0
      %737 = vmatpush2.bf16.xpose.msra.mxu0 0
      %738 = vmatprep.subr.bf16.mxu0 0
      %739 = vmatpush2.bf16.xpose.msra.mxu0 0
      %740 = vmatprep.subr.bf16.mxu0 0
      %741 = vmatpush2.bf16.xpose.msra.mxu0 0
      %742 = vmatprep.mubr.bf16.mxu0 0
      %743 = vmatmul.mubr.bf16.gmra.mxu0 %v705
      %v744 = vpop.f32.mrf.mxu0
      %v745 = vadd.f32 0.0, %v744
      %v746 = vpop.f32.mrf.mxu0
      %v747 = vpop.f32.mrf.mxu0
      %v748 = vpop.f32.mrf.mxu0
      %749 = vdwg.mxu0
      %v750 = vmul.f32 %v745, 0.17677669
      %752 = vrot.lane.b32.xlu0 %v536, 96
      %v753 = vpop.permute.xlu0 %752
      %v755 = vsel %vm545, %v753, 0.0
      %756 = vadd.xlane.f32.xlu0 %v755
      %v757 = vpop.xlane.xlu0 %756
      %758 = vxpose.xlu0.b32.start [1/16] %v757, 128
      %759 = vxpose.xlu0.b32.cont [2/16] 0.0, 128
      %760 = vxpose.xlu0.b32.cont [3/16] 0.0, 128
      %761 = vxpose.xlu0.b32.cont [4/16] 0.0, 128
      %762 = vxpose.xlu0.b32.cont [5/16] 0.0, 128
      %763 = vxpose.xlu0.b32.cont [6/16] 0.0, 128
      %764 = vxpose.xlu0.b32.cont [7/16] 0.0, 128
      %765 = vxpose.xlu0.b32.cont [8/16] 0.0, 128
      %766 = vxpose.xlu0.b32.cont [9/16] 0.0, 128
      %767 = vxpose.xlu0.b32.cont [10/16] 0.0, 128
      %768 = vxpose.xlu0.b32.cont [11/16] 0.0, 128
      %769 = vxpose.xlu0.b32.cont [12/16] 0.0, 128
      %770 = vxpose.xlu0.b32.cont [13/16] 0.0, 128
      %771 = vxpose.xlu0.b32.cont [14/16] 0.0, 128
      %772 = vxpose.xlu0.b32.cont [15/16] 0.0, 128
      %773 = vxpose.xlu0.b32.end [16/16] 0.0, 128
      %v774 = vpop.trf.xlu0
      %v775 = vpop.trf.xlu0
      %v776 = vpop.trf.xlu0
      %v777 = vpop.trf.xlu0
      %v778 = vpop.trf.xlu0
      %v779 = vpop.trf.xlu0
      %v780 = vpop.trf.xlu0
      %v781 = vpop.trf.xlu0
      %v782 = vpop.trf.xlu0
      %v783 = vpop.trf.xlu0
      %v784 = vpop.trf.xlu0
      %v785 = vpop.trf.xlu0
      %v786 = vpop.trf.xlu0
      %v787 = vpop.trf.xlu0
      %v788 = vpop.trf.xlu0
      %v789 = vpop.trf.xlu0
      %vm790 = vcmp.eq.f32.partialorder %v774, 0.0
      %v791 = vsel %vm790, 1, 0
      %v792 = vlaneseq
      %v793 = vshrl.u32 %v792, 7
      %v794 = vsub.s32 0, %v793
      %v795 = vrot.slane %v791, %v794
      %vm796 = vcmp.eq.s32.totalorder %v795, 1
      %v797 = vsel %vm796, -4.2949673e+09, %v750
      %v798 = vsel %vm542, -4.2949673e+09, %v797
      %v799 = vsel %vm637, %v798, -inf
      %800 = vmax.xlane.f32.xlu0 %v799
      %v801 = vpop.xlane.xlu0 %800
      %v802 = vsub.f32 %v798, %v801
      %v803 = vmul.f32 %v802, 1.442695
      %v804 = vpow.pop %v803
      %v805 = vsel %vm637, %v804, 0.0
      %806 = vadd.xlane.f32.xlu0 %v805
      %v807 = vpop.xlane.xlu0 %806
      %v808 = vrcp.pop %v807
      %v809 = vmul.f32 %v804, %v808
      %v810 = vpack.c.bf16 %v809, %v809
      %812 = vrot.lane.b32.xlu0 %v650, 96
      %v813 = vpop.permute.xlu0 %812
      %v815 = vsel %vm637, %v810, 0
      %v818 = vsel %vm654, %v813, 0
      %820 = vmatprep.subr.bf16.mxu0 0
      %821 = vmatpush1.bf16.msra.mxu0 0
      %822 = vmatprep.subr.bf16.mxu0 0
      %823 = vmatpush1.bf16.msra.mxu0 0
      %824 = vmatprep.subr.bf16.mxu0 0
      %825 = vmatpush1.bf16.msra.mxu0 0
      %826 = vmatprep.subr.bf16.mxu0 0
      %827 = vmatpush1.bf16.msra.mxu0 0
      %828 = vmatprep.subr.bf16.mxu0 0
      %829 = vmatpush1.bf16.msra.mxu0 0
      %830 = vmatprep.subr.bf16.mxu0 0
      %831 = vmatpush1.bf16.msra.mxu0 0
      %832 = vmatprep.subr.bf16.mxu0 0
      %833 = vmatpush1.bf16.msra.mxu0 0
      %834 = vmatprep.subr.bf16.mxu0 0
      %835 = vmatpush1.bf16.msra.mxu0 %v818
      %836 = vmatprep.subr.bf16.mxu0 0
      %837 = vmatpush2.bf16.msra.mxu0 0
      %838 = vmatprep.subr.bf16.mxu0 0
      %839 = vmatpush2.bf16.msra.mxu0 0
      %840 = vmatprep.subr.bf16.mxu0 0
      %841 = vmatpush2.bf16.msra.mxu0 0
      %842 = vmatprep.subr.bf16.mxu0 0
      %843 = vmatpush2.bf16.msra.mxu0 0
      %844 = vmatprep.subr.bf16.mxu0 0
      %845 = vmatpush2.bf16.msra.mxu0 0
      %846 = vmatprep.subr.bf16.mxu0 0
      %847 = vmatpush2.bf16.msra.mxu0 0
      %848 = vmatprep.subr.bf16.mxu0 0
      %849 = vmatpush2.bf16.msra.mxu0 0
      %850 = vmatprep.subr.bf16.mxu0 0
      %851 = vmatpush2.bf16.msra.mxu0 0
      %852 = vmatprep.mubr.bf16.mxu0 0
      %853 = vmatmul.mubr.bf16.gmra.mxu0 %v815
      %v854 = vpop.f32.mrf.mxu0
      %v855 = vadd.f32 0.0, %v854
      %v856 = vpop.f32.mrf.mxu0
      %v857 = vpop.f32.mrf.mxu0
      %v858 = vpop.f32.mrf.mxu0
      %859 = vdwg.mxu0
      %860 = vrot.lane.b32.xlu0 %v543, 64
      %v861 = vpop.permute.xlu0 %860
      %862 = vrot.lane.b32.xlu0 %v544, 64
      %v863 = vpop.permute.xlu0 %862
      %v865 = vsel %vm545, %v861, 0
      %v868 = vsel %vm545, %v863, 0
      %870 = vmatprep.subr.bf16.mxu0 0
      %871 = vmatpush1.bf16.xpose.msra.mxu0 0
      %872 = vmatprep.subr.bf16.mxu0 0
      %873 = vmatpush1.bf16.xpose.msra.mxu0 0
      %874 = vmatprep.subr.bf16.mxu0 0
      %875 = vmatpush1.bf16.xpose.msra.mxu0 0
      %876 = vmatprep.subr.bf16.mxu0 0
      %877 = vmatpush1.bf16.xpose.msra.mxu0 0
      %878 = vmatprep.subr.bf16.mxu0 0
      %879 = vmatpush1.bf16.xpose.msra.mxu0 0
      %880 = vmatprep.subr.bf16.mxu0 0
      %881 = vmatpush1.bf16.xpose.msra.mxu0 0
      %882 = vmatprep.subr.bf16.mxu0 0
      %883 = vmatpush1.bf16.xpose.msra.mxu0 0
      %884 = vmatprep.subr.bf16.mxu0 0
      %885 = vmatpush1.bf16.xpose.msra.mxu0 %v868
      %886 = vmatprep.subr.bf16.mxu0 0
      %887 = vmatpush2.bf16.xpose.msra.mxu0 0
      %888 = vmatprep.subr.bf16.mxu0 0
      %889 = vmatpush2.bf16.xpose.msra.mxu0 0
      %890 = vmatprep.subr.bf16.mxu0 0
      %891 = vmatpush2.bf16.xpose.msra.mxu0 0
      %892 = vmatprep.subr.bf16.mxu0 0
      %893 = vmatpush2.bf16.xpose.msra.mxu0 0
      %894 = vmatprep.subr.bf16.mxu0 0
      %895 = vmatpush2.bf16.xpose.msra.mxu0 0
      %896 = vmatprep.subr.bf16.mxu0 0
      %897 = vmatpush2.bf16.xpose.msra.mxu0 0
      %898 = vmatprep.subr.bf16.mxu0 0
      %899 = vmatpush2.bf16.xpose.msra.mxu0 0
      %900 = vmatprep.subr.bf16.mxu0 0
      %901 = vmatpush2.bf16.xpose.msra.mxu0 0
      %902 = vmatprep.mubr.bf16.mxu0 0
      %903 = vmatmul.mubr.bf16.gmra.mxu0 %v865
      %v904 = vpop.f32.mrf.mxu0
      %v905 = vadd.f32 0.0, %v904
      %v906 = vpop.f32.mrf.mxu0
      %v907 = vpop.f32.mrf.mxu0
      %v908 = vpop.f32.mrf.mxu0
      %909 = vdwg.mxu0
      %v910 = vmul.f32 %v905, 0.17677669
      %911 = vrot.lane.b32.xlu0 %v536, 64
      %v912 = vpop.permute.xlu0 %911
      %v914 = vsel %vm545, %v912, 0.0
      %915 = vadd.xlane.f32.xlu0 %v914
      %v916 = vpop.xlane.xlu0 %915
      %917 = vxpose.xlu0.b32.start [1/16] %v916, 128
      %918 = vxpose.xlu0.b32.cont [2/16] 0.0, 128
      %919 = vxpose.xlu0.b32.cont [3/16] 0.0, 128
      %920 = vxpose.xlu0.b32.cont [4/16] 0.0, 128
      %921 = vxpose.xlu0.b32.cont [5/16] 0.0, 128
      %922 = vxpose.xlu0.b32.cont [6/16] 0.0, 128
      %923 = vxpose.xlu0.b32.cont [7/16] 0.0, 128
      %924 = vxpose.xlu0.b32.cont [8/16] 0.0, 128
      %925 = vxpose.xlu0.b32.cont [9/16] 0.0, 128
      %926 = vxpose.xlu0.b32.cont [10/16] 0.0, 128
      %927 = vxpose.xlu0.b32.cont [11/16] 0.0, 128
      %928 = vxpose.xlu0.b32.cont [12/16] 0.0, 128
      %929 = vxpose.xlu0.b32.cont [13/16] 0.0, 128
      %930 = vxpose.xlu0.b32.cont [14/16] 0.0, 128
      %931 = vxpose.xlu0.b32.cont [15/16] 0.0, 128
      %932 = vxpose.xlu0.b32.end [16/16] 0.0, 128
      %v933 = vpop.trf.xlu0
      %v934 = vpop.trf.xlu0
      %v935 = vpop.trf.xlu0
      %v936 = vpop.trf.xlu0
      %v937 = vpop.trf.xlu0
      %v938 = vpop.trf.xlu0
      %v939 = vpop.trf.xlu0
      %v940 = vpop.trf.xlu0
      %v941 = vpop.trf.xlu0
      %v942 = vpop.trf.xlu0
      %v943 = vpop.trf.xlu0
      %v944 = vpop.trf.xlu0
      %v945 = vpop.trf.xlu0
      %v946 = vpop.trf.xlu0
      %v947 = vpop.trf.xlu0
      %v948 = vpop.trf.xlu0
      %vm949 = vcmp.eq.f32.partialorder %v933, 0.0
      %v950 = vsel %vm949, 1, 0
      %v951 = vlaneseq
      %v952 = vshrl.u32 %v951, 7
      %v953 = vsub.s32 0, %v952
      %v954 = vrot.slane %v950, %v953
      %vm955 = vcmp.eq.s32.totalorder %v954, 1
      %v956 = vsel %vm955, -4.2949673e+09, %v910
      %v957 = vsel %vm542, -4.2949673e+09, %v956
      %v958 = vsel %vm637, %v957, -inf
      %959 = vmax.xlane.f32.xlu0 %v958
      %v960 = vpop.xlane.xlu0 %959
      %v961 = vsub.f32 %v957, %v960
      %v962 = vmul.f32 %v961, 1.442695
      %v963 = vpow.pop %v962
      %v964 = vsel %vm637, %v963, 0.0
      %965 = vadd.xlane.f32.xlu0 %v964
      %v966 = vpop.xlane.xlu0 %965
      %v967 = vrcp.pop %v966
      %v968 = vmul.f32 %v963, %v967
      %v969 = vpack.c.bf16 %v968, %v968
      %970 = vrot.lane.b32.xlu0 %v650, 64
      %v971 = vpop.permute.xlu0 %970
      %v973 = vsel %vm637, %v969, 0
      %v976 = vsel %vm654, %v971, 0
      %978 = vmatprep.subr.bf16.mxu0 0
      %979 = vmatpush1.bf16.msra.mxu0 0
      %980 = vmatprep.subr.bf16.mxu0 0
      %981 = vmatpush1.bf16.msra.mxu0 0
      %982 = vmatprep.subr.bf16.mxu0 0
      %983 = vmatpush1.bf16.msra.mxu0 0
      %984 = vmatprep.subr.bf16.mxu0 0
      %985 = vmatpush1.bf16.msra.mxu0 0
      %986 = vmatprep.subr.bf16.mxu0 0
      %987 = vmatpush1.bf16.msra.mxu0 0
      %988 = vmatprep.subr.bf16.mxu0 0
      %989 = vmatpush1.bf16.msra.mxu0 0
      %990 = vmatprep.subr.bf16.mxu0 0
      %991 = vmatpush1.bf16.msra.mxu0 0
      %992 = vmatprep.subr.bf16.mxu0 0
      %993 = vmatpush1.bf16.msra.mxu0 %v976
      %994 = vmatprep.subr.bf16.mxu0 0
      %995 = vmatpush2.bf16.msra.mxu0 0
      %996 = vmatprep.subr.bf16.mxu0 0
      %997 = vmatpush2.bf16.msra.mxu0 0
      %998 = vmatprep.subr.bf16.mxu0 0
      %999 = vmatpush2.bf16.msra.mxu0 0
      %1000 = vmatprep.subr.bf16.mxu0 0
      %1001 = vmatpush2.bf16.msra.mxu0 0
      %1002 = vmatprep.subr.bf16.mxu0 0
      %1003 = vmatpush2.bf16.msra.mxu0 0
      %1004 = vmatprep.subr.bf16.mxu0 0
      %1005 = vmatpush2.bf16.msra.mxu0 0
      %1006 = vmatprep.subr.bf16.mxu0 0
      %1007 = vmatpush2.bf16.msra.mxu0 0
      %1008 = vmatprep.subr.bf16.mxu0 0
      %1009 = vmatpush2.bf16.msra.mxu0 0
      %1010 = vmatprep.mubr.bf16.mxu0 0
      %1011 = vmatmul.mubr.bf16.gmra.mxu0 %v973
      %v1012 = vpop.f32.mrf.mxu0
      %v1013 = vadd.f32 0.0, %v1012
      %v1014 = vpop.f32.mrf.mxu0
      %v1015 = vpop.f32.mrf.mxu0
      %v1016 = vpop.f32.mrf.mxu0
      %1017 = vdwg.mxu0
      %1018 = vrot.lane.b32.xlu0 %v543, 32
      %v1019 = vpop.permute.xlu0 %1018
      %1020 = vrot.lane.b32.xlu0 %v544, 32
      %v1021 = vpop.permute.xlu0 %1020
      %v1023 = vsel %vm545, %v1019, 0
      %v1026 = vsel %vm545, %v1021, 0
      %1028 = vmatprep.subr.bf16.mxu0 0
      %1029 = vmatpush1.bf16.xpose.msra.mxu0 0
      %1030 = vmatprep.subr.bf16.mxu0 0
      %1031 = vmatpush1.bf16.xpose.msra.mxu0 0
      %1032 = vmatprep.subr.bf16.mxu0 0
      %1033 = vmatpush1.bf16.xpose.msra.mxu0 0
      %1034 = vmatprep.subr.bf16.mxu0 0
      %1035 = vmatpush1.bf16.xpose.msra.mxu0 0
      %1036 = vmatprep.subr.bf16.mxu0 0
      %1037 = vmatpush1.bf16.xpose.msra.mxu0 0
      %1038 = vmatprep.subr.bf16.mxu0 0
      %1039 = vmatpush1.bf16.xpose.msra.mxu0 0
      %1040 = vmatprep.subr.bf16.mxu0 0
      %1041 = vmatpush1.bf16.xpose.msra.mxu0 0
      %1042 = vmatprep.subr.bf16.mxu0 0
      %1043 = vmatpush1.bf16.xpose.msra.mxu0 %v1026
      %1044 = vmatprep.subr.bf16.mxu0 0
      %1045 = vmatpush2.bf16.xpose.msra.mxu0 0
      %1046 = vmatprep.subr.bf16.mxu0 0
      %1047 = vmatpush2.bf16.xpose.msra.mxu0 0
      %1048 = vmatprep.subr.bf16.mxu0 0
      %1049 = vmatpush2.bf16.xpose.msra.mxu0 0
      %1050 = vmatprep.subr.bf16.mxu0 0
      %1051 = vmatpush2.bf16.xpose.msra.mxu0 0
      %1052 = vmatprep.subr.bf16.mxu0 0
      %1053 = vmatpush2.bf16.xpose.msra.mxu0 0
      %1054 = vmatprep.subr.bf16.mxu0 0
      %1055 = vmatpush2.bf16.xpose.msra.mxu0 0
      %1056 = vmatprep.subr.bf16.mxu0 0
      %1057 = vmatpush2.bf16.xpose.msra.mxu0 0
      %1058 = vmatprep.subr.bf16.mxu0 0
      %1059 = vmatpush2.bf16.xpose.msra.mxu0 0
      %1060 = vmatprep.mubr.bf16.mxu0 0
      %1061 = vmatmul.mubr.bf16.gmra.mxu0 %v1023
      %v1062 = vpop.f32.mrf.mxu0
      %v1063 = vadd.f32 0.0, %v1062
      %v1064 = vpop.f32.mrf.mxu0
      %v1065 = vpop.f32.mrf.mxu0
      %v1066 = vpop.f32.mrf.mxu0
      %1067 = vdwg.mxu0
      %v1068 = vmul.f32 %v1063, 0.17677669
      %1069 = vrot.lane.b32.xlu0 %v536, 32
      %v1070 = vpop.permute.xlu0 %1069
      %v1072 = vsel %vm545, %v1070, 0.0
      %1073 = vadd.xlane.f32.xlu0 %v1072
      %v1074 = vpop.xlane.xlu0 %1073
      %1075 = vxpose.xlu0.b32.start [1/16] %v1074, 128
      %1076 = vxpose.xlu0.b32.cont [2/16] 0.0, 128
      %1077 = vxpose.xlu0.b32.cont [3/16] 0.0, 128
      %1078 = vxpose.xlu0.b32.cont [4/16] 0.0, 128
      %1079 = vxpose.xlu0.b32.cont [5/16] 0.0, 128
      %1080 = vxpose.xlu0.b32.cont [6/16] 0.0, 128
      %1081 = vxpose.xlu0.b32.cont [7/16] 0.0, 128
      %1082 = vxpose.xlu0.b32.cont [8/16] 0.0, 128
      %1083 = vxpose.xlu0.b32.cont [9/16] 0.0, 128
      %1084 = vxpose.xlu0.b32.cont [10/16] 0.0, 128
      %1085 = vxpose.xlu0.b32.cont [11/16] 0.0, 128
      %1086 = vxpose.xlu0.b32.cont [12/16] 0.0, 128
      %1087 = vxpose.xlu0.b32.cont [13/16] 0.0, 128
      %1088 = vxpose.xlu0.b32.cont [14/16] 0.0, 128
      %1089 = vxpose.xlu0.b32.cont [15/16] 0.0, 128
      %1090 = vxpose.xlu0.b32.end [16/16] 0.0, 128
      %v1091 = vpop.trf.xlu0
      %v1092 = vpop.trf.xlu0
      %v1093 = vpop.trf.xlu0
      %v1094 = vpop.trf.xlu0
      %v1095 = vpop.trf.xlu0
      %v1096 = vpop.trf.xlu0
      %v1097 = vpop.trf.xlu0
      %v1098 = vpop.trf.xlu0
      %v1099 = vpop.trf.xlu0
      %v1100 = vpop.trf.xlu0
      %v1101 = vpop.trf.xlu0
      %v1102 = vpop.trf.xlu0
      %v1103 = vpop.trf.xlu0
      %v1104 = vpop.trf.xlu0
      %v1105 = vpop.trf.xlu0
      %v1106 = vpop.trf.xlu0
      %vm1107 = vcmp.eq.f32.partialorder %v1091, 0.0
      %v1108 = vsel %vm1107, 1, 0
      %v1109 = vlaneseq
      %v1110 = vshrl.u32 %v1109, 7
      %v1111 = vsub.s32 0, %v1110
      %v1112 = vrot.slane %v1108, %v1111
      %vm1113 = vcmp.eq.s32.totalorder %v1112, 1
      %v1114 = vsel %vm1113, -4.2949673e+09, %v1068
      %v1115 = vsel %vm542, -4.2949673e+09, %v1114
      %v1116 = vsel %vm637, %v1115, -inf
      %1117 = vmax.xlane.f32.xlu0 %v1116
      %v1118 = vpop.xlane.xlu0 %1117
      %v1119 = vsub.f32 %v1115, %v1118
      %v1120 = vmul.f32 %v1119, 1.442695
      %v1121 = vpow.pop %v1120
      %v1122 = vsel %vm637, %v1121, 0.0
      %1123 = vadd.xlane.f32.xlu0 %v1122
      %v1124 = vpop.xlane.xlu0 %1123
      %v1125 = vrcp.pop %v1124
      %v1126 = vmul.f32 %v1121, %v1125
      %v1127 = vpack.c.bf16 %v1126, %v1126
      %1128 = vrot.lane.b32.xlu0 %v650, 32
      %v1129 = vpop.permute.xlu0 %1128
      %v1131 = vsel %vm637, %v1127, 0
      %v1134 = vsel %vm654, %v1129, 0
      %1136 = vmatprep.subr.bf16.mxu0 0
      %1137 = vmatpush1.bf16.msra.mxu0 0
      %1138 = vmatprep.subr.bf16.mxu0 0
      %1139 = vmatpush1.bf16.msra.mxu0 0
      %1140 = vmatprep.subr.bf16.mxu0 0
      %1141 = vmatpush1.bf16.msra.mxu0 0
      %1142 = vmatprep.subr.bf16.mxu0 0
      %1143 = vmatpush1.bf16.msra.mxu0 0
      %1144 = vmatprep.subr.bf16.mxu0 0
      %1145 = vmatpush1.bf16.msra.mxu0 0
      %1146 = vmatprep.subr.bf16.mxu0 0
      %1147 = vmatpush1.bf16.msra.mxu0 0
      %1148 = vmatprep.subr.bf16.mxu0 0
      %1149 = vmatpush1.bf16.msra.mxu0 0
      %1150 = vmatprep.subr.bf16.mxu0 0
      %1151 = vmatpush1.bf16.msra.mxu0 %v1134
      %1152 = vmatprep.subr.bf16.mxu0 0
      %1153 = vmatpush2.bf16.msra.mxu0 0
      %1154 = vmatprep.subr.bf16.mxu0 0
      %1155 = vmatpush2.bf16.msra.mxu0 0
      %1156 = vmatprep.subr.bf16.mxu0 0
      %1157 = vmatpush2.bf16.msra.mxu0 0
      %1158 = vmatprep.subr.bf16.mxu0 0
      %1159 = vmatpush2.bf16.msra.mxu0 0
      %1160 = vmatprep.subr.bf16.mxu0 0
      %1161 = vmatpush2.bf16.msra.mxu0 0
      %1162 = vmatprep.subr.bf16.mxu0 0
      %1163 = vmatpush2.bf16.msra.mxu0 0
      %1164 = vmatprep.subr.bf16.mxu0 0
      %1165 = vmatpush2.bf16.msra.mxu0 0
      %1166 = vmatprep.subr.bf16.mxu0 0
      %1167 = vmatpush2.bf16.msra.mxu0 0
      %1168 = vmatprep.mubr.bf16.mxu0 0
      %1169 = vmatmul.mubr.bf16.gmra.mxu0 %v1131
      %v1170 = vpop.f32.mrf.mxu0
      %v1171 = vadd.f32 0.0, %v1170
      %v1172 = vpop.f32.mrf.mxu0
      %v1173 = vpop.f32.mrf.mxu0
      %v1174 = vpop.f32.mrf.mxu0
      %1175 = vdwg.mxu0
      %1177 = vrot.lane.b32.xlu0 %v855, 32
      %v1178 = vpop.permute.xlu0 %1177
      %1181 = vrot.lane.b32.xlu0 %v1013, 64
      %v1182 = vpop.permute.xlu0 %1181
      %1185 = vrot.lane.b32.xlu0 %v1171, 96
      %v1186 = vpop.permute.xlu0 %1185
      %v1188 = vsel %vm545, %v693, %v1178
      %vm1189 = vcmask 523264
      %v1190 = vsel %vm1189, %v1188, %v1182
      %vm1191 = vcmask 785408
      %v1192 = vsel %vm1191, %v1190, %v1186
      %v1193 = vpack.c.bf16 %v1192, %v1192
      %v1194 = vld [vmem:[%s3] sm:$0xf]
      %v1195 = vld [vmem:[%s3 + $0x4] sm:$0xf]
      %v1196 = vld [vmem:[%s3 + $0x8] sm:$0xf]
      %v1197 = vld [vmem:[%s3 + $0xc] sm:$0xf]
      %v1198 = vld [vmem:[%s3 + $0x10] sm:$0xf]
      %v1199 = vld [vmem:[%s3 + $0x14] sm:$0xf]
      %v1200 = vld [vmem:[%s3 + $0x18] sm:$0xf]
      %v1201 = vld [vmem:[%s3 + $0x1c] sm:$0xf]
      %v1202 = vld [vmem:[%s3 + $0x20] sm:$0xf]
      %v1203 = vld [vmem:[%s3 + $0x24] sm:$0xf]
      %v1204 = vld [vmem:[%s3 + $0x28] sm:$0xf]
      %v1205 = vld [vmem:[%s3 + $0x2c] sm:$0xf]
      %v1206 = vld [vmem:[%s3 + $0x30] sm:$0xf]
      %v1207 = vld [vmem:[%s3 + $0x34] sm:$0xf]
      %v1208 = vld [vmem:[%s3 + $0x38] sm:$0xf]
      %v1209 = vld [vmem:[%s3 + $0x3c] sm:$0xf]
      %v1210 = vld [vmem:[%s4] sm:$0x1]
      %v1212 = vlaneseq
      %v1213 = vshrl.u32 %v1212, 7
      %v1214 = vsub.s32 0, %v1213
      %v1215 = vrot.slane %v1210, %v1214
      %v1233 = vunpack.c.l.b16 %v1194
      %v1234 = vunpack.c.l.b16 %v1195
      %v1235 = vunpack.c.l.b16 %v1196
      %v1236 = vunpack.c.l.b16 %v1197
      %v1237 = vunpack.c.l.b16 %v1198
      %v1238 = vunpack.c.l.b16 %v1199
      %v1239 = vunpack.c.l.b16 %v1200
      %v1240 = vunpack.c.l.b16 %v1201
      %v1241 = vunpack.c.l.b16 %v1202
      %v1242 = vunpack.c.l.b16 %v1203
      %v1243 = vunpack.c.l.b16 %v1204
      %v1244 = vunpack.c.l.b16 %v1205
      %v1245 = vunpack.c.l.b16 %v1206
      %v1246 = vunpack.c.l.b16 %v1207
      %v1247 = vunpack.c.l.b16 %v1208
      %v1248 = vunpack.c.l.b16 %v1209
      %v1249 = vpack.c.b16 %v1234, %v1233
      %v1250 = vpack.c.b16 %v1236, %v1235
      %v1251 = vpack.c.b16 %v1238, %v1237
      %v1252 = vpack.c.b16 %v1240, %v1239
      %v1253 = vpack.c.b16 %v1242, %v1241
      %v1254 = vpack.c.b16 %v1244, %v1243
      %v1255 = vpack.c.b16 %v1246, %v1245
      %v1256 = vpack.c.b16 %v1248, %v1247
      %1265 = vmatprep.subr.bf16.mxu0 0
      %1266 = vmatpush1.bf16.msra.mxu0 %v1256
      %1267 = vmatprep.subr.bf16.mxu0 0
      %1268 = vmatpush1.bf16.msra.mxu0 %v1255
      %1269 = vmatprep.subr.bf16.mxu0 0
      %1270 = vmatpush1.bf16.msra.mxu0 %v1254
      %1271 = vmatprep.subr.bf16.mxu0 0
      %1272 = vmatpush1.bf16.msra.mxu0 %v1253
      %1273 = vmatprep.subr.bf16.mxu0 0
      %1274 = vmatpush1.bf16.msra.mxu0 %v1252
      %1275 = vmatprep.subr.bf16.mxu0 0
      %1276 = vmatpush1.bf16.msra.mxu0 %v1251
      %1277 = vmatprep.subr.bf16.mxu0 0
      %1278 = vmatpush1.bf16.msra.mxu0 %v1250
      %1279 = vmatprep.subr.bf16.mxu0 0
      %1280 = vmatpush1.bf16.msra.mxu0 %v1249
      %1281 = vmatprep.subr.bf16.mxu0 0
      %1282 = vmatpush2.bf16.msra.mxu0 0
      %1283 = vmatprep.subr.bf16.mxu0 0
      %1284 = vmatpush2.bf16.msra.mxu0 0
      %1285 = vmatprep.subr.bf16.mxu0 0
      %1286 = vmatpush2.bf16.msra.mxu0 0
      %1287 = vmatprep.subr.bf16.mxu0 0
      %1288 = vmatpush2.bf16.msra.mxu0 0
      %1289 = vmatprep.subr.bf16.mxu0 0
      %1290 = vmatpush2.bf16.msra.mxu0 0
      %1291 = vmatprep.subr.bf16.mxu0 0
      %1292 = vmatpush2.bf16.msra.mxu0 0
      %1293 = vmatprep.subr.bf16.mxu0 0
      %1294 = vmatpush2.bf16.msra.mxu0 0
      %1295 = vmatprep.subr.bf16.mxu0 0
      %1296 = vmatpush2.bf16.msra.mxu0 0
      %1297 = vmatprep.mubr.bf16.mxu0 0
      %1298 = vmatmul.mubr.bf16.gmra.mxu0 %v1193
      %v1299 = vpop.f32.mrf.mxu0
      %v1300 = vadd.f32 %v1215, %v1299
      %v1301 = vpop.f32.mrf.mxu0
      %v1302 = vpop.f32.mrf.mxu0
      %v1303 = vpop.f32.mrf.mxu0
      %1304 = vdwg.mxu0
      %v1305 = vadd.f32 %v275, %v1300
      %v1306 = vld [vmem:[%s5] sm:$0x1]
      %v1307 = vld [vmem:[%s6] sm:$0x1]
      %1308 = vadd.xlane.f32.xlu0 %v1305
      %v1309 = vpop.xlane.xlu0 %1308
      %v1310 = vrcp.pop 128.0
      %v1311 = vmul.f32 %v1309, %v1310
      %v1312 = vsub.f32 %v1305, %v1311
      %v1313 = vmul.f32 %v1312, %v1312
      %1314 = vadd.xlane.f32.xlu0 %v1313
      %v1315 = vpop.xlane.xlu0 %1314
      %v1316 = vmul.f32 %v1315, %v1310
      %v1317 = vadd.f32 %v1316, 1e-05
      %v1318 = vrsqrt.pop %v1317
      %v1319 = vmul.f32 %v1312, %v1318
      %v1321 = vlaneseq
      %v1322 = vshrl.u32 %v1321, 7
      %v1323 = vsub.s32 0, %v1322
      %v1324 = vrot.slane %v1306, %v1323
      %v1326 = vmul.f32 %v1319, %v1324
      %v1328 = vlaneseq
      %v1329 = vshrl.u32 %v1328, 7
      %v1330 = vsub.s32 0, %v1329
      %v1331 = vrot.slane %v1307, %v1330
      %v1333 = vadd.f32 %v1326, %v1331
      %1334 = vst [vmem:[%s273] sm:$0xff] %v1333
      %p1335 = scmp.lt.s32.totalorder %s18, 1
      %s1336 = scalar_select %p1335, %s18, 1
      %s1337 = smul.addr %s1336, 8
      %s1338 = scalar_lea.vmem %s7, %s1337
      // Predicated region
      $region49: #{_lambda_.15} parent=47 // pred_check
        %p1339 = pneg %p188
      $region50: #{_lambda_.15} parent=47 // pred_check_branch
        %1341 = sbr.rel (%p1339) target = $region52
      $region51: #{_lambda_.15} parent=47 // pred_region
        _
      $region52: #{_lambda_.15} parent=47 // pred_fallthru
        _
    $region48: #{_lambda_.15} parent=5 // pred_fallthru
      _
    %p1342 = scmp.le.s32.totalorder 2, %s13
    // Predicated region
    $region53: #{_lambda_.15} parent=5 // pred_check
      %p1343 = pneg %p1342
    $region54: #{_lambda_.15} parent=5 // pred_check_branch
      %1345 = sbr.rel (%p1343) target = $region56
    $region55: #{_lambda_.15} parent=5 // pred_region
      %s1346 = ssub.s32 %s13, 2
      // Predicated region
      $region57: #{_lambda_.15} parent=55 // pred_check
        %p1347 = pneg %p194
      $region58: #{_lambda_.15} parent=55 // pred_check_branch
        %1349 = sbr.rel (%p1347) target = $region60
      $region59: #{_lambda_.15} parent=55 // pred_region
        %p1350 = scmp.lt.s32.totalorder %s19, 1
        %s1351 = scalar_select %p1350, %s19, 1
        %s1352 = smul.addr %s1351, 8
        %s1353 = scalar_lea.vmem %s7, %s1352
      $region60: #{_lambda_.15} parent=55 // pred_fallthru
        _
    $region56: #{_lambda_.15} parent=5 // pred_fallthru
      _
  $region6: #{_lambda_.15} parent=0 // loop_footer
    %s17 = sadd.s32 1, %s13
  $region7: #{_lambda_.15} parent=0 // loop_footer_branch
    %12 = sbr.rel target = $region3
  $region8: #{_lambda_.15} parent=0 // loop_exit
    _

// kernel: _lambda_.21
$region0: #{_lambda_.21}
  #allocation0 [shape = 'u32[]', space=smem, size = 0x4, offset = 0x4, fixed_abs, tag = 'smem constant byte address 0x4 - core index']
  #allocation1 [shape = 'u32[144,128]{1,0:T(1,128)}', space=vmem, size = 0x12000, scoped, tag = 'internal scratch']
  %s0 = inlined_call_operand.vmem [shape: f32[16,128], index: 0, kind: input, shape index: {}]
  %s1 = inlined_call_operand.vmem [shape: bf16[128,256], index: 1, kind: input, shape index: {}]
  %s2 = inlined_call_operand.hbm [shape: f32[16,256], index: 2, kind: output, shape index: {}]
  %s3 = sld [smem:[#allocation0]]
  $region41: #{_lambda_.21} parent=0
    _
  %s5 = ssub.s32 1, %s3
  %s6 = scalar_select 0, %s5, %s3
  $region1: #{_lambda_.21} parent=0
    #allocation2 [shape = 'u8[16384]{0}', space=vmem, size = 0x4000, scoped, tag = 'output window, operand 0']
    #allocation3 [shape = 's32[2]{0}', space=sflag, size = 0x8, scoped, tag = 'scoped memory for _lambda_.21']
    %7 = vsyncpa [#allocation3], 0
    %s8 = scalar_lea.sflag [#allocation3], 1
    %9 = vsyncpa %s8, 0
    loop: start=0, step=1, limit=4
    $region2: #{_lambda_.21} parent=1 // loop_pre_header
      _
    $region3: #{_lambda_.21} parent=1 // loop_header
      %s11 = sphi 0, %s15
      %p12 = scmp.ge.s32.totalorder %s11, 4
      %s21 = sphi 0, %s23
      %s24 = sphi 0, %s21
      %s25 = sphi 0, %s24
      %s41 = sphi 0, %s25
      %s45 = sphi 0, %s45
      %s47 = sphi 0, %s45
      %s48 = sphi 0, %s47
      %s62 = sphi 0, %s48
      %s68 = sphi 0, %s70
      %s71 = sphi 0, %s68
      %s72 = sphi 0, %s71
      %s88 = sphi 0, %s72
    $region4: #{_lambda_.21} parent=1 // loop_header_branch
      %14 = sbr.rel (%p12) target = $region8
    $region5: #{_lambda_.21} parent=1 // loop_body
      %s16 = ssub.s32 %s11, 1
      %s17 = ssub.s32 %s11, 2
      %s18 = sadd.s32 %s11, 1
      %s19 = ssub.s32 %s11, %s18
      %p20 = scmp.eq.s32.totalorder %s19, 0
      %s22 = sadd.s32 %s21, 1
      %s23 = scalar_select %p20, %s21, %s22
      %p26 = pneg %p20
      %p27 = scmp.eq.s32.totalorder %s11, 1
      %p28 = por %p26, %p27
      %p29 = scmp.ne.s32.totalorder %s21, %s24
      %p30 = scmp.eq.s32.totalorder %s11, 0
      %p31 = por %p29, %p30
      %p32 = scmp.ne.s32.totalorder %s21, %s24
      %p33 = scmp.eq.s32.totalorder %s16, 1
      %p34 = por %p32, %p33
      %p35 = scmp.ne.s32.totalorder %s24, %s25
      %p36 = scmp.eq.s32.totalorder %s16, 0
      %p37 = por %p35, %p36
      %p38 = scmp.ne.s32.totalorder %s24, %s25
      %p39 = scmp.eq.s32.totalorder %s17, 1
      %p40 = por %p38, %p39
      %p42 = scmp.ne.s32.totalorder %s25, %s41
      %p43 = scmp.eq.s32.totalorder %s17, 0
      %p44 = por %p42, %p43
      %s46 = sadd.s32 %s45, 1
      %p49 = scmp.eq.s32.totalorder %s11, 1
      %p50 = scmp.ne.s32.totalorder %s45, %s47
      %p51 = scmp.eq.s32.totalorder %s11, 0
      %p52 = por %p50, %p51
      %p53 = scmp.ne.s32.totalorder %s45, %s47
      %p54 = scmp.eq.s32.totalorder %s16, 1
      %p55 = por %p53, %p54
      %p56 = scmp.ne.s32.totalorder %s47, %s48
      %p57 = scmp.eq.s32.totalorder %s16, 0
      %p58 = por %p56, %p57
      %p59 = scmp.ne.s32.totalorder %s47, %s48
      %p60 = scmp.eq.s32.totalorder %s17, 1
      %p61 = por %p59, %p60
      %p63 = scmp.ne.s32.totalorder %s48, %s62
      %p64 = scmp.eq.s32.totalorder %s17, 0
      %p65 = por %p63, %p64
      %s66 = ssub.s32 %s11, %s18
      %p67 = scmp.eq.s32.totalorder %s66, 0
      %s69 = sadd.s32 %s68, 1
      %s70 = scalar_select %p67, %s68, %s69
      %p73 = pneg %p67
      %p74 = scmp.eq.s32.totalorder %s11, 1
      %p75 = por %p73, %p74
      %p76 = scmp.ne.s32.totalorder %s68, %s71
      %p77 = scmp.eq.s32.totalorder %s11, 0
      %p78 = por %p76, %p77
      %p79 = scmp.ne.s32.totalorder %s68, %s71
      %p80 = scmp.eq.s32.totalorder %s16, 1
      %p81 = por %p79, %p80
      %p82 = scmp.ne.s32.totalorder %s71, %s72
      %p83 = scmp.eq.s32.totalorder %s16, 0
      %p84 = por %p82, %p83
      %p85 = scmp.ne.s32.totalorder %s71, %s72
      %p86 = scmp.eq.s32.totalorder %s17, 1
      %p87 = por %p85, %p86
      %p89 = scmp.ne.s32.totalorder %s72, %s88
      %p90 = scmp.eq.s32.totalorder %s17, 0
      %p91 = por %p89, %p90
      %p92 = scmp.le.s32.totalorder 1, %s11
      %p93 = scmp.lt.s32.totalorder %s11, 3
      %p94 = pnand %p92, %p93
      %p95 = pneg %p94
      // Predicated region
      $region9: #{_lambda_.21} parent=5 // pred_check
        _
      $region10: #{_lambda_.21} parent=5 // pred_check_branch
        %97 = sbr.rel (%p94) target = $region12
      $region11: #{_lambda_.21} parent=5 // pred_region
        %s98 = ssub.s32 %s11, 1
        // Predicated region
        $region13: #{_lambda_.21} parent=11 // pred_check
          %p99 = pneg %p58
        $region14: #{_lambda_.21} parent=11 // pred_check_branch
          %101 = sbr.rel (%p99) target = $region16
        $region15: #{_lambda_.21} parent=11 // pred_region
          _
        $region16: #{_lambda_.21} parent=11 // pred_fallthru
          _
      $region12: #{_lambda_.21} parent=5 // pred_fallthru
        _
      %p102 = scmp.lt.s32.totalorder %s11, 2
      // Predicated region
      $region17: #{_lambda_.21} parent=5 // pred_check
        %p103 = pneg %p102
      $region18: #{_lambda_.21} parent=5 // pred_check_branch
        %105 = sbr.rel (%p103) target = $region20
      $region19: #{_lambda_.21} parent=5 // pred_region
        // Predicated region
        $region21: #{_lambda_.21} parent=19 // pred_check
          %p106 = pneg %p31
        $region22: #{_lambda_.21} parent=19 // pred_check_branch
          %108 = sbr.rel (%p106) target = $region24
        $region23: #{_lambda_.21} parent=19 // pred_region
          %p109 = scmp.lt.s32.totalorder %s11, 1
          %s110 = scalar_select %p109, %s11, 1
          %s111 = smul.addr %s110, 8
          %s112 = scalar_lea.vmem %s0, %s111
        $region24: #{_lambda_.21} parent=19 // pred_fallthru
          _
      $region20: #{_lambda_.21} parent=5 // pred_fallthru
        _
      %p113 = scmp.le.s32.totalorder 1, %s11
      %p114 = scmp.lt.s32.totalorder %s11, 3
      %p115 = pnand %p113, %p114
      %p116 = pneg %p115
      // Predicated region
      $region25: #{_lambda_.21} parent=5 // pred_check
        _
      $region26: #{_lambda_.21} parent=5 // pred_check_branch
        %118 = sbr.rel (%p115) target = $region28
      $region27: #{_lambda_.21} parent=5 // pred_region
        %s119 = ssub.s32 %s11, 1
        %p120 = scmp.lt.s32.totalorder %s16, 1
        %s121 = scalar_select %p120, %s16, 1
        %s122 = smul.addr %s121, 8
        %s123 = scalar_lea.vmem %s0, %s122
        %p124 = pneg %p37
        %p125 = pneg %p34
        %p126 = pneg %p58
        %p127 = pneg %p55
        %p128 = pneg %p84
        %p129 = pneg %p81
        %s130 = sand.u32 %s71, 1
        %s131 = scalar_lea.sflag [#allocation3], %s130
        %s132 = sand.u32 %s71, 1
        %s133 = smul.addr %s132, 16
        %s134 = scalar_lea.vmem [#allocation2], %s133
        %p135 = scmp.lt.s32.totalorder %s16, 1
        %s136 = scalar_select %p135, %s16, 1
        %s137 = smul.addr %s136, 8
        %s138 = scalar_lea.vmem %s0, %s137
        %v140 = vld [vmem:[%s138] sm:$0xff]
        %v141 = vpack.c.bf16 %v140, %v140
        %v142 = vld [vmem:[%s1] sm:$0xff]
        %v143 = vld [vmem:[%s1 + $0x8] sm:$0xff]
        %v144 = vld [vmem:[%s1 + $0x10] sm:$0xff]
        %v145 = vld [vmem:[%s1 + $0x18] sm:$0xff]
        %v146 = vld [vmem:[%s1 + $0x20] sm:$0xff]
        %v147 = vld [vmem:[%s1 + $0x28] sm:$0xff]
        %v148 = vld [vmem:[%s1 + $0x30] sm:$0xff]
        %v149 = vld [vmem:[%s1 + $0x38] sm:$0xff]
        %v150 = vld [vmem:[%s1 + $0x40] sm:$0xff]
        %v151 = vld [vmem:[%s1 + $0x48] sm:$0xff]
        %v152 = vld [vmem:[%s1 + $0x50] sm:$0xff]
        %v153 = vld [vmem:[%s1 + $0x58] sm:$0xff]
        %v154 = vld [vmem:[%s1 + $0x60] sm:$0xff]
        %v155 = vld [vmem:[%s1 + $0x68] sm:$0xff]
        %v156 = vld [vmem:[%s1 + $0x70] sm:$0xff]
        %v157 = vld [vmem:[%s1 + $0x78] sm:$0xff]
        %v174 = vunpack.c.l.b16 %v142
        %v175 = vunpack.c.h.b16 %v142
        %v176 = vunpack.c.l.b16 %v143
        %v177 = vunpack.c.h.b16 %v143
        %v178 = vunpack.c.l.b16 %v144
        %v179 = vunpack.c.h.b16 %v144
        %v180 = vunpack.c.l.b16 %v145
        %v181 = vunpack.c.h.b16 %v145
        %v182 = vunpack.c.l.b16 %v146
        %v183 = vunpack.c.h.b16 %v146
        %v184 = vunpack.c.l.b16 %v147
        %v185 = vunpack.c.h.b16 %v147
        %v186 = vunpack.c.l.b16 %v148
        %v187 = vunpack.c.h.b16 %v148
        %v188 = vunpack.c.l.b16 %v149
        %v189 = vunpack.c.h.b16 %v149
        %v190 = vunpack.c.l.b16 %v150
        %v191 = vunpack.c.h.b16 %v150
        %v192 = vunpack.c.l.b16 %v151
        %v193 = vunpack.c.h.b16 %v151
        %v194 = vunpack.c.l.b16 %v152
        %v195 = vunpack.c.h.b16 %v152
        %v196 = vunpack.c.l.b16 %v153
        %v197 = vunpack.c.h.b16 %v153
        %v198 = vunpack.c.l.b16 %v154
        %v199 = vunpack.c.h.b16 %v154
        %v200 = vunpack.c.l.b16 %v155
        %v201 = vunpack.c.h.b16 %v155
        %v202 = vunpack.c.l.b16 %v156
        %v203 = vunpack.c.h.b16 %v156
        %v204 = vunpack.c.l.b16 %v157
        %v205 = vunpack.c.h.b16 %v157
        %v206 = vpack.c.b16 %v176, %v174
        %v207 = vpack.c.b16 %v177, %v175
        %v208 = vpack.c.b16 %v180, %v178
        %v209 = vpack.c.b16 %v181, %v179
        %v210 = vpack.c.b16 %v184, %v182
        %v211 = vpack.c.b16 %v185, %v183
        %v212 = vpack.c.b16 %v188, %v186
        %v213 = vpack.c.b16 %v189, %v187
        %v214 = vpack.c.b16 %v192, %v190
        %v215 = vpack.c.b16 %v193, %v191
        %v216 = vpack.c.b16 %v196, %v194
        %v217 = vpack.c.b16 %v197, %v195
        %v218 = vpack.c.b16 %v200, %v198
        %v219 = vpack.c.b16 %v201, %v199
        %v220 = vpack.c.b16 %v204, %v202
        %v221 = vpack.c.b16 %v205, %v203
        %238 = vmatprep.subr.bf16.mxu0 %v221
        %239 = vmatpush1.bf16.msra.mxu0 %v220
        %240 = vmatprep.subr.bf16.mxu0 %v219
        %241 = vmatpush1.bf16.msra.mxu0 %v218
        %242 = vmatprep.subr.bf16.mxu0 %v217
        %243 = vmatpush1.bf16.msra.mxu0 %v216
        %244 = vmatprep.subr.bf16.mxu0 %v215
        %245 = vmatpush1.bf16.msra.mxu0 %v214
        %246 = vmatprep.subr.bf16.mxu0 %v213
        %247 = vmatpush1.bf16.msra.mxu0 %v212
        %248 = vmatprep.subr.bf16.mxu0 %v211
        %249 = vmatpush1.bf16.msra.mxu0 %v210
        %250 = vmatprep.subr.bf16.mxu0 %v209
        %251 = vmatpush1.bf16.msra.mxu0 %v208
        %252 = vmatprep.subr.bf16.mxu0 %v207
        %253 = vmatpush1.bf16.msra.mxu0 %v206
        %254 = vmatprep.subr.bf16.mxu0 0
        %255 = vmatpush2.bf16.msra.mxu0 0
        %256 = vmatprep.subr.bf16.mxu0 0
        %257 = vmatpush2.bf16.msra.mxu0 0
        %258 = vmatprep.subr.bf16.mxu0 0
        %259 = vmatpush2.bf16.msra.mxu0 0
        %260 = vmatprep.subr.bf16.mxu0 0
        %261 = vmatpush2.bf16.msra.mxu0 0
        %262 = vmatprep.subr.bf16.mxu0 0
        %263 = vmatpush2.bf16.msra.mxu0 0
        %264 = vmatprep.subr.bf16.mxu0 0
        %265 = vmatpush2.bf16.msra.mxu0 0
        %266 = vmatprep.subr.bf16.mxu0 0
        %267 = vmatpush2.bf16.msra.mxu0 0
        %268 = vmatprep.subr.bf16.mxu0 0
        %269 = vmatpush2.bf16.msra.mxu0 0
        %270 = vmatprep.mubr.bf16.mxu0 0
        %271 = vmatmul.mubr.bf16.gmra.mxu0 %v141
        %v272 = vpop.f32.mrf.mxu0
        %v273 = vadd.f32 0.0, %v272
        %v274 = vpop.f32.mrf.mxu0
        %v275 = vadd.f32 0.0, %v274
        %v276 = vpop.f32.mrf.mxu0
        %v277 = vpop.f32.mrf.mxu0
        %278 = vdwg.mxu0
        %v279 = vmax.f32 %v273, %v275
        %280 = vmax.xlane.f32.xlu0 %v279
        %v281 = vpop.xlane.xlu0 %280
        %v282 = vsub.f32 %v273, %v281
        %v283 = vsub.f32 %v275, %v281
        %v284 = vmul.f32 %v282, 1.442695
        %v285 = vpow.pop %v284
        %v286 = vmul.f32 %v283, 1.442695
        %v287 = vpow.pop %v286
        %v288 = vadd.f32 %v285, %v287
        %289 = vadd.xlane.f32.xlu0 %v288
        %v290 = vpop.xlane.xlu0 %289
        %v291 = vrcp.pop %v290
        %v292 = vmul.f32 %v285, %v291
        %v293 = vmul.f32 %v287, %v291
        %294 = vst [vmem:[%s134] sm:$0xff] %v292
        %295 = vst [vmem:[%s134 + $0x8] sm:$0xff] %v293
        %s296 = sand.u32 %s71, 1
        %s297 = scalar_lea.sflag [#allocation3], %s296
        %s298 = sand.u32 %s71, 1
        %s299 = smul.addr %s298, 16
        %s300 = scalar_lea.vmem [#allocation2], %s299
        // Predicated region
        $region29: #{_lambda_.21} parent=27 // pred_check
          %p301 = pneg %p81
        $region30: #{_lambda_.21} parent=27 // pred_check_branch
          %303 = sbr.rel (%p301) target = $region32
        $region31: #{_lambda_.21} parent=27 // pred_region
          %s305 = ssub.s32 256, 256
          %306 = vsyncadd %s297, %s305
          %s307 = smul.addr %s16, 2
          %s308 = smul.addr %s307, 128
          %s309 = scalar_lea.hbm %s2, %s308
          %s311 = sshll.u32 %s300, 4
          %s312 = int_to_ptr.vmem [resolvable:$true] %s311
          %314 = dma.vmem_to_hbm [thread:$0]  %s312, 256, %s309, %s297
        $region32: #{_lambda_.21} parent=27 // pred_fallthru
          _
      $region28: #{_lambda_.21} parent=5 // pred_fallthru
        _
      %p315 = scmp.le.s32.totalorder 2, %s11
      // Predicated region
      $region33: #{_lambda_.21} parent=5 // pred_check
        %p316 = pneg %p315
      $region34: #{_lambda_.21} parent=5 // pred_check_branch
        %318 = sbr.rel (%p316) target = $region36
      $region35: #{_lambda_.21} parent=5 // pred_region
        %s319 = ssub.s32 %s11, 2
        // Predicated region
        $region37: #{_lambda_.21} parent=35 // pred_check
          %p320 = pneg %p87
        $region38: #{_lambda_.21} parent=35 // pred_check_branch
          %322 = sbr.rel (%p320) target = $region40
        $region39: #{_lambda_.21} parent=35 // pred_region
          %s323 = sand.u32 %s72, 1
          %s324 = scalar_lea.sflag [#allocation3], %s323
          %s325 = sand.u32 %s72, 1
          %s326 = smul.addr %s325, 16
          %s327 = scalar_lea.vmem [#allocation2], %s326
          %328 = dma.done %s324, 256
        $region40: #{_lambda_.21} parent=35 // pred_fallthru
          _
      $region36: #{_lambda_.21} parent=5 // pred_fallthru
        _
    $region6: #{_lambda_.21} parent=1 // loop_footer
      %s15 = sadd.s32 1, %s11
    $region7: #{_lambda_.21} parent=1 // loop_footer_branch
      %10 = sbr.rel target = $region3
    $region8: #{_lambda_.21} parent=1 // loop_exit
      _
    %329 = vsyncpa [#allocation3], 1
    %s330 = scalar_lea.sflag [#allocation3], 1
    %331 = vsyncpa %s330, 1

// kernel: _lambda_.16
$region0: #{_lambda_.16}
  #allocation0 [shape = 'u32[]', space=smem, size = 0x4, offset = 0x4, fixed_abs, tag = 'smem constant byte address 0x4 - core index']
  #allocation1 [shape = 'u32[144,128]{1,0:T(1,128)}', space=vmem, size = 0x12000, scoped, tag = 'internal scratch']
  %s0 = inlined_call_operand.vmem [shape: f32[2,8,128], index: 0, kind: input, shape index: {}]
  %s1 = inlined_call_operand.vmem [shape: f32[2,8,128], index: 1, kind: input, shape index: {}]
  %s2 = inlined_call_operand.vmem [shape: bf16[128,128], index: 2, kind: input, shape index: {}]
  %s3 = inlined_call_operand.vmem [shape: f32[1,128], index: 3, kind: input, shape index: {}]
  %s4 = inlined_call_operand.vmem [shape: bf16[128,256], index: 4, kind: input, shape index: {}]
  %s5 = inlined_call_operand.vmem [shape: f32[1,256], index: 5, kind: input, shape index: {}]
  %s6 = inlined_call_operand.vmem [shape: bf16[128,128], index: 6, kind: input, shape index: {}]
  %s7 = inlined_call_operand.vmem [shape: f32[1,128], index: 7, kind: input, shape index: {}]
  %s8 = inlined_call_operand.vmem [shape: f32[1,128], index: 8, kind: input, shape index: {}]
  %s9 = inlined_call_operand.vmem [shape: f32[1,128], index: 9, kind: input, shape index: {}]
  %s10 = inlined_call_operand.vmem [shape: f32[2,8,128], index: 10, kind: output, shape index: {}]
  %s11 = sld [smem:[#allocation0]]
  $region73: #{_lambda_.16} parent=0
    _
  %s13 = ssub.s32 1, %s11
  %s14 = scalar_select 0, %s13, %s11
  loop: start=0, step=1, limit=4
  $region2: #{_lambda_.16} parent=0 // loop_pre_header
    _
  $region3: #{_lambda_.16} parent=0 // loop_header
    %s16 = sphi 0, %s20
    %p17 = scmp.ge.s32.totalorder %s16, 4
    %s26 = sphi 0, %s28
    %s29 = sphi 0, %s26
    %s30 = sphi 0, %s29
    %s46 = sphi 0, %s30
    %s52 = sphi 0, %s54
    %s55 = sphi 0, %s52
    %s56 = sphi 0, %s55
    %s72 = sphi 0, %s56
    %s76 = sphi 0, %s76
    %s78 = sphi 0, %s76
    %s79 = sphi 0, %s78
    %s93 = sphi 0, %s79
    %s97 = sphi 0, %s97
    %s99 = sphi 0, %s97
    %s100 = sphi 0, %s99
    %s114 = sphi 0, %s100
    %s118 = sphi 0, %s118
    %s120 = sphi 0, %s118
    %s121 = sphi 0, %s120
    %s135 = sphi 0, %s121
    %s139 = sphi 0, %s139
    %s141 = sphi 0, %s139
    %s142 = sphi 0, %s141
    %s156 = sphi 0, %s142
    %s160 = sphi 0, %s160
    %s162 = sphi 0, %s160
    %s163 = sphi 0, %s162
    %s177 = sphi 0, %s163
    %s181 = sphi 0, %s181
    %s183 = sphi 0, %s181
    %s184 = sphi 0, %s183
    %s198 = sphi 0, %s184
    %s202 = sphi 0, %s202
    %s204 = sphi 0, %s202
    %s205 = sphi 0, %s204
    %s219 = sphi 0, %s205
    %s223 = sphi 0, %s223
    %s225 = sphi 0, %s223
    %s226 = sphi 0, %s225
    %s240 = sphi 0, %s226
    %s246 = sphi 0, %s248
    %s249 = sphi 0, %s246
    %s250 = sphi 0, %s249
    %s266 = sphi 0, %s250
  $region4: #{_lambda_.16} parent=0 // loop_header_branch
    %19 = sbr.rel (%p17) target = $region8
  $region5: #{_lambda_.16} parent=0 // loop_body
    %s21 = ssub.s32 %s16, 1
    %s22 = ssub.s32 %s16, 2
    %s23 = sadd.s32 %s16, 1
    %s24 = ssub.s32 %s16, %s23
    %p25 = scmp.eq.s32.totalorder %s24, 0
    %s27 = sadd.s32 %s26, 1
    %s28 = scalar_select %p25, %s26, %s27
    %p31 = pneg %p25
    %p32 = scmp.eq.s32.totalorder %s16, 1
    %p33 = por %p31, %p32
    %p34 = scmp.ne.s32.totalorder %s26, %s29
    %p35 = scmp.eq.s32.totalorder %s16, 0
    %p36 = por %p34, %p35
    %p37 = scmp.ne.s32.totalorder %s26, %s29
    %p38 = scmp.eq.s32.totalorder %s21, 1
    %p39 = por %p37, %p38
    %p40 = scmp.ne.s32.totalorder %s29, %s30
    %p41 = scmp.eq.s32.totalorder %s21, 0
    %p42 = por %p40, %p41
    %p43 = scmp.ne.s32.totalorder %s29, %s30
    %p44 = scmp.eq.s32.totalorder %s22, 1
    %p45 = por %p43, %p44
    %p47 = scmp.ne.s32.totalorder %s30, %s46
    %p48 = scmp.eq.s32.totalorder %s22, 0
    %p49 = por %p47, %p48
    %s50 = ssub.s32 %s16, %s23
    %p51 = scmp.eq.s32.totalorder %s50, 0
    %s53 = sadd.s32 %s52, 1
    %s54 = scalar_select %p51, %s52, %s53
    %p57 = pneg %p51
    %p58 = scmp.eq.s32.totalorder %s16, 1
    %p59 = por %p57, %p58
    %p60 = scmp.ne.s32.totalorder %s52, %s55
    %p61 = scmp.eq.s32.totalorder %s16, 0
    %p62 = por %p60, %p61
    %p63 = scmp.ne.s32.totalorder %s52, %s55
    %p64 = scmp.eq.s32.totalorder %s21, 1
    %p65 = por %p63, %p64
    %p66 = scmp.ne.s32.totalorder %s55, %s56
    %p67 = scmp.eq.s32.totalorder %s21, 0
    %p68 = por %p66, %p67
    %p69 = scmp.ne.s32.totalorder %s55, %s56
    %p70 = scmp.eq.s32.totalorder %s22, 1
    %p71 = por %p69, %p70
    %p73 = scmp.ne.s32.totalorder %s56, %s72
    %p74 = scmp.eq.s32.totalorder %s22, 0
    %p75 = por %p73, %p74
    %s77 = sadd.s32 %s76, 1
    %p80 = scmp.eq.s32.totalorder %s16, 1
    %p81 = scmp.ne.s32.totalorder %s76, %s78
    %p82 = scmp.eq.s32.totalorder %s16, 0
    %p83 = por %p81, %p82
    %p84 = scmp.ne.s32.totalorder %s76, %s78
    %p85 = scmp.eq.s32.totalorder %s21, 1
    %p86 = por %p84, %p85
    %p87 = scmp.ne.s32.totalorder %s78, %s79
    %p88 = scmp.eq.s32.totalorder %s21, 0
    %p89 = por %p87, %p88
    %p90 = scmp.ne.s32.totalorder %s78, %s79
    %p91 = scmp.eq.s32.totalorder %s22, 1
    %p92 = por %p90, %p91
    %p94 = scmp.ne.s32.totalorder %s79, %s93
    %p95 = scmp.eq.s32.totalorder %s22, 0
    %p96 = por %p94, %p95
    %s98 = sadd.s32 %s97, 1
    %p101 = scmp.eq.s32.totalorder %s16, 1
    %p102 = scmp.ne.s32.totalorder %s97, %s99
    %p103 = scmp.eq.s32.totalorder %s16, 0
    %p104 = por %p102, %p103
    %p105 = scmp.ne.s32.totalorder %s97, %s99
    %p106 = scmp.eq.s32.totalorder %s21, 1
    %p107 = por %p105, %p106
    %p108 = scmp.ne.s32.totalorder %s99, %s100
    %p109 = scmp.eq.s32.totalorder %s21, 0
    %p110 = por %p108, %p109
    %p111 = scmp.ne.s32.totalorder %s99, %s100
    %p112 = scmp.eq.s32.totalorder %s22, 1
    %p113 = por %p111, %p112
    %p115 = scmp.ne.s32.totalorder %s100, %s114
    %p116 = scmp.eq.s32.totalorder %s22, 0
    %p117 = por %p115, %p116
    %s119 = sadd.s32 %s118, 1
    %p122 = scmp.eq.s32.totalorder %s16, 1
    %p123 = scmp.ne.s32.totalorder %s118, %s120
    %p124 = scmp.eq.s32.totalorder %s16, 0
    %p125 = por %p123, %p124
    %p126 = scmp.ne.s32.totalorder %s118, %s120
    %p127 = scmp.eq.s32.totalorder %s21, 1
    %p128 = por %p126, %p127
    %p129 = scmp.ne.s32.totalorder %s120, %s121
    %p130 = scmp.eq.s32.totalorder %s21, 0
    %p131 = por %p129, %p130
    %p132 = scmp.ne.s32.totalorder %s120, %s121
    %p133 = scmp.eq.s32.totalorder %s22, 1
    %p134 = por %p132, %p133
    %p136 = scmp.ne.s32.totalorder %s121, %s135
    %p137 = scmp.eq.s32.totalorder %s22, 0
    %p138 = por %p136, %p137
    %s140 = sadd.s32 %s139, 1
    %p143 = scmp.eq.s32.totalorder %s16, 1
    %p144 = scmp.ne.s32.totalorder %s139, %s141
    %p145 = scmp.eq.s32.totalorder %s16, 0
    %p146 = por %p144, %p145
    %p147 = scmp.ne.s32.totalorder %s139, %s141
    %p148 = scmp.eq.s32.totalorder %s21, 1
    %p149 = por %p147, %p148
    %p150 = scmp.ne.s32.totalorder %s141, %s142
    %p151 = scmp.eq.s32.totalorder %s21, 0
    %p152 = por %p150, %p151
    %p153 = scmp.ne.s32.totalorder %s141, %s142
    %p154 = scmp.eq.s32.totalorder %s22, 1
    %p155 = por %p153, %p154
    %p157 = scmp.ne.s32.totalorder %s142, %s156
    %p158 = scmp.eq.s32.totalorder %s22, 0
    %p159 = por %p157, %p158
    %s161 = sadd.s32 %s160, 1
    %p164 = scmp.eq.s32.totalorder %s16, 1
    %p165 = scmp.ne.s32.totalorder %s160, %s162
    %p166 = scmp.eq.s32.totalorder %s16, 0
    %p167 = por %p165, %p166
    %p168 = scmp.ne.s32.totalorder %s160, %s162
    %p169 = scmp.eq.s32.totalorder %s21, 1
    %p170 = por %p168, %p169
    %p171 = scmp.ne.s32.totalorder %s162, %s163
    %p172 = scmp.eq.s32.totalorder %s21, 0
    %p173 = por %p171, %p172
    %p174 = scmp.ne.s32.totalorder %s162, %s163
    %p175 = scmp.eq.s32.totalorder %s22, 1
    %p176 = por %p174, %p175
    %p178 = scmp.ne.s32.totalorder %s163, %s177
    %p179 = scmp.eq.s32.totalorder %s22, 0
    %p180 = por %p178, %p179
    %s182 = sadd.s32 %s181, 1
    %p185 = scmp.eq.s32.totalorder %s16, 1
    %p186 = scmp.ne.s32.totalorder %s181, %s183
    %p187 = scmp.eq.s32.totalorder %s16, 0
    %p188 = por %p186, %p187
    %p189 = scmp.ne.s32.totalorder %s181, %s183
    %p190 = scmp.eq.s32.totalorder %s21, 1
    %p191 = por %p189, %p190
    %p192 = scmp.ne.s32.totalorder %s183, %s184
    %p193 = scmp.eq.s32.totalorder %s21, 0
    %p194 = por %p192, %p193
    %p195 = scmp.ne.s32.totalorder %s183, %s184
    %p196 = scmp.eq.s32.totalorder %s22, 1
    %p197 = por %p195, %p196
    %p199 = scmp.ne.s32.totalorder %s184, %s198
    %p200 = scmp.eq.s32.totalorder %s22, 0
    %p201 = por %p199, %p200
    %s203 = sadd.s32 %s202, 1
    %p206 = scmp.eq.s32.totalorder %s16, 1
    %p207 = scmp.ne.s32.totalorder %s202, %s204
    %p208 = scmp.eq.s32.totalorder %s16, 0
    %p209 = por %p207, %p208
    %p210 = scmp.ne.s32.totalorder %s202, %s204
    %p211 = scmp.eq.s32.totalorder %s21, 1
    %p212 = por %p210, %p211
    %p213 = scmp.ne.s32.totalorder %s204, %s205
    %p214 = scmp.eq.s32.totalorder %s21, 0
    %p215 = por %p213, %p214
    %p216 = scmp.ne.s32.totalorder %s204, %s205
    %p217 = scmp.eq.s32.totalorder %s22, 1
    %p218 = por %p216, %p217
    %p220 = scmp.ne.s32.totalorder %s205, %s219
    %p221 = scmp.eq.s32.totalorder %s22, 0
    %p222 = por %p220, %p221
    %s224 = sadd.s32 %s223, 1
    %p227 = scmp.eq.s32.totalorder %s16, 1
    %p228 = scmp.ne.s32.totalorder %s223, %s225
    %p229 = scmp.eq.s32.totalorder %s16, 0
    %p230 = por %p228, %p229
    %p231 = scmp.ne.s32.totalorder %s223, %s225
    %p232 = scmp.eq.s32.totalorder %s21, 1
    %p233 = por %p231, %p232
    %p234 = scmp.ne.s32.totalorder %s225, %s226
    %p235 = scmp.eq.s32.totalorder %s21, 0
    %p236 = por %p234, %p235
    %p237 = scmp.ne.s32.totalorder %s225, %s226
    %p238 = scmp.eq.s32.totalorder %s22, 1
    %p239 = por %p237, %p238
    %p241 = scmp.ne.s32.totalorder %s226, %s240
    %p242 = scmp.eq.s32.totalorder %s22, 0
    %p243 = por %p241, %p242
    %s244 = ssub.s32 %s16, %s23
    %p245 = scmp.eq.s32.totalorder %s244, 0
    %s247 = sadd.s32 %s246, 1
    %s248 = scalar_select %p245, %s246, %s247
    %p251 = pneg %p245
    %p252 = scmp.eq.s32.totalorder %s16, 1
    %p253 = por %p251, %p252
    %p254 = scmp.ne.s32.totalorder %s246, %s249
    %p255 = scmp.eq.s32.totalorder %s16, 0
    %p256 = por %p254, %p255
    %p257 = scmp.ne.s32.totalorder %s246, %s249
    %p258 = scmp.eq.s32.totalorder %s21, 1
    %p259 = por %p257, %p258
    %p260 = scmp.ne.s32.totalorder %s249, %s250
    %p261 = scmp.eq.s32.totalorder %s21, 0
    %p262 = por %p260, %p261
    %p263 = scmp.ne.s32.totalorder %s249, %s250
    %p264 = scmp.eq.s32.totalorder %s22, 1
    %p265 = por %p263, %p264
    %p267 = scmp.ne.s32.totalorder %s250, %s266
    %p268 = scmp.eq.s32.totalorder %s22, 0
    %p269 = por %p267, %p268
    %p270 = scmp.le.s32.totalorder 1, %s16
    %p271 = scmp.lt.s32.totalorder %s16, 3
    %p272 = pnand %p270, %p271
    %p273 = pneg %p272
    // Predicated region
    $region9: #{_lambda_.16} parent=5 // pred_check
      _
    $region10: #{_lambda_.16} parent=5 // pred_check_branch
      %275 = sbr.rel (%p272) target = $region12
    $region11: #{_lambda_.16} parent=5 // pred_region
      %s276 = ssub.s32 %s16, 1
      // Predicated region
      $region13: #{_lambda_.16} parent=11 // pred_check
        %p277 = pneg %p89
      $region14: #{_lambda_.16} parent=11 // pred_check_branch
        %279 = sbr.rel (%p277) target = $region16
      $region15: #{_lambda_.16} parent=11 // pred_region
        _
      $region16: #{_lambda_.16} parent=11 // pred_fallthru
        _
      // Predicated region
      $region17: #{_lambda_.16} parent=11 // pred_check
        %p280 = pneg %p110
      $region18: #{_lambda_.16} parent=11 // pred_check_branch
        %282 = sbr.rel (%p280) target = $region20
      $region19: #{_lambda_.16} parent=11 // pred_region
        _
      $region20: #{_lambda_.16} parent=11 // pred_fallthru
        _
      // Predicated region
      $region21: #{_lambda_.16} parent=11 // pred_check
        %p283 = pneg %p131
      $region22: #{_lambda_.16} parent=11 // pred_check_branch
        %285 = sbr.rel (%p283) target = $region24
      $region23: #{_lambda_.16} parent=11 // pred_region
        _
      $region24: #{_lambda_.16} parent=11 // pred_fallthru
        _
      // Predicated region
      $region25: #{_lambda_.16} parent=11 // pred_check
        %p286 = pneg %p152
      $region26: #{_lambda_.16} parent=11 // pred_check_branch
        %288 = sbr.rel (%p286) target = $region28
      $region27: #{_lambda_.16} parent=11 // pred_region
        _
      $region28: #{_lambda_.16} parent=11 // pred_fallthru
        _
      // Predicated region
      $region29: #{_lambda_.16} parent=11 // pred_check
        %p289 = pneg %p173
      $region30: #{_lambda_.16} parent=11 // pred_check_branch
        %291 = sbr.rel (%p289) target = $region32
      $region31: #{_lambda_.16} parent=11 // pred_region
        _
      $region32: #{_lambda_.16} parent=11 // pred_fallthru
        _
      // Predicated region
      $region33: #{_lambda_.16} parent=11 // pred_check
        %p292 = pneg %p194
      $region34: #{_lambda_.16} parent=11 // pred_check_branch
        %294 = sbr.rel (%p292) target = $region36
      $region35: #{_lambda_.16} parent=11 // pred_region
        _
      $region36: #{_lambda_.16} parent=11 // pred_fallthru
        _
      // Predicated region
      $region37: #{_lambda_.16} parent=11 // pred_check
        %p295 = pneg %p215
      $region38: #{_lambda_.16} parent=11 // pred_check_branch
        %297 = sbr.rel (%p295) target = $region40
      $region39: #{_lambda_.16} parent=11 // pred_region
        _
      $region40: #{_lambda_.16} parent=11 // pred_fallthru
        _
      // Predicated region
      $region41: #{_lambda_.16} parent=11 // pred_check
        %p298 = pneg %p236
      $region42: #{_lambda_.16} parent=11 // pred_check_branch
        %300 = sbr.rel (%p298) target = $region44
      $region43: #{_lambda_.16} parent=11 // pred_region
        _
      $region44: #{_lambda_.16} parent=11 // pred_fallthru
        _
    $region12: #{_lambda_.16} parent=5 // pred_fallthru
      _
    %p301 = scmp.lt.s32.totalorder %s16, 2
    // Predicated region
    $region45: #{_lambda_.16} parent=5 // pred_check
      %p302 = pneg %p301
    $region46: #{_lambda_.16} parent=5 // pred_check_branch
      %304 = sbr.rel (%p302) target = $region48
    $region47: #{_lambda_.16} parent=5 // pred_region
      // Predicated region
      $region49: #{_lambda_.16} parent=47 // pred_check
        %p305 = pneg %p36
      $region50: #{_lambda_.16} parent=47 // pred_check_branch
        %307 = sbr.rel (%p305) target = $region52
      $region51: #{_lambda_.16} parent=47 // pred_region
        %p308 = scmp.lt.s32.totalorder %s16, 1
        %s309 = scalar_select %p308, %s16, 1
        %s310 = smul.addr %s309, 8
        %s311 = scalar_lea.vmem %s0, %s310
      $region52: #{_lambda_.16} parent=47 // pred_fallthru
        _
      // Predicated region
      $region53: #{_lambda_.16} parent=47 // pred_check
        %p312 = pneg %p62
      $region54: #{_lambda_.16} parent=47 // pred_check_branch
        %314 = sbr.rel (%p312) target = $region56
      $region55: #{_lambda_.16} parent=47 // pred_region
        %p315 = scmp.lt.s32.totalorder %s16, 1
        %s316 = scalar_select %p315, %s16, 1
        %s317 = smul.addr %s316, 8
        %s318 = scalar_lea.vmem %s1, %s317
      $region56: #{_lambda_.16} parent=47 // pred_fallthru
        _
    $region48: #{_lambda_.16} parent=5 // pred_fallthru
      _
    %p319 = scmp.le.s32.totalorder 1, %s16
    %p320 = scmp.lt.s32.totalorder %s16, 3
    %p321 = pnand %p319, %p320
    %p322 = pneg %p321
    // Predicated region
    $region57: #{_lambda_.16} parent=5 // pred_check
      _
    $region58: #{_lambda_.16} parent=5 // pred_check_branch
      %324 = sbr.rel (%p321) target = $region60
    $region59: #{_lambda_.16} parent=5 // pred_region
      %s325 = ssub.s32 %s16, 1
      %p326 = scmp.lt.s32.totalorder %s21, 1
      %s327 = scalar_select %p326, %s21, 1
      %s328 = smul.addr %s327, 8
      %s329 = scalar_lea.vmem %s0, %s328
      %p330 = pneg %p42
      %p331 = pneg %p39
      %p332 = scmp.lt.s32.totalorder %s21, 1
      %s333 = scalar_select %p332, %s21, 1
      %s334 = smul.addr %s333, 8
      %s335 = scalar_lea.vmem %s1, %s334
      %p336 = pneg %p68
      %p337 = pneg %p65
      %p338 = pneg %p89
      %p339 = pneg %p86
      %p340 = pneg %p110
      %p341 = pneg %p107
      %p342 = pneg %p131
      %p343 = pneg %p128
      %p344 = pneg %p152
      %p345 = pneg %p149
      %p346 = pneg %p173
      %p347 = pneg %p170
      %p348 = pneg %p194
      %p349 = pneg %p191
      %p350 = pneg %p215
      %p351 = pneg %p212
      %p352 = pneg %p236
      %p353 = pneg %p233
      %p354 = pneg %p262
      %p355 = pneg %p259
      %p356 = scmp.lt.s32.totalorder %s21, 1
      %s357 = scalar_select %p356, %s21, 1
      %s358 = smul.addr %s357, 8
      %s359 = scalar_lea.vmem %s10, %s358
      %p360 = scmp.lt.s32.totalorder %s21, 1
      %s361 = scalar_select %p360, %s21, 1
      %s362 = smul.addr %s361, 8
      %s363 = scalar_lea.vmem %s0, %s362
      %p364 = scmp.lt.s32.totalorder %s21, 1
      %s365 = scalar_select %p364, %s21, 1
      %s366 = smul.addr %s365, 8
      %s367 = scalar_lea.vmem %s1, %s366
      %p368 = scmp.lt.s32.totalorder %s21, 1
      %s369 = scalar_select %p368, %s21, 1
      %s370 = smul.addr %s369, 8
      %s371 = scalar_lea.vmem %s10, %s370
      %v373 = vld [vmem:[%s363] sm:$0xff]
      %v374 = vld [vmem:[%s367] sm:$0xff]
      %v375 = vpack.c.bf16 %v373, %v373
      %v376 = vld [vmem:[%s2] sm:$0xf]
      %v377 = vld [vmem:[%s2 + $0x4] sm:$0xf]
      %v378 = vld [vmem:[%s2 + $0x8] sm:$0xf]
      %v379 = vld [vmem:[%s2 + $0xc] sm:$0xf]
      %v380 = vld [vmem:[%s2 + $0x10] sm:$0xf]
      %v381 = vld [vmem:[%s2 + $0x14] sm:$0xf]
      %v382 = vld [vmem:[%s2 + $0x18] sm:$0xf]
      %v383 = vld [vmem:[%s2 + $0x1c] sm:$0xf]
      %v384 = vld [vmem:[%s2 + $0x20] sm:$0xf]
      %v385 = vld [vmem:[%s2 + $0x24] sm:$0xf]
      %v386 = vld [vmem:[%s2 + $0x28] sm:$0xf]
      %v387 = vld [vmem:[%s2 + $0x2c] sm:$0xf]
      %v388 = vld [vmem:[%s2 + $0x30] sm:$0xf]
      %v389 = vld [vmem:[%s2 + $0x34] sm:$0xf]
      %v390 = vld [vmem:[%s2 + $0x38] sm:$0xf]
      %v391 = vld [vmem:[%s2 + $0x3c] sm:$0xf]
      %v392 = vld [vmem:[%s3] sm:$0x1]
      %v394 = vlaneseq
      %v395 = vshrl.u32 %v394, 7
      %v396 = vsub.s32 0, %v395
      %v397 = vrot.slane %v392, %v396
      %v415 = vunpack.c.l.b16 %v376
      %v416 = vunpack.c.l.b16 %v377
      %v417 = vunpack.c.l.b16 %v378
      %v418 = vunpack.c.l.b16 %v379
      %v419 = vunpack.c.l.b16 %v380
      %v420 = vunpack.c.l.b16 %v381
      %v421 = vunpack.c.l.b16 %v382
      %v422 = vunpack.c.l.b16 %v383
      %v423 = vunpack.c.l.b16 %v384
      %v424 = vunpack.c.l.b16 %v385
      %v425 = vunpack.c.l.b16 %v386
      %v426 = vunpack.c.l.b16 %v387
      %v427 = vunpack.c.l.b16 %v388
      %v428 = vunpack.c.l.b16 %v389
      %v429 = vunpack.c.l.b16 %v390
      %v430 = vunpack.c.l.b16 %v391
      %v431 = vpack.c.b16 %v416, %v415
      %v432 = vpack.c.b16 %v418, %v417
      %v433 = vpack.c.b16 %v420, %v419
      %v434 = vpack.c.b16 %v422, %v421
      %v435 = vpack.c.b16 %v424, %v423
      %v436 = vpack.c.b16 %v426, %v425
      %v437 = vpack.c.b16 %v428, %v427
      %v438 = vpack.c.b16 %v430, %v429
      %447 = vmatprep.subr.bf16.mxu0 0
      %448 = vmatpush1.bf16.msra.mxu0 %v438
      %449 = vmatprep.subr.bf16.mxu0 0
      %450 = vmatpush1.bf16.msra.mxu0 %v437
      %451 = vmatprep.subr.bf16.mxu0 0
      %452 = vmatpush1.bf16.msra.mxu0 %v436
      %453 = vmatprep.subr.bf16.mxu0 0
      %454 = vmatpush1.bf16.msra.mxu0 %v435
      %455 = vmatprep.subr.bf16.mxu0 0
      %456 = vmatpush1.bf16.msra.mxu0 %v434
      %457 = vmatprep.subr.bf16.mxu0 0
      %458 = vmatpush1.bf16.msra.mxu0 %v433
      %459 = vmatprep.subr.bf16.mxu0 0
      %460 = vmatpush1.bf16.msra.mxu0 %v432
      %461 = vmatprep.subr.bf16.mxu0 0
      %462 = vmatpush1.bf16.msra.mxu0 %v431
      %463 = vmatprep.subr.bf16.mxu0 0
      %464 = vmatpush2.bf16.msra.mxu0 0
      %465 = vmatprep.subr.bf16.mxu0 0
      %466 = vmatpush2.bf16.msra.mxu0 0
      %467 = vmatprep.subr.bf16.mxu0 0
      %468 = vmatpush2.bf16.msra.mxu0 0
      %469 = vmatprep.subr.bf16.mxu0 0
      %470 = vmatpush2.bf16.msra.mxu0 0
      %471 = vmatprep.subr.bf16.mxu0 0
      %472 = vmatpush2.bf16.msra.mxu0 0
      %473 = vmatprep.subr.bf16.mxu0 0
      %474 = vmatpush2.bf16.msra.mxu0 0
      %475 = vmatprep.subr.bf16.mxu0 0
      %476 = vmatpush2.bf16.msra.mxu0 0
      %477 = vmatprep.subr.bf16.mxu0 0
      %478 = vmatpush2.bf16.msra.mxu0 0
      %479 = vmatprep.mubr.bf16.mxu0 0
      %480 = vmatmul.mubr.bf16.gmra.mxu0 %v375
      %v481 = vpop.f32.mrf.mxu0
      %v482 = vadd.f32 %v397, %v481
      %v483 = vpop.f32.mrf.mxu0
      %v484 = vpop.f32.mrf.mxu0
      %v485 = vpop.f32.mrf.mxu0
      %486 = vdwg.mxu0
      %v487 = vmax.f32 %v482, 0.0
      %v488 = vpack.c.bf16 %v374, %v374
      %v489 = vld [vmem:[%s4] sm:$0xff]
      %v490 = vld [vmem:[%s4 + $0x8] sm:$0xff]
      %v491 = vld [vmem:[%s4 + $0x10] sm:$0xff]
      %v492 = vld [vmem:[%s4 + $0x18] sm:$0xff]
      %v493 = vld [vmem:[%s4 + $0x20] sm:$0xff]
      %v494 = vld [vmem:[%s4 + $0x28] sm:$0xff]
      %v495 = vld [vmem:[%s4 + $0x30] sm:$0xff]
      %v496 = vld [vmem:[%s4 + $0x38] sm:$0xff]
      %v497 = vld [vmem:[%s4 + $0x40] sm:$0xff]
      %v498 = vld [vmem:[%s4 + $0x48] sm:$0xff]
      %v499 = vld [vmem:[%s4 + $0x50] sm:$0xff]
      %v500 = vld [vmem:[%s4 + $0x58] sm:$0xff]
      %v501 = vld [vmem:[%s4 + $0x60] sm:$0xff]
      %v502 = vld [vmem:[%s4 + $0x68] sm:$0xff]
      %v503 = vld [vmem:[%s4 + $0x70] sm:$0xff]
      %v504 = vld [vmem:[%s4 + $0x78] sm:$0xff]
      %v505 = vld [vmem:[%s5] sm:$0x3]
      %v507 = vlaneseq
      %v508 = vshrl.u32 %v507, 7
      %v509 = vsub.s32 0, %v508
      %v510 = vrot.slane %v505, %v509
      %v511 = vlaneseq
      %v512 = vshrl.u32 %v511, 7
      %v513 = vsub.s32 1, %v512
      %v514 = vrot.slane %v505, %v513
      %v533 = vunpack.c.l.b16 %v489
      %v534 = vunpack.c.h.b16 %v489
      %v535 = vunpack.c.l.b16 %v490
      %v536 = vunpack.c.h.b16 %v490
      %v537 = vunpack.c.l.b16 %v491
      %v538 = vunpack.c.h.b16 %v491
      %v539 = vunpack.c.l.b16 %v492
      %v540 = vunpack.c.h.b16 %v492
      %v541 = vunpack.c.l.b16 %v493
      %v542 = vunpack.c.h.b16 %v493
      %v543 = vunpack.c.l.b16 %v494
      %v544 = vunpack.c.h.b16 %v494
      %v545 = vunpack.c.l.b16 %v495
      %v546 = vunpack.c.h.b16 %v495
      %v547 = vunpack.c.l.b16 %v496
      %v548 = vunpack.c.h.b16 %v496
      %v549 = vunpack.c.l.b16 %v497
      %v550 = vunpack.c.h.b16 %v497
      %v551 = vunpack.c.l.b16 %v498
      %v552 = vunpack.c.h.b16 %v498
      %v553 = vunpack.c.l.b16 %v499
      %v554 = vunpack.c.h.b16 %v499
      %v555 = vunpack.c.l.b16 %v500
      %v556 = vunpack.c.h.b16 %v500
      %v557 = vunpack.c.l.b16 %v501
      %v558 = vunpack.c.h.b16 %v501
      %v559 = vunpack.c.l.b16 %v502
      %v560 = vunpack.c.h.b16 %v502
      %v561 = vunpack.c.l.b16 %v503
      %v562 = vunpack.c.h.b16 %v503
      %v563 = vunpack.c.l.b16 %v504
      %v564 = vunpack.c.h.b16 %v504
      %v565 = vpack.c.b16 %v535, %v533
      %v566 = vpack.c.b16 %v536, %v534
      %v567 = vpack.c.b16 %v539, %v537
      %v568 = vpack.c.b16 %v540, %v538
      %v569 = vpack.c.b16 %v543, %v541
      %v570 = vpack.c.b16 %v544, %v542
      %v571 = vpack.c.b16 %v547, %v545
      %v572 = vpack.c.b16 %v548, %v546
      %v573 = vpack.c.b16 %v551, %v549
      %v574 = vpack.c.b16 %v552, %v550
      %v575 = vpack.c.b16 %v555, %v553
      %v576 = vpack.c.b16 %v556, %v554
      %v577 = vpack.c.b16 %v559, %v557
      %v578 = vpack.c.b16 %v560, %v558
      %v579 = vpack.c.b16 %v563, %v561
      %v580 = vpack.c.b16 %v564, %v562
      %597 = vmatprep.subr.bf16.mxu0 %v580
      %598 = vmatpush1.bf16.msra.mxu0 %v579
      %599 = vmatprep.subr.bf16.mxu0 %v578
      %600 = vmatpush1.bf16.msra.mxu0 %v577
      %601 = vmatprep.subr.bf16.mxu0 %v576
      %602 = vmatpush1.bf16.msra.mxu0 %v575
      %603 = vmatprep.subr.bf16.mxu0 %v574
      %604 = vmatpush1.bf16.msra.mxu0 %v573
      %605 = vmatprep.subr.bf16.mxu0 %v572
      %606 = vmatpush1.bf16.msra.mxu0 %v571
      %607 = vmatprep.subr.bf16.mxu0 %v570
      %608 = vmatpush1.bf16.msra.mxu0 %v569
      %609 = vmatprep.subr.bf16.mxu0 %v568
      %610 = vmatpush1.bf16.msra.mxu0 %v567
      %611 = vmatprep.subr.bf16.mxu0 %v566
      %612 = vmatpush1.bf16.msra.mxu0 %v565
      %613 = vmatprep.subr.bf16.mxu0 0
      %614 = vmatpush2.bf16.msra.mxu0 0
      %615 = vmatprep.subr.bf16.mxu0 0
      %616 = vmatpush2.bf16.msra.mxu0 0
      %617 = vmatprep.subr.bf16.mxu0 0
      %618 = vmatpush2.bf16.msra.mxu0 0
      %619 = vmatprep.subr.bf16.mxu0 0
      %620 = vmatpush2.bf16.msra.mxu0 0
      %621 = vmatprep.subr.bf16.mxu0 0
      %622 = vmatpush2.bf16.msra.mxu0 0
      %623 = vmatprep.subr.bf16.mxu0 0
      %624 = vmatpush2.bf16.msra.mxu0 0
      %625 = vmatprep.subr.bf16.mxu0 0
      %626 = vmatpush2.bf16.msra.mxu0 0
      %627 = vmatprep.subr.bf16.mxu0 0
      %628 = vmatpush2.bf16.msra.mxu0 0
      %629 = vmatprep.mubr.bf16.mxu0 0
      %630 = vmatmul.mubr.bf16.gmra.mxu0 %v488
      %v631 = vpop.f32.mrf.mxu0
      %v632 = vadd.f32 %v510, %v631
      %v633 = vpop.f32.mrf.mxu0
      %v634 = vadd.f32 %v514, %v633
      %v635 = vpop.f32.mrf.mxu0
      %v636 = vpop.f32.mrf.mxu0
      %637 = vdwg.mxu0
      %v638 = vmax.f32 %v632, 0.0
      %v639 = vmax.f32 %v634, 0.0
      %v640 = vpack.c.bf16 %v487, %v487
      %v641 = vpack.c.bf16 %v638, %v638
      %vm642 = vcmask 261120
      %v644 = vsel %vm642, %v640, 0
      %v647 = vsel %vm642, %v641, 0
      %649 = vmatprep.subr.bf16.mxu0 0
      %650 = vmatpush1.bf16.xpose.msra.mxu0 0
      %651 = vmatprep.subr.bf16.mxu0 0
      %652 = vmatpush1.bf16.xpose.msra.mxu0 0
      %653 = vmatprep.subr.bf16.mxu0 0
      %654 = vmatpush1.bf16.xpose.msra.mxu0 0
      %655 = vmatprep.subr.bf16.mxu0 0
      %656 = vmatpush1.bf16.xpose.msra.mxu0 0
      %657 = vmatprep.subr.bf16.mxu0 0
      %658 = vmatpush1.bf16.xpose.msra.mxu0 0
      %659 = vmatprep.subr.bf16.mxu0 0
      %660 = vmatpush1.bf16.xpose.msra.mxu0 0
      %661 = vmatprep.subr.bf16.mxu0 0
      %662 = vmatpush1.bf16.xpose.msra.mxu0 0
      %663 = vmatprep.subr.bf16.mxu0 0
      %664 = vmatpush1.bf16.xpose.msra.mxu0 %v647
      %665 = vmatprep.subr.bf16.mxu0 0
      %666 = vmatpush2.bf16.xpose.msra.mxu0 0
      %667 = vmatprep.subr.bf16.mxu0 0
      %668 = vmatpush2.bf16.xpose.msra.mxu0 0
      %669 = vmatprep.subr.bf16.mxu0 0
      %670 = vmatpush2.bf16.xpose.msra.mxu0 0
      %671 = vmatprep.subr.bf16.mxu0 0
      %672 = vmatpush2.bf16.xpose.msra.mxu0 0
      %673 = vmatprep.subr.bf16.mxu0 0
      %674 = vmatpush2.bf16.xpose.msra.mxu0 0
      %675 = vmatprep.subr.bf16.mxu0 0
      %676 = vmatpush2.bf16.xpose.msra.mxu0 0
      %677 = vmatprep.subr.bf16.mxu0 0
      %678 = vmatpush2.bf16.xpose.msra.mxu0 0
      %679 = vmatprep.subr.bf16.mxu0 0
      %680 = vmatpush2.bf16.xpose.msra.mxu0 0
      %681 = vmatprep.mubr.bf16.mxu0 0
      %682 = vmatmul.mubr.bf16.gmra.mxu0 %v644
      %v683 = vpop.f32.mrf.mxu0
      %v684 = vadd.f32 0.0, %v683
      %v685 = vpop.f32.mrf.mxu0
      %v686 = vpop.f32.mrf.mxu0
      %v687 = vpop.f32.mrf.mxu0
      %688 = vdwg.mxu0
      %v689 = vmul.f32 %v684, 0.17677669
      %v690 = vsel %vm642, %v638, 0.0
      %691 = vadd.xlane.f32.xlu0 %v690
      %v692 = vpop.xlane.xlu0 %691
      %693 = vxpose.xlu0.b32.start [1/16] %v692, 128
      %694 = vxpose.xlu0.b32.cont [2/16] 0.0, 128
      %695 = vxpose.xlu0.b32.cont [3/16] 0.0, 128
      %696 = vxpose.xlu0.b32.cont [4/16] 0.0, 128
      %697 = vxpose.xlu0.b32.cont [5/16] 0.0, 128
      %698 = vxpose.xlu0.b32.cont [6/16] 0.0, 128
      %699 = vxpose.xlu0.b32.cont [7/16] 0.0, 128
      %700 = vxpose.xlu0.b32.cont [8/16] 0.0, 128
      %701 = vxpose.xlu0.b32.cont [9/16] 0.0, 128
      %702 = vxpose.xlu0.b32.cont [10/16] 0.0, 128
      %703 = vxpose.xlu0.b32.cont [11/16] 0.0, 128
      %704 = vxpose.xlu0.b32.cont [12/16] 0.0, 128
      %705 = vxpose.xlu0.b32.cont [13/16] 0.0, 128
      %706 = vxpose.xlu0.b32.cont [14/16] 0.0, 128
      %707 = vxpose.xlu0.b32.cont [15/16] 0.0, 128
      %708 = vxpose.xlu0.b32.end [16/16] 0.0, 128
      %v709 = vpop.trf.xlu0
      %v710 = vpop.trf.xlu0
      %v711 = vpop.trf.xlu0
      %v712 = vpop.trf.xlu0
      %v713 = vpop.trf.xlu0
      %v714 = vpop.trf.xlu0
      %v715 = vpop.trf.xlu0
      %v716 = vpop.trf.xlu0
      %v717 = vpop.trf.xlu0
      %v718 = vpop.trf.xlu0
      %v719 = vpop.trf.xlu0
      %v720 = vpop.trf.xlu0
      %v721 = vpop.trf.xlu0
      %v722 = vpop.trf.xlu0
      %v723 = vpop.trf.xlu0
      %v724 = vpop.trf.xlu0
      %vm725 = vcmp.eq.f32.partialorder %v709, 0.0
      %v726 = vsel %vm725, 1, 0
      %v727 = vlaneseq
      %v728 = vshrl.u32 %v727, 7
      %v729 = vsub.s32 0, %v728
      %v730 = vrot.slane %v726, %v729
      %vm731 = vcmp.eq.s32.totalorder %v730, 1
      %v732 = vsel %vm731, -4.2949673e+09, %v689
      %vm733 = vcmask 64512
      %v734 = vsel %vm733, %v732, -inf
      %735 = vmax.xlane.f32.xlu0 %v734
      %v736 = vpop.xlane.xlu0 %735
      %v737 = vsub.f32 %v732, %v736
      %v738 = vmul.f32 %v737, 1.442695
      %v739 = vpow.pop %v738
      %v740 = vsel %vm733, %v739, 0.0
      %741 = vadd.xlane.f32.xlu0 %v740
      %v742 = vpop.xlane.xlu0 %741
      %v743 = vrcp.pop %v742
      %v744 = vmul.f32 %v739, %v743
      %v745 = vpack.c.bf16 %v744, %v744
      %v746 = vpack.c.bf16 %v639, %v639
      %v748 = vsel %vm733, %v745, 0
      %vm750 = vcmask 1043456
      %v752 = vsel %vm750, %v746, 0
      %754 = vmatprep.subr.bf16.mxu0 0
      %755 = vmatpush1.bf16.msra.mxu0 0
      %756 = vmatprep.subr.bf16.mxu0 0
      %757 = vmatpush1.bf16.msra.mxu0 0
      %758 = vmatprep.subr.bf16.mxu0 0
      %759 = vmatpush1.bf16.msra.mxu0 0
      %760 = vmatprep.subr.bf16.mxu0 0
      %761 = vmatpush1.bf16.msra.mxu0 0
      %762 = vmatprep.subr.bf16.mxu0 0
      %763 = vmatpush1.bf16.msra.mxu0 0
      %764 = vmatprep.subr.bf16.mxu0 0
      %765 = vmatpush1.bf16.msra.mxu0 0
      %766 = vmatprep.subr.bf16.mxu0 0
      %767 = vmatpush1.bf16.msra.mxu0 0
      %768 = vmatprep.subr.bf16.mxu0 0
      %769 = vmatpush1.bf16.msra.mxu0 %v752
      %770 = vmatprep.subr.bf16.mxu0 0
      %771 = vmatpush2.bf16.msra.mxu0 0
      %772 = vmatprep.subr.bf16.mxu0 0
      %773 = vmatpush2.bf16.msra.mxu0 0
      %774 = vmatprep.subr.bf16.mxu0 0
      %775 = vmatpush2.bf16.msra.mxu0 0
      %776 = vmatprep.subr.bf16.mxu0 0
      %777 = vmatpush2.bf16.msra.mxu0 0
      %778 = vmatprep.subr.bf16.mxu0 0
      %779 = vmatpush2.bf16.msra.mxu0 0
      %780 = vmatprep.subr.bf16.mxu0 0
      %781 = vmatpush2.bf16.msra.mxu0 0
      %782 = vmatprep.subr.bf16.mxu0 0
      %783 = vmatpush2.bf16.msra.mxu0 0
      %784 = vmatprep.subr.bf16.mxu0 0
      %785 = vmatpush2.bf16.msra.mxu0 0
      %786 = vmatprep.mubr.bf16.mxu0 0
      %787 = vmatmul.mubr.bf16.gmra.mxu0 %v748
      %v788 = vpop.f32.mrf.mxu0
      %v789 = vadd.f32 0.0, %v788
      %v790 = vpop.f32.mrf.mxu0
      %v791 = vpop.f32.mrf.mxu0
      %v792 = vpop.f32.mrf.mxu0
      %793 = vdwg.mxu0
      %795 = vrot.lane.b32.xlu0 %v640, 96
      %v796 = vpop.permute.xlu0 %795
      %798 = vrot.lane.b32.xlu0 %v641, 96
      %v799 = vpop.permute.xlu0 %798
      %v801 = vsel %vm642, %v796, 0
      %v804 = vsel %vm642, %v799, 0
      %806 = vmatprep.subr.bf16.mxu0 0
      %807 = vmatpush1.bf16.xpose.msra.mxu0 0
      %808 = vmatprep.subr.bf16.mxu0 0
      %809 = vmatpush1.bf16.xpose.msra.mxu0 0
      %810 = vmatprep.subr.bf16.mxu0 0
      %811 = vmatpush1.bf16.xpose.msra.mxu0 0
      %812 = vmatprep.subr.bf16.mxu0 0
      %813 = vmatpush1.bf16.xpose.msra.mxu0 0
      %814 = vmatprep.subr.bf16.mxu0 0
      %815 = vmatpush1.bf16.xpose.msra.mxu0 0
      %816 = vmatprep.subr.bf16.mxu0 0
      %817 = vmatpush1.bf16.xpose.msra.mxu0 0
      %818 = vmatprep.subr.bf16.mxu0 0
      %819 = vmatpush1.bf16.xpose.msra.mxu0 0
      %820 = vmatprep.subr.bf16.mxu0 0
      %821 = vmatpush1.bf16.xpose.msra.mxu0 %v804
      %822 = vmatprep.subr.bf16.mxu0 0
      %823 = vmatpush2.bf16.xpose.msra.mxu0 0
      %824 = vmatprep.subr.bf16.mxu0 0
      %825 = vmatpush2.bf16.xpose.msra.mxu0 0
      %826 = vmatprep.subr.bf16.mxu0 0
      %827 = vmatpush2.bf16.xpose.msra.mxu0 0
      %828 = vmatprep.subr.bf16.mxu0 0
      %829 = vmatpush2.bf16.xpose.msra.mxu0 0
      %830 = vmatprep.subr.bf16.mxu0 0
      %831 = vmatpush2.bf16.xpose.msra.mxu0 0
      %832 = vmatprep.subr.bf16.mxu0 0
      %833 = vmatpush2.bf16.xpose.msra.mxu0 0
      %834 = vmatprep.subr.bf16.mxu0 0
      %835 = vmatpush2.bf16.xpose.msra.mxu0 0
      %836 = vmatprep.subr.bf16.mxu0 0
      %837 = vmatpush2.bf16.xpose.msra.mxu0 0
      %838 = vmatprep.mubr.bf16.mxu0 0
      %839 = vmatmul.mubr.bf16.gmra.mxu0 %v801
      %v840 = vpop.f32.mrf.mxu0
      %v841 = vadd.f32 0.0, %v840
      %v842 = vpop.f32.mrf.mxu0
      %v843 = vpop.f32.mrf.mxu0
      %v844 = vpop.f32.mrf.mxu0
      %845 = vdwg.mxu0
      %v846 = vmul.f32 %v841, 0.17677669
      %848 = vrot.lane.b32.xlu0 %v638, 96
      %v849 = vpop.permute.xlu0 %848
      %v851 = vsel %vm642, %v849, 0.0
      %852 = vadd.xlane.f32.xlu0 %v851
      %v853 = vpop.xlane.xlu0 %852
      %854 = vxpose.xlu0.b32.start [1/16] %v853, 128
      %855 = vxpose.xlu0.b32.cont [2/16] 0.0, 128
      %856 = vxpose.xlu0.b32.cont [3/16] 0.0, 128
      %857 = vxpose.xlu0.b32.cont [4/16] 0.0, 128
      %858 = vxpose.xlu0.b32.cont [5/16] 0.0, 128
      %859 = vxpose.xlu0.b32.cont [6/16] 0.0, 128
      %860 = vxpose.xlu0.b32.cont [7/16] 0.0, 128
      %861 = vxpose.xlu0.b32.cont [8/16] 0.0, 128
      %862 = vxpose.xlu0.b32.cont [9/16] 0.0, 128
      %863 = vxpose.xlu0.b32.cont [10/16] 0.0, 128
      %864 = vxpose.xlu0.b32.cont [11/16] 0.0, 128
      %865 = vxpose.xlu0.b32.cont [12/16] 0.0, 128
      %866 = vxpose.xlu0.b32.cont [13/16] 0.0, 128
      %867 = vxpose.xlu0.b32.cont [14/16] 0.0, 128
      %868 = vxpose.xlu0.b32.cont [15/16] 0.0, 128
      %869 = vxpose.xlu0.b32.end [16/16] 0.0, 128
      %v870 = vpop.trf.xlu0
      %v871 = vpop.trf.xlu0
      %v872 = vpop.trf.xlu0
      %v873 = vpop.trf.xlu0
      %v874 = vpop.trf.xlu0
      %v875 = vpop.trf.xlu0
      %v876 = vpop.trf.xlu0
      %v877 = vpop.trf.xlu0
      %v878 = vpop.trf.xlu0
      %v879 = vpop.trf.xlu0
      %v880 = vpop.trf.xlu0
      %v881 = vpop.trf.xlu0
      %v882 = vpop.trf.xlu0
      %v883 = vpop.trf.xlu0
      %v884 = vpop.trf.xlu0
      %v885 = vpop.trf.xlu0
      %vm886 = vcmp.eq.f32.partialorder %v870, 0.0
      %v887 = vsel %vm886, 1, 0
      %v888 = vlaneseq
      %v889 = vshrl.u32 %v888, 7
      %v890 = vsub.s32 0, %v889
      %v891 = vrot.slane %v887, %v890
      %vm892 = vcmp.eq.s32.totalorder %v891, 1
      %v893 = vsel %vm892, -4.2949673e+09, %v846
      %v894 = vsel %vm733, %v893, -inf
      %895 = vmax.xlane.f32.xlu0 %v894
      %v896 = vpop.xlane.xlu0 %895
      %v897 = vsub.f32 %v893, %v896
      %v898 = vmul.f32 %v897, 1.442695
      %v899 = vpow.pop %v898
      %v900 = vsel %vm733, %v899, 0.0
      %901 = vadd.xlane.f32.xlu0 %v900
      %v902 = vpop.xlane.xlu0 %901
      %v903 = vrcp.pop %v902
      %v904 = vmul.f32 %v899, %v903
      %v905 = vpack.c.bf16 %v904, %v904
      %907 = vrot.lane.b32.xlu0 %v746, 96
      %v908 = vpop.permute.xlu0 %907
      %v910 = vsel %vm733, %v905, 0
      %v913 = vsel %vm750, %v908, 0
      %915 = vmatprep.subr.bf16.mxu0 0
      %916 = vmatpush1.bf16.msra.mxu0 0
      %917 = vmatprep.subr.bf16.mxu0 0
      %918 = vmatpush1.bf16.msra.mxu0 0
      %919 = vmatprep.subr.bf16.mxu0 0
      %920 = vmatpush1.bf16.msra.mxu0 0
      %921 = vmatprep.subr.bf16.mxu0 0
      %922 = vmatpush1.bf16.msra.mxu0 0
      %923 = vmatprep.subr.bf16.mxu0 0
      %924 = vmatpush1.bf16.msra.mxu0 0
      %925 = vmatprep.subr.bf16.mxu0 0
      %926 = vmatpush1.bf16.msra.mxu0 0
      %927 = vmatprep.subr.bf16.mxu0 0
      %928 = vmatpush1.bf16.msra.mxu0 0
      %929 = vmatprep.subr.bf16.mxu0 0
      %930 = vmatpush1.bf16.msra.mxu0 %v913
      %931 = vmatprep.subr.bf16.mxu0 0
      %932 = vmatpush2.bf16.msra.mxu0 0
      %933 = vmatprep.subr.bf16.mxu0 0
      %934 = vmatpush2.bf16.msra.mxu0 0
      %935 = vmatprep.subr.bf16.mxu0 0
      %936 = vmatpush2.bf16.msra.mxu0 0
      %937 = vmatprep.subr.bf16.mxu0 0
      %938 = vmatpush2.bf16.msra.mxu0 0
      %939 = vmatprep.subr.bf16.mxu0 0
      %940 = vmatpush2.bf16.msra.mxu0 0
      %941 = vmatprep.subr.bf16.mxu0 0
      %942 = vmatpush2.bf16.msra.mxu0 0
      %943 = vmatprep.subr.bf16.mxu0 0
      %944 = vmatpush2.bf16.msra.mxu0 0
      %945 = vmatprep.subr.bf16.mxu0 0
      %946 = vmatpush2.bf16.msra.mxu0 0
      %947 = vmatprep.mubr.bf16.mxu0 0
      %948 = vmatmul.mubr.bf16.gmra.mxu0 %v910
      %v949 = vpop.f32.mrf.mxu0
      %v950 = vadd.f32 0.0, %v949
      %v951 = vpop.f32.mrf.mxu0
      %v952 = vpop.f32.mrf.mxu0
      %v953 = vpop.f32.mrf.mxu0
      %954 = vdwg.mxu0
      %955 = vrot.lane.b32.xlu0 %v640, 64
      %v956 = vpop.permute.xlu0 %955
      %957 = vrot.lane.b32.xlu0 %v641, 64
      %v958 = vpop.permute.xlu0 %957
      %v960 = vsel %vm642, %v956, 0
      %v963 = vsel %vm642, %v958, 0
      %965 = vmatprep.subr.bf16.mxu0 0
      %966 = vmatpush1.bf16.xpose.msra.mxu0 0
      %967 = vmatprep.subr.bf16.mxu0 0
      %968 = vmatpush1.bf16.xpose.msra.mxu0 0
      %969 = vmatprep.subr.bf16.mxu0 0
      %970 = vmatpush1.bf16.xpose.msra.mxu0 0
      %971 = vmatprep.subr.bf16.mxu0 0
      %972 = vmatpush1.bf16.xpose.msra.mxu0 0
      %973 = vmatprep.subr.bf16.mxu0 0
      %974 = vmatpush1.bf16.xpose.msra.mxu0 0
      %975 = vmatprep.subr.bf16.mxu0 0
      %976 = vmatpush1.bf16.xpose.msra.mxu0 0
      %977 = vmatprep.subr.bf16.mxu0 0
      %978 = vmatpush1.bf16.xpose.msra.mxu0 0
      %979 = vmatprep.subr.bf16.mxu0 0
      %980 = vmatpush1.bf16.xpose.msra.mxu0 %v963
      %981 = vmatprep.subr.bf16.mxu0 0
      %982 = vmatpush2.bf16.xpose.msra.mxu0 0
      %983 = vmatprep.subr.bf16.mxu0 0
      %984 = vmatpush2.bf16.xpose.msra.mxu0 0
      %985 = vmatprep.subr.bf16.mxu0 0
      %986 = vmatpush2.bf16.xpose.msra.mxu0 0
      %987 = vmatprep.subr.bf16.mxu0 0
      %988 = vmatpush2.bf16.xpose.msra.mxu0 0
      %989 = vmatprep.subr.bf16.mxu0 0
      %990 = vmatpush2.bf16.xpose.msra.mxu0 0
      %991 = vmatprep.subr.bf16.mxu0 0
      %992 = vmatpush2.bf16.xpose.msra.mxu0 0
      %993 = vmatprep.subr.bf16.mxu0 0
      %994 = vmatpush2.bf16.xpose.msra.mxu0 0
      %995 = vmatprep.subr.bf16.mxu0 0
      %996 = vmatpush2.bf16.xpose.msra.mxu0 0
      %997 = vmatprep.mubr.bf16.mxu0 0
      %998 = vmatmul.mubr.bf16.gmra.mxu0 %v960
      %v999 = vpop.f32.mrf.mxu0
      %v1000 = vadd.f32 0.0, %v999
      %v1001 = vpop.f32.mrf.mxu0
      %v1002 = vpop.f32.mrf.mxu0
      %v1003 = vpop.f32.mrf.mxu0
      %1004 = vdwg.mxu0
      %v1005 = vmul.f32 %v1000, 0.17677669
      %1006 = vrot.lane.b32.xlu0 %v638, 64
      %v1007 = vpop.permute.xlu0 %1006
      %v1009 = vsel %vm642, %v1007, 0.0
      %1010 = vadd.xlane.f32.xlu0 %v1009
      %v1011 = vpop.xlane.xlu0 %1010
      %1012 = vxpose.xlu0.b32.start [1/16] %v1011, 128
      %1013 = vxpose.xlu0.b32.cont [2/16] 0.0, 128
      %1014 = vxpose.xlu0.b32.cont [3/16] 0.0, 128
      %1015 = vxpose.xlu0.b32.cont [4/16] 0.0, 128
      %1016 = vxpose.xlu0.b32.cont [5/16] 0.0, 128
      %1017 = vxpose.xlu0.b32.cont [6/16] 0.0, 128
      %1018 = vxpose.xlu0.b32.cont [7/16] 0.0, 128
      %1019 = vxpose.xlu0.b32.cont [8/16] 0.0, 128
      %1020 = vxpose.xlu0.b32.cont [9/16] 0.0, 128
      %1021 = vxpose.xlu0.b32.cont [10/16] 0.0, 128
      %1022 = vxpose.xlu0.b32.cont [11/16] 0.0, 128
      %1023 = vxpose.xlu0.b32.cont [12/16] 0.0, 128
      %1024 = vxpose.xlu0.b32.cont [13/16] 0.0, 128
      %1025 = vxpose.xlu0.b32.cont [14/16] 0.0, 128
      %1026 = vxpose.xlu0.b32.cont [15/16] 0.0, 128
      %1027 = vxpose.xlu0.b32.end [16/16] 0.0, 128
      %v1028 = vpop.trf.xlu0
      %v1029 = vpop.trf.xlu0
      %v1030 = vpop.trf.xlu0
      %v1031 = vpop.trf.xlu0
      %v1032 = vpop.trf.xlu0
      %v1033 = vpop.trf.xlu0
      %v1034 = vpop.trf.xlu0
      %v1035 = vpop.trf.xlu0
      %v1036 = vpop.trf.xlu0
      %v1037 = vpop.trf.xlu0
      %v1038 = vpop.trf.xlu0
      %v1039 = vpop.trf.xlu0
      %v1040 = vpop.trf.xlu0
      %v1041 = vpop.trf.xlu0
      %v1042 = vpop.trf.xlu0
      %v1043 = vpop.trf.xlu0
      %vm1044 = vcmp.eq.f32.partialorder %v1028, 0.0
      %v1045 = vsel %vm1044, 1, 0
      %v1046 = vlaneseq
      %v1047 = vshrl.u32 %v1046, 7
      %v1048 = vsub.s32 0, %v1047
      %v1049 = vrot.slane %v1045, %v1048
      %vm1050 = vcmp.eq.s32.totalorder %v1049, 1
      %v1051 = vsel %vm1050, -4.2949673e+09, %v1005
      %v1052 = vsel %vm733, %v1051, -inf
      %1053 = vmax.xlane.f32.xlu0 %v1052
      %v1054 = vpop.xlane.xlu0 %1053
      %v1055 = vsub.f32 %v1051, %v1054
      %v1056 = vmul.f32 %v1055, 1.442695
      %v1057 = vpow.pop %v1056
      %v1058 = vsel %vm733, %v1057, 0.0
      %1059 = vadd.xlane.f32.xlu0 %v1058
      %v1060 = vpop.xlane.xlu0 %1059
      %v1061 = vrcp.pop %v1060
      %v1062 = vmul.f32 %v1057, %v1061
      %v1063 = vpack.c.bf16 %v1062, %v1062
      %1064 = vrot.lane.b32.xlu0 %v746, 64
      %v1065 = vpop.permute.xlu0 %1064
      %v1067 = vsel %vm733, %v1063, 0
      %v1070 = vsel %vm750, %v1065, 0
      %1072 = vmatprep.subr.bf16.mxu0 0
      %1073 = vmatpush1.bf16.msra.mxu0 0
      %1074 = vmatprep.subr.bf16.mxu0 0
      %1075 = vmatpush1.bf16.msra.mxu0 0
      %1076 = vmatprep.subr.bf16.mxu0 0
      %1077 = vmatpush1.bf16.msra.mxu0 0
      %1078 = vmatprep.subr.bf16.mxu0 0
      %1079 = vmatpush1.bf16.msra.mxu0 0
      %1080 = vmatprep.subr.bf16.mxu0 0
      %1081 = vmatpush1.bf16.msra.mxu0 0
      %1082 = vmatprep.subr.bf16.mxu0 0
      %1083 = vmatpush1.bf16.msra.mxu0 0
      %1084 = vmatprep.subr.bf16.mxu0 0
      %1085 = vmatpush1.bf16.msra.mxu0 0
      %1086 = vmatprep.subr.bf16.mxu0 0
      %1087 = vmatpush1.bf16.msra.mxu0 %v1070
      %1088 = vmatprep.subr.bf16.mxu0 0
      %1089 = vmatpush2.bf16.msra.mxu0 0
      %1090 = vmatprep.subr.bf16.mxu0 0
      %1091 = vmatpush2.bf16.msra.mxu0 0
      %1092 = vmatprep.subr.bf16.mxu0 0
      %1093 = vmatpush2.bf16.msra.mxu0 0
      %1094 = vmatprep.subr.bf16.mxu0 0
      %1095 = vmatpush2.bf16.msra.mxu0 0
      %1096 = vmatprep.subr.bf16.mxu0 0
      %1097 = vmatpush2.bf16.msra.mxu0 0
      %1098 = vmatprep.subr.bf16.mxu0 0
      %1099 = vmatpush2.bf16.msra.mxu0 0
      %1100 = vmatprep.subr.bf16.mxu0 0
      %1101 = vmatpush2.bf16.msra.mxu0 0
      %1102 = vmatprep.subr.bf16.mxu0 0
      %1103 = vmatpush2.bf16.msra.mxu0 0
      %1104 = vmatprep.mubr.bf16.mxu0 0
      %1105 = vmatmul.mubr.bf16.gmra.mxu0 %v1067
      %v1106 = vpop.f32.mrf.mxu0
      %v1107 = vadd.f32 0.0, %v1106
      %v1108 = vpop.f32.mrf.mxu0
      %v1109 = vpop.f32.mrf.mxu0
      %v1110 = vpop.f32.mrf.mxu0
      %1111 = vdwg.mxu0
      %1112 = vrot.lane.b32.xlu0 %v640, 32
      %v1113 = vpop.permute.xlu0 %1112
      %1114 = vrot.lane.b32.xlu0 %v641, 32
      %v1115 = vpop.permute.xlu0 %1114
      %v1117 = vsel %vm642, %v1113, 0
      %v1120 = vsel %vm642, %v1115, 0
      %1122 = vmatprep.subr.bf16.mxu0 0
      %1123 = vmatpush1.bf16.xpose.msra.mxu0 0
      %1124 = vmatprep.subr.bf16.mxu0 0
      %1125 = vmatpush1.bf16.xpose.msra.mxu0 0
      %1126 = vmatprep.subr.bf16.mxu0 0
      %1127 = vmatpush1.bf16.xpose.msra.mxu0 0
      %1128 = vmatprep.subr.bf16.mxu0 0
      %1129 = vmatpush1.bf16.xpose.msra.mxu0 0
      %1130 = vmatprep.subr.bf16.mxu0 0
      %1131 = vmatpush1.bf16.xpose.msra.mxu0 0
      %1132 = vmatprep.subr.bf16.mxu0 0
      %1133 = vmatpush1.bf16.xpose.msra.mxu0 0
      %1134 = vmatprep.subr.bf16.mxu0 0
      %1135 = vmatpush1.bf16.xpose.msra.mxu0 0
      %1136 = vmatprep.subr.bf16.mxu0 0
      %1137 = vmatpush1.bf16.xpose.msra.mxu0 %v1120
      %1138 = vmatprep.subr.bf16.mxu0 0
      %1139 = vmatpush2.bf16.xpose.msra.mxu0 0
      %1140 = vmatprep.subr.bf16.mxu0 0
      %1141 = vmatpush2.bf16.xpose.msra.mxu0 0
      %1142 = vmatprep.subr.bf16.mxu0 0
      %1143 = vmatpush2.bf16.xpose.msra.mxu0 0
      %1144 = vmatprep.subr.bf16.mxu0 0
      %1145 = vmatpush2.bf16.xpose.msra.mxu0 0
      %1146 = vmatprep.subr.bf16.mxu0 0
      %1147 = vmatpush2.bf16.xpose.msra.mxu0 0
      %1148 = vmatprep.subr.bf16.mxu0 0
      %1149 = vmatpush2.bf16.xpose.msra.mxu0 0
      %1150 = vmatprep.subr.bf16.mxu0 0
      %1151 = vmatpush2.bf16.xpose.msra.mxu0 0
      %1152 = vmatprep.subr.bf16.mxu0 0
      %1153 = vmatpush2.bf16.xpose.msra.mxu0 0
      %1154 = vmatprep.mubr.bf16.mxu0 0
      %1155 = vmatmul.mubr.bf16.gmra.mxu0 %v1117
      %v1156 = vpop.f32.mrf.mxu0
      %v1157 = vadd.f32 0.0, %v1156
      %v1158 = vpop.f32.mrf.mxu0
      %v1159 = vpop.f32.mrf.mxu0
      %v1160 = vpop.f32.mrf.mxu0
      %1161 = vdwg.mxu0
      %v1162 = vmul.f32 %v1157, 0.17677669
      %1163 = vrot.lane.b32.xlu0 %v638, 32
      %v1164 = vpop.permute.xlu0 %1163
      %v1166 = vsel %vm642, %v1164, 0.0
      %1167 = vadd.xlane.f32.xlu0 %v1166
      %v1168 = vpop.xlane.xlu0 %1167
      %1169 = vxpose.xlu0.b32.start [1/16] %v1168, 128
      %1170 = vxpose.xlu0.b32.cont [2/16] 0.0, 128
      %1171 = vxpose.xlu0.b32.cont [3/16] 0.0, 128
      %1172 = vxpose.xlu0.b32.cont [4/16] 0.0, 128
      %1173 = vxpose.xlu0.b32.cont [5/16] 0.0, 128
      %1174 = vxpose.xlu0.b32.cont [6/16] 0.0, 128
      %1175 = vxpose.xlu0.b32.cont [7/16] 0.0, 128
      %1176 = vxpose.xlu0.b32.cont [8/16] 0.0, 128
      %1177 = vxpose.xlu0.b32.cont [9/16] 0.0, 128
      %1178 = vxpose.xlu0.b32.cont [10/16] 0.0, 128
      %1179 = vxpose.xlu0.b32.cont [11/16] 0.0, 128
      %1180 = vxpose.xlu0.b32.cont [12/16] 0.0, 128
      %1181 = vxpose.xlu0.b32.cont [13/16] 0.0, 128
      %1182 = vxpose.xlu0.b32.cont [14/16] 0.0, 128
      %1183 = vxpose.xlu0.b32.cont [15/16] 0.0, 128
      %1184 = vxpose.xlu0.b32.end [16/16] 0.0, 128
      %v1185 = vpop.trf.xlu0
      %v1186 = vpop.trf.xlu0
      %v1187 = vpop.trf.xlu0
      %v1188 = vpop.trf.xlu0
      %v1189 = vpop.trf.xlu0
      %v1190 = vpop.trf.xlu0
      %v1191 = vpop.trf.xlu0
      %v1192 = vpop.trf.xlu0
      %v1193 = vpop.trf.xlu0
      %v1194 = vpop.trf.xlu0
      %v1195 = vpop.trf.xlu0
      %v1196 = vpop.trf.xlu0
      %v1197 = vpop.trf.xlu0
      %v1198 = vpop.trf.xlu0
      %v1199 = vpop.trf.xlu0
      %v1200 = vpop.trf.xlu0
      %vm1201 = vcmp.eq.f32.partialorder %v1185, 0.0
      %v1202 = vsel %vm1201, 1, 0
      %v1203 = vlaneseq
      %v1204 = vshrl.u32 %v1203, 7
      %v1205 = vsub.s32 0, %v1204
      %v1206 = vrot.slane %v1202, %v1205
      %vm1207 = vcmp.eq.s32.totalorder %v1206, 1
      %v1208 = vsel %vm1207, -4.2949673e+09, %v1162
      %v1209 = vsel %vm733, %v1208, -inf
      %1210 = vmax.xlane.f32.xlu0 %v1209
      %v1211 = vpop.xlane.xlu0 %1210
      %v1212 = vsub.f32 %v1208, %v1211
      %v1213 = vmul.f32 %v1212, 1.442695
      %v1214 = vpow.pop %v1213
      %v1215 = vsel %vm733, %v1214, 0.0
      %1216 = vadd.xlane.f32.xlu0 %v1215
      %v1217 = vpop.xlane.xlu0 %1216
      %v1218 = vrcp.pop %v1217
      %v1219 = vmul.f32 %v1214, %v1218
      %v1220 = vpack.c.bf16 %v1219, %v1219
      %1221 = vrot.lane.b32.xlu0 %v746, 32
      %v1222 = vpop.permute.xlu0 %1221
      %v1224 = vsel %vm733, %v1220, 0
      %v1227 = vsel %vm750, %v1222, 0
      %1229 = vmatprep.subr.bf16.mxu0 0
      %1230 = vmatpush1.bf16.msra.mxu0 0
      %1231 = vmatprep.subr.bf16.mxu0 0
      %1232 = vmatpush1.bf16.msra.mxu0 0
      %1233 = vmatprep.subr.bf16.mxu0 0
      %1234 = vmatpush1.bf16.msra.mxu0 0
      %1235 = vmatprep.subr.bf16.mxu0 0
      %1236 = vmatpush1.bf16.msra.mxu0 0
      %1237 = vmatprep.subr.bf16.mxu0 0
      %1238 = vmatpush1.bf16.msra.mxu0 0
      %1239 = vmatprep.subr.bf16.mxu0 0
      %1240 = vmatpush1.bf16.msra.mxu0 0
      %1241 = vmatprep.subr.bf16.mxu0 0
      %1242 = vmatpush1.bf16.msra.mxu0 0
      %1243 = vmatprep.subr.bf16.mxu0 0
      %1244 = vmatpush1.bf16.msra.mxu0 %v1227
      %1245 = vmatprep.subr.bf16.mxu0 0
      %1246 = vmatpush2.bf16.msra.mxu0 0
      %1247 = vmatprep.subr.bf16.mxu0 0
      %1248 = vmatpush2.bf16.msra.mxu0 0
      %1249 = vmatprep.subr.bf16.mxu0 0
      %1250 = vmatpush2.bf16.msra.mxu0 0
      %1251 = vmatprep.subr.bf16.mxu0 0
      %1252 = vmatpush2.bf16.msra.mxu0 0
      %1253 = vmatprep.subr.bf16.mxu0 0
      %1254 = vmatpush2.bf16.msra.mxu0 0
      %1255 = vmatprep.subr.bf16.mxu0 0
      %1256 = vmatpush2.bf16.msra.mxu0 0
      %1257 = vmatprep.subr.bf16.mxu0 0
      %1258 = vmatpush2.bf16.msra.mxu0 0
      %1259 = vmatprep.subr.bf16.mxu0 0
      %1260 = vmatpush2.bf16.msra.mxu0 0
      %1261 = vmatprep.mubr.bf16.mxu0 0
      %1262 = vmatmul.mubr.bf16.gmra.mxu0 %v1224
      %v1263 = vpop.f32.mrf.mxu0
      %v1264 = vadd.f32 0.0, %v1263
      %v1265 = vpop.f32.mrf.mxu0
      %v1266 = vpop.f32.mrf.mxu0
      %v1267 = vpop.f32.mrf.mxu0
      %1268 = vdwg.mxu0
      %1270 = vrot.lane.b32.xlu0 %v950, 32
      %v1271 = vpop.permute.xlu0 %1270
      %1274 = vrot.lane.b32.xlu0 %v1107, 64
      %v1275 = vpop.permute.xlu0 %1274
      %1278 = vrot.lane.b32.xlu0 %v1264, 96
      %v1279 = vpop.permute.xlu0 %1278
      %v1281 = vsel %vm642, %v789, %v1271
      %vm1282 = vcmask 523264
      %v1283 = vsel %vm1282, %v1281, %v1275
      %vm1284 = vcmask 785408
      %v1285 = vsel %vm1284, %v1283, %v1279
      %v1286 = vpack.c.bf16 %v1285, %v1285
      %v1287 = vld [vmem:[%s6] sm:$0xf]
      %v1288 = vld [vmem:[%s6 + $0x4] sm:$0xf]
      %v1289 = vld [vmem:[%s6 + $0x8] sm:$0xf]
      %v1290 = vld [vmem:[%s6 + $0xc] sm:$0xf]
      %v1291 = vld [vmem:[%s6 + $0x10] sm:$0xf]
      %v1292 = vld [vmem:[%s6 + $0x14] sm:$0xf]
      %v1293 = vld [vmem:[%s6 + $0x18] sm:$0xf]
      %v1294 = vld [vmem:[%s6 + $0x1c] sm:$0xf]
      %v1295 = vld [vmem:[%s6 + $0x20] sm:$0xf]
      %v1296 = vld [vmem:[%s6 + $0x24] sm:$0xf]
      %v1297 = vld [vmem:[%s6 + $0x28] sm:$0xf]
      %v1298 = vld [vmem:[%s6 + $0x2c] sm:$0xf]
      %v1299 = vld [vmem:[%s6 + $0x30] sm:$0xf]
      %v1300 = vld [vmem:[%s6 + $0x34] sm:$0xf]
      %v1301 = vld [vmem:[%s6 + $0x38] sm:$0xf]
      %v1302 = vld [vmem:[%s6 + $0x3c] sm:$0xf]
      %v1303 = vld [vmem:[%s7] sm:$0x1]
      %v1305 = vlaneseq
      %v1306 = vshrl.u32 %v1305, 7
      %v1307 = vsub.s32 0, %v1306
      %v1308 = vrot.slane %v1303, %v1307
      %v1326 = vunpack.c.l.b16 %v1287
      %v1327 = vunpack.c.l.b16 %v1288
      %v1328 = vunpack.c.l.b16 %v1289
      %v1329 = vunpack.c.l.b16 %v1290
      %v1330 = vunpack.c.l.b16 %v1291
      %v1331 = vunpack.c.l.b16 %v1292
      %v1332 = vunpack.c.l.b16 %v1293
      %v1333 = vunpack.c.l.b16 %v1294
      %v1334 = vunpack.c.l.b16 %v1295
      %v1335 = vunpack.c.l.b16 %v1296
      %v1336 = vunpack.c.l.b16 %v1297
      %v1337 = vunpack.c.l.b16 %v1298
      %v1338 = vunpack.c.l.b16 %v1299
      %v1339 = vunpack.c.l.b16 %v1300
      %v1340 = vunpack.c.l.b16 %v1301
      %v1341 = vunpack.c.l.b16 %v1302
      %v1342 = vpack.c.b16 %v1327, %v1326
      %v1343 = vpack.c.b16 %v1329, %v1328
      %v1344 = vpack.c.b16 %v1331, %v1330
      %v1345 = vpack.c.b16 %v1333, %v1332
      %v1346 = vpack.c.b16 %v1335, %v1334
      %v1347 = vpack.c.b16 %v1337, %v1336
      %v1348 = vpack.c.b16 %v1339, %v1338
      %v1349 = vpack.c.b16 %v1341, %v1340
      %1358 = vmatprep.subr.bf16.mxu0 0
      %1359 = vmatpush1.bf16.msra.mxu0 %v1349
      %1360 = vmatprep.subr.bf16.mxu0 0
      %1361 = vmatpush1.bf16.msra.mxu0 %v1348
      %1362 = vmatprep.subr.bf16.mxu0 0
      %1363 = vmatpush1.bf16.msra.mxu0 %v1347
      %1364 = vmatprep.subr.bf16.mxu0 0
      %1365 = vmatpush1.bf16.msra.mxu0 %v1346
      %1366 = vmatprep.subr.bf16.mxu0 0
      %1367 = vmatpush1.bf16.msra.mxu0 %v1345
      %1368 = vmatprep.subr.bf16.mxu0 0
      %1369 = vmatpush1.bf16.msra.mxu0 %v1344
      %1370 = vmatprep.subr.bf16.mxu0 0
      %1371 = vmatpush1.bf16.msra.mxu0 %v1343
      %1372 = vmatprep.subr.bf16.mxu0 0
      %1373 = vmatpush1.bf16.msra.mxu0 %v1342
      %1374 = vmatprep.subr.bf16.mxu0 0
      %1375 = vmatpush2.bf16.msra.mxu0 0
      %1376 = vmatprep.subr.bf16.mxu0 0
      %1377 = vmatpush2.bf16.msra.mxu0 0
      %1378 = vmatprep.subr.bf16.mxu0 0
      %1379 = vmatpush2.bf16.msra.mxu0 0
      %1380 = vmatprep.subr.bf16.mxu0 0
      %1381 = vmatpush2.bf16.msra.mxu0 0
      %1382 = vmatprep.subr.bf16.mxu0 0
      %1383 = vmatpush2.bf16.msra.mxu0 0
      %1384 = vmatprep.subr.bf16.mxu0 0
      %1385 = vmatpush2.bf16.msra.mxu0 0
      %1386 = vmatprep.subr.bf16.mxu0 0
      %1387 = vmatpush2.bf16.msra.mxu0 0
      %1388 = vmatprep.subr.bf16.mxu0 0
      %1389 = vmatpush2.bf16.msra.mxu0 0
      %1390 = vmatprep.mubr.bf16.mxu0 0
      %1391 = vmatmul.mubr.bf16.gmra.mxu0 %v1286
      %v1392 = vpop.f32.mrf.mxu0
      %v1393 = vadd.f32 %v1308, %v1392
      %v1394 = vpop.f32.mrf.mxu0
      %v1395 = vpop.f32.mrf.mxu0
      %v1396 = vpop.f32.mrf.mxu0
      %1397 = vdwg.mxu0
      %v1398 = vadd.f32 %v373, %v1393
      %v1399 = vld [vmem:[%s8] sm:$0x1]
      %v1400 = vld [vmem:[%s9] sm:$0x1]
      %1401 = vadd.xlane.f32.xlu0 %v1398
      %v1402 = vpop.xlane.xlu0 %1401
      %v1403 = vrcp.pop 128.0
      %v1404 = vmul.f32 %v1402, %v1403
      %v1405 = vsub.f32 %v1398, %v1404
      %v1406 = vmul.f32 %v1405, %v1405
      %1407 = vadd.xlane.f32.xlu0 %v1406
      %v1408 = vpop.xlane.xlu0 %1407
      %v1409 = vmul.f32 %v1408, %v1403
      %v1410 = vadd.f32 %v1409, 1e-05
      %v1411 = vrsqrt.pop %v1410
      %v1412 = vmul.f32 %v1405, %v1411
      %v1414 = vlaneseq
      %v1415 = vshrl.u32 %v1414, 7
      %v1416 = vsub.s32 0, %v1415
      %v1417 = vrot.slane %v1399, %v1416
      %v1419 = vmul.f32 %v1412, %v1417
      %v1421 = vlaneseq
      %v1422 = vshrl.u32 %v1421, 7
      %v1423 = vsub.s32 0, %v1422
      %v1424 = vrot.slane %v1400, %v1423
      %v1426 = vadd.f32 %v1419, %v1424
      %1427 = vst [vmem:[%s371] sm:$0xff] %v1426
      %p1428 = scmp.lt.s32.totalorder %s21, 1
      %s1429 = scalar_select %p1428, %s21, 1
      %s1430 = smul.addr %s1429, 8
      %s1431 = scalar_lea.vmem %s10, %s1430
      // Predicated region
      $region61: #{_lambda_.16} parent=59 // pred_check
        %p1432 = pneg %p259
      $region62: #{_lambda_.16} parent=59 // pred_check_branch
        %1434 = sbr.rel (%p1432) target = $region64
      $region63: #{_lambda_.16} parent=59 // pred_region
        _
      $region64: #{_lambda_.16} parent=59 // pred_fallthru
        _
    $region60: #{_lambda_.16} parent=5 // pred_fallthru
      _
    %p1435 = scmp.le.s32.totalorder 2, %s16
    // Predicated region
    $region65: #{_lambda_.16} parent=5 // pred_check
      %p1436 = pneg %p1435
    $region66: #{_lambda_.16} parent=5 // pred_check_branch
      %1438 = sbr.rel (%p1436) target = $region68
    $region67: #{_lambda_.16} parent=5 // pred_region
      %s1439 = ssub.s32 %s16, 2
      // Predicated region
      $region69: #{_lambda_.16} parent=67 // pred_check
        %p1440 = pneg %p265
      $region70: #{_lambda_.16} parent=67 // pred_check_branch
        %1442 = sbr.rel (%p1440) target = $region72
      $region71: #{_lambda_.16} parent=67 // pred_region
        %p1443 = scmp.lt.s32.totalorder %s22, 1
        %s1444 = scalar_select %p1443, %s22, 1
        %s1445 = smul.addr %s1444, 8
        %s1446 = scalar_lea.vmem %s10, %s1445
      $region72: #{_lambda_.16} parent=67 // pred_fallthru
        _
    $region68: #{_lambda_.16} parent=5 // pred_fallthru
      _
  $region6: #{_lambda_.16} parent=0 // loop_footer
    %s20 = sadd.s32 1, %s16
  $region7: #{_lambda_.16} parent=0 // loop_footer_branch
    %15 = sbr.rel target = $region3
  $region8: #{_lambda_.16} parent=0 // loop_exit
    _

</llo_original>
